<compile_context>
chip_gen: v7x
topology: tpu7x:2x2x1
jax: 0.10.0
libtpu: 0.0.40
codegen_flags: <defaults>
</compile_context>

<pallas_src>
import functools

import jax
import jax.numpy as jnp
from jax import lax
from jax.experimental import pallas as pl
from jax.experimental.pallas import tpu as pltpu

EPS = 1e-5
DIM = 5                      # one-hot classes / base channel count
H = 20                       # GRU hidden size
NCH = DIM + 2 * DIM + 2 * DIM + 3 * DIM   # 5+10+10+15 = 40 concat channels
LEN = 33                     # architecture fixes len=33 (GRU input_size, fc 1600)
LPAD = LEN + 2               # 35 after F.pad(...,(1,1))
NCLASS = 5


# ----------------------------------------------------------------------------
# Kernel 1: one-hot -> conv branches -> maxpool -> 2-layer bidirectional GRU
# ----------------------------------------------------------------------------
def _features_kernel(tok_ref, whead_ref, bhead_ref,
                     w3b_ref, b3b_ref, w4b_ref, b4b_ref, w4c_ref, b4c_ref,
                     wih0_ref, bih0_ref, whhf0_ref, bhhf0_ref, whhb0_ref, bhhb0_ref,
                     wih1_ref, bih1_ref, whhf1_ref, bhhf1_ref, whhb1_ref, bhhb1_ref,
                     g_ref, *, batch):
    B = batch
    rows = B * LPAD
    f32 = jnp.float32

    # ---- one-hot encode tokens in-kernel: (1, B*LPAD) i32 -> (5, B*LPAD) f32
    cls = lax.broadcasted_iota(jnp.int32, (NCLASS, rows), 0)
    x = jnp.where(tok_ref[...] == cls, 1.0, 0.0).astype(f32)

    # ---- merged 1x1 conv heads of all 4 branches (BatchNorm folded): one dot
    y = jnp.dot(whead_ref[...], x, preferred_element_type=f32) + bhead_ref[...]   # (35, rows)

    # ---- batch-boundary masks along the flattened (batch*position) lane axis
    lidx = lax.broadcasted_iota(jnp.int32, (1, rows), 1)
    is_first = lidx == 0
    is_last = lidx == (LPAD - 1)
    for b in range(1, B):
        is_first = jnp.logical_or(is_first, lidx == b * LPAD)
        is_last = jnp.logical_or(is_last, lidx == b * LPAD + LPAD - 1)
    not_first = jnp.where(is_first, 0.0, 1.0).astype(f32)
    not_last = jnp.where(is_last, 0.0, 1.0).astype(f32)

    def shift_left(a, n):            # out[:, i] = a[:, i + n], zero fill
        pad = jnp.zeros((a.shape[0], n), f32)
        return jnp.concatenate([a[:, n:], pad], axis=1)

    def shift_right(a, n):           # out[:, i] = a[:, i - n], zero fill
        pad = jnp.zeros((a.shape[0], n), f32)
        return jnp.concatenate([pad, a[:, :-n]], axis=1)

    def conv3_same(h, w_ref, b_ref, relu):
        # k=3 'same' Conv1d (BN folded) as ONE im2col matmul:
        #   (Cout, 3*Cin) @ (3*Cin, rows)
        prev = shift_right(h, 1) * not_first     # zero left pad per batch
        nxt = shift_left(h, 1) * not_last        # zero right pad per batch
        col = jnp.concatenate([prev, h, nxt], axis=0)
        z = jnp.dot(w_ref[...], col, preferred_element_type=f32) + b_ref[...]
        return jnp.maximum(z, 0.0) if relu else z

    b1 = y[0:DIM, :]                                        # ConvLayer1 (no ReLU)
    b2 = y[DIM:3 * DIM, :]                                  # ConvLayer2 (no ReLU)
    h3 = jnp.maximum(y[3 * DIM:5 * DIM, :], 0.0)            # ConvLayer3 head + ReLU
    h4 = jnp.maximum(y[5 * DIM:7 * DIM, :], 0.0)            # ConvLayer4 head + ReLU
    b3 = conv3_same(h3, w3b_ref, b3b_ref, relu=False)       # (10, rows)
    h4 = conv3_same(h4, w4b_ref, b4b_ref, relu=True)        # (10, rows)
    b4 = conv3_same(h4, w4c_ref, b4c_ref, relu=False)       # (15, rows)

    cat = jnp.concatenate([b1, b2, b3, b4], axis=0)         # (40, rows)

    # ---- MaxPool1d(kernel=3, stride=1): only in-batch positions 0..LEN-1 kept
    pooled = jnp.maximum(jnp.maximum(cat, shift_left(cat, 1)), shift_left(cat, 2))

    # ---- GRU input: time = original batch, GRU-"batch" = 40 channels,
    #      features = LEN positions.  Rows of xg are ordered (b, channel).
    xg = jnp.concatenate(
        [pooled[:, b * LPAD:b * LPAD + LEN] for b in range(B)], axis=0)   # (B*40, 33)

    # ---- one bidirectional GRU layer (PyTorch gate order r, z, n).
    #      Input projection (both directions, all steps) hoisted into one dot;
    #      T=B recurrence unrolled, forward/backward interleaved.
    def bigru(xflat, wih_ref, bih_ref, whhf_ref, bhhf_ref, whhb_ref, bhhb_ref):
        N = NCH
        gi = jnp.dot(xflat, wih_ref[...], preferred_element_type=f32) + bih_ref[...]  # (B*N, 6H)
        whf, bhf = whhf_ref[...], bhhf_ref[...]
        whb, bhb = whhb_ref[...], bhhb_ref[...]

        def cell(g, h, whh, bhh):
            gh = jnp.dot(h, whh, preferred_element_type=f32) + bhh
            r = jax.nn.sigmoid(g[:, 0:H] + gh[:, 0:H])
            z = jax.nn.sigmoid(g[:, H:2 * H] + gh[:, H:2 * H])
            n = jnp.tanh(g[:, 2 * H:3 * H] + r * gh[:, 2 * H:3 * H])
            return (1.0 - z) * n + z * h

        hf = jnp.zeros((N, H), f32)
        hb = jnp.zeros((N, H), f32)
        hf_out = [None] * B
        hb_out = [None] * B
        for t in range(B):                       # fully unrolled (T = B, static)
            tb = B - 1 - t
            gf = gi[t * N:(t + 1) * N, 0:3 * H]
            gb = gi[tb * N:(tb + 1) * N, 3 * H:6 * H]
            hf = cell(gf, hf, whf, bhf)          # forward dir, step t
            hb = cell(gb, hb, whb, bhb)          # backward dir, step T-1-t
            hf_out[t] = hf
            hb_out[tb] = hb
        # output[t] = [h_fwd(t), h_bwd(t)]  -> rows ordered (t, channel)
        return jnp.concatenate(
            [jnp.concatenate([hf_out[t], hb_out[t]], axis=1) for t in range(B)],
            axis=0)                              # (B*40, 2H)

    g0 = bigru(xg, wih0_ref, bih0_ref, whhf0_ref, bhhf0_ref, whhb0_ref, bhhb0_ref)
    g1 = bigru(g0, wih1_ref, bih1_ref, whhf1_ref, bhhf1_ref, whhb1_ref, bhhb1_ref)
    g_ref[...] = g1                              # single dense (160, 40) store


# ----------------------------------------------------------------------------
# Kernel 2: predictor fc1 -> fc2 -> fc3 (BatchNorm folded, ReLU in-kernel)
# ----------------------------------------------------------------------------
def _predictor_kernel(x_ref, w1_ref, b1_ref, w2_ref, b2_ref, w3_ref, b3_ref, o_ref):
    f32 = jnp.float32
    y = jnp.dot(x_ref[...], w1_ref[...], preferred_element_type=f32) + b1_ref[...]
    y = jnp.maximum(y, 0.0)
    y = jnp.dot(y, w2_ref[...], preferred_element_type=f32) + b2_ref[...]
    y = jnp.maximum(y, 0.0)
    o_ref[...] = jnp.dot(y, w3_ref[...], preferred_element_type=f32) + b3_ref[...]


# ----------------------------------------------------------------------------
# pallas_call wrappers
# ----------------------------------------------------------------------------
def _vmem_spec():
    return pl.BlockSpec(memory_space=pltpu.MemorySpace.VMEM)


def msc_gru_forward(params, inputs):
    B = inputs.shape[0]
    assert inputs.shape[1] == LEN, "architecture fixes len=33"
    # F.pad(inputs, (1,1)); flatten (b, position) onto the lane axis.
    tok = jnp.pad(inputs.astype(jnp.int32), ((0, 0), (1, 1))).reshape(1, B * LPAD)

    g0p, g1p = params["gru0"], params["gru1"]
    feat_args = (tok, params["w_head"], params["b_head"],
                 params["w3b"], params["b3b"], params["w4b"], params["b4b"],
                 params["w4c"], params["b4c"],
                 g0p["wih"], g0p["bih"], g0p["whh_f"], g0p["bhh_f"],
                 g0p["whh_b"], g0p["bhh_b"],
                 g1p["wih"], g1p["bih"], g1p["whh_f"], g1p["bhh_f"],
                 g1p["whh_b"], g1p["bhh_b"])

    g = pl.pallas_call(
        functools.partial(_features_kernel, batch=B),
        out_shape=jax.ShapeDtypeStruct((B * NCH, 2 * H), jnp.float32),
        in_specs=[_vmem_spec() for _ in feat_args],
        out_specs=_vmem_spec(),
    )(*feat_args)

    # nn.Flatten(): g rows are ordered (b, channel), columns are the 2H GRU
    # features, so a plain row-major reshape gives the (B, 1600) flatten.
    flat = g.reshape(B, NCH * 2 * H)

    pred_args = (flat, params["w1"], params["b1"], params["w2"], params["b2"],
                 params["w3"], params["b3"])
    out = pl.pallas_call(
        _predictor_kernel,
        out_shape=jax.ShapeDtypeStruct((B, 1), jnp.float32),
        in_specs=[_vmem_spec() for _ in pred_args],
        out_specs=_vmem_spec(),
    )(*pred_args)
    return jnp.squeeze(out, axis=-1)


# ----------------------------------------------------------------------------
# Deterministic parameter initialization with BatchNorm folded into weights
# (shapes follow MSC_GRU.__init__; eval-mode running stats).
# ----------------------------------------------------------------------------
def init_params(key):
    ks = iter(jax.random.split(key, 96))

    def nk():
        return next(ks)

    def bn(c):
        gamma = 1.0 + 0.1 * jax.random.normal(nk(), (c,), jnp.float32)
        beta = 0.1 * jax.random.normal(nk(), (c,), jnp.float32)
        mean = 0.1 * jax.random.normal(nk(), (c,), jnp.float32)
        var = jnp.abs(jax.random.normal(nk(), (c,), jnp.float32)) + 0.5
        scale = gamma / jnp.sqrt(var + EPS)
        shift = beta - mean * scale
        return scale, shift

    def conv1x1_bn(cin, cout):
        # channel-major: y = W @ x + b with W (cout, cin), b (cout, 1)
        w = jax.random.normal(nk(), (cout, cin), jnp.float32) / jnp.sqrt(float(cin))
        b = 0.1 * jax.random.normal(nk(), (cout,), jnp.float32)
        scale, shift = bn(cout)
        return w * scale[:, None], (b * scale + shift)[:, None]

    def conv3_bn(cin, cout):
        # PyTorch weight (cout, cin, 3); fold BN; reorder to (cout, 3*cin)
        # with column index k*cin + ci to match the kernel's im2col rows.
        w = jax.random.normal(nk(), (cout, cin, 3), jnp.float32) / jnp.sqrt(3.0 * cin)
        b = 0.1 * jax.random.normal(nk(), (cout,), jnp.float32)
        scale, shift = bn(cout)
        wf = w * scale[:, None, None]
        wf = jnp.transpose(wf, (0, 2, 1)).reshape(cout, 3 * cin)
        return wf, (b * scale + shift)[:, None]

    def linear_bn(fin, fout, with_bn=True):
        w = jax.random.normal(nk(), (fin, fout), jnp.float32) / jnp.sqrt(float(fin))
        b = 0.1 * jax.random.normal(nk(), (fout,), jnp.float32)
        if with_bn:
            scale, shift = bn(fout)
            w = w * scale[None, :]
            b = b * scale + shift
        return w, b[None, :]

    def gru_layer(inp):
        # pre-transposed GRU weights; both directions concatenated for the
        # hoisted input projection (wih (inp, 6H), bih (1, 6H)).
        def direction():
            wih = jax.random.normal(nk(), (inp, 3 * H), jnp.float32) / jnp.sqrt(float(H))
            whh = jax.random.normal(nk(), (H, 3 * H), jnp.float32) / jnp.sqrt(float(H))
            bih = 0.1 * jax.random.normal(nk(), (1, 3 * H), jnp.float32)
            bhh = 0.1 * jax.random.normal(nk(), (1, 3 * H), jnp.float32)
            return wih, whh, bih, bhh

        wif, whf, bif, bhf = direction()
        wib, whb, bib, bhb = direction()
        return dict(wih=jnp.concatenate([wif, wib], axis=1),
                    bih=jnp.concatenate([bif, bib], axis=1),
                    whh_f=whf, bhh_f=bhf, whh_b=whb, bhh_b=bhb)

    p = {}
    # Merged 1x1 heads: ConvLayer1 (5), ConvLayer2 (10), ConvLayer3a (10), ConvLayer4a (10)
    w1, b1 = conv1x1_bn(DIM, DIM)
    w2, b2 = conv1x1_bn(DIM, 2 * DIM)
    w3a, b3a = conv1x1_bn(DIM, 2 * DIM)
    w4a, b4a = conv1x1_bn(DIM, 2 * DIM)
    p["w_head"] = jnp.concatenate([w1, w2, w3a, w4a], axis=0)   # (35, 5)
    p["b_head"] = jnp.concatenate([b1, b2, b3a, b4a], axis=0)   # (35, 1)
    # k=3 'same' convs
    p["w3b"], p["b3b"] = conv3_bn(2 * DIM, 2 * DIM)
    p["w4b"], p["b4b"] = conv3_bn(2 * DIM, 2 * DIM)
    p["w4c"], p["b4c"] = conv3_bn(2 * DIM, 3 * DIM)
    # GRU(33, 20, num_layers=2, bidirectional=True)
    p["gru0"] = gru_layer(LEN)
    p["gru1"] = gru_layer(2 * H)
    # Predictor
    p["w1"], p["b1"] = linear_bn(NCH * 2 * H, 256)
    p["w2"], p["b2"] = linear_bn(256, 32)
    p["w3"], p["b3"] = linear_bn(32, 1, with_bn=False)
    return p


if __name__ == "__main__":
    BATCH = 4
    key = jax.random.PRNGKey(0)
    k_in, k_par = jax.random.split(key)
    inputs = jax.random.randint(k_in, (BATCH, LEN), 0, NCLASS, dtype=jnp.int32)
    params = init_params(k_par)

    fwd = jax.jit(msc_gru_forward)
    out = jax.block_until_ready(fwd(params, inputs))
    assert out.shape == (BATCH,), out.shape
    assert bool(jnp.all(jnp.isfinite(out)))
    print("KERNEL_OK")
</pallas_src>

<mosaic_0001>
module attributes {stable_mosaic.version = 11 : i64} {
  func.func @_predictor_kernel(%arg0: memref<4x1600xf32, #tpu.memory_space<vmem>>, %arg1: memref<1600x256xf32, #tpu.memory_space<vmem>>, %arg2: memref<1x256xf32, #tpu.memory_space<vmem>>, %arg3: memref<256x32xf32, #tpu.memory_space<vmem>>, %arg4: memref<1x32xf32, #tpu.memory_space<vmem>>, %arg5: memref<32x1xf32, #tpu.memory_space<vmem>>, %arg6: memref<1x1xf32, #tpu.memory_space<vmem>>, %arg7: memref<4x1xf32, #tpu.memory_space<vmem>>) attributes {dimension_semantics = [], scalar_prefetch = 0 : i64, scratch_operands = 0 : i64, tpu.core_type = #tpu.core_type<tc>} {
    %c0 = arith.constant 0 : index
    %c0_0 = arith.constant 0 : index
    %0 = vector.load %arg0[%c0, %c0_0] : memref<4x1600xf32, #tpu.memory_space<vmem>>, vector<4x1600xf32>
    %c0_1 = arith.constant 0 : index
    %c0_2 = arith.constant 0 : index
    %1 = vector.load %arg1[%c0_1, %c0_2] : memref<1600x256xf32, #tpu.memory_space<vmem>>, vector<1600x256xf32>
    %cst = arith.constant dense<0.000000e+00> : vector<4x256xf32>
    %2 = tpu.matmul %0, %1, %cst {dimension_numbers = #tpu.dot_dimension_numbers<[1], [0], [0], [1], [0, 0, 1, 1], [], []>} : vector<4x1600xf32>, vector<1600x256xf32>, vector<4x256xf32> -> vector<4x256xf32>
    %c0_3 = arith.constant 0 : index
    %c0_4 = arith.constant 0 : index
    %3 = vector.load %arg2[%c0_3, %c0_4] : memref<1x256xf32, #tpu.memory_space<vmem>>, vector<1x256xf32>
    %4 = vector.broadcast %3 : vector<1x256xf32> to vector<4x256xf32>
    %5 = arith.addf %2, %4 : vector<4x256xf32>
    %cst_5 = arith.constant 0.000000e+00 : f32
    %6 = vector.broadcast %cst_5 : f32 to vector<4x256xf32>
    %7 = arith.maximumf %5, %6 : vector<4x256xf32>
    %c0_6 = arith.constant 0 : index
    %c0_7 = arith.constant 0 : index
    %8 = vector.load %arg3[%c0_6, %c0_7] : memref<256x32xf32, #tpu.memory_space<vmem>>, vector<256x32xf32>
    %cst_8 = arith.constant dense<0.000000e+00> : vector<4x32xf32>
    %9 = tpu.matmul %7, %8, %cst_8 {dimension_numbers = #tpu.dot_dimension_numbers<[1], [0], [0], [1], [0, 0, 1, 1], [], []>} : vector<4x256xf32>, vector<256x32xf32>, vector<4x32xf32> -> vector<4x32xf32>
    %c0_9 = arith.constant 0 : index
    %c0_10 = arith.constant 0 : index
    %10 = vector.load %arg4[%c0_9, %c0_10] : memref<1x32xf32, #tpu.memory_space<vmem>>, vector<1x32xf32>
    %11 = vector.broadcast %10 : vector<1x32xf32> to vector<4x32xf32>
    %12 = arith.addf %9, %11 : vector<4x32xf32>
    %cst_11 = arith.constant 0.000000e+00 : f32
    %13 = vector.broadcast %cst_11 : f32 to vector<4x32xf32>
    %14 = arith.maximumf %12, %13 : vector<4x32xf32>
    %c0_12 = arith.constant 0 : index
    %c0_13 = arith.constant 0 : index
    %15 = vector.load %arg5[%c0_12, %c0_13] : memref<32x1xf32, #tpu.memory_space<vmem>>, vector<32x1xf32>
    %cst_14 = arith.constant dense<0.000000e+00> : vector<4x1xf32>
    %16 = tpu.matmul %14, %15, %cst_14 {dimension_numbers = #tpu.dot_dimension_numbers<[1], [0], [0], [1], [0, 0, 1, 1], [], []>} : vector<4x32xf32>, vector<32x1xf32>, vector<4x1xf32> -> vector<4x1xf32>
    %c0_15 = arith.constant 0 : index
    %c0_16 = arith.constant 0 : index
    %17 = vector.load %arg6[%c0_15, %c0_16] : memref<1x1xf32, #tpu.memory_space<vmem>>, vector<1x1xf32>
    %18 = vector.broadcast %17 : vector<1x1xf32> to vector<4x1xf32>
    %19 = arith.addf %16, %18 : vector<4x1xf32>
    %c0_17 = arith.constant 0 : index
    %c0_18 = arith.constant 0 : index
    %20 = vector.load %arg7[%c0_17, %c0_18] : memref<4x1xf32, #tpu.memory_space<vmem>>, vector<4x1xf32>
    tpu.vector_store %arg7[%c0_17, %c0_18], %19 {strides = array<i32>} : memref<4x1xf32, #tpu.memory_space<vmem>>, vector<4x1xf32>,
    return
  }
}

module attributes {stable_mosaic.version = 11 : i64} {
  func.func @_features_kernel(%arg0: memref<1x140xi32, #tpu.memory_space<vmem>>, %arg1: memref<35x5xf32, #tpu.memory_space<vmem>>, %arg2: memref<35x1xf32, #tpu.memory_space<vmem>>, %arg3: memref<10x30xf32, #tpu.memory_space<vmem>>, %arg4: memref<10x1xf32, #tpu.memory_space<vmem>>, %arg5: memref<10x30xf32, #tpu.memory_space<vmem>>, %arg6: memref<10x1xf32, #tpu.memory_space<vmem>>, %arg7: memref<15x30xf32, #tpu.memory_space<vmem>>, %arg8: memref<15x1xf32, #tpu.memory_space<vmem>>, %arg9: memref<33x120xf32, #tpu.memory_space<vmem>>, %arg10: memref<1x120xf32, #tpu.memory_space<vmem>>, %arg11: memref<20x60xf32, #tpu.memory_space<vmem>>, %arg12: memref<1x60xf32, #tpu.memory_space<vmem>>, %arg13: memref<20x60xf32, #tpu.memory_space<vmem>>, %arg14: memref<1x60xf32, #tpu.memory_space<vmem>>, %arg15: memref<40x120xf32, #tpu.memory_space<vmem>>, %arg16: memref<1x120xf32, #tpu.memory_space<vmem>>, %arg17: memref<20x60xf32, #tpu.memory_space<vmem>>, %arg18: memref<1x60xf32, #tpu.memory_space<vmem>>, %arg19: memref<20x60xf32, #tpu.memory_space<vmem>>, %arg20: memref<1x60xf32, #tpu.memory_space<vmem>>, %arg21: memref<160x40xf32, #tpu.memory_space<vmem>>) attributes {dimension_semantics = [], scalar_prefetch = 0 : i64, scratch_operands = 0 : i64, tpu.core_type = #tpu.core_type<tc>} {
    %0 = tpu.iota {dimensions = array<i32: 0>} : vector<5x140xi32>
    %c0 = arith.constant 0 : index
    %c0_0 = arith.constant 0 : index
    %1 = vector.load %arg0[%c0, %c0_0] : memref<1x140xi32, #tpu.memory_space<vmem>>, vector<1x140xi32>
    %2 = vector.broadcast %1 : vector<1x140xi32> to vector<5x140xi32>
    %3 = arith.cmpi eq, %2, %0 : vector<5x140xi32>
    %cst = arith.constant 1.000000e+00 : f32
    %cst_1 = arith.constant 0.000000e+00 : f32
    %4 = vector.broadcast %cst : f32 to vector<5x140xf32>
    %5 = vector.broadcast %cst_1 : f32 to vector<5x140xf32>
    %6 = arith.select %3, %4, %5 : vector<5x140xi1>, vector<5x140xf32>
    %c0_2 = arith.constant 0 : index
    %c0_3 = arith.constant 0 : index
    %7 = vector.load %arg1[%c0_2, %c0_3] : memref<35x5xf32, #tpu.memory_space<vmem>>, vector<35x5xf32>
    %cst_4 = arith.constant dense<0.000000e+00> : vector<35x140xf32>
    %8 = tpu.matmul %7, %6, %cst_4 {dimension_numbers = #tpu.dot_dimension_numbers<[1], [0], [0], [1], [0, 0, 1, 1], [], []>} : vector<35x5xf32>, vector<5x140xf32>, vector<35x140xf32> -> vector<35x140xf32>
    %c0_5 = arith.constant 0 : index
    %c0_6 = arith.constant 0 : index
    %9 = vector.load %arg2[%c0_5, %c0_6] : memref<35x1xf32, #tpu.memory_space<vmem>>, vector<35x1xf32>
    %10 = vector.broadcast %9 : vector<35x1xf32> to vector<35x140xf32>
    %11 = arith.addf %8, %10 : vector<35x140xf32>
    %12 = tpu.iota {dimensions = array<i32: 1>} : vector<1x140xi32>
    %c0_i32 = arith.constant 0 : i32
    %13 = vector.broadcast %c0_i32 : i32 to vector<1x140xi32>
    %14 = arith.cmpi eq, %12, %13 : vector<1x140xi32>
    %c34_i32 = arith.constant 34 : i32
    %15 = vector.broadcast %c34_i32 : i32 to vector<1x140xi32>
    %16 = arith.cmpi eq, %12, %15 : vector<1x140xi32>
    %c35_i32 = arith.constant 35 : i32
    %17 = vector.broadcast %c35_i32 : i32 to vector<1x140xi32>
    %18 = arith.cmpi eq, %12, %17 : vector<1x140xi32>
    %19 = arith.ori %14, %18 : vector<1x140xi1>
    %c69_i32 = arith.constant 69 : i32
    %20 = vector.broadcast %c69_i32 : i32 to vector<1x140xi32>
    %21 = arith.cmpi eq, %12, %20 : vector<1x140xi32>
    %22 = arith.ori %16, %21 : vector<1x140xi1>
    %c70_i32 = arith.constant 70 : i32
    %23 = vector.broadcast %c70_i32 : i32 to vector<1x140xi32>
    %24 = arith.cmpi eq, %12, %23 : vector<1x140xi32>
    %25 = arith.ori %19, %24 : vector<1x140xi1>
    %c104_i32 = arith.constant 104 : i32
    %26 = vector.broadcast %c104_i32 : i32 to vector<1x140xi32>
    %27 = arith.cmpi eq, %12, %26 : vector<1x140xi32>
    %28 = arith.ori %22, %27 : vector<1x140xi1>
    %c105_i32 = arith.constant 105 : i32
    %29 = vector.broadcast %c105_i32 : i32 to vector<1x140xi32>
    %30 = arith.cmpi eq, %12, %29 : vector<1x140xi32>
    %31 = arith.ori %25, %30 : vector<1x140xi1>
    %c139_i32 = arith.constant 139 : i32
    %32 = vector.broadcast %c139_i32 : i32 to vector<1x140xi32>
    %33 = arith.cmpi eq, %12, %32 : vector<1x140xi32>
    %34 = arith.ori %28, %33 : vector<1x140xi1>
    %cst_7 = arith.constant 0.000000e+00 : f32
    %cst_8 = arith.constant 1.000000e+00 : f32
    %35 = vector.broadcast %cst_7 : f32 to vector<1x140xf32>
    %36 = vector.broadcast %cst_8 : f32 to vector<1x140xf32>
    %37 = arith.select %31, %35, %36 : vector<1x140xi1>, vector<1x140xf32>
    %cst_9 = arith.constant 0.000000e+00 : f32
    %cst_10 = arith.constant 1.000000e+00 : f32
    %38 = vector.broadcast %cst_9 : f32 to vector<1x140xf32>
    %39 = vector.broadcast %cst_10 : f32 to vector<1x140xf32>
    %40 = arith.select %34, %38, %39 : vector<1x140xi1>, vector<1x140xf32>
    %41 = vector.extract_strided_slice %11 {offsets = [0, 0], sizes = [5, 140], strides = [1, 1]} : vector<35x140xf32> to vector<5x140xf32>
    %42 = vector.extract_strided_slice %11 {offsets = [5, 0], sizes = [10, 140], strides = [1, 1]} : vector<35x140xf32> to vector<10x140xf32>
    %43 = vector.extract_strided_slice %11 {offsets = [15, 0], sizes = [10, 140], strides = [1, 1]} : vector<35x140xf32> to vector<10x140xf32>
    %cst_11 = arith.constant 0.000000e+00 : f32
    %44 = vector.broadcast %cst_11 : f32 to vector<10x140xf32>
    %45 = arith.maximumf %43, %44 : vector<10x140xf32>
    %46 = vector.extract_strided_slice %11 {offsets = [25, 0], sizes = [10, 140], strides = [1, 1]} : vector<35x140xf32> to vector<10x140xf32>
    %cst_12 = arith.constant 0.000000e+00 : f32
    %47 = vector.broadcast %cst_12 : f32 to vector<10x140xf32>
    %48 = arith.maximumf %46, %47 : vector<10x140xf32>
    %cst_13 = arith.constant 0.000000e+00 : f32
    %49 = vector.broadcast %cst_13 : f32 to vector<10x1xf32>
    %50 = vector.extract_strided_slice %45 {offsets = [0, 0], sizes = [10, 139], strides = [1, 1]} : vector<10x140xf32> to vector<10x139xf32>
    %51 = tpu.concatenate %49, %50 in 1 : vector<10x1xf32>, vector<10x139xf32> -> vector<10x140xf32>
    %52 = vector.broadcast %37 : vector<1x140xf32> to vector<10x140xf32>
    %53 = arith.mulf %51, %52 : vector<10x140xf32>
    %cst_14 = arith.constant 0.000000e+00 : f32
    %54 = vector.broadcast %cst_14 : f32 to vector<10x1xf32>
    %55 = vector.extract_strided_slice %45 {offsets = [0, 1], sizes = [10, 139], strides = [1, 1]} : vector<10x140xf32> to vector<10x139xf32>
    %56 = tpu.concatenate %55, %54 in 1 : vector<10x139xf32>, vector<10x1xf32> -> vector<10x140xf32>
    %57 = vector.broadcast %40 : vector<1x140xf32> to vector<10x140xf32>
    %58 = arith.mulf %56, %57 : vector<10x140xf32>
    %59 = tpu.concatenate %53, %45, %58 in 0 : vector<10x140xf32>, vector<10x140xf32>, vector<10x140xf32> -> vector<30x140xf32>
    %c0_15 = arith.constant 0 : index
    %c0_16 = arith.constant 0 : index
    %60 = vector.load %arg3[%c0_15, %c0_16] : memref<10x30xf32, #tpu.memory_space<vmem>>, vector<10x30xf32>
    %cst_17 = arith.constant dense<0.000000e+00> : vector<10x140xf32>
    %61 = tpu.matmul %60, %59, %cst_17 {dimension_numbers = #tpu.dot_dimension_numbers<[1], [0], [0], [1], [0, 0, 1, 1], [], []>} : vector<10x30xf32>, vector<30x140xf32>, vector<10x140xf32> -> vector<10x140xf32>
    %c0_18 = arith.constant 0 : index
    %c0_19 = arith.constant 0 : index
    %62 = vector.load %arg4[%c0_18, %c0_19] : memref<10x1xf32, #tpu.memory_space<vmem>>, vector<10x1xf32>
    %63 = vector.broadcast %62 : vector<10x1xf32> to vector<10x140xf32>
    %64 = arith.addf %61, %63 : vector<10x140xf32>
    %cst_20 = arith.constant 0.000000e+00 : f32
    %65 = vector.broadcast %cst_20 : f32 to vector<10x1xf32>
    %66 = vector.extract_strided_slice %48 {offsets = [0, 0], sizes = [10, 139], strides = [1, 1]} : vector<10x140xf32> to vector<10x139xf32>
    %67 = tpu.concatenate %65, %66 in 1 : vector<10x1xf32>, vector<10x139xf32> -> vector<10x140xf32>
    %68 = vector.broadcast %37 : vector<1x140xf32> to vector<10x140xf32>
    %69 = arith.mulf %67, %68 : vector<10x140xf32>
    %cst_21 = arith.constant 0.000000e+00 : f32
    %70 = vector.broadcast %cst_21 : f32 to vector<10x1xf32>
    %71 = vector.extract_strided_slice %48 {offsets = [0, 1], sizes = [10, 139], strides = [1, 1]} : vector<10x140xf32> to vector<10x139xf32>
    %72 = tpu.concatenate %71, %70 in 1 : vector<10x139xf32>, vector<10x1xf32> -> vector<10x140xf32>
    %73 = vector.broadcast %40 : vector<1x140xf32> to vector<10x140xf32>
    %74 = arith.mulf %72, %73 : vector<10x140xf32>
    %75 = tpu.concatenate %69, %48, %74 in 0 : vector<10x140xf32>, vector<10x140xf32>, vector<10x140xf32> -> vector<30x140xf32>
    %c0_22 = arith.constant 0 : index
    %c0_23 = arith.constant 0 : index
    %76 = vector.load %arg5[%c0_22, %c0_23] : memref<10x30xf32, #tpu.memory_space<vmem>>, vector<10x30xf32>
    %cst_24 = arith.constant dense<0.000000e+00> : vector<10x140xf32>
    %77 = tpu.matmul %76, %75, %cst_24 {dimension_numbers = #tpu.dot_dimension_numbers<[1], [0], [0], [1], [0, 0, 1, 1], [], []>} : vector<10x30xf32>, vector<30x140xf32>, vector<10x140xf32> -> vector<10x140xf32>
    %c0_25 = arith.constant 0 : index
    %c0_26 = arith.constant 0 : index
    %78 = vector.load %arg6[%c0_25, %c0_26] : memref<10x1xf32, #tpu.memory_space<vmem>>, vector<10x1xf32>
    %79 = vector.broadcast %78 : vector<10x1xf32> to vector<10x140xf32>
    %80 = arith.addf %77, %79 : vector<10x140xf32>
    %cst_27 = arith.constant 0.000000e+00 : f32
    %81 = vector.broadcast %cst_27 : f32 to vector<10x140xf32>
    %82 = arith.maximumf %80, %81 : vector<10x140xf32>
    %cst_28 = arith.constant 0.000000e+00 : f32
    %83 = vector.broadcast %cst_28 : f32 to vector<10x1xf32>
    %84 = vector.extract_strided_slice %82 {offsets = [0, 0], sizes = [10, 139], strides = [1, 1]} : vector<10x140xf32> to vector<10x139xf32>
    %85 = tpu.concatenate %83, %84 in 1 : vector<10x1xf32>, vector<10x139xf32> -> vector<10x140xf32>
    %86 = vector.broadcast %37 : vector<1x140xf32> to vector<10x140xf32>
    %87 = arith.mulf %85, %86 : vector<10x140xf32>
    %cst_29 = arith.constant 0.000000e+00 : f32
    %88 = vector.broadcast %cst_29 : f32 to vector<10x1xf32>
    %89 = vector.extract_strided_slice %82 {offsets = [0, 1], sizes = [10, 139], strides = [1, 1]} : vector<10x140xf32> to vector<10x139xf32>
    %90 = tpu.concatenate %89, %88 in 1 : vector<10x139xf32>, vector<10x1xf32> -> vector<10x140xf32>
    %91 = vector.broadcast %40 : vector<1x140xf32> to vector<10x140xf32>
    %92 = arith.mulf %90, %91 : vector<10x140xf32>
    %93 = tpu.concatenate %87, %82, %92 in 0 : vector<10x140xf32>, vector<10x140xf32>, vector<10x140xf32> -> vector<30x140xf32>
    %c0_30 = arith.constant 0 : index
    %c0_31 = arith.constant 0 : index
    %94 = vector.load %arg7[%c0_30, %c0_31] : memref<15x30xf32, #tpu.memory_space<vmem>>, vector<15x30xf32>
    %cst_32 = arith.constant dense<0.000000e+00> : vector<15x140xf32>
    %95 = tpu.matmul %94, %93, %cst_32 {dimension_numbers = #tpu.dot_dimension_numbers<[1], [0], [0], [1], [0, 0, 1, 1], [], []>} : vector<15x30xf32>, vector<30x140xf32>, vector<15x140xf32> -> vector<15x140xf32>
    %c0_33 = arith.constant 0 : index
    %c0_34 = arith.constant 0 : index
    %96 = vector.load %arg8[%c0_33, %c0_34] : memref<15x1xf32, #tpu.memory_space<vmem>>, vector<15x1xf32>
    %97 = vector.broadcast %96 : vector<15x1xf32> to vector<15x140xf32>
    %98 = arith.addf %95, %97 : vector<15x140xf32>
    %99 = tpu.concatenate %41, %42, %64, %98 in 0 : vector<5x140xf32>, vector<10x140xf32>, vector<10x140xf32>, vector<15x140xf32> -> vector<40x140xf32>
    %cst_35 = arith.constant 0.000000e+00 : f32
    %100 = vector.broadcast %cst_35 : f32 to vector<40x1xf32>
    %101 = vector.extract_strided_slice %99 {offsets = [0, 1], sizes = [40, 139], strides = [1, 1]} : vector<40x140xf32> to vector<40x139xf32>
    %102 = tpu.concatenate %101, %100 in 1 : vector<40x139xf32>, vector<40x1xf32> -> vector<40x140xf32>
    %103 = arith.maximumf %99, %102 : vector<40x140xf32>
    %cst_36 = arith.constant 0.000000e+00 : f32
    %104 = vector.broadcast %cst_36 : f32 to vector<40x2xf32>
    %105 = vector.extract_strided_slice %99 {offsets = [0, 2], sizes = [40, 138], strides = [1, 1]} : vector<40x140xf32> to vector<40x138xf32>
    %106 = tpu.concatenate %105, %104 in 1 : vector<40x138xf32>, vector<40x2xf32> -> vector<40x140xf32>
    %107 = arith.maximumf %103, %106 : vector<40x140xf32>
    %108 = vector.extract_strided_slice %107 {offsets = [0, 0], sizes = [40, 33], strides = [1, 1]} : vector<40x140xf32> to vector<40x33xf32>
    %109 = vector.extract_strided_slice %107 {offsets = [0, 35], sizes = [40, 33], strides = [1, 1]} : vector<40x140xf32> to vector<40x33xf32>
    %110 = vector.extract_strided_slice %107 {offsets = [0, 70], sizes = [40, 33], strides = [1, 1]} : vector<40x140xf32> to vector<40x33xf32>
    %111 = vector.extract_strided_slice %107 {offsets = [0, 105], sizes = [40, 33], strides = [1, 1]} : vector<40x140xf32> to vector<40x33xf32>
    %112 = tpu.concatenate %108, %109, %110, %111 in 0 : vector<40x33xf32>, vector<40x33xf32>, vector<40x33xf32>, vector<40x33xf32> -> vector<160x33xf32>
    %c0_37 = arith.constant 0 : index
    %c0_38 = arith.constant 0 : index
    %113 = vector.load %arg9[%c0_37, %c0_38] : memref<33x120xf32, #tpu.memory_space<vmem>>, vector<33x120xf32>
    %cst_39 = arith.constant dense<0.000000e+00> : vector<160x120xf32>
    %114 = tpu.matmul %112, %113, %cst_39 {dimension_numbers = #tpu.dot_dimension_numbers<[1], [0], [0], [1], [0, 0, 1, 1], [], []>} : vector<160x33xf32>, vector<33x120xf32>, vector<160x120xf32> -> vector<160x120xf32>
    %c0_40 = arith.constant 0 : index
    %c0_41 = arith.constant 0 : index
    %115 = vector.load %arg10[%c0_40, %c0_41] : memref<1x120xf32, #tpu.memory_space<vmem>>, vector<1x120xf32>
    %116 = vector.broadcast %115 : vector<1x120xf32> to vector<160x120xf32>
    %117 = arith.addf %114, %116 : vector<160x120xf32>
    %c0_42 = arith.constant 0 : index
    %c0_43 = arith.constant 0 : index
    %118 = vector.load %arg11[%c0_42, %c0_43] : memref<20x60xf32, #tpu.memory_space<vmem>>, vector<20x60xf32>
    %c0_44 = arith.constant 0 : index
    %c0_45 = arith.constant 0 : index
    %119 = vector.load %arg12[%c0_44, %c0_45] : memref<1x60xf32, #tpu.memory_space<vmem>>, vector<1x60xf32>
    %c0_46 = arith.constant 0 : index
    %c0_47 = arith.constant 0 : index
    %120 = vector.load %arg13[%c0_46, %c0_47] : memref<20x60xf32, #tpu.memory_space<vmem>>, vector<20x60xf32>
    %c0_48 = arith.constant 0 : index
    %c0_49 = arith.constant 0 : index
    %121 = vector.load %arg14[%c0_48, %c0_49] : memref<1x60xf32, #tpu.memory_space<vmem>>, vector<1x60xf32>
    %cst_50 = arith.constant 0.000000e+00 : f32
    %122 = vector.broadcast %cst_50 : f32 to vector<40x20xf32>
    %cst_51 = arith.constant 0.000000e+00 : f32
    %123 = vector.broadcast %cst_51 : f32 to vector<40x20xf32>
    %124 = vector.extract_strided_slice %117 {offsets = [0, 0], sizes = [40, 60], strides = [1, 1]} : vector<160x120xf32> to vector<40x60xf32>
    %125 = vector.extract_strided_slice %117 {offsets = [120, 60], sizes = [40, 60], strides = [1, 1]} : vector<160x120xf32> to vector<40x60xf32>
    %cst_52 = arith.constant dense<0.000000e+00> : vector<40x60xf32>
    %126 = tpu.matmul %122, %118, %cst_52 {dimension_numbers = #tpu.dot_dimension_numbers<[1], [0], [0], [1], [0, 0, 1, 1], [], []>} : vector<40x20xf32>, vector<20x60xf32>, vector<40x60xf32> -> vector<40x60xf32>
    %127 = vector.broadcast %119 : vector<1x60xf32> to vector<40x60xf32>
    %128 = arith.addf %126, %127 : vector<40x60xf32>
    %129 = vector.extract_strided_slice %124 {offsets = [0, 0], sizes = [40, 20], strides = [1, 1]} : vector<40x60xf32> to vector<40x20xf32>
    %130 = vector.extract_strided_slice %128 {offsets = [0, 0], sizes = [40, 20], strides = [1, 1]} : vector<40x60xf32> to vector<40x20xf32>
    %131 = arith.addf %129, %130 : vector<40x20xf32>
    %132 = arith.negf %131 : vector<40x20xf32>
    %133 = math.exp %132 : vector<40x20xf32>
    %cst_53 = arith.constant 1.000000e+00 : f32
    %134 = vector.broadcast %cst_53 : f32 to vector<40x20xf32>
    %135 = arith.addf %134, %133 : vector<40x20xf32>
    %136 = arith.divf %134, %135 : vector<40x20xf32>
    %137 = vector.extract_strided_slice %124 {offsets = [0, 20], sizes = [40, 20], strides = [1, 1]} : vector<40x60xf32> to vector<40x20xf32>
    %138 = vector.extract_strided_slice %128 {offsets = [0, 20], sizes = [40, 20], strides = [1, 1]} : vector<40x60xf32> to vector<40x20xf32>
    %139 = arith.addf %137, %138 : vector<40x20xf32>
    %140 = arith.negf %139 : vector<40x20xf32>
    %141 = math.exp %140 : vector<40x20xf32>
    %cst_54 = arith.constant 1.000000e+00 : f32
    %142 = vector.broadcast %cst_54 : f32 to vector<40x20xf32>
    %143 = arith.addf %142, %141 : vector<40x20xf32>
    %144 = arith.divf %142, %143 : vector<40x20xf32>
    %145 = vector.extract_strided_slice %124 {offsets = [0, 40], sizes = [40, 20], strides = [1, 1]} : vector<40x60xf32> to vector<40x20xf32>
    %146 = vector.extract_strided_slice %128 {offsets = [0, 40], sizes = [40, 20], strides = [1, 1]} : vector<40x60xf32> to vector<40x20xf32>
    %147 = arith.mulf %136, %146 : vector<40x20xf32>
    %148 = arith.addf %145, %147 : vector<40x20xf32>
    %149 = math.tanh %148 : vector<40x20xf32>
    %cst_55 = arith.constant 1.000000e+00 : f32
    %150 = vector.broadcast %cst_55 : f32 to vector<40x20xf32>
    %151 = arith.subf %150, %144 : vector<40x20xf32>
    %152 = arith.mulf %151, %149 : vector<40x20xf32>
    %153 = arith.mulf %144, %122 : vector<40x20xf32>
    %154 = arith.addf %152, %153 : vector<40x20xf32>
    %cst_56 = arith.constant dense<0.000000e+00> : vector<40x60xf32>
    %155 = tpu.matmul %123, %120, %cst_56 {dimension_numbers = #tpu.dot_dimension_numbers<[1], [0], [0], [1], [0, 0, 1, 1], [], []>} : vector<40x20xf32>, vector<20x60xf32>, vector<40x60xf32> -> vector<40x60xf32>
    %156 = vector.broadcast %121 : vector<1x60xf32> to vector<40x60xf32>
    %157 = arith.addf %155, %156 : vector<40x60xf32>
    %158 = vector.extract_strided_slice %125 {offsets = [0, 0], sizes = [40, 20], strides = [1, 1]} : vector<40x60xf32> to vector<40x20xf32>
    %159 = vector.extract_strided_slice %157 {offsets = [0, 0], sizes = [40, 20], strides = [1, 1]} : vector<40x60xf32> to vector<40x20xf32>
    %160 = arith.addf %158, %159 : vector<40x20xf32>
    %161 = arith.negf %160 : vector<40x20xf32>
    %162 = math.exp %161 : vector<40x20xf32>
    %cst_57 = arith.constant 1.000000e+00 : f32
    %163 = vector.broadcast %cst_57 : f32 to vector<40x20xf32>
    %164 = arith.addf %163, %162 : vector<40x20xf32>
    %165 = arith.divf %163, %164 : vector<40x20xf32>
    %166 = vector.extract_strided_slice %125 {offsets = [0, 20], sizes = [40, 20], strides = [1, 1]} : vector<40x60xf32> to vector<40x20xf32>
    %167 = vector.extract_strided_slice %157 {offsets = [0, 20], sizes = [40, 20], strides = [1, 1]} : vector<40x60xf32> to vector<40x20xf32>
    %168 = arith.addf %166, %167 : vector<40x20xf32>
    %169 = arith.negf %168 : vector<40x20xf32>
    %170 = math.exp %169 : vector<40x20xf32>
    %cst_58 = arith.constant 1.000000e+00 : f32
    %171 = vector.broadcast %cst_58 : f32 to vector<40x20xf32>
    %172 = arith.addf %171, %170 : vector<40x20xf32>
    %173 = arith.divf %171, %172 : vector<40x20xf32>
    %174 = vector.extract_strided_slice %125 {offsets = [0, 40], sizes = [40, 20], strides = [1, 1]} : vector<40x60xf32> to vector<40x20xf32>
    %175 = vector.extract_strided_slice %157 {offsets = [0, 40], sizes = [40, 20], strides = [1, 1]} : vector<40x60xf32> to vector<40x20xf32>
    %176 = arith.mulf %165, %175 : vector<40x20xf32>
    %177 = arith.addf %174, %176 : vector<40x20xf32>
    %178 = math.tanh %177 : vector<40x20xf32>
    %cst_59 = arith.constant 1.000000e+00 : f32
    %179 = vector.broadcast %cst_59 : f32 to vector<40x20xf32>
    %180 = arith.subf %179, %173 : vector<40x20xf32>
    %181 = arith.mulf %180, %178 : vector<40x20xf32>
    %182 = arith.mulf %173, %123 : vector<40x20xf32>
    %183 = arith.addf %181, %182 : vector<40x20xf32>
    %184 = vector.extract_strided_slice %117 {offsets = [40, 0], sizes = [40, 60], strides = [1, 1]} : vector<160x120xf32> to vector<40x60xf32>
    %185 = vector.extract_strided_slice %117 {offsets = [80, 60], sizes = [40, 60], strides = [1, 1]} : vector<160x120xf32> to vector<40x60xf32>
    %cst_60 = arith.constant dense<0.000000e+00> : vector<40x60xf32>
    %186 = tpu.matmul %154, %118, %cst_60 {dimension_numbers = #tpu.dot_dimension_numbers<[1], [0], [0], [1], [0, 0, 1, 1], [], []>} : vector<40x20xf32>, vector<20x60xf32>, vector<40x60xf32> -> vector<40x60xf32>
    %187 = vector.broadcast %119 : vector<1x60xf32> to vector<40x60xf32>
    %188 = arith.addf %186, %187 : vector<40x60xf32>
    %189 = vector.extract_strided_slice %184 {offsets = [0, 0], sizes = [40, 20], strides = [1, 1]} : vector<40x60xf32> to vector<40x20xf32>
    %190 = vector.extract_strided_slice %188 {offsets = [0, 0], sizes = [40, 20], strides = [1, 1]} : vector<40x60xf32> to vector<40x20xf32>
    %191 = arith.addf %189, %190 : vector<40x20xf32>
    %192 = arith.negf %191 : vector<40x20xf32>
    %193 = math.exp %192 : vector<40x20xf32>
    %cst_61 = arith.constant 1.000000e+00 : f32
    %194 = vector.broadcast %cst_61 : f32 to vector<40x20xf32>
    %195 = arith.addf %194, %193 : vector<40x20xf32>
    %196 = arith.divf %194, %195 : vector<40x20xf32>
    %197 = vector.extract_strided_slice %184 {offsets = [0, 20], sizes = [40, 20], strides = [1, 1]} : vector<40x60xf32> to vector<40x20xf32>
    %198 = vector.extract_strided_slice %188 {offsets = [0, 20], sizes = [40, 20], strides = [1, 1]} : vector<40x60xf32> to vector<40x20xf32>
    %199 = arith.addf %197, %198 : vector<40x20xf32>
    %200 = arith.negf %199 : vector<40x20xf32>
    %201 = math.exp %200 : vector<40x20xf32>
    %cst_62 = arith.constant 1.000000e+00 : f32
    %202 = vector.broadcast %cst_62 : f32 to vector<40x20xf32>
    %203 = arith.addf %202, %201 : vector<40x20xf32>
    %204 = arith.divf %202, %203 : vector<40x20xf32>
    %205 = vector.extract_strided_slice %184 {offsets = [0, 40], sizes = [40, 20], strides = [1, 1]} : vector<40x60xf32> to vector<40x20xf32>
    %206 = vector.extract_strided_slice %188 {offsets = [0, 40], sizes = [40, 20], strides = [1, 1]} : vector<40x60xf32> to vector<40x20xf32>
    %207 = arith.mulf %196, %206 : vector<40x20xf32>
    %208 = arith.addf %205, %207 : vector<40x20xf32>
    %209 = math.tanh %208 : vector<40x20xf32>
    %cst_63 = arith.constant 1.000000e+00 : f32
    %210 = vector.broadcast %cst_63 : f32 to vector<40x20xf32>
    %211 = arith.subf %210, %204 : vector<40x20xf32>
    %212 = arith.mulf %211, %209 : vector<40x20xf32>
    %213 = arith.mulf %204, %154 : vector<40x20xf32>
    %214 = arith.addf %212, %213 : vector<40x20xf32>
    %cst_64 = arith.constant dense<0.000000e+00> : vector<40x60xf32>
    %215 = tpu.matmul %183, %120, %cst_64 {dimension_numbers = #tpu.dot_dimension_numbers<[1], [0], [0], [1], [0, 0, 1, 1], [], []>} : vector<40x20xf32>, vector<20x60xf32>, vector<40x60xf32> -> vector<40x60xf32>
    %216 = vector.broadcast %121 : vector<1x60xf32> to vector<40x60xf32>
    %217 = arith.addf %215, %216 : vector<40x60xf32>
    %218 = vector.extract_strided_slice %185 {offsets = [0, 0], sizes = [40, 20], strides = [1, 1]} : vector<40x60xf32> to vector<40x20xf32>
    %219 = vector.extract_strided_slice %217 {offsets = [0, 0], sizes = [40, 20], strides = [1, 1]} : vector<40x60xf32> to vector<40x20xf32>
    %220 = arith.addf %218, %219 : vector<40x20xf32>
    %221 = arith.negf %220 : vector<40x20xf32>
    %222 = math.exp %221 : vector<40x20xf32>
    %cst_65 = arith.constant 1.000000e+00 : f32
    %223 = vector.broadcast %cst_65 : f32 to vector<40x20xf32>
    %224 = arith.addf %223, %222 : vector<40x20xf32>
    %225 = arith.divf %223, %224 : vector<40x20xf32>
    %226 = vector.extract_strided_slice %185 {offsets = [0, 20], sizes = [40, 20], strides = [1, 1]} : vector<40x60xf32> to vector<40x20xf32>
    %227 = vector.extract_strided_slice %217 {offsets = [0, 20], sizes = [40, 20], strides = [1, 1]} : vector<40x60xf32> to vector<40x20xf32>
    %228 = arith.addf %226, %227 : vector<40x20xf32>
    %229 = arith.negf %228 : vector<40x20xf32>
    %230 = math.exp %229 : vector<40x20xf32>
    %cst_66 = arith.constant 1.000000e+00 : f32
    %231 = vector.broadcast %cst_66 : f32 to vector<40x20xf32>
    %232 = arith.addf %231, %230 : vector<40x20xf32>
    %233 = arith.divf %231, %232 : vector<40x20xf32>
    %234 = vector.extract_strided_slice %185 {offsets = [0, 40], sizes = [40, 20], strides = [1, 1]} : vector<40x60xf32> to vector<40x20xf32>
    %235 = vector.extract_strided_slice %217 {offsets = [0, 40], sizes = [40, 20], strides = [1, 1]} : vector<40x60xf32> to vector<40x20xf32>
    %236 = arith.mulf %225, %235 : vector<40x20xf32>
    %237 = arith.addf %234, %236 : vector<40x20xf32>
    %238 = math.tanh %237 : vector<40x20xf32>
    %cst_67 = arith.constant 1.000000e+00 : f32
    %239 = vector.broadcast %cst_67 : f32 to vector<40x20xf32>
    %240 = arith.subf %239, %233 : vector<40x20xf32>
    %241 = arith.mulf %240, %238 : vector<40x20xf32>
    %242 = arith.mulf %233, %183 : vector<40x20xf32>
    %243 = arith.addf %241, %242 : vector<40x20xf32>
    %244 = vector.extract_strided_slice %117 {offsets = [80, 0], sizes = [40, 60], strides = [1, 1]} : vector<160x120xf32> to vector<40x60xf32>
    %245 = vector.extract_strided_slice %117 {offsets = [40, 60], sizes = [40, 60], strides = [1, 1]} : vector<160x120xf32> to vector<40x60xf32>
    %cst_68 = arith.constant dense<0.000000e+00> : vector<40x60xf32>
    %246 = tpu.matmul %214, %118, %cst_68 {dimension_numbers = #tpu.dot_dimension_numbers<[1], [0], [0], [1], [0, 0, 1, 1], [], []>} : vector<40x20xf32>, vector<20x60xf32>, vector<40x60xf32> -> vector<40x60xf32>
    %247 = vector.broadcast %119 : vector<1x60xf32> to vector<40x60xf32>
    %248 = arith.addf %246, %247 : vector<40x60xf32>
    %249 = vector.extract_strided_slice %244 {offsets = [0, 0], sizes = [40, 20], strides = [1, 1]} : vector<40x60xf32> to vector<40x20xf32>
    %250 = vector.extract_strided_slice %248 {offsets = [0, 0], sizes = [40, 20], strides = [1, 1]} : vector<40x60xf32> to vector<40x20xf32>
    %251 = arith.addf %249, %250 : vector<40x20xf32>
    %252 = arith.negf %251 : vector<40x20xf32>
    %253 = math.exp %252 : vector<40x20xf32>
    %cst_69 = arith.constant 1.000000e+00 : f32
    %254 = vector.broadcast %cst_69 : f32 to vector<40x20xf32>
    %255 = arith.addf %254, %253 : vector<40x20xf32>
    %256 = arith.divf %254, %255 : vector<40x20xf32>
    %257 = vector.extract_strided_slice %244 {offsets = [0, 20], sizes = [40, 20], strides = [1, 1]} : vector<40x60xf32> to vector<40x20xf32>
    %258 = vector.extract_strided_slice %248 {offsets = [0, 20], sizes = [40, 20], strides = [1, 1]} : vector<40x60xf32> to vector<40x20xf32>
    %259 = arith.addf %257, %258 : vector<40x20xf32>
    %260 = arith.negf %259 : vector<40x20xf32>
    %261 = math.exp %260 : vector<40x20xf32>
    %cst_70 = arith.constant 1.000000e+00 : f32
    %262 = vector.broadcast %cst_70 : f32 to vector<40x20xf32>
    %263 = arith.addf %262, %261 : vector<40x20xf32>
    %264 = arith.divf %262, %263 : vector<40x20xf32>
    %265 = vector.extract_strided_slice %244 {offsets = [0, 40], sizes = [40, 20], strides = [1, 1]} : vector<40x60xf32> to vector<40x20xf32>
    %266 = vector.extract_strided_slice %248 {offsets = [0, 40], sizes = [40, 20], strides = [1, 1]} : vector<40x60xf32> to vector<40x20xf32>
    %267 = arith.mulf %256, %266 : vector<40x20xf32>
    %268 = arith.addf %265, %267 : vector<40x20xf32>
    %269 = math.tanh %268 : vector<40x20xf32>
    %cst_71 = arith.constant 1.000000e+00 : f32
    %270 = vector.broadcast %cst_71 : f32 to vector<40x20xf32>
    %271 = arith.subf %270, %264 : vector<40x20xf32>
    %272 = arith.mulf %271, %269 : vector<40x20xf32>
    %273 = arith.mulf %264, %214 : vector<40x20xf32>
    %274 = arith.addf %272, %273 : vector<40x20xf32>
    %cst_72 = arith.constant dense<0.000000e+00> : vector<40x60xf32>
    %275 = tpu.matmul %243, %120, %cst_72 {dimension_numbers = #tpu.dot_dimension_numbers<[1], [0], [0], [1], [0, 0, 1, 1], [], []>} : vector<40x20xf32>, vector<20x60xf32>, vector<40x60xf32> -> vector<40x60xf32>
    %276 = vector.broadcast %121 : vector<1x60xf32> to vector<40x60xf32>
    %277 = arith.addf %275, %276 : vector<40x60xf32>
    %278 = vector.extract_strided_slice %245 {offsets = [0, 0], sizes = [40, 20], strides = [1, 1]} : vector<40x60xf32> to vector<40x20xf32>
    %279 = vector.extract_strided_slice %277 {offsets = [0, 0], sizes = [40, 20], strides = [1, 1]} : vector<40x60xf32> to vector<40x20xf32>
    %280 = arith.addf %278, %279 : vector<40x20xf32>
    %281 = arith.negf %280 : vector<40x20xf32>
    %282 = math.exp %281 : vector<40x20xf32>
    %cst_73 = arith.constant 1.000000e+00 : f32
    %283 = vector.broadcast %cst_73 : f32 to vector<40x20xf32>
    %284 = arith.addf %283, %282 : vector<40x20xf32>
    %285 = arith.divf %283, %284 : vector<40x20xf32>
    %286 = vector.extract_strided_slice %245 {offsets = [0, 20], sizes = [40, 20], strides = [1, 1]} : vector<40x60xf32> to vector<40x20xf32>
    %287 = vector.extract_strided_slice %277 {offsets = [0, 20], sizes = [40, 20], strides = [1, 1]} : vector<40x60xf32> to vector<40x20xf32>
    %288 = arith.addf %286, %287 : vector<40x20xf32>
    %289 = arith.negf %288 : vector<40x20xf32>
    %290 = math.exp %289 : vector<40x20xf32>
    %cst_74 = arith.constant 1.000000e+00 : f32
    %291 = vector.broadcast %cst_74 : f32 to vector<40x20xf32>
    %292 = arith.addf %291, %290 : vector<40x20xf32>
    %293 = arith.divf %291, %292 : vector<40x20xf32>
    %294 = vector.extract_strided_slice %245 {offsets = [0, 40], sizes = [40, 20], strides = [1, 1]} : vector<40x60xf32> to vector<40x20xf32>
    %295 = vector.extract_strided_slice %277 {offsets = [0, 40], sizes = [40, 20], strides = [1, 1]} : vector<40x60xf32> to vector<40x20xf32>
    %296 = arith.mulf %285, %295 : vector<40x20xf32>
    %297 = arith.addf %294, %296 : vector<40x20xf32>
    %298 = math.tanh %297 : vector<40x20xf32>
    %cst_75 = arith.constant 1.000000e+00 : f32
    %299 = vector.broadcast %cst_75 : f32 to vector<40x20xf32>
    %300 = arith.subf %299, %293 : vector<40x20xf32>
    %301 = arith.mulf %300, %298 : vector<40x20xf32>
    %302 = arith.mulf %293, %243 : vector<40x20xf32>
    %303 = arith.addf %301, %302 : vector<40x20xf32>
    %304 = vector.extract_strided_slice %117 {offsets = [120, 0], sizes = [40, 60], strides = [1, 1]} : vector<160x120xf32> to vector<40x60xf32>
    %305 = vector.extract_strided_slice %117 {offsets = [0, 60], sizes = [40, 60], strides = [1, 1]} : vector<160x120xf32> to vector<40x60xf32>
    %cst_76 = arith.constant dense<0.000000e+00> : vector<40x60xf32>
    %306 = tpu.matmul %274, %118, %cst_76 {dimension_numbers = #tpu.dot_dimension_numbers<[1], [0], [0], [1], [0, 0, 1, 1], [], []>} : vector<40x20xf32>, vector<20x60xf32>, vector<40x60xf32> -> vector<40x60xf32>
    %307 = vector.broadcast %119 : vector<1x60xf32> to vector<40x60xf32>
    %308 = arith.addf %306, %307 : vector<40x60xf32>
    %309 = vector.extract_strided_slice %304 {offsets = [0, 0], sizes = [40, 20], strides = [1, 1]} : vector<40x60xf32> to vector<40x20xf32>
    %310 = vector.extract_strided_slice %308 {offsets = [0, 0], sizes = [40, 20], strides = [1, 1]} : vector<40x60xf32> to vector<40x20xf32>
    %311 = arith.addf %309, %310 : vector<40x20xf32>
    %312 = arith.negf %311 : vector<40x20xf32>
    %313 = math.exp %312 : vector<40x20xf32>
    %cst_77 = arith.constant 1.000000e+00 : f32
    %314 = vector.broadcast %cst_77 : f32 to vector<40x20xf32>
    %315 = arith.addf %314, %313 : vector<40x20xf32>
    %316 = arith.divf %314, %315 : vector<40x20xf32>
    %317 = vector.extract_strided_slice %304 {offsets = [0, 20], sizes = [40, 20], strides = [1, 1]} : vector<40x60xf32> to vector<40x20xf32>
    %318 = vector.extract_strided_slice %308 {offsets = [0, 20], sizes = [40, 20], strides = [1, 1]} : vector<40x60xf32> to vector<40x20xf32>
    %319 = arith.addf %317, %318 : vector<40x20xf32>
    %320 = arith.negf %319 : vector<40x20xf32>
    %321 = math.exp %320 : vector<40x20xf32>
    %cst_78 = arith.constant 1.000000e+00 : f32
    %322 = vector.broadcast %cst_78 : f32 to vector<40x20xf32>
    %323 = arith.addf %322, %321 : vector<40x20xf32>
    %324 = arith.divf %322, %323 : vector<40x20xf32>
    %325 = vector.extract_strided_slice %304 {offsets = [0, 40], sizes = [40, 20], strides = [1, 1]} : vector<40x60xf32> to vector<40x20xf32>
    %326 = vector.extract_strided_slice %308 {offsets = [0, 40], sizes = [40, 20], strides = [1, 1]} : vector<40x60xf32> to vector<40x20xf32>
    %327 = arith.mulf %316, %326 : vector<40x20xf32>
    %328 = arith.addf %325, %327 : vector<40x20xf32>
    %329 = math.tanh %328 : vector<40x20xf32>
    %cst_79 = arith.constant 1.000000e+00 : f32
    %330 = vector.broadcast %cst_79 : f32 to vector<40x20xf32>
    %331 = arith.subf %330, %324 : vector<40x20xf32>
    %332 = arith.mulf %331, %329 : vector<40x20xf32>
    %333 = arith.mulf %324, %274 : vector<40x20xf32>
    %334 = arith.addf %332, %333 : vector<40x20xf32>
    %cst_80 = arith.constant dense<0.000000e+00> : vector<40x60xf32>
    %335 = tpu.matmul %303, %120, %cst_80 {dimension_numbers = #tpu.dot_dimension_numbers<[1], [0], [0], [1], [0, 0, 1, 1], [], []>} : vector<40x20xf32>, vector<20x60xf32>, vector<40x60xf32> -> vector<40x60xf32>
    %336 = vector.broadcast %121 : vector<1x60xf32> to vector<40x60xf32>
    %337 = arith.addf %335, %336 : vector<40x60xf32>
    %338 = vector.extract_strided_slice %305 {offsets = [0, 0], sizes = [40, 20], strides = [1, 1]} : vector<40x60xf32> to vector<40x20xf32>
    %339 = vector.extract_strided_slice %337 {offsets = [0, 0], sizes = [40, 20], strides = [1, 1]} : vector<40x60xf32> to vector<40x20xf32>
    %340 = arith.addf %338, %339 : vector<40x20xf32>
    %341 = arith.negf %340 : vector<40x20xf32>
    %342 = math.exp %341 : vector<40x20xf32>
    %cst_81 = arith.constant 1.000000e+00 : f32
    %343 = vector.broadcast %cst_81 : f32 to vector<40x20xf32>
    %344 = arith.addf %343, %342 : vector<40x20xf32>
    %345 = arith.divf %343, %344 : vector<40x20xf32>
    %346 = vector.extract_strided_slice %305 {offsets = [0, 20], sizes = [40, 20], strides = [1, 1]} : vector<40x60xf32> to vector<40x20xf32>
    %347 = vector.extract_strided_slice %337 {offsets = [0, 20], sizes = [40, 20], strides = [1, 1]} : vector<40x60xf32> to vector<40x20xf32>
    %348 = arith.addf %346, %347 : vector<40x20xf32>
    %349 = arith.negf %348 : vector<40x20xf32>
    %350 = math.exp %349 : vector<40x20xf32>
    %cst_82 = arith.constant 1.000000e+00 : f32
    %351 = vector.broadcast %cst_82 : f32 to vector<40x20xf32>
    %352 = arith.addf %351, %350 : vector<40x20xf32>
    %353 = arith.divf %351, %352 : vector<40x20xf32>
    %354 = vector.extract_strided_slice %305 {offsets = [0, 40], sizes = [40, 20], strides = [1, 1]} : vector<40x60xf32> to vector<40x20xf32>
    %355 = vector.extract_strided_slice %337 {offsets = [0, 40], sizes = [40, 20], strides = [1, 1]} : vector<40x60xf32> to vector<40x20xf32>
    %356 = arith.mulf %345, %355 : vector<40x20xf32>
    %357 = arith.addf %354, %356 : vector<40x20xf32>
    %358 = math.tanh %357 : vector<40x20xf32>
    %cst_83 = arith.constant 1.000000e+00 : f32
    %359 = vector.broadcast %cst_83 : f32 to vector<40x20xf32>
    %360 = arith.subf %359, %353 : vector<40x20xf32>
    %361 = arith.mulf %360, %358 : vector<40x20xf32>
    %362 = arith.mulf %353, %303 : vector<40x20xf32>
    %363 = arith.addf %361, %362 : vector<40x20xf32>
    %364 = tpu.concatenate %154, %363 in 1 : vector<40x20xf32>, vector<40x20xf32> -> vector<40x40xf32>
    %365 = tpu.concatenate %214, %303 in 1 : vector<40x20xf32>, vector<40x20xf32> -> vector<40x40xf32>
    %366 = tpu.concatenate %274, %243 in 1 : vector<40x20xf32>, vector<40x20xf32> -> vector<40x40xf32>
    %367 = tpu.concatenate %334, %183 in 1 : vector<40x20xf32>, vector<40x20xf32> -> vector<40x40xf32>
    %368 = tpu.concatenate %364, %365, %366, %367 in 0 : vector<40x40xf32>, vector<40x40xf32>, vector<40x40xf32>, vector<40x40xf32> -> vector<160x40xf32>
    %c0_84 = arith.constant 0 : index
    %c0_85 = arith.constant 0 : index
    %369 = vector.load %arg15[%c0_84, %c0_85] : memref<40x120xf32, #tpu.memory_space<vmem>>, vector<40x120xf32>
    %cst_86 = arith.constant dense<0.000000e+00> : vector<160x120xf32>
    %370 = tpu.matmul %368, %369, %cst_86 {dimension_numbers = #tpu.dot_dimension_numbers<[1], [0], [0], [1], [0, 0, 1, 1], [], []>} : vector<160x40xf32>, vector<40x120xf32>, vector<160x120xf32> -> vector<160x120xf32>
    %c0_87 = arith.constant 0 : index
    %c0_88 = arith.constant 0 : index
    %371 = vector.load %arg16[%c0_87, %c0_88] : memref<1x120xf32, #tpu.memory_space<vmem>>, vector<1x120xf32>
    %372 = vector.broadcast %371 : vector<1x120xf32> to vector<160x120xf32>
    %373 = arith.addf %370, %372 : vector<160x120xf32>
    %c0_89 = arith.constant 0 : index
    %c0_90 = arith.constant 0 : index
    %374 = vector.load %arg17[%c0_89, %c0_90] : memref<20x60xf32, #tpu.memory_space<vmem>>, vector<20x60xf32>
    %c0_91 = arith.constant 0 : index
    %c0_92 = arith.constant 0 : index
    %375 = vector.load %arg18[%c0_91, %c0_92] : memref<1x60xf32, #tpu.memory_space<vmem>>, vector<1x60xf32>
    %c0_93 = arith.constant 0 : index
    %c0_94 = arith.constant 0 : index
    %376 = vector.load %arg19[%c0_93, %c0_94] : memref<20x60xf32, #tpu.memory_space<vmem>>, vector<20x60xf32>
    %c0_95 = arith.constant 0 : index
    %c0_96 = arith.constant 0 : index
    %377 = vector.load %arg20[%c0_95, %c0_96] : memref<1x60xf32, #tpu.memory_space<vmem>>, vector<1x60xf32>
    %cst_97 = arith.constant 0.000000e+00 : f32
    %378 = vector.broadcast %cst_97 : f32 to vector<40x20xf32>
    %cst_98 = arith.constant 0.000000e+00 : f32
    %379 = vector.broadcast %cst_98 : f32 to vector<40x20xf32>
    %380 = vector.extract_strided_slice %373 {offsets = [0, 0], sizes = [40, 60], strides = [1, 1]} : vector<160x120xf32> to vector<40x60xf32>
    %381 = vector.extract_strided_slice %373 {offsets = [120, 60], sizes = [40, 60], strides = [1, 1]} : vector<160x120xf32> to vector<40x60xf32>
    %cst_99 = arith.constant dense<0.000000e+00> : vector<40x60xf32>
    %382 = tpu.matmul %378, %374, %cst_99 {dimension_numbers = #tpu.dot_dimension_numbers<[1], [0], [0], [1], [0, 0, 1, 1], [], []>} : vector<40x20xf32>, vector<20x60xf32>, vector<40x60xf32> -> vector<40x60xf32>
    %383 = vector.broadcast %375 : vector<1x60xf32> to vector<40x60xf32>
    %384 = arith.addf %382, %383 : vector<40x60xf32>
    %385 = vector.extract_strided_slice %380 {offsets = [0, 0], sizes = [40, 20], strides = [1, 1]} : vector<40x60xf32> to vector<40x20xf32>
    %386 = vector.extract_strided_slice %384 {offsets = [0, 0], sizes = [40, 20], strides = [1, 1]} : vector<40x60xf32> to vector<40x20xf32>
    %387 = arith.addf %385, %386 : vector<40x20xf32>
    %388 = arith.negf %387 : vector<40x20xf32>
    %389 = math.exp %388 : vector<40x20xf32>
    %cst_100 = arith.constant 1.000000e+00 : f32
    %390 = vector.broadcast %cst_100 : f32 to vector<40x20xf32>
    %391 = arith.addf %390, %389 : vector<40x20xf32>
    %392 = arith.divf %390, %391 : vector<40x20xf32>
    %393 = vector.extract_strided_slice %380 {offsets = [0, 20], sizes = [40, 20], strides = [1, 1]} : vector<40x60xf32> to vector<40x20xf32>
    %394 = vector.extract_strided_slice %384 {offsets = [0, 20], sizes = [40, 20], strides = [1, 1]} : vector<40x60xf32> to vector<40x20xf32>
    %395 = arith.addf %393, %394 : vector<40x20xf32>
    %396 = arith.negf %395 : vector<40x20xf32>
    %397 = math.exp %396 : vector<40x20xf32>
    %cst_101 = arith.constant 1.000000e+00 : f32
    %398 = vector.broadcast %cst_101 : f32 to vector<40x20xf32>
    %399 = arith.addf %398, %397 : vector<40x20xf32>
    %400 = arith.divf %398, %399 : vector<40x20xf32>
    %401 = vector.extract_strided_slice %380 {offsets = [0, 40], sizes = [40, 20], strides = [1, 1]} : vector<40x60xf32> to vector<40x20xf32>
    %402 = vector.extract_strided_slice %384 {offsets = [0, 40], sizes = [40, 20], strides = [1, 1]} : vector<40x60xf32> to vector<40x20xf32>
    %403 = arith.mulf %392, %402 : vector<40x20xf32>
    %404 = arith.addf %401, %403 : vector<40x20xf32>
    %405 = math.tanh %404 : vector<40x20xf32>
    %cst_102 = arith.constant 1.000000e+00 : f32
    %406 = vector.broadcast %cst_102 : f32 to vector<40x20xf32>
    %407 = arith.subf %406, %400 : vector<40x20xf32>
    %408 = arith.mulf %407, %405 : vector<40x20xf32>
    %409 = arith.mulf %400, %378 : vector<40x20xf32>
    %410 = arith.addf %408, %409 : vector<40x20xf32>
    %cst_103 = arith.constant dense<0.000000e+00> : vector<40x60xf32>
    %411 = tpu.matmul %379, %376, %cst_103 {dimension_numbers = #tpu.dot_dimension_numbers<[1], [0], [0], [1], [0, 0, 1, 1], [], []>} : vector<40x20xf32>, vector<20x60xf32>, vector<40x60xf32> -> vector<40x60xf32>
    %412 = vector.broadcast %377 : vector<1x60xf32> to vector<40x60xf32>
    %413 = arith.addf %411, %412 : vector<40x60xf32>
    %414 = vector.extract_strided_slice %381 {offsets = [0, 0], sizes = [40, 20], strides = [1, 1]} : vector<40x60xf32> to vector<40x20xf32>
    %415 = vector.extract_strided_slice %413 {offsets = [0, 0], sizes = [40, 20], strides = [1, 1]} : vector<40x60xf32> to vector<40x20xf32>
    %416 = arith.addf %414, %415 : vector<40x20xf32>
    %417 = arith.negf %416 : vector<40x20xf32>
    %418 = math.exp %417 : vector<40x20xf32>
    %cst_104 = arith.constant 1.000000e+00 : f32
    %419 = vector.broadcast %cst_104 : f32 to vector<40x20xf32>
    %420 = arith.addf %419, %418 : vector<40x20xf32>
    %421 = arith.divf %419, %420 : vector<40x20xf32>
    %422 = vector.extract_strided_slice %381 {offsets = [0, 20], sizes = [40, 20], strides = [1, 1]} : vector<40x60xf32> to vector<40x20xf32>
    %423 = vector.extract_strided_slice %413 {offsets = [0, 20], sizes = [40, 20], strides = [1, 1]} : vector<40x60xf32> to vector<40x20xf32>
    %424 = arith.addf %422, %423 : vector<40x20xf32>
    %425 = arith.negf %424 : vector<40x20xf32>
    %426 = math.exp %425 : vector<40x20xf32>
    %cst_105 = arith.constant 1.000000e+00 : f32
    %427 = vector.broadcast %cst_105 : f32 to vector<40x20xf32>
    %428 = arith.addf %427, %426 : vector<40x20xf32>
    %429 = arith.divf %427, %428 : vector<40x20xf32>
    %430 = vector.extract_strided_slice %381 {offsets = [0, 40], sizes = [40, 20], strides = [1, 1]} : vector<40x60xf32> to vector<40x20xf32>
    %431 = vector.extract_strided_slice %413 {offsets = [0, 40], sizes = [40, 20], strides = [1, 1]} : vector<40x60xf32> to vector<40x20xf32>
    %432 = arith.mulf %421, %431 : vector<40x20xf32>
    %433 = arith.addf %430, %432 : vector<40x20xf32>
    %434 = math.tanh %433 : vector<40x20xf32>
    %cst_106 = arith.constant 1.000000e+00 : f32
    %435 = vector.broadcast %cst_106 : f32 to vector<40x20xf32>
    %436 = arith.subf %435, %429 : vector<40x20xf32>
    %437 = arith.mulf %436, %434 : vector<40x20xf32>
    %438 = arith.mulf %429, %379 : vector<40x20xf32>
    %439 = arith.addf %437, %438 : vector<40x20xf32>
    %440 = vector.extract_strided_slice %373 {offsets = [40, 0], sizes = [40, 60], strides = [1, 1]} : vector<160x120xf32> to vector<40x60xf32>
    %441 = vector.extract_strided_slice %373 {offsets = [80, 60], sizes = [40, 60], strides = [1, 1]} : vector<160x120xf32> to vector<40x60xf32>
    %cst_107 = arith.constant dense<0.000000e+00> : vector<40x60xf32>
    %442 = tpu.matmul %410, %374, %cst_107 {dimension_numbers = #tpu.dot_dimension_numbers<[1], [0], [0], [1], [0, 0, 1, 1], [], []>} : vector<40x20xf32>, vector<20x60xf32>, vector<40x60xf32> -> vector<40x60xf32>
    %443 = vector.broadcast %375 : vector<1x60xf32> to vector<40x60xf32>
    %444 = arith.addf %442, %443 : vector<40x60xf32>
    %445 = vector.extract_strided_slice %440 {offsets = [0, 0], sizes = [40, 20], strides = [1, 1]} : vector<40x60xf32> to vector<40x20xf32>
    %446 = vector.extract_strided_slice %444 {offsets = [0, 0], sizes = [40, 20], strides = [1, 1]} : vector<40x60xf32> to vector<40x20xf32>
    %447 = arith.addf %445, %446 : vector<40x20xf32>
    %448 = arith.negf %447 : vector<40x20xf32>
    %449 = math.exp %448 : vector<40x20xf32>
    %cst_108 = arith.constant 1.000000e+00 : f32
    %450 = vector.broadcast %cst_108 : f32 to vector<40x20xf32>
    %451 = arith.addf %450, %449 : vector<40x20xf32>
    %452 = arith.divf %450, %451 : vector<40x20xf32>
    %453 = vector.extract_strided_slice %440 {offsets = [0, 20], sizes = [40, 20], strides = [1, 1]} : vector<40x60xf32> to vector<40x20xf32>
    %454 = vector.extract_strided_slice %444 {offsets = [0, 20], sizes = [40, 20], strides = [1, 1]} : vector<40x60xf32> to vector<40x20xf32>
    %455 = arith.addf %453, %454 : vector<40x20xf32>
    %456 = arith.negf %455 : vector<40x20xf32>
    %457 = math.exp %456 : vector<40x20xf32>
    %cst_109 = arith.constant 1.000000e+00 : f32
    %458 = vector.broadcast %cst_109 : f32 to vector<40x20xf32>
    %459 = arith.addf %458, %457 : vector<40x20xf32>
    %460 = arith.divf %458, %459 : vector<40x20xf32>
    %461 = vector.extract_strided_slice %440 {offsets = [0, 40], sizes = [40, 20], strides = [1, 1]} : vector<40x60xf32> to vector<40x20xf32>
    %462 = vector.extract_strided_slice %444 {offsets = [0, 40], sizes = [40, 20], strides = [1, 1]} : vector<40x60xf32> to vector<40x20xf32>
    %463 = arith.mulf %452, %462 : vector<40x20xf32>
    %464 = arith.addf %461, %463 : vector<40x20xf32>
    %465 = math.tanh %464 : vector<40x20xf32>
    %cst_110 = arith.constant 1.000000e+00 : f32
    %466 = vector.broadcast %cst_110 : f32 to vector<40x20xf32>
    %467 = arith.subf %466, %460 : vector<40x20xf32>
    %468 = arith.mulf %467, %465 : vector<40x20xf32>
    %469 = arith.mulf %460, %410 : vector<40x20xf32>
    %470 = arith.addf %468, %469 : vector<40x20xf32>
    %cst_111 = arith.constant dense<0.000000e+00> : vector<40x60xf32>
    %471 = tpu.matmul %439, %376, %cst_111 {dimension_numbers = #tpu.dot_dimension_numbers<[1], [0], [0], [1], [0, 0, 1, 1], [], []>} : vector<40x20xf32>, vector<20x60xf32>, vector<40x60xf32> -> vector<40x60xf32>
    %472 = vector.broadcast %377 : vector<1x60xf32> to vector<40x60xf32>
    %473 = arith.addf %471, %472 : vector<40x60xf32>
    %474 = vector.extract_strided_slice %441 {offsets = [0, 0], sizes = [40, 20], strides = [1, 1]} : vector<40x60xf32> to vector<40x20xf32>
    %475 = vector.extract_strided_slice %473 {offsets = [0, 0], sizes = [40, 20], strides = [1, 1]} : vector<40x60xf32> to vector<40x20xf32>
    %476 = arith.addf %474, %475 : vector<40x20xf32>
    %477 = arith.negf %476 : vector<40x20xf32>
    %478 = math.exp %477 : vector<40x20xf32>
    %cst_112 = arith.constant 1.000000e+00 : f32
    %479 = vector.broadcast %cst_112 : f32 to vector<40x20xf32>
    %480 = arith.addf %479, %478 : vector<40x20xf32>
    %481 = arith.divf %479, %480 : vector<40x20xf32>
    %482 = vector.extract_strided_slice %441 {offsets = [0, 20], sizes = [40, 20], strides = [1, 1]} : vector<40x60xf32> to vector<40x20xf32>
    %483 = vector.extract_strided_slice %473 {offsets = [0, 20], sizes = [40, 20], strides = [1, 1]} : vector<40x60xf32> to vector<40x20xf32>
    %484 = arith.addf %482, %483 : vector<40x20xf32>
    %485 = arith.negf %484 : vector<40x20xf32>
    %486 = math.exp %485 : vector<40x20xf32>
    %cst_113 = arith.constant 1.000000e+00 : f32
    %487 = vector.broadcast %cst_113 : f32 to vector<40x20xf32>
    %488 = arith.addf %487, %486 : vector<40x20xf32>
    %489 = arith.divf %487, %488 : vector<40x20xf32>
    %490 = vector.extract_strided_slice %441 {offsets = [0, 40], sizes = [40, 20], strides = [1, 1]} : vector<40x60xf32> to vector<40x20xf32>
    %491 = vector.extract_strided_slice %473 {offsets = [0, 40], sizes = [40, 20], strides = [1, 1]} : vector<40x60xf32> to vector<40x20xf32>
    %492 = arith.mulf %481, %491 : vector<40x20xf32>
    %493 = arith.addf %490, %492 : vector<40x20xf32>
    %494 = math.tanh %493 : vector<40x20xf32>
    %cst_114 = arith.constant 1.000000e+00 : f32
    %495 = vector.broadcast %cst_114 : f32 to vector<40x20xf32>
    %496 = arith.subf %495, %489 : vector<40x20xf32>
    %497 = arith.mulf %496, %494 : vector<40x20xf32>
    %498 = arith.mulf %489, %439 : vector<40x20xf32>
    %499 = arith.addf %497, %498 : vector<40x20xf32>
    %500 = vector.extract_strided_slice %373 {offsets = [80, 0], sizes = [40, 60], strides = [1, 1]} : vector<160x120xf32> to vector<40x60xf32>
    %501 = vector.extract_strided_slice %373 {offsets = [40, 60], sizes = [40, 60], strides = [1, 1]} : vector<160x120xf32> to vector<40x60xf32>
    %cst_115 = arith.constant dense<0.000000e+00> : vector<40x60xf32>
    %502 = tpu.matmul %470, %374, %cst_115 {dimension_numbers = #tpu.dot_dimension_numbers<[1], [0], [0], [1], [0, 0, 1, 1], [], []>} : vector<40x20xf32>, vector<20x60xf32>, vector<40x60xf32> -> vector<40x60xf32>
    %503 = vector.broadcast %375 : vector<1x60xf32> to vector<40x60xf32>
    %504 = arith.addf %502, %503 : vector<40x60xf32>
    %505 = vector.extract_strided_slice %500 {offsets = [0, 0], sizes = [40, 20], strides = [1, 1]} : vector<40x60xf32> to vector<40x20xf32>
    %506 = vector.extract_strided_slice %504 {offsets = [0, 0], sizes = [40, 20], strides = [1, 1]} : vector<40x60xf32> to vector<40x20xf32>
    %507 = arith.addf %505, %506 : vector<40x20xf32>
    %508 = arith.negf %507 : vector<40x20xf32>
    %509 = math.exp %508 : vector<40x20xf32>
    %cst_116 = arith.constant 1.000000e+00 : f32
    %510 = vector.broadcast %cst_116 : f32 to vector<40x20xf32>
    %511 = arith.addf %510, %509 : vector<40x20xf32>
    %512 = arith.divf %510, %511 : vector<40x20xf32>
    %513 = vector.extract_strided_slice %500 {offsets = [0, 20], sizes = [40, 20], strides = [1, 1]} : vector<40x60xf32> to vector<40x20xf32>
    %514 = vector.extract_strided_slice %504 {offsets = [0, 20], sizes = [40, 20], strides = [1, 1]} : vector<40x60xf32> to vector<40x20xf32>
    %515 = arith.addf %513, %514 : vector<40x20xf32>
    %516 = arith.negf %515 : vector<40x20xf32>
    %517 = math.exp %516 : vector<40x20xf32>
    %cst_117 = arith.constant 1.000000e+00 : f32
    %518 = vector.broadcast %cst_117 : f32 to vector<40x20xf32>
    %519 = arith.addf %518, %517 : vector<40x20xf32>
    %520 = arith.divf %518, %519 : vector<40x20xf32>
    %521 = vector.extract_strided_slice %500 {offsets = [0, 40], sizes = [40, 20], strides = [1, 1]} : vector<40x60xf32> to vector<40x20xf32>
    %522 = vector.extract_strided_slice %504 {offsets = [0, 40], sizes = [40, 20], strides = [1, 1]} : vector<40x60xf32> to vector<40x20xf32>
    %523 = arith.mulf %512, %522 : vector<40x20xf32>
    %524 = arith.addf %521, %523 : vector<40x20xf32>
    %525 = math.tanh %524 : vector<40x20xf32>
    %cst_118 = arith.constant 1.000000e+00 : f32
    %526 = vector.broadcast %cst_118 : f32 to vector<40x20xf32>
    %527 = arith.subf %526, %520 : vector<40x20xf32>
    %528 = arith.mulf %527, %525 : vector<40x20xf32>
    %529 = arith.mulf %520, %470 : vector<40x20xf32>
    %530 = arith.addf %528, %529 : vector<40x20xf32>
    %cst_119 = arith.constant dense<0.000000e+00> : vector<40x60xf32>
    %531 = tpu.matmul %499, %376, %cst_119 {dimension_numbers = #tpu.dot_dimension_numbers<[1], [0], [0], [1], [0, 0, 1, 1], [], []>} : vector<40x20xf32>, vector<20x60xf32>, vector<40x60xf32> -> vector<40x60xf32>
    %532 = vector.broadcast %377 : vector<1x60xf32> to vector<40x60xf32>
    %533 = arith.addf %531, %532 : vector<40x60xf32>
    %534 = vector.extract_strided_slice %501 {offsets = [0, 0], sizes = [40, 20], strides = [1, 1]} : vector<40x60xf32> to vector<40x20xf32>
    %535 = vector.extract_strided_slice %533 {offsets = [0, 0], sizes = [40, 20], strides = [1, 1]} : vector<40x60xf32> to vector<40x20xf32>
    %536 = arith.addf %534, %535 : vector<40x20xf32>
    %537 = arith.negf %536 : vector<40x20xf32>
    %538 = math.exp %537 : vector<40x20xf32>
    %cst_120 = arith.constant 1.000000e+00 : f32
    %539 = vector.broadcast %cst_120 : f32 to vector<40x20xf32>
    %540 = arith.addf %539, %538 : vector<40x20xf32>
    %541 = arith.divf %539, %540 : vector<40x20xf32>
    %542 = vector.extract_strided_slice %501 {offsets = [0, 20], sizes = [40, 20], strides = [1, 1]} : vector<40x60xf32> to vector<40x20xf32>
    %543 = vector.extract_strided_slice %533 {offsets = [0, 20], sizes = [40, 20], strides = [1, 1]} : vector<40x60xf32> to vector<40x20xf32>
    %544 = arith.addf %542, %543 : vector<40x20xf32>
    %545 = arith.negf %544 : vector<40x20xf32>
    %546 = math.exp %545 : vector<40x20xf32>
    %cst_121 = arith.constant 1.000000e+00 : f32
    %547 = vector.broadcast %cst_121 : f32 to vector<40x20xf32>
    %548 = arith.addf %547, %546 : vector<40x20xf32>
    %549 = arith.divf %547, %548 : vector<40x20xf32>
    %550 = vector.extract_strided_slice %501 {offsets = [0, 40], sizes = [40, 20], strides = [1, 1]} : vector<40x60xf32> to vector<40x20xf32>
    %551 = vector.extract_strided_slice %533 {offsets = [0, 40], sizes = [40, 20], strides = [1, 1]} : vector<40x60xf32> to vector<40x20xf32>
    %552 = arith.mulf %541, %551 : vector<40x20xf32>
    %553 = arith.addf %550, %552 : vector<40x20xf32>
    %554 = math.tanh %553 : vector<40x20xf32>
    %cst_122 = arith.constant 1.000000e+00 : f32
    %555 = vector.broadcast %cst_122 : f32 to vector<40x20xf32>
    %556 = arith.subf %555, %549 : vector<40x20xf32>
    %557 = arith.mulf %556, %554 : vector<40x20xf32>
    %558 = arith.mulf %549, %499 : vector<40x20xf32>
    %559 = arith.addf %557, %558 : vector<40x20xf32>
    %560 = vector.extract_strided_slice %373 {offsets = [120, 0], sizes = [40, 60], strides = [1, 1]} : vector<160x120xf32> to vector<40x60xf32>
    %561 = vector.extract_strided_slice %373 {offsets = [0, 60], sizes = [40, 60], strides = [1, 1]} : vector<160x120xf32> to vector<40x60xf32>
    %cst_123 = arith.constant dense<0.000000e+00> : vector<40x60xf32>
    %562 = tpu.matmul %530, %374, %cst_123 {dimension_numbers = #tpu.dot_dimension_numbers<[1], [0], [0], [1], [0, 0, 1, 1], [], []>} : vector<40x20xf32>, vector<20x60xf32>, vector<40x60xf32> -> vector<40x60xf32>
    %563 = vector.broadcast %375 : vector<1x60xf32> to vector<40x60xf32>
    %564 = arith.addf %562, %563 : vector<40x60xf32>
    %565 = vector.extract_strided_slice %560 {offsets = [0, 0], sizes = [40, 20], strides = [1, 1]} : vector<40x60xf32> to vector<40x20xf32>
    %566 = vector.extract_strided_slice %564 {offsets = [0, 0], sizes = [40, 20], strides = [1, 1]} : vector<40x60xf32> to vector<40x20xf32>
    %567 = arith.addf %565, %566 : vector<40x20xf32>
    %568 = arith.negf %567 : vector<40x20xf32>
    %569 = math.exp %568 : vector<40x20xf32>
    %cst_124 = arith.constant 1.000000e+00 : f32
    %570 = vector.broadcast %cst_124 : f32 to vector<40x20xf32>
    %571 = arith.addf %570, %569 : vector<40x20xf32>
    %572 = arith.divf %570, %571 : vector<40x20xf32>
    %573 = vector.extract_strided_slice %560 {offsets = [0, 20], sizes = [40, 20], strides = [1, 1]} : vector<40x60xf32> to vector<40x20xf32>
    %574 = vector.extract_strided_slice %564 {offsets = [0, 20], sizes = [40, 20], strides = [1, 1]} : vector<40x60xf32> to vector<40x20xf32>
    %575 = arith.addf %573, %574 : vector<40x20xf32>
    %576 = arith.negf %575 : vector<40x20xf32>
    %577 = math.exp %576 : vector<40x20xf32>
    %cst_125 = arith.constant 1.000000e+00 : f32
    %578 = vector.broadcast %cst_125 : f32 to vector<40x20xf32>
    %579 = arith.addf %578, %577 : vector<40x20xf32>
    %580 = arith.divf %578, %579 : vector<40x20xf32>
    %581 = vector.extract_strided_slice %560 {offsets = [0, 40], sizes = [40, 20], strides = [1, 1]} : vector<40x60xf32> to vector<40x20xf32>
    %582 = vector.extract_strided_slice %564 {offsets = [0, 40], sizes = [40, 20], strides = [1, 1]} : vector<40x60xf32> to vector<40x20xf32>
    %583 = arith.mulf %572, %582 : vector<40x20xf32>
    %584 = arith.addf %581, %583 : vector<40x20xf32>
    %585 = math.tanh %584 : vector<40x20xf32>
    %cst_126 = arith.constant 1.000000e+00 : f32
    %586 = vector.broadcast %cst_126 : f32 to vector<40x20xf32>
    %587 = arith.subf %586, %580 : vector<40x20xf32>
    %588 = arith.mulf %587, %585 : vector<40x20xf32>
    %589 = arith.mulf %580, %530 : vector<40x20xf32>
    %590 = arith.addf %588, %589 : vector<40x20xf32>
    %cst_127 = arith.constant dense<0.000000e+00> : vector<40x60xf32>
    %591 = tpu.matmul %559, %376, %cst_127 {dimension_numbers = #tpu.dot_dimension_numbers<[1], [0], [0], [1], [0, 0, 1, 1], [], []>} : vector<40x20xf32>, vector<20x60xf32>, vector<40x60xf32> -> vector<40x60xf32>
    %592 = vector.broadcast %377 : vector<1x60xf32> to vector<40x60xf32>
    %593 = arith.addf %591, %592 : vector<40x60xf32>
    %594 = vector.extract_strided_slice %561 {offsets = [0, 0], sizes = [40, 20], strides = [1, 1]} : vector<40x60xf32> to vector<40x20xf32>
    %595 = vector.extract_strided_slice %593 {offsets = [0, 0], sizes = [40, 20], strides = [1, 1]} : vector<40x60xf32> to vector<40x20xf32>
    %596 = arith.addf %594, %595 : vector<40x20xf32>
    %597 = arith.negf %596 : vector<40x20xf32>
    %598 = math.exp %597 : vector<40x20xf32>
    %cst_128 = arith.constant 1.000000e+00 : f32
    %599 = vector.broadcast %cst_128 : f32 to vector<40x20xf32>
    %600 = arith.addf %599, %598 : vector<40x20xf32>
    %601 = arith.divf %599, %600 : vector<40x20xf32>
    %602 = vector.extract_strided_slice %561 {offsets = [0, 20], sizes = [40, 20], strides = [1, 1]} : vector<40x60xf32> to vector<40x20xf32>
    %603 = vector.extract_strided_slice %593 {offsets = [0, 20], sizes = [40, 20], strides = [1, 1]} : vector<40x60xf32> to vector<40x20xf32>
    %604 = arith.addf %602, %603 : vector<40x20xf32>
    %605 = arith.negf %604 : vector<40x20xf32>
    %606 = math.exp %605 : vector<40x20xf32>
    %cst_129 = arith.constant 1.000000e+00 : f32
    %607 = vector.broadcast %cst_129 : f32 to vector<40x20xf32>
    %608 = arith.addf %607, %606 : vector<40x20xf32>
    %609 = arith.divf %607, %608 : vector<40x20xf32>
    %610 = vector.extract_strided_slice %561 {offsets = [0, 40], sizes = [40, 20], strides = [1, 1]} : vector<40x60xf32> to vector<40x20xf32>
    %611 = vector.extract_strided_slice %593 {offsets = [0, 40], sizes = [40, 20], strides = [1, 1]} : vector<40x60xf32> to vector<40x20xf32>
    %612 = arith.mulf %601, %611 : vector<40x20xf32>
    %613 = arith.addf %610, %612 : vector<40x20xf32>
    %614 = math.tanh %613 : vector<40x20xf32>
    %cst_130 = arith.constant 1.000000e+00 : f32
    %615 = vector.broadcast %cst_130 : f32 to vector<40x20xf32>
    %616 = arith.subf %615, %609 : vector<40x20xf32>
    %617 = arith.mulf %616, %614 : vector<40x20xf32>
    %618 = arith.mulf %609, %559 : vector<40x20xf32>
    %619 = arith.addf %617, %618 : vector<40x20xf32>
    %620 = tpu.concatenate %410, %619 in 1 : vector<40x20xf32>, vector<40x20xf32> -> vector<40x40xf32>
    %621 = tpu.concatenate %470, %559 in 1 : vector<40x20xf32>, vector<40x20xf32> -> vector<40x40xf32>
    %622 = tpu.concatenate %530, %499 in 1 : vector<40x20xf32>, vector<40x20xf32> -> vector<40x40xf32>
    %623 = tpu.concatenate %590, %439 in 1 : vector<40x20xf32>, vector<40x20xf32> -> vector<40x40xf32>
    %624 = tpu.concatenate %620, %621, %622, %623 in 0 : vector<40x40xf32>, vector<40x40xf32>, vector<40x40xf32>, vector<40x40xf32> -> vector<160x40xf32>
    %c0_131 = arith.constant 0 : index
    %c0_132 = arith.constant 0 : index
    %625 = vector.load %arg21[%c0_131, %c0_132] : memref<160x40xf32, #tpu.memory_space<vmem>>, vector<160x40xf32>
    tpu.vector_store %arg21[%c0_131, %c0_132], %624 {strides = array<i32>} : memref<160x40xf32, #tpu.memory_space<vmem>>, vector<160x40xf32>,
    return
  }
}

</mosaic_0001>

<llo_original>
// kernel: msc_gru_forward.3
$region0: #{msc_gru_forward.3}
  #allocation0 [shape = 'u32[]', space=smem, size = 0x4, offset = 0x4, fixed_abs, tag = 'smem constant byte address 0x4 - core index']
  #allocation1 [shape = 'u32[144,128]{1,0:T(1,128)}', space=vmem, size = 0x12000, scoped, tag = 'internal scratch']
  #allocation2 [shape = 'f32[1,1]{1,0:T(1,128)S(1)}', space=vmem, size = 0x200, scoped, tag = 'scoped memory for msc_gru_forward.3']
  %s0 = inlined_call_operand.vmem [shape: f32[4,1600], index: 0, kind: input, shape index: {}]
  %s1 = inlined_call_operand.hbm [shape: f32[1600,256], index: 1, kind: input, shape index: {}]
  %s2 = inlined_call_operand.hbm [shape: f32[1,256], index: 2, kind: input, shape index: {}]
  %s3 = inlined_call_operand.vmem [shape: f32[256,32], index: 3, kind: input, shape index: {}]
  %s4 = inlined_call_operand.hbm [shape: f32[1,32], index: 4, kind: input, shape index: {}]
  %s5 = inlined_call_operand.vmem [shape: f32[32,1], index: 5, kind: input, shape index: {}]
  %s6 = inlined_call_operand.<no memory space> [shape: f32[1,1], index: 6, kind: input, shape index: {}]
  %s7 = inlined_call_operand.vmem [shape: f32[4,1], index: 7, kind: output, shape index: {}]
  %s8 = sld [smem:[#allocation0]]
  $region50: #{msc_gru_forward.3} parent=0
    _
  %s10 = ssub.s32 1, %s8
  %s11 = scalar_select 0, %s10, %s8
  %v12 = vstv %s6
  %13 = vst [vmem:[#allocation2] sm:$0x1] %v12
  $region1: #{msc_gru_forward.3} parent=0
    #allocation3 [shape = 'u8[1638400]{0}', space=vmem, size = 0x190000, scoped, tag = 'input window, operand 1, single buffered']
    #allocation4 [shape = 's32[1]{0}', space=sflag, size = 0x4, scoped, tag = 'scoped memory for msc_gru_forward.3']
    #allocation5 [shape = 'u8[1024]{0}', space=vmem, size = 0x400, scoped, tag = 'input window, operand 2, single buffered']
    #allocation6 [shape = 's32[1]{0}', space=sflag, size = 0x4, scoped, tag = 'scoped memory for msc_gru_forward.3']
    #allocation7 [shape = 'u8[512]{0}', space=vmem, size = 0x400, scoped, tag = 'input window, operand 4, single buffered']
    %14 = vsyncpa [#allocation4], 0
    %15 = vsyncpa [#allocation6], 0
    // Predicated region
    $region2: #{msc_gru_forward.3} parent=1 // pred_check
      _
    $region3: #{msc_gru_forward.3} parent=1 // pred_check_branch
      %17 = sbr.rel (0) target = $region5
    $region4: #{msc_gru_forward.3} parent=1 // pred_region
      _
    $region5: #{msc_gru_forward.3} parent=1 // pred_fallthru
      _
    // Predicated region
    $region6: #{msc_gru_forward.3} parent=1 // pred_check
      _
    $region7: #{msc_gru_forward.3} parent=1 // pred_check_branch
      %19 = sbr.rel (0) target = $region9
    $region8: #{msc_gru_forward.3} parent=1 // pred_region
      %s21 = ssub.s32 51200, 51200
      %22 = vsyncadd [#allocation4], %s21
      %s23 = sshll.u32 [#allocation3], 4
      %s24 = int_to_ptr.vmem [resolvable:$true] %s23
      %29 = dma.hbm_to_vmem [thread:$0]  %s1, 51200, %s24, [#allocation4], 256, 256, 16
    $region9: #{msc_gru_forward.3} parent=1 // pred_fallthru
      _
    // Predicated region
    $region10: #{msc_gru_forward.3} parent=1 // pred_check
      _
    $region11: #{msc_gru_forward.3} parent=1 // pred_check_branch
      %31 = sbr.rel (0) target = $region13
    $region12: #{msc_gru_forward.3} parent=1 // pred_region
      %s33 = ssub.s32 32, 32
      %34 = vsyncadd [#allocation6], %s33
      %s36 = sshll.u32 [#allocation5], 4
      %s37 = int_to_ptr.vmem [resolvable:$true] %s36
      %39 = dma.hbm_to_vmem [thread:$0]  %s2, 32, %s37, [#allocation6]
    $region13: #{msc_gru_forward.3} parent=1 // pred_fallthru
      _
    // Predicated region
    $region14: #{msc_gru_forward.3} parent=1 // pred_check
      _
    $region15: #{msc_gru_forward.3} parent=1 // pred_check_branch
      %41 = sbr.rel (0) target = $region17
    $region16: #{msc_gru_forward.3} parent=1 // pred_region
      _
    $region17: #{msc_gru_forward.3} parent=1 // pred_fallthru
      _
    // Predicated region
    $region18: #{msc_gru_forward.3} parent=1 // pred_check
      _
    $region19: #{msc_gru_forward.3} parent=1 // pred_check_branch
      %43 = sbr.rel (0) target = $region21
    $region20: #{msc_gru_forward.3} parent=1 // pred_region
      %s45 = ssub.s32 16, 16
      %46 = vsyncadd [#allocation6], %s45
      %s48 = sshll.u32 [#allocation7], 4
      %s49 = int_to_ptr.vmem [resolvable:$true] %s48
      %51 = dma.hbm_to_vmem [thread:$0]  %s4, 16, %s49, [#allocation6]
    $region21: #{msc_gru_forward.3} parent=1 // pred_fallthru
      _
    // Predicated region
    $region22: #{msc_gru_forward.3} parent=1 // pred_check
      _
    $region23: #{msc_gru_forward.3} parent=1 // pred_check_branch
      %53 = sbr.rel (0) target = $region25
    $region24: #{msc_gru_forward.3} parent=1 // pred_region
      _
    $region25: #{msc_gru_forward.3} parent=1 // pred_fallthru
      _
    // Predicated region
    $region26: #{msc_gru_forward.3} parent=1 // pred_check
      _
    $region27: #{msc_gru_forward.3} parent=1 // pred_check_branch
      %55 = sbr.rel (0) target = $region29
    $region28: #{msc_gru_forward.3} parent=1 // pred_region
      _
    $region29: #{msc_gru_forward.3} parent=1 // pred_fallthru
      _
    // Predicated region
    $region30: #{msc_gru_forward.3} parent=1 // pred_check
      _
    $region31: #{msc_gru_forward.3} parent=1 // pred_check_branch
      %57 = sbr.rel (0) target = $region33
    $region32: #{msc_gru_forward.3} parent=1 // pred_region
      %58 = dma.done [#allocation4], 51200
    $region33: #{msc_gru_forward.3} parent=1 // pred_fallthru
      _
    // Predicated region
    $region34: #{msc_gru_forward.3} parent=1 // pred_check
      _
    $region35: #{msc_gru_forward.3} parent=1 // pred_check_branch
      %60 = sbr.rel (0) target = $region37
    $region36: #{msc_gru_forward.3} parent=1 // pred_region
      %61 = dma.done [#allocation6], 32
    $region37: #{msc_gru_forward.3} parent=1 // pred_fallthru
      _
    // Predicated region
    $region38: #{msc_gru_forward.3} parent=1 // pred_check
      _
    $region39: #{msc_gru_forward.3} parent=1 // pred_check_branch
      %63 = sbr.rel (0) target = $region41
    $region40: #{msc_gru_forward.3} parent=1 // pred_region
      %64 = dma.done [#allocation6], 16
    $region41: #{msc_gru_forward.3} parent=1 // pred_fallthru
      _
    %v65 = vld [vmem:[%s0] sm:$0xff]
    %v66 = vld [vmem:[%s0 + $0x8] sm:$0xff]
    %v67 = vld [vmem:[%s0 + $0x10] sm:$0xff]
    %v68 = vld [vmem:[%s0 + $0x18] sm:$0xff]
    %v69 = vld [vmem:[%s0 + $0x20] sm:$0xff]
    %v70 = vld [vmem:[%s0 + $0x28] sm:$0xff]
    %v71 = vld [vmem:[%s0 + $0x30] sm:$0xf]
    %v72 = vld [vmem:[#allocation3] sm:$0xff]
    %v73 = vld [vmem:[#allocation3 + $0x8] sm:$0xff]
    %v74 = vld [vmem:[#allocation3 + $0x10] sm:$0xff]
    %v75 = vld [vmem:[#allocation3 + $0x18] sm:$0xff]
    %v76 = vld [vmem:[#allocation3 + $0x20] sm:$0xff]
    %v77 = vld [vmem:[#allocation3 + $0x28] sm:$0xff]
    %v78 = vld [vmem:[#allocation3 + $0x30] sm:$0xff]
    %v79 = vld [vmem:[#allocation3 + $0x38] sm:$0xff]
    %v80 = vld [vmem:[#allocation3 + $0x40] sm:$0xff]
    %v81 = vld [vmem:[#allocation3 + $0x48] sm:$0xff]
    %v82 = vld [vmem:[#allocation3 + $0x50] sm:$0xff]
    %v83 = vld [vmem:[#allocation3 + $0x58] sm:$0xff]
    %v84 = vld [vmem:[#allocation3 + $0x60] sm:$0xff]
    %v85 = vld [vmem:[#allocation3 + $0x68] sm:$0xff]
    %v86 = vld [vmem:[#allocation3 + $0x70] sm:$0xff]
    %v87 = vld [vmem:[#allocation3 + $0x78] sm:$0xff]
    %v88 = vld [vmem:[#allocation3 + $0x80] sm:$0xff]
    %v89 = vld [vmem:[#allocation3 + $0x88] sm:$0xff]
    %v90 = vld [vmem:[#allocation3 + $0x90] sm:$0xff]
    %v91 = vld [vmem:[#allocation3 + $0x98] sm:$0xff]
    %v92 = vld [vmem:[#allocation3 + $0xa0] sm:$0xff]
    %v93 = vld [vmem:[#allocation3 + $0xa8] sm:$0xff]
    %v94 = vld [vmem:[#allocation3 + $0xb0] sm:$0xff]
    %v95 = vld [vmem:[#allocation3 + $0xb8] sm:$0xff]
    %v96 = vld [vmem:[#allocation3 + $0xc0] sm:$0xff]
    %v97 = vld [vmem:[#allocation3 + $0xc8] sm:$0xff]
    %v98 = vld [vmem:[#allocation3 + $0xd0] sm:$0xff]
    %v99 = vld [vmem:[#allocation3 + $0xd8] sm:$0xff]
    %v100 = vld [vmem:[#allocation3 + $0xe0] sm:$0xff]
    %v101 = vld [vmem:[#allocation3 + $0xe8] sm:$0xff]
    %v102 = vld [vmem:[#allocation3 + $0xf0] sm:$0xff]
    %v103 = vld [vmem:[#allocation3 + $0xf8] sm:$0xff]
    %v104 = vld [vmem:[#allocation3 + $0x100] sm:$0xff]
    %v105 = vld [vmem:[#allocation3 + $0x108] sm:$0xff]
    %v106 = vld [vmem:[#allocation3 + $0x110] sm:$0xff]
    %v107 = vld [vmem:[#allocation3 + $0x118] sm:$0xff]
    %v108 = vld [vmem:[#allocation3 + $0x120] sm:$0xff]
    %v109 = vld [vmem:[#allocation3 + $0x128] sm:$0xff]
    %v110 = vld [vmem:[#allocation3 + $0x130] sm:$0xff]
    %v111 = vld [vmem:[#allocation3 + $0x138] sm:$0xff]
    %v112 = vld [vmem:[#allocation3 + $0x140] sm:$0xff]
    %v113 = vld [vmem:[#allocation3 + $0x148] sm:$0xff]
    %v114 = vld [vmem:[#allocation3 + $0x150] sm:$0xff]
    %v115 = vld [vmem:[#allocation3 + $0x158] sm:$0xff]
    %v116 = vld [vmem:[#allocation3 + $0x160] sm:$0xff]
    %v117 = vld [vmem:[#allocation3 + $0x168] sm:$0xff]
    %v118 = vld [vmem:[#allocation3 + $0x170] sm:$0xff]
    %v119 = vld [vmem:[#allocation3 + $0x178] sm:$0xff]
    %v120 = vld [vmem:[#allocation3 + $0x180] sm:$0xff]
    %v121 = vld [vmem:[#allocation3 + $0x188] sm:$0xff]
    %v122 = vld [vmem:[#allocation3 + $0x190] sm:$0xff]
    %v123 = vld [vmem:[#allocation3 + $0x198] sm:$0xff]
    %v124 = vld [vmem:[#allocation3 + $0x1a0] sm:$0xff]
    %v125 = vld [vmem:[#allocation3 + $0x1a8] sm:$0xff]
    %v126 = vld [vmem:[#allocation3 + $0x1b0] sm:$0xff]
    %v127 = vld [vmem:[#allocation3 + $0x1b8] sm:$0xff]
    %v128 = vld [vmem:[#allocation3 + $0x1c0] sm:$0xff]
    %v129 = vld [vmem:[#allocation3 + $0x1c8] sm:$0xff]
    %v130 = vld [vmem:[#allocation3 + $0x1d0] sm:$0xff]
    %v131 = vld [vmem:[#allocation3 + $0x1d8] sm:$0xff]
    %v132 = vld [vmem:[#allocation3 + $0x1e0] sm:$0xff]
    %v133 = vld [vmem:[#allocation3 + $0x1e8] sm:$0xff]
    %v134 = vld [vmem:[#allocation3 + $0x1f0] sm:$0xff]
    %v135 = vld [vmem:[#allocation3 + $0x1f8] sm:$0xff]
    %v136 = vld [vmem:[#allocation3 + $0x200] sm:$0xff]
    %v137 = vld [vmem:[#allocation3 + $0x208] sm:$0xff]
    %v138 = vld [vmem:[#allocation3 + $0x210] sm:$0xff]
    %v139 = vld [vmem:[#allocation3 + $0x218] sm:$0xff]
    %v140 = vld [vmem:[#allocation3 + $0x220] sm:$0xff]
    %v141 = vld [vmem:[#allocation3 + $0x228] sm:$0xff]
    %v142 = vld [vmem:[#allocation3 + $0x230] sm:$0xff]
    %v143 = vld [vmem:[#allocation3 + $0x238] sm:$0xff]
    %v144 = vld [vmem:[#allocation3 + $0x240] sm:$0xff]
    %v145 = vld [vmem:[#allocation3 + $0x248] sm:$0xff]
    %v146 = vld [vmem:[#allocation3 + $0x250] sm:$0xff]
    %v147 = vld [vmem:[#allocation3 + $0x258] sm:$0xff]
    %v148 = vld [vmem:[#allocation3 + $0x260] sm:$0xff]
    %v149 = vld [vmem:[#allocation3 + $0x268] sm:$0xff]
    %v150 = vld [vmem:[#allocation3 + $0x270] sm:$0xff]
    %v151 = vld [vmem:[#allocation3 + $0x278] sm:$0xff]
    %v152 = vld [vmem:[#allocation3 + $0x280] sm:$0xff]
    %v153 = vld [vmem:[#allocation3 + $0x288] sm:$0xff]
    %v154 = vld [vmem:[#allocation3 + $0x290] sm:$0xff]
    %v155 = vld [vmem:[#allocation3 + $0x298] sm:$0xff]
    %v156 = vld [vmem:[#allocation3 + $0x2a0] sm:$0xff]
    %v157 = vld [vmem:[#allocation3 + $0x2a8] sm:$0xff]
    %v158 = vld [vmem:[#allocation3 + $0x2b0] sm:$0xff]
    %v159 = vld [vmem:[#allocation3 + $0x2b8] sm:$0xff]
    %v160 = vld [vmem:[#allocation3 + $0x2c0] sm:$0xff]
    %v161 = vld [vmem:[#allocation3 + $0x2c8] sm:$0xff]
    %v162 = vld [vmem:[#allocation3 + $0x2d0] sm:$0xff]
    %v163 = vld [vmem:[#allocation3 + $0x2d8] sm:$0xff]
    %v164 = vld [vmem:[#allocation3 + $0x2e0] sm:$0xff]
    %v165 = vld [vmem:[#allocation3 + $0x2e8] sm:$0xff]
    %v166 = vld [vmem:[#allocation3 + $0x2f0] sm:$0xff]
    %v167 = vld [vmem:[#allocation3 + $0x2f8] sm:$0xff]
    %v168 = vld [vmem:[#allocation3 + $0x300] sm:$0xff]
    %v169 = vld [vmem:[#allocation3 + $0x308] sm:$0xff]
    %v170 = vld [vmem:[#allocation3 + $0x310] sm:$0xff]
    %v171 = vld [vmem:[#allocation3 + $0x318] sm:$0xff]
    %v172 = vld [vmem:[#allocation3 + $0x320] sm:$0xff]
    %v173 = vld [vmem:[#allocation3 + $0x328] sm:$0xff]
    %v174 = vld [vmem:[#allocation3 + $0x330] sm:$0xff]
    %v175 = vld [vmem:[#allocation3 + $0x338] sm:$0xff]
    %v176 = vld [vmem:[#allocation3 + $0x340] sm:$0xff]
    %v177 = vld [vmem:[#allocation3 + $0x348] sm:$0xff]
    %v178 = vld [vmem:[#allocation3 + $0x350] sm:$0xff]
    %v179 = vld [vmem:[#allocation3 + $0x358] sm:$0xff]
    %v180 = vld [vmem:[#allocation3 + $0x360] sm:$0xff]
    %v181 = vld [vmem:[#allocation3 + $0x368] sm:$0xff]
    %v182 = vld [vmem:[#allocation3 + $0x370] sm:$0xff]
    %v183 = vld [vmem:[#allocation3 + $0x378] sm:$0xff]
    %v184 = vld [vmem:[#allocation3 + $0x380] sm:$0xff]
    %v185 = vld [vmem:[#allocation3 + $0x388] sm:$0xff]
    %v186 = vld [vmem:[#allocation3 + $0x390] sm:$0xff]
    %v187 = vld [vmem:[#allocation3 + $0x398] sm:$0xff]
    %v188 = vld [vmem:[#allocation3 + $0x3a0] sm:$0xff]
    %v189 = vld [vmem:[#allocation3 + $0x3a8] sm:$0xff]
    %v190 = vld [vmem:[#allocation3 + $0x3b0] sm:$0xff]
    %v191 = vld [vmem:[#allocation3 + $0x3b8] sm:$0xff]
    %v192 = vld [vmem:[#allocation3 + $0x3c0] sm:$0xff]
    %v193 = vld [vmem:[#allocation3 + $0x3c8] sm:$0xff]
    %v194 = vld [vmem:[#allocation3 + $0x3d0] sm:$0xff]
    %v195 = vld [vmem:[#allocation3 + $0x3d8] sm:$0xff]
    %v196 = vld [vmem:[#allocation3 + $0x3e0] sm:$0xff]
    %v197 = vld [vmem:[#allocation3 + $0x3e8] sm:$0xff]
    %v198 = vld [vmem:[#allocation3 + $0x3f0] sm:$0xff]
    %v199 = vld [vmem:[#allocation3 + $0x3f8] sm:$0xff]
    %v200 = vld [vmem:[#allocation3 + $0x400] sm:$0xff]
    %v201 = vld [vmem:[#allocation3 + $0x408] sm:$0xff]
    %v202 = vld [vmem:[#allocation3 + $0x410] sm:$0xff]
    %v203 = vld [vmem:[#allocation3 + $0x418] sm:$0xff]
    %v204 = vld [vmem:[#allocation3 + $0x420] sm:$0xff]
    %v205 = vld [vmem:[#allocation3 + $0x428] sm:$0xff]
    %v206 = vld [vmem:[#allocation3 + $0x430] sm:$0xff]
    %v207 = vld [vmem:[#allocation3 + $0x438] sm:$0xff]
    %v208 = vld [vmem:[#allocation3 + $0x440] sm:$0xff]
    %v209 = vld [vmem:[#allocation3 + $0x448] sm:$0xff]
    %v210 = vld [vmem:[#allocation3 + $0x450] sm:$0xff]
    %v211 = vld [vmem:[#allocation3 + $0x458] sm:$0xff]
    %v212 = vld [vmem:[#allocation3 + $0x460] sm:$0xff]
    %v213 = vld [vmem:[#allocation3 + $0x468] sm:$0xff]
    %v214 = vld [vmem:[#allocation3 + $0x470] sm:$0xff]
    %v215 = vld [vmem:[#allocation3 + $0x478] sm:$0xff]
    %v216 = vld [vmem:[#allocation3 + $0x480] sm:$0xff]
    %v217 = vld [vmem:[#allocation3 + $0x488] sm:$0xff]
    %v218 = vld [vmem:[#allocation3 + $0x490] sm:$0xff]
    %v219 = vld [vmem:[#allocation3 + $0x498] sm:$0xff]
    %v220 = vld [vmem:[#allocation3 + $0x4a0] sm:$0xff]
    %v221 = vld [vmem:[#allocation3 + $0x4a8] sm:$0xff]
    %v222 = vld [vmem:[#allocation3 + $0x4b0] sm:$0xff]
    %v223 = vld [vmem:[#allocation3 + $0x4b8] sm:$0xff]
    %v224 = vld [vmem:[#allocation3 + $0x4c0] sm:$0xff]
    %v225 = vld [vmem:[#allocation3 + $0x4c8] sm:$0xff]
    %v226 = vld [vmem:[#allocation3 + $0x4d0] sm:$0xff]
    %v227 = vld [vmem:[#allocation3 + $0x4d8] sm:$0xff]
    %v228 = vld [vmem:[#allocation3 + $0x4e0] sm:$0xff]
    %v229 = vld [vmem:[#allocation3 + $0x4e8] sm:$0xff]
    %v230 = vld [vmem:[#allocation3 + $0x4f0] sm:$0xff]
    %v231 = vld [vmem:[#allocation3 + $0x4f8] sm:$0xff]
    %v232 = vld [vmem:[#allocation3 + $0x500] sm:$0xff]
    %v233 = vld [vmem:[#allocation3 + $0x508] sm:$0xff]
    %v234 = vld [vmem:[#allocation3 + $0x510] sm:$0xff]
    %v235 = vld [vmem:[#allocation3 + $0x518] sm:$0xff]
    %v236 = vld [vmem:[#allocation3 + $0x520] sm:$0xff]
    %v237 = vld [vmem:[#allocation3 + $0x528] sm:$0xff]
    %v238 = vld [vmem:[#allocation3 + $0x530] sm:$0xff]
    %v239 = vld [vmem:[#allocation3 + $0x538] sm:$0xff]
    %v240 = vld [vmem:[#allocation3 + $0x540] sm:$0xff]
    %v241 = vld [vmem:[#allocation3 + $0x548] sm:$0xff]
    %v242 = vld [vmem:[#allocation3 + $0x550] sm:$0xff]
    %v243 = vld [vmem:[#allocation3 + $0x558] sm:$0xff]
    %v244 = vld [vmem:[#allocation3 + $0x560] sm:$0xff]
    %v245 = vld [vmem:[#allocation3 + $0x568] sm:$0xff]
    %v246 = vld [vmem:[#allocation3 + $0x570] sm:$0xff]
    %v247 = vld [vmem:[#allocation3 + $0x578] sm:$0xff]
    %v248 = vld [vmem:[#allocation3 + $0x580] sm:$0xff]
    %v249 = vld [vmem:[#allocation3 + $0x588] sm:$0xff]
    %v250 = vld [vmem:[#allocation3 + $0x590] sm:$0xff]
    %v251 = vld [vmem:[#allocation3 + $0x598] sm:$0xff]
    %v252 = vld [vmem:[#allocation3 + $0x5a0] sm:$0xff]
    %v253 = vld [vmem:[#allocation3 + $0x5a8] sm:$0xff]
    %v254 = vld [vmem:[#allocation3 + $0x5b0] sm:$0xff]
    %v255 = vld [vmem:[#allocation3 + $0x5b8] sm:$0xff]
    %v256 = vld [vmem:[#allocation3 + $0x5c0] sm:$0xff]
    %v257 = vld [vmem:[#allocation3 + $0x5c8] sm:$0xff]
    %v258 = vld [vmem:[#allocation3 + $0x5d0] sm:$0xff]
    %v259 = vld [vmem:[#allocation3 + $0x5d8] sm:$0xff]
    %v260 = vld [vmem:[#allocation3 + $0x5e0] sm:$0xff]
    %v261 = vld [vmem:[#allocation3 + $0x5e8] sm:$0xff]
    %v262 = vld [vmem:[#allocation3 + $0x5f0] sm:$0xff]
    %v263 = vld [vmem:[#allocation3 + $0x5f8] sm:$0xff]
    %v264 = vld [vmem:[#allocation3 + $0x600] sm:$0xff]
    %v265 = vld [vmem:[#allocation3 + $0x608] sm:$0xff]
    %v266 = vld [vmem:[#allocation3 + $0x610] sm:$0xff]
    %v267 = vld [vmem:[#allocation3 + $0x618] sm:$0xff]
    %v268 = vld [vmem:[#allocation3 + $0x620] sm:$0xff]
    %v269 = vld [vmem:[#allocation3 + $0x628] sm:$0xff]
    %v270 = vld [vmem:[#allocation3 + $0x630] sm:$0xff]
    %v271 = vld [vmem:[#allocation3 + $0x638] sm:$0xff]
    %v272 = vld [vmem:[#allocation3 + $0x640] sm:$0xff]
    %v273 = vld [vmem:[#allocation3 + $0x648] sm:$0xff]
    %v274 = vld [vmem:[#allocation3 + $0x650] sm:$0xff]
    %v275 = vld [vmem:[#allocation3 + $0x658] sm:$0xff]
    %v276 = vld [vmem:[#allocation3 + $0x660] sm:$0xff]
    %v277 = vld [vmem:[#allocation3 + $0x668] sm:$0xff]
    %v278 = vld [vmem:[#allocation3 + $0x670] sm:$0xff]
    %v279 = vld [vmem:[#allocation3 + $0x678] sm:$0xff]
    %v280 = vld [vmem:[#allocation3 + $0x680] sm:$0xff]
    %v281 = vld [vmem:[#allocation3 + $0x688] sm:$0xff]
    %v282 = vld [vmem:[#allocation3 + $0x690] sm:$0xff]
    %v283 = vld [vmem:[#allocation3 + $0x698] sm:$0xff]
    %v284 = vld [vmem:[#allocation3 + $0x6a0] sm:$0xff]
    %v285 = vld [vmem:[#allocation3 + $0x6a8] sm:$0xff]
    %v286 = vld [vmem:[#allocation3 + $0x6b0] sm:$0xff]
    %v287 = vld [vmem:[#allocation3 + $0x6b8] sm:$0xff]
    %v288 = vld [vmem:[#allocation3 + $0x6c0] sm:$0xff]
    %v289 = vld [vmem:[#allocation3 + $0x6c8] sm:$0xff]
    %v290 = vld [vmem:[#allocation3 + $0x6d0] sm:$0xff]
    %v291 = vld [vmem:[#allocation3 + $0x6d8] sm:$0xff]
    %v292 = vld [vmem:[#allocation3 + $0x6e0] sm:$0xff]
    %v293 = vld [vmem:[#allocation3 + $0x6e8] sm:$0xff]
    %v294 = vld [vmem:[#allocation3 + $0x6f0] sm:$0xff]
    %v295 = vld [vmem:[#allocation3 + $0x6f8] sm:$0xff]
    %v296 = vld [vmem:[#allocation3 + $0x700] sm:$0xff]
    %v297 = vld [vmem:[#allocation3 + $0x708] sm:$0xff]
    %v298 = vld [vmem:[#allocation3 + $0x710] sm:$0xff]
    %v299 = vld [vmem:[#allocation3 + $0x718] sm:$0xff]
    %v300 = vld [vmem:[#allocation3 + $0x720] sm:$0xff]
    %v301 = vld [vmem:[#allocation3 + $0x728] sm:$0xff]
    %v302 = vld [vmem:[#allocation3 + $0x730] sm:$0xff]
    %v303 = vld [vmem:[#allocation3 + $0x738] sm:$0xff]
    %v304 = vld [vmem:[#allocation3 + $0x740] sm:$0xff]
    %v305 = vld [vmem:[#allocation3 + $0x748] sm:$0xff]
    %v306 = vld [vmem:[#allocation3 + $0x750] sm:$0xff]
    %v307 = vld [vmem:[#allocation3 + $0x758] sm:$0xff]
    %v308 = vld [vmem:[#allocation3 + $0x760] sm:$0xff]
    %v309 = vld [vmem:[#allocation3 + $0x768] sm:$0xff]
    %v310 = vld [vmem:[#allocation3 + $0x770] sm:$0xff]
    %v311 = vld [vmem:[#allocation3 + $0x778] sm:$0xff]
    %v312 = vld [vmem:[#allocation3 + $0x780] sm:$0xff]
    %v313 = vld [vmem:[#allocation3 + $0x788] sm:$0xff]
    %v314 = vld [vmem:[#allocation3 + $0x790] sm:$0xff]
    %v315 = vld [vmem:[#allocation3 + $0x798] sm:$0xff]
    %v316 = vld [vmem:[#allocation3 + $0x7a0] sm:$0xff]
    %v317 = vld [vmem:[#allocation3 + $0x7a8] sm:$0xff]
    %v318 = vld [vmem:[#allocation3 + $0x7b0] sm:$0xff]
    %v319 = vld [vmem:[#allocation3 + $0x7b8] sm:$0xff]
    %v320 = vld [vmem:[#allocation3 + $0x7c0] sm:$0xff]
    %v321 = vld [vmem:[#allocation3 + $0x7c8] sm:$0xff]
    %v322 = vld [vmem:[#allocation3 + $0x7d0] sm:$0xff]
    %v323 = vld [vmem:[#allocation3 + $0x7d8] sm:$0xff]
    %v324 = vld [vmem:[#allocation3 + $0x7e0] sm:$0xff]
    %v325 = vld [vmem:[#allocation3 + $0x7e8] sm:$0xff]
    %v326 = vld [vmem:[#allocation3 + $0x7f0] sm:$0xff]
    %v327 = vld [vmem:[#allocation3 + $0x7f8] sm:$0xff]
    %v328 = vld [vmem:[#allocation3 + $0x800] sm:$0xff]
    %v329 = vld [vmem:[#allocation3 + $0x808] sm:$0xff]
    %v330 = vld [vmem:[#allocation3 + $0x810] sm:$0xff]
    %v331 = vld [vmem:[#allocation3 + $0x818] sm:$0xff]
    %v332 = vld [vmem:[#allocation3 + $0x820] sm:$0xff]
    %v333 = vld [vmem:[#allocation3 + $0x828] sm:$0xff]
    %v334 = vld [vmem:[#allocation3 + $0x830] sm:$0xff]
    %v335 = vld [vmem:[#allocation3 + $0x838] sm:$0xff]
    %v336 = vld [vmem:[#allocation3 + $0x840] sm:$0xff]
    %v337 = vld [vmem:[#allocation3 + $0x848] sm:$0xff]
    %v338 = vld [vmem:[#allocation3 + $0x850] sm:$0xff]
    %v339 = vld [vmem:[#allocation3 + $0x858] sm:$0xff]
    %v340 = vld [vmem:[#allocation3 + $0x860] sm:$0xff]
    %v341 = vld [vmem:[#allocation3 + $0x868] sm:$0xff]
    %v342 = vld [vmem:[#allocation3 + $0x870] sm:$0xff]
    %v343 = vld [vmem:[#allocation3 + $0x878] sm:$0xff]
    %v344 = vld [vmem:[#allocation3 + $0x880] sm:$0xff]
    %v345 = vld [vmem:[#allocation3 + $0x888] sm:$0xff]
    %v346 = vld [vmem:[#allocation3 + $0x890] sm:$0xff]
    %v347 = vld [vmem:[#allocation3 + $0x898] sm:$0xff]
    %v348 = vld [vmem:[#allocation3 + $0x8a0] sm:$0xff]
    %v349 = vld [vmem:[#allocation3 + $0x8a8] sm:$0xff]
    %v350 = vld [vmem:[#allocation3 + $0x8b0] sm:$0xff]
    %v351 = vld [vmem:[#allocation3 + $0x8b8] sm:$0xff]
    %v352 = vld [vmem:[#allocation3 + $0x8c0] sm:$0xff]
    %v353 = vld [vmem:[#allocation3 + $0x8c8] sm:$0xff]
    %v354 = vld [vmem:[#allocation3 + $0x8d0] sm:$0xff]
    %v355 = vld [vmem:[#allocation3 + $0x8d8] sm:$0xff]
    %v356 = vld [vmem:[#allocation3 + $0x8e0] sm:$0xff]
    %v357 = vld [vmem:[#allocation3 + $0x8e8] sm:$0xff]
    %v358 = vld [vmem:[#allocation3 + $0x8f0] sm:$0xff]
    %v359 = vld [vmem:[#allocation3 + $0x8f8] sm:$0xff]
    %v360 = vld [vmem:[#allocation3 + $0x900] sm:$0xff]
    %v361 = vld [vmem:[#allocation3 + $0x908] sm:$0xff]
    %v362 = vld [vmem:[#allocation3 + $0x910] sm:$0xff]
    %v363 = vld [vmem:[#allocation3 + $0x918] sm:$0xff]
    %v364 = vld [vmem:[#allocation3 + $0x920] sm:$0xff]
    %v365 = vld [vmem:[#allocation3 + $0x928] sm:$0xff]
    %v366 = vld [vmem:[#allocation3 + $0x930] sm:$0xff]
    %v367 = vld [vmem:[#allocation3 + $0x938] sm:$0xff]
    %v368 = vld [vmem:[#allocation3 + $0x940] sm:$0xff]
    %v369 = vld [vmem:[#allocation3 + $0x948] sm:$0xff]
    %v370 = vld [vmem:[#allocation3 + $0x950] sm:$0xff]
    %v371 = vld [vmem:[#allocation3 + $0x958] sm:$0xff]
    %v372 = vld [vmem:[#allocation3 + $0x960] sm:$0xff]
    %v373 = vld [vmem:[#allocation3 + $0x968] sm:$0xff]
    %v374 = vld [vmem:[#allocation3 + $0x970] sm:$0xff]
    %v375 = vld [vmem:[#allocation3 + $0x978] sm:$0xff]
    %v376 = vld [vmem:[#allocation3 + $0x980] sm:$0xff]
    %v377 = vld [vmem:[#allocation3 + $0x988] sm:$0xff]
    %v378 = vld [vmem:[#allocation3 + $0x990] sm:$0xff]
    %v379 = vld [vmem:[#allocation3 + $0x998] sm:$0xff]
    %v380 = vld [vmem:[#allocation3 + $0x9a0] sm:$0xff]
    %v381 = vld [vmem:[#allocation3 + $0x9a8] sm:$0xff]
    %v382 = vld [vmem:[#allocation3 + $0x9b0] sm:$0xff]
    %v383 = vld [vmem:[#allocation3 + $0x9b8] sm:$0xff]
    %v384 = vld [vmem:[#allocation3 + $0x9c0] sm:$0xff]
    %v385 = vld [vmem:[#allocation3 + $0x9c8] sm:$0xff]
    %v386 = vld [vmem:[#allocation3 + $0x9d0] sm:$0xff]
    %v387 = vld [vmem:[#allocation3 + $0x9d8] sm:$0xff]
    %v388 = vld [vmem:[#allocation3 + $0x9e0] sm:$0xff]
    %v389 = vld [vmem:[#allocation3 + $0x9e8] sm:$0xff]
    %v390 = vld [vmem:[#allocation3 + $0x9f0] sm:$0xff]
    %v391 = vld [vmem:[#allocation3 + $0x9f8] sm:$0xff]
    %v392 = vld [vmem:[#allocation3 + $0xa00] sm:$0xff]
    %v393 = vld [vmem:[#allocation3 + $0xa08] sm:$0xff]
    %v394 = vld [vmem:[#allocation3 + $0xa10] sm:$0xff]
    %v395 = vld [vmem:[#allocation3 + $0xa18] sm:$0xff]
    %v396 = vld [vmem:[#allocation3 + $0xa20] sm:$0xff]
    %v397 = vld [vmem:[#allocation3 + $0xa28] sm:$0xff]
    %v398 = vld [vmem:[#allocation3 + $0xa30] sm:$0xff]
    %v399 = vld [vmem:[#allocation3 + $0xa38] sm:$0xff]
    %v400 = vld [vmem:[#allocation3 + $0xa40] sm:$0xff]
    %v401 = vld [vmem:[#allocation3 + $0xa48] sm:$0xff]
    %v402 = vld [vmem:[#allocation3 + $0xa50] sm:$0xff]
    %v403 = vld [vmem:[#allocation3 + $0xa58] sm:$0xff]
    %v404 = vld [vmem:[#allocation3 + $0xa60] sm:$0xff]
    %v405 = vld [vmem:[#allocation3 + $0xa68] sm:$0xff]
    %v406 = vld [vmem:[#allocation3 + $0xa70] sm:$0xff]
    %v407 = vld [vmem:[#allocation3 + $0xa78] sm:$0xff]
    %v408 = vld [vmem:[#allocation3 + $0xa80] sm:$0xff]
    %v409 = vld [vmem:[#allocation3 + $0xa88] sm:$0xff]
    %v410 = vld [vmem:[#allocation3 + $0xa90] sm:$0xff]
    %v411 = vld [vmem:[#allocation3 + $0xa98] sm:$0xff]
    %v412 = vld [vmem:[#allocation3 + $0xaa0] sm:$0xff]
    %v413 = vld [vmem:[#allocation3 + $0xaa8] sm:$0xff]
    %v414 = vld [vmem:[#allocation3 + $0xab0] sm:$0xff]
    %v415 = vld [vmem:[#allocation3 + $0xab8] sm:$0xff]
    %v416 = vld [vmem:[#allocation3 + $0xac0] sm:$0xff]
    %v417 = vld [vmem:[#allocation3 + $0xac8] sm:$0xff]
    %v418 = vld [vmem:[#allocation3 + $0xad0] sm:$0xff]
    %v419 = vld [vmem:[#allocation3 + $0xad8] sm:$0xff]
    %v420 = vld [vmem:[#allocation3 + $0xae0] sm:$0xff]
    %v421 = vld [vmem:[#allocation3 + $0xae8] sm:$0xff]
    %v422 = vld [vmem:[#allocation3 + $0xaf0] sm:$0xff]
    %v423 = vld [vmem:[#allocation3 + $0xaf8] sm:$0xff]
    %v424 = vld [vmem:[#allocation3 + $0xb00] sm:$0xff]
    %v425 = vld [vmem:[#allocation3 + $0xb08] sm:$0xff]
    %v426 = vld [vmem:[#allocation3 + $0xb10] sm:$0xff]
    %v427 = vld [vmem:[#allocation3 + $0xb18] sm:$0xff]
    %v428 = vld [vmem:[#allocation3 + $0xb20] sm:$0xff]
    %v429 = vld [vmem:[#allocation3 + $0xb28] sm:$0xff]
    %v430 = vld [vmem:[#allocation3 + $0xb30] sm:$0xff]
    %v431 = vld [vmem:[#allocation3 + $0xb38] sm:$0xff]
    %v432 = vld [vmem:[#allocation3 + $0xb40] sm:$0xff]
    %v433 = vld [vmem:[#allocation3 + $0xb48] sm:$0xff]
    %v434 = vld [vmem:[#allocation3 + $0xb50] sm:$0xff]
    %v435 = vld [vmem:[#allocation3 + $0xb58] sm:$0xff]
    %v436 = vld [vmem:[#allocation3 + $0xb60] sm:$0xff]
    %v437 = vld [vmem:[#allocation3 + $0xb68] sm:$0xff]
    %v438 = vld [vmem:[#allocation3 + $0xb70] sm:$0xff]
    %v439 = vld [vmem:[#allocation3 + $0xb78] sm:$0xff]
    %v440 = vld [vmem:[#allocation3 + $0xb80] sm:$0xff]
    %v441 = vld [vmem:[#allocation3 + $0xb88] sm:$0xff]
    %v442 = vld [vmem:[#allocation3 + $0xb90] sm:$0xff]
    %v443 = vld [vmem:[#allocation3 + $0xb98] sm:$0xff]
    %v444 = vld [vmem:[#allocation3 + $0xba0] sm:$0xff]
    %v445 = vld [vmem:[#allocation3 + $0xba8] sm:$0xff]
    %v446 = vld [vmem:[#allocation3 + $0xbb0] sm:$0xff]
    %v447 = vld [vmem:[#allocation3 + $0xbb8] sm:$0xff]
    %v448 = vld [vmem:[#allocation3 + $0xbc0] sm:$0xff]
    %v449 = vld [vmem:[#allocation3 + $0xbc8] sm:$0xff]
    %v450 = vld [vmem:[#allocation3 + $0xbd0] sm:$0xff]
    %v451 = vld [vmem:[#allocation3 + $0xbd8] sm:$0xff]
    %v452 = vld [vmem:[#allocation3 + $0xbe0] sm:$0xff]
    %v453 = vld [vmem:[#allocation3 + $0xbe8] sm:$0xff]
    %v454 = vld [vmem:[#allocation3 + $0xbf0] sm:$0xff]
    %v455 = vld [vmem:[#allocation3 + $0xbf8] sm:$0xff]
    %v456 = vld [vmem:[#allocation3 + $0xc00] sm:$0xff]
    %v457 = vld [vmem:[#allocation3 + $0xc08] sm:$0xff]
    %v458 = vld [vmem:[#allocation3 + $0xc10] sm:$0xff]
    %v459 = vld [vmem:[#allocation3 + $0xc18] sm:$0xff]
    %v460 = vld [vmem:[#allocation3 + $0xc20] sm:$0xff]
    %v461 = vld [vmem:[#allocation3 + $0xc28] sm:$0xff]
    %v462 = vld [vmem:[#allocation3 + $0xc30] sm:$0xff]
    %v463 = vld [vmem:[#allocation3 + $0xc38] sm:$0xff]
    %v464 = vld [vmem:[#allocation3 + $0xc40] sm:$0xff]
    %v465 = vld [vmem:[#allocation3 + $0xc48] sm:$0xff]
    %v466 = vld [vmem:[#allocation3 + $0xc50] sm:$0xff]
    %v467 = vld [vmem:[#allocation3 + $0xc58] sm:$0xff]
    %v468 = vld [vmem:[#allocation3 + $0xc60] sm:$0xff]
    %v469 = vld [vmem:[#allocation3 + $0xc68] sm:$0xff]
    %v470 = vld [vmem:[#allocation3 + $0xc70] sm:$0xff]
    %v471 = vld [vmem:[#allocation3 + $0xc78] sm:$0xff]
    %v472 = vld [vmem:[#allocation5] sm:$0x3]
    %v474 = vlaneseq
    %v475 = vshrl.u32 %v474, 7
    %v476 = vsub.s32 0, %v475
    %v477 = vrot.slane %v472, %v476
    %v478 = vlaneseq
    %v479 = vshrl.u32 %v478, 7
    %v480 = vsub.s32 1, %v479
    %v481 = vrot.slane %v472, %v480
    %v491 = vcombine.high %v65, %v65
    %v492 = vcombine.high %v66, %v66
    %v493 = vcombine.high %v67, %v67
    %v494 = vcombine.high %v68, %v68
    %v495 = vcombine.high %v69, %v69
    %v496 = vcombine.high %v70, %v70
    %vm503 = vcmask 523264
    %v504 = vsel %vm503, %v71, 0
    %506 = vmatprep.subr.mxu0 %v73
    %507 = vmatpush1.msra.mxu0 %v72
    %508 = vmatprep.subr.mxu0 %v75
    %509 = vmatpush1.msra.mxu0 %v74
    %510 = vmatprep.subr.mxu0 %v77
    %511 = vmatpush1.msra.mxu0 %v76
    %512 = vmatprep.subr.mxu0 %v79
    %513 = vmatpush1.msra.mxu0 %v78
    %514 = vmatprep.subr.mxu0 %v81
    %515 = vmatpush1.msra.mxu0 %v80
    %516 = vmatprep.subr.mxu0 %v83
    %517 = vmatpush1.msra.mxu0 %v82
    %518 = vmatprep.subr.mxu0 %v85
    %519 = vmatpush1.msra.mxu0 %v84
    %520 = vmatprep.subr.mxu0 %v87
    %521 = vmatpush1.msra.mxu0 %v86
    %522 = vmatprep.subr.mxu0 %v89
    %523 = vmatpush1.msra.mxu0 %v88
    %524 = vmatprep.subr.mxu0 %v91
    %525 = vmatpush1.msra.mxu0 %v90
    %526 = vmatprep.subr.mxu0 %v93
    %527 = vmatpush1.msra.mxu0 %v92
    %528 = vmatprep.subr.mxu0 %v95
    %529 = vmatpush1.msra.mxu0 %v94
    %530 = vmatprep.subr.mxu0 %v97
    %531 = vmatpush1.msra.mxu0 %v96
    %532 = vmatprep.subr.mxu0 %v99
    %533 = vmatpush1.msra.mxu0 %v98
    %534 = vmatprep.subr.mxu0 %v101
    %535 = vmatpush1.msra.mxu0 %v100
    %536 = vmatprep.subr.mxu0 %v103
    %537 = vmatpush1.msra.mxu0 %v102
    %538 = vmatprep.subr.mxu0 %v105
    %539 = vmatpush1.msra.mxu0 %v104
    %540 = vmatprep.subr.mxu0 %v107
    %541 = vmatpush1.msra.mxu0 %v106
    %542 = vmatprep.subr.mxu0 %v109
    %543 = vmatpush1.msra.mxu0 %v108
    %544 = vmatprep.subr.mxu0 %v111
    %545 = vmatpush1.msra.mxu0 %v110
    %546 = vmatprep.subr.mxu0 %v113
    %547 = vmatpush1.msra.mxu0 %v112
    %548 = vmatprep.subr.mxu0 %v115
    %549 = vmatpush1.msra.mxu0 %v114
    %550 = vmatprep.subr.mxu0 %v117
    %551 = vmatpush1.msra.mxu0 %v116
    %552 = vmatprep.subr.mxu0 %v119
    %553 = vmatpush1.msra.mxu0 %v118
    %554 = vmatprep.subr.mxu0 %v121
    %555 = vmatpush1.msra.mxu0 %v120
    %556 = vmatprep.subr.mxu0 %v123
    %557 = vmatpush1.msra.mxu0 %v122
    %558 = vmatprep.subr.mxu0 %v125
    %559 = vmatpush1.msra.mxu0 %v124
    %560 = vmatprep.subr.mxu0 %v127
    %561 = vmatpush1.msra.mxu0 %v126
    %562 = vmatprep.subr.mxu0 %v129
    %563 = vmatpush1.msra.mxu0 %v128
    %564 = vmatprep.subr.mxu0 %v131
    %565 = vmatpush1.msra.mxu0 %v130
    %566 = vmatprep.subr.mxu0 %v133
    %567 = vmatpush1.msra.mxu0 %v132
    %568 = vmatprep.subr.mxu0 %v135
    %569 = vmatpush1.msra.mxu0 %v134
    %570 = vmatprep.mubr.f32.mxu0 %v491
    %571 = vmatmul.mubr.f32.gmra.mrb[0].mxu0 %v65
    %v572 = vpop.f32.mrb[0].mxu0
    %v573 = vadd.f32 %v477, %v572
    %v574 = vpop.f32.mrb[0].mxu0
    %v575 = vadd.f32 %v481, %v574
    %576 = vdwg.mxu0
    %577 = vmatprep.subr.mxu0 %v137
    %578 = vmatpush1.msra.mxu0 %v136
    %579 = vmatprep.subr.mxu0 %v139
    %580 = vmatpush1.msra.mxu0 %v138
    %581 = vmatprep.subr.mxu0 %v141
    %582 = vmatpush1.msra.mxu0 %v140
    %583 = vmatprep.subr.mxu0 %v143
    %584 = vmatpush1.msra.mxu0 %v142
    %585 = vmatprep.subr.mxu0 %v145
    %586 = vmatpush1.msra.mxu0 %v144
    %587 = vmatprep.subr.mxu0 %v147
    %588 = vmatpush1.msra.mxu0 %v146
    %589 = vmatprep.subr.mxu0 %v149
    %590 = vmatpush1.msra.mxu0 %v148
    %591 = vmatprep.subr.mxu0 %v151
    %592 = vmatpush1.msra.mxu0 %v150
    %593 = vmatprep.subr.mxu0 %v153
    %594 = vmatpush1.msra.mxu0 %v152
    %595 = vmatprep.subr.mxu0 %v155
    %596 = vmatpush1.msra.mxu0 %v154
    %597 = vmatprep.subr.mxu0 %v157
    %598 = vmatpush1.msra.mxu0 %v156
    %599 = vmatprep.subr.mxu0 %v159
    %600 = vmatpush1.msra.mxu0 %v158
    %601 = vmatprep.subr.mxu0 %v161
    %602 = vmatpush1.msra.mxu0 %v160
    %603 = vmatprep.subr.mxu0 %v163
    %604 = vmatpush1.msra.mxu0 %v162
    %605 = vmatprep.subr.mxu0 %v165
    %606 = vmatpush1.msra.mxu0 %v164
    %607 = vmatprep.subr.mxu0 %v167
    %608 = vmatpush1.msra.mxu0 %v166
    %609 = vmatprep.subr.mxu0 %v169
    %610 = vmatpush1.msra.mxu0 %v168
    %611 = vmatprep.subr.mxu0 %v171
    %612 = vmatpush1.msra.mxu0 %v170
    %613 = vmatprep.subr.mxu0 %v173
    %614 = vmatpush1.msra.mxu0 %v172
    %615 = vmatprep.subr.mxu0 %v175
    %616 = vmatpush1.msra.mxu0 %v174
    %617 = vmatprep.subr.mxu0 %v177
    %618 = vmatpush1.msra.mxu0 %v176
    %619 = vmatprep.subr.mxu0 %v179
    %620 = vmatpush1.msra.mxu0 %v178
    %621 = vmatprep.subr.mxu0 %v181
    %622 = vmatpush1.msra.mxu0 %v180
    %623 = vmatprep.subr.mxu0 %v183
    %624 = vmatpush1.msra.mxu0 %v182
    %625 = vmatprep.subr.mxu0 %v185
    %626 = vmatpush1.msra.mxu0 %v184
    %627 = vmatprep.subr.mxu0 %v187
    %628 = vmatpush1.msra.mxu0 %v186
    %629 = vmatprep.subr.mxu0 %v189
    %630 = vmatpush1.msra.mxu0 %v188
    %631 = vmatprep.subr.mxu0 %v191
    %632 = vmatpush1.msra.mxu0 %v190
    %633 = vmatprep.subr.mxu0 %v193
    %634 = vmatpush1.msra.mxu0 %v192
    %635 = vmatprep.subr.mxu0 %v195
    %636 = vmatpush1.msra.mxu0 %v194
    %637 = vmatprep.subr.mxu0 %v197
    %638 = vmatpush1.msra.mxu0 %v196
    %639 = vmatprep.subr.mxu0 %v199
    %640 = vmatpush1.msra.mxu0 %v198
    %641 = vmatprep.mubr.f32.mxu0 %v492
    %642 = vmatmul.mubr.f32.gmra.mrb[0].mxu0 %v66
    %v643 = vpop.f32.mrb[0].mxu0
    %v644 = vadd.f32 %v573, %v643
    %v645 = vpop.f32.mrb[0].mxu0
    %v646 = vadd.f32 %v575, %v645
    %647 = vdwg.mxu0
    %648 = vmatprep.subr.mxu0 %v201
    %649 = vmatpush1.msra.mxu0 %v200
    %650 = vmatprep.subr.mxu0 %v203
    %651 = vmatpush1.msra.mxu0 %v202
    %652 = vmatprep.subr.mxu0 %v205
    %653 = vmatpush1.msra.mxu0 %v204
    %654 = vmatprep.subr.mxu0 %v207
    %655 = vmatpush1.msra.mxu0 %v206
    %656 = vmatprep.subr.mxu0 %v209
    %657 = vmatpush1.msra.mxu0 %v208
    %658 = vmatprep.subr.mxu0 %v211
    %659 = vmatpush1.msra.mxu0 %v210
    %660 = vmatprep.subr.mxu0 %v213
    %661 = vmatpush1.msra.mxu0 %v212
    %662 = vmatprep.subr.mxu0 %v215
    %663 = vmatpush1.msra.mxu0 %v214
    %664 = vmatprep.subr.mxu0 %v217
    %665 = vmatpush1.msra.mxu0 %v216
    %666 = vmatprep.subr.mxu0 %v219
    %667 = vmatpush1.msra.mxu0 %v218
    %668 = vmatprep.subr.mxu0 %v221
    %669 = vmatpush1.msra.mxu0 %v220
    %670 = vmatprep.subr.mxu0 %v223
    %671 = vmatpush1.msra.mxu0 %v222
    %672 = vmatprep.subr.mxu0 %v225
    %673 = vmatpush1.msra.mxu0 %v224
    %674 = vmatprep.subr.mxu0 %v227
    %675 = vmatpush1.msra.mxu0 %v226
    %676 = vmatprep.subr.mxu0 %v229
    %677 = vmatpush1.msra.mxu0 %v228
    %678 = vmatprep.subr.mxu0 %v231
    %679 = vmatpush1.msra.mxu0 %v230
    %680 = vmatprep.subr.mxu0 %v233
    %681 = vmatpush1.msra.mxu0 %v232
    %682 = vmatprep.subr.mxu0 %v235
    %683 = vmatpush1.msra.mxu0 %v234
    %684 = vmatprep.subr.mxu0 %v237
    %685 = vmatpush1.msra.mxu0 %v236
    %686 = vmatprep.subr.mxu0 %v239
    %687 = vmatpush1.msra.mxu0 %v238
    %688 = vmatprep.subr.mxu0 %v241
    %689 = vmatpush1.msra.mxu0 %v240
    %690 = vmatprep.subr.mxu0 %v243
    %691 = vmatpush1.msra.mxu0 %v242
    %692 = vmatprep.subr.mxu0 %v245
    %693 = vmatpush1.msra.mxu0 %v244
    %694 = vmatprep.subr.mxu0 %v247
    %695 = vmatpush1.msra.mxu0 %v246
    %696 = vmatprep.subr.mxu0 %v249
    %697 = vmatpush1.msra.mxu0 %v248
    %698 = vmatprep.subr.mxu0 %v251
    %699 = vmatpush1.msra.mxu0 %v250
    %700 = vmatprep.subr.mxu0 %v253
    %701 = vmatpush1.msra.mxu0 %v252
    %702 = vmatprep.subr.mxu0 %v255
    %703 = vmatpush1.msra.mxu0 %v254
    %704 = vmatprep.subr.mxu0 %v257
    %705 = vmatpush1.msra.mxu0 %v256
    %706 = vmatprep.subr.mxu0 %v259
    %707 = vmatpush1.msra.mxu0 %v258
    %708 = vmatprep.subr.mxu0 %v261
    %709 = vmatpush1.msra.mxu0 %v260
    %710 = vmatprep.subr.mxu0 %v263
    %711 = vmatpush1.msra.mxu0 %v262
    %712 = vmatprep.mubr.f32.mxu0 %v493
    %713 = vmatmul.mubr.f32.gmra.mrb[0].mxu0 %v67
    %v714 = vpop.f32.mrb[0].mxu0
    %v715 = vadd.f32 %v644, %v714
    %v716 = vpop.f32.mrb[0].mxu0
    %v717 = vadd.f32 %v646, %v716
    %718 = vdwg.mxu0
    %719 = vmatprep.subr.mxu0 %v265
    %720 = vmatpush1.msra.mxu0 %v264
    %721 = vmatprep.subr.mxu0 %v267
    %722 = vmatpush1.msra.mxu0 %v266
    %723 = vmatprep.subr.mxu0 %v269
    %724 = vmatpush1.msra.mxu0 %v268
    %725 = vmatprep.subr.mxu0 %v271
    %726 = vmatpush1.msra.mxu0 %v270
    %727 = vmatprep.subr.mxu0 %v273
    %728 = vmatpush1.msra.mxu0 %v272
    %729 = vmatprep.subr.mxu0 %v275
    %730 = vmatpush1.msra.mxu0 %v274
    %731 = vmatprep.subr.mxu0 %v277
    %732 = vmatpush1.msra.mxu0 %v276
    %733 = vmatprep.subr.mxu0 %v279
    %734 = vmatpush1.msra.mxu0 %v278
    %735 = vmatprep.subr.mxu0 %v281
    %736 = vmatpush1.msra.mxu0 %v280
    %737 = vmatprep.subr.mxu0 %v283
    %738 = vmatpush1.msra.mxu0 %v282
    %739 = vmatprep.subr.mxu0 %v285
    %740 = vmatpush1.msra.mxu0 %v284
    %741 = vmatprep.subr.mxu0 %v287
    %742 = vmatpush1.msra.mxu0 %v286
    %743 = vmatprep.subr.mxu0 %v289
    %744 = vmatpush1.msra.mxu0 %v288
    %745 = vmatprep.subr.mxu0 %v291
    %746 = vmatpush1.msra.mxu0 %v290
    %747 = vmatprep.subr.mxu0 %v293
    %748 = vmatpush1.msra.mxu0 %v292
    %749 = vmatprep.subr.mxu0 %v295
    %750 = vmatpush1.msra.mxu0 %v294
    %751 = vmatprep.subr.mxu0 %v297
    %752 = vmatpush1.msra.mxu0 %v296
    %753 = vmatprep.subr.mxu0 %v299
    %754 = vmatpush1.msra.mxu0 %v298
    %755 = vmatprep.subr.mxu0 %v301
    %756 = vmatpush1.msra.mxu0 %v300
    %757 = vmatprep.subr.mxu0 %v303
    %758 = vmatpush1.msra.mxu0 %v302
    %759 = vmatprep.subr.mxu0 %v305
    %760 = vmatpush1.msra.mxu0 %v304
    %761 = vmatprep.subr.mxu0 %v307
    %762 = vmatpush1.msra.mxu0 %v306
    %763 = vmatprep.subr.mxu0 %v309
    %764 = vmatpush1.msra.mxu0 %v308
    %765 = vmatprep.subr.mxu0 %v311
    %766 = vmatpush1.msra.mxu0 %v310
    %767 = vmatprep.subr.mxu0 %v313
    %768 = vmatpush1.msra.mxu0 %v312
    %769 = vmatprep.subr.mxu0 %v315
    %770 = vmatpush1.msra.mxu0 %v314
    %771 = vmatprep.subr.mxu0 %v317
    %772 = vmatpush1.msra.mxu0 %v316
    %773 = vmatprep.subr.mxu0 %v319
    %774 = vmatpush1.msra.mxu0 %v318
    %775 = vmatprep.subr.mxu0 %v321
    %776 = vmatpush1.msra.mxu0 %v320
    %777 = vmatprep.subr.mxu0 %v323
    %778 = vmatpush1.msra.mxu0 %v322
    %779 = vmatprep.subr.mxu0 %v325
    %780 = vmatpush1.msra.mxu0 %v324
    %781 = vmatprep.subr.mxu0 %v327
    %782 = vmatpush1.msra.mxu0 %v326
    %783 = vmatprep.mubr.f32.mxu0 %v494
    %784 = vmatmul.mubr.f32.gmra.mrb[0].mxu0 %v68
    %v785 = vpop.f32.mrb[0].mxu0
    %v786 = vadd.f32 %v715, %v785
    %v787 = vpop.f32.mrb[0].mxu0
    %v788 = vadd.f32 %v717, %v787
    %789 = vdwg.mxu0
    %790 = vmatprep.subr.mxu0 %v329
    %791 = vmatpush1.msra.mxu0 %v328
    %792 = vmatprep.subr.mxu0 %v331
    %793 = vmatpush1.msra.mxu0 %v330
    %794 = vmatprep.subr.mxu0 %v333
    %795 = vmatpush1.msra.mxu0 %v332
    %796 = vmatprep.subr.mxu0 %v335
    %797 = vmatpush1.msra.mxu0 %v334
    %798 = vmatprep.subr.mxu0 %v337
    %799 = vmatpush1.msra.mxu0 %v336
    %800 = vmatprep.subr.mxu0 %v339
    %801 = vmatpush1.msra.mxu0 %v338
    %802 = vmatprep.subr.mxu0 %v341
    %803 = vmatpush1.msra.mxu0 %v340
    %804 = vmatprep.subr.mxu0 %v343
    %805 = vmatpush1.msra.mxu0 %v342
    %806 = vmatprep.subr.mxu0 %v345
    %807 = vmatpush1.msra.mxu0 %v344
    %808 = vmatprep.subr.mxu0 %v347
    %809 = vmatpush1.msra.mxu0 %v346
    %810 = vmatprep.subr.mxu0 %v349
    %811 = vmatpush1.msra.mxu0 %v348
    %812 = vmatprep.subr.mxu0 %v351
    %813 = vmatpush1.msra.mxu0 %v350
    %814 = vmatprep.subr.mxu0 %v353
    %815 = vmatpush1.msra.mxu0 %v352
    %816 = vmatprep.subr.mxu0 %v355
    %817 = vmatpush1.msra.mxu0 %v354
    %818 = vmatprep.subr.mxu0 %v357
    %819 = vmatpush1.msra.mxu0 %v356
    %820 = vmatprep.subr.mxu0 %v359
    %821 = vmatpush1.msra.mxu0 %v358
    %822 = vmatprep.subr.mxu0 %v361
    %823 = vmatpush1.msra.mxu0 %v360
    %824 = vmatprep.subr.mxu0 %v363
    %825 = vmatpush1.msra.mxu0 %v362
    %826 = vmatprep.subr.mxu0 %v365
    %827 = vmatpush1.msra.mxu0 %v364
    %828 = vmatprep.subr.mxu0 %v367
    %829 = vmatpush1.msra.mxu0 %v366
    %830 = vmatprep.subr.mxu0 %v369
    %831 = vmatpush1.msra.mxu0 %v368
    %832 = vmatprep.subr.mxu0 %v371
    %833 = vmatpush1.msra.mxu0 %v370
    %834 = vmatprep.subr.mxu0 %v373
    %835 = vmatpush1.msra.mxu0 %v372
    %836 = vmatprep.subr.mxu0 %v375
    %837 = vmatpush1.msra.mxu0 %v374
    %838 = vmatprep.subr.mxu0 %v377
    %839 = vmatpush1.msra.mxu0 %v376
    %840 = vmatprep.subr.mxu0 %v379
    %841 = vmatpush1.msra.mxu0 %v378
    %842 = vmatprep.subr.mxu0 %v381
    %843 = vmatpush1.msra.mxu0 %v380
    %844 = vmatprep.subr.mxu0 %v383
    %845 = vmatpush1.msra.mxu0 %v382
    %846 = vmatprep.subr.mxu0 %v385
    %847 = vmatpush1.msra.mxu0 %v384
    %848 = vmatprep.subr.mxu0 %v387
    %849 = vmatpush1.msra.mxu0 %v386
    %850 = vmatprep.subr.mxu0 %v389
    %851 = vmatpush1.msra.mxu0 %v388
    %852 = vmatprep.subr.mxu0 %v391
    %853 = vmatpush1.msra.mxu0 %v390
    %854 = vmatprep.mubr.f32.mxu0 %v495
    %855 = vmatmul.mubr.f32.gmra.mrb[0].mxu0 %v69
    %v856 = vpop.f32.mrb[0].mxu0
    %v857 = vadd.f32 %v786, %v856
    %v858 = vpop.f32.mrb[0].mxu0
    %v859 = vadd.f32 %v788, %v858
    %860 = vdwg.mxu0
    %861 = vmatprep.subr.mxu0 %v393
    %862 = vmatpush1.msra.mxu0 %v392
    %863 = vmatprep.subr.mxu0 %v395
    %864 = vmatpush1.msra.mxu0 %v394
    %865 = vmatprep.subr.mxu0 %v397
    %866 = vmatpush1.msra.mxu0 %v396
    %867 = vmatprep.subr.mxu0 %v399
    %868 = vmatpush1.msra.mxu0 %v398
    %869 = vmatprep.subr.mxu0 %v401
    %870 = vmatpush1.msra.mxu0 %v400
    %871 = vmatprep.subr.mxu0 %v403
    %872 = vmatpush1.msra.mxu0 %v402
    %873 = vmatprep.subr.mxu0 %v405
    %874 = vmatpush1.msra.mxu0 %v404
    %875 = vmatprep.subr.mxu0 %v407
    %876 = vmatpush1.msra.mxu0 %v406
    %877 = vmatprep.subr.mxu0 %v409
    %878 = vmatpush1.msra.mxu0 %v408
    %879 = vmatprep.subr.mxu0 %v411
    %880 = vmatpush1.msra.mxu0 %v410
    %881 = vmatprep.subr.mxu0 %v413
    %882 = vmatpush1.msra.mxu0 %v412
    %883 = vmatprep.subr.mxu0 %v415
    %884 = vmatpush1.msra.mxu0 %v414
    %885 = vmatprep.subr.mxu0 %v417
    %886 = vmatpush1.msra.mxu0 %v416
    %887 = vmatprep.subr.mxu0 %v419
    %888 = vmatpush1.msra.mxu0 %v418
    %889 = vmatprep.subr.mxu0 %v421
    %890 = vmatpush1.msra.mxu0 %v420
    %891 = vmatprep.subr.mxu0 %v423
    %892 = vmatpush1.msra.mxu0 %v422
    %893 = vmatprep.subr.mxu0 %v425
    %894 = vmatpush1.msra.mxu0 %v424
    %895 = vmatprep.subr.mxu0 %v427
    %896 = vmatpush1.msra.mxu0 %v426
    %897 = vmatprep.subr.mxu0 %v429
    %898 = vmatpush1.msra.mxu0 %v428
    %899 = vmatprep.subr.mxu0 %v431
    %900 = vmatpush1.msra.mxu0 %v430
    %901 = vmatprep.subr.mxu0 %v433
    %902 = vmatpush1.msra.mxu0 %v432
    %903 = vmatprep.subr.mxu0 %v435
    %904 = vmatpush1.msra.mxu0 %v434
    %905 = vmatprep.subr.mxu0 %v437
    %906 = vmatpush1.msra.mxu0 %v436
    %907 = vmatprep.subr.mxu0 %v439
    %908 = vmatpush1.msra.mxu0 %v438
    %909 = vmatprep.subr.mxu0 %v441
    %910 = vmatpush1.msra.mxu0 %v440
    %911 = vmatprep.subr.mxu0 %v443
    %912 = vmatpush1.msra.mxu0 %v442
    %913 = vmatprep.subr.mxu0 %v445
    %914 = vmatpush1.msra.mxu0 %v444
    %915 = vmatprep.subr.mxu0 %v447
    %916 = vmatpush1.msra.mxu0 %v446
    %917 = vmatprep.subr.mxu0 %v449
    %918 = vmatpush1.msra.mxu0 %v448
    %919 = vmatprep.subr.mxu0 %v451
    %920 = vmatpush1.msra.mxu0 %v450
    %921 = vmatprep.subr.mxu0 %v453
    %922 = vmatpush1.msra.mxu0 %v452
    %923 = vmatprep.subr.mxu0 %v455
    %924 = vmatpush1.msra.mxu0 %v454
    %925 = vmatprep.mubr.f32.mxu0 %v496
    %926 = vmatmul.mubr.f32.gmra.mrb[0].mxu0 %v70
    %v927 = vpop.f32.mrb[0].mxu0
    %v928 = vadd.f32 %v857, %v927
    %v929 = vpop.f32.mrb[0].mxu0
    %v930 = vadd.f32 %v859, %v929
    %931 = vdwg.mxu0
    %932 = vmatprep.subr.mxu0 %v457
    %933 = vmatpush1.msra.mxu0 %v456
    %934 = vmatprep.subr.mxu0 %v459
    %935 = vmatpush1.msra.mxu0 %v458
    %936 = vmatprep.subr.mxu0 %v461
    %937 = vmatpush1.msra.mxu0 %v460
    %938 = vmatprep.subr.mxu0 %v463
    %939 = vmatpush1.msra.mxu0 %v462
    %940 = vmatprep.subr.mxu0 %v465
    %941 = vmatpush1.msra.mxu0 %v464
    %942 = vmatprep.subr.mxu0 %v467
    %943 = vmatpush1.msra.mxu0 %v466
    %944 = vmatprep.subr.mxu0 %v469
    %945 = vmatpush1.msra.mxu0 %v468
    %946 = vmatprep.subr.mxu0 %v471
    %947 = vmatpush1.msra.mxu0 %v470
    %948 = vmatprep.subr.mxu0 0.0
    %949 = vmatpush1.msra.mxu0 0.0
    %950 = vmatprep.subr.mxu0 0.0
    %951 = vmatpush1.msra.mxu0 0.0
    %952 = vmatprep.subr.mxu0 0.0
    %953 = vmatpush1.msra.mxu0 0.0
    %954 = vmatprep.subr.mxu0 0.0
    %955 = vmatpush1.msra.mxu0 0.0
    %956 = vmatprep.subr.mxu0 0.0
    %957 = vmatpush1.msra.mxu0 0.0
    %958 = vmatprep.subr.mxu0 0.0
    %959 = vmatpush1.msra.mxu0 0.0
    %960 = vmatprep.subr.mxu0 0.0
    %961 = vmatpush1.msra.mxu0 0.0
    %962 = vmatprep.subr.mxu0 0.0
    %963 = vmatpush1.msra.mxu0 0.0
    %964 = vmatprep.subr.mxu0 0.0
    %965 = vmatpush1.msra.mxu0 0.0
    %966 = vmatprep.subr.mxu0 0.0
    %967 = vmatpush1.msra.mxu0 0.0
    %968 = vmatprep.subr.mxu0 0.0
    %969 = vmatpush1.msra.mxu0 0.0
    %970 = vmatprep.subr.mxu0 0.0
    %971 = vmatpush1.msra.mxu0 0.0
    %972 = vmatprep.subr.mxu0 0.0
    %973 = vmatpush1.msra.mxu0 0.0
    %974 = vmatprep.subr.mxu0 0.0
    %975 = vmatpush1.msra.mxu0 0.0
    %976 = vmatprep.subr.mxu0 0.0
    %977 = vmatpush1.msra.mxu0 0.0
    %978 = vmatprep.subr.mxu0 0.0
    %979 = vmatpush1.msra.mxu0 0.0
    %980 = vmatprep.subr.mxu0 0.0
    %981 = vmatpush1.msra.mxu0 0.0
    %982 = vmatprep.subr.mxu0 0.0
    %983 = vmatpush1.msra.mxu0 0.0
    %984 = vmatprep.subr.mxu0 0.0
    %985 = vmatpush1.msra.mxu0 0.0
    %986 = vmatprep.subr.mxu0 0.0
    %987 = vmatpush1.msra.mxu0 0.0
    %988 = vmatprep.subr.mxu0 0.0
    %989 = vmatpush1.msra.mxu0 0.0
    %990 = vmatprep.subr.mxu0 0.0
    %991 = vmatpush1.msra.mxu0 0.0
    %992 = vmatprep.subr.mxu0 0.0
    %993 = vmatpush1.msra.mxu0 0.0
    %994 = vmatprep.subr.mxu0 0.0
    %995 = vmatpush1.msra.mxu0 0.0
    %996 = vmatprep.mubr.f32.mxu0 0.0
    %997 = vmatmul.mubr.f32.gmra.mrb[0].mxu0 %v504
    %v998 = vpop.f32.mrb[0].mxu0
    %v999 = vadd.f32 %v928, %v998
    %v1000 = vpop.f32.mrb[0].mxu0
    %v1001 = vadd.f32 %v930, %v1000
    %1002 = vdwg.mxu0
    %v1003 = vmax.f32 %v999, 0.0
    %v1004 = vmax.f32 %v1001, 0.0
    %v1005 = vld [vmem:[%s3] sm:$0xff]
    %v1006 = vld [vmem:[%s3 + $0x8] sm:$0xff]
    %v1007 = vld [vmem:[%s3 + $0x10] sm:$0xff]
    %v1008 = vld [vmem:[%s3 + $0x18] sm:$0xff]
    %v1009 = vld [vmem:[%s3 + $0x20] sm:$0xff]
    %v1010 = vld [vmem:[%s3 + $0x28] sm:$0xff]
    %v1011 = vld [vmem:[%s3 + $0x30] sm:$0xff]
    %v1012 = vld [vmem:[%s3 + $0x38] sm:$0xff]
    %v1013 = vld [vmem:[%s3 + $0x40] sm:$0xff]
    %v1014 = vld [vmem:[%s3 + $0x48] sm:$0xff]
    %v1015 = vld [vmem:[%s3 + $0x50] sm:$0xff]
    %v1016 = vld [vmem:[%s3 + $0x58] sm:$0xff]
    %v1017 = vld [vmem:[%s3 + $0x60] sm:$0xff]
    %v1018 = vld [vmem:[%s3 + $0x68] sm:$0xff]
    %v1019 = vld [vmem:[%s3 + $0x70] sm:$0xff]
    %v1020 = vld [vmem:[%s3 + $0x78] sm:$0xff]
    %v1021 = vld [vmem:[%s3 + $0x80] sm:$0xff]
    %v1022 = vld [vmem:[%s3 + $0x88] sm:$0xff]
    %v1023 = vld [vmem:[%s3 + $0x90] sm:$0xff]
    %v1024 = vld [vmem:[%s3 + $0x98] sm:$0xff]
    %v1025 = vld [vmem:[%s3 + $0xa0] sm:$0xff]
    %v1026 = vld [vmem:[%s3 + $0xa8] sm:$0xff]
    %v1027 = vld [vmem:[%s3 + $0xb0] sm:$0xff]
    %v1028 = vld [vmem:[%s3 + $0xb8] sm:$0xff]
    %v1029 = vld [vmem:[%s3 + $0xc0] sm:$0xff]
    %v1030 = vld [vmem:[%s3 + $0xc8] sm:$0xff]
    %v1031 = vld [vmem:[%s3 + $0xd0] sm:$0xff]
    %v1032 = vld [vmem:[%s3 + $0xd8] sm:$0xff]
    %v1033 = vld [vmem:[%s3 + $0xe0] sm:$0xff]
    %v1034 = vld [vmem:[%s3 + $0xe8] sm:$0xff]
    %v1035 = vld [vmem:[%s3 + $0xf0] sm:$0xff]
    %v1036 = vld [vmem:[%s3 + $0xf8] sm:$0xff]
    %v1037 = vld [vmem:[#allocation7] sm:$0x1]
    %v1039 = vlaneseq
    %v1040 = vshrl.u32 %v1039, 7
    %v1041 = vsub.s32 0, %v1040
    %v1042 = vrot.slane %v1037, %v1041
    %1044 = vmatprep.subr.mxu0 0.0
    %1045 = vmatpush1.msra.mxu0 %v1005
    %1046 = vmatprep.subr.mxu0 0.0
    %1047 = vmatpush1.msra.mxu0 %v1006
    %1048 = vmatprep.subr.mxu0 0.0
    %1049 = vmatpush1.msra.mxu0 %v1007
    %1050 = vmatprep.subr.mxu0 0.0
    %1051 = vmatpush1.msra.mxu0 %v1008
    %1052 = vmatprep.subr.mxu0 0.0
    %1053 = vmatpush1.msra.mxu0 %v1009
    %1054 = vmatprep.subr.mxu0 0.0
    %1055 = vmatpush1.msra.mxu0 %v1010
    %1056 = vmatprep.subr.mxu0 0.0
    %1057 = vmatpush1.msra.mxu0 %v1011
    %1058 = vmatprep.subr.mxu0 0.0
    %1059 = vmatpush1.msra.mxu0 %v1012
    %1060 = vmatprep.subr.mxu0 0.0
    %1061 = vmatpush1.msra.mxu0 %v1013
    %1062 = vmatprep.subr.mxu0 0.0
    %1063 = vmatpush1.msra.mxu0 %v1014
    %1064 = vmatprep.subr.mxu0 0.0
    %1065 = vmatpush1.msra.mxu0 %v1015
    %1066 = vmatprep.subr.mxu0 0.0
    %1067 = vmatpush1.msra.mxu0 %v1016
    %1068 = vmatprep.subr.mxu0 0.0
    %1069 = vmatpush1.msra.mxu0 %v1017
    %1070 = vmatprep.subr.mxu0 0.0
    %1071 = vmatpush1.msra.mxu0 %v1018
    %1072 = vmatprep.subr.mxu0 0.0
    %1073 = vmatpush1.msra.mxu0 %v1019
    %1074 = vmatprep.subr.mxu0 0.0
    %1075 = vmatpush1.msra.mxu0 %v1020
    %1076 = vmatprep.subr.mxu0 0.0
    %1077 = vmatpush1.msra.mxu0 %v1021
    %1078 = vmatprep.subr.mxu0 0.0
    %1079 = vmatpush1.msra.mxu0 %v1022
    %1080 = vmatprep.subr.mxu0 0.0
    %1081 = vmatpush1.msra.mxu0 %v1023
    %1082 = vmatprep.subr.mxu0 0.0
    %1083 = vmatpush1.msra.mxu0 %v1024
    %1084 = vmatprep.subr.mxu0 0.0
    %1085 = vmatpush1.msra.mxu0 %v1025
    %1086 = vmatprep.subr.mxu0 0.0
    %1087 = vmatpush1.msra.mxu0 %v1026
    %1088 = vmatprep.subr.mxu0 0.0
    %1089 = vmatpush1.msra.mxu0 %v1027
    %1090 = vmatprep.subr.mxu0 0.0
    %1091 = vmatpush1.msra.mxu0 %v1028
    %1092 = vmatprep.subr.mxu0 0.0
    %1093 = vmatpush1.msra.mxu0 %v1029
    %1094 = vmatprep.subr.mxu0 0.0
    %1095 = vmatpush1.msra.mxu0 %v1030
    %1096 = vmatprep.subr.mxu0 0.0
    %1097 = vmatpush1.msra.mxu0 %v1031
    %1098 = vmatprep.subr.mxu0 0.0
    %1099 = vmatpush1.msra.mxu0 %v1032
    %1100 = vmatprep.subr.mxu0 0.0
    %1101 = vmatpush1.msra.mxu0 %v1033
    %1102 = vmatprep.subr.mxu0 0.0
    %1103 = vmatpush1.msra.mxu0 %v1034
    %1104 = vmatprep.subr.mxu0 0.0
    %1105 = vmatpush1.msra.mxu0 %v1035
    %1106 = vmatprep.subr.mxu0 0.0
    %1107 = vmatpush1.msra.mxu0 %v1036
    %1108 = vmatprep.mubr.f32.mxu0 %v1004
    %1109 = vmatmul.mubr.f32.gmra.mrb[0].mxu0 %v1003
    %v1110 = vpop.f32.mrb[0].mxu0
    %v1111 = vadd.f32 %v1042, %v1110
    %v1112 = vpop.f32.mrb[0].mxu0
    %1113 = vdwg.mxu0
    %v1114 = vmax.f32 %v1111, 0.0
    %v1115 = vld [vmem:[%s5] sm:$0xff]
    %v1116 = vld [vmem:[%s5 + $0x8] sm:$0xff]
    %v1117 = vld [vmem:[%s5 + $0x10] sm:$0xff]
    %v1118 = vld [vmem:[%s5 + $0x18] sm:$0xff]
    %v1119 = vld [vmem:[#allocation2] sm:$0x1]
    %v1121 = vlaneseq
    %v1122 = vshrl.u32 %v1121, 7
    %v1123 = vsub.s32 0, %v1122
    %v1124 = vrot.slane %v1119, %v1123
    %vm1126 = vcmask 261120
    %v1128 = vsel %vm1126, %v1114, 0
    %1130 = vmatprep.subr.mxu0 0.0
    %1131 = vmatpush1.msra.mxu0 %v1115
    %1132 = vmatprep.subr.mxu0 0.0
    %1133 = vmatpush1.msra.mxu0 %v1116
    %1134 = vmatprep.subr.mxu0 0.0
    %1135 = vmatpush1.msra.mxu0 %v1117
    %1136 = vmatprep.subr.mxu0 0.0
    %1137 = vmatpush1.msra.mxu0 %v1118
    %1138 = vmatprep.subr.mxu0 0.0
    %1139 = vmatpush1.msra.mxu0 0.0
    %1140 = vmatprep.subr.mxu0 0.0
    %1141 = vmatpush1.msra.mxu0 0.0
    %1142 = vmatprep.subr.mxu0 0.0
    %1143 = vmatpush1.msra.mxu0 0.0
    %1144 = vmatprep.subr.mxu0 0.0
    %1145 = vmatpush1.msra.mxu0 0.0
    %1146 = vmatprep.subr.mxu0 0.0
    %1147 = vmatpush1.msra.mxu0 0.0
    %1148 = vmatprep.subr.mxu0 0.0
    %1149 = vmatpush1.msra.mxu0 0.0
    %1150 = vmatprep.subr.mxu0 0.0
    %1151 = vmatpush1.msra.mxu0 0.0
    %1152 = vmatprep.subr.mxu0 0.0
    %1153 = vmatpush1.msra.mxu0 0.0
    %1154 = vmatprep.subr.mxu0 0.0
    %1155 = vmatpush1.msra.mxu0 0.0
    %1156 = vmatprep.subr.mxu0 0.0
    %1157 = vmatpush1.msra.mxu0 0.0
    %1158 = vmatprep.subr.mxu0 0.0
    %1159 = vmatpush1.msra.mxu0 0.0
    %1160 = vmatprep.subr.mxu0 0.0
    %1161 = vmatpush1.msra.mxu0 0.0
    %1162 = vmatprep.subr.mxu0 0.0
    %1163 = vmatpush1.msra.mxu0 0.0
    %1164 = vmatprep.subr.mxu0 0.0
    %1165 = vmatpush1.msra.mxu0 0.0
    %1166 = vmatprep.subr.mxu0 0.0
    %1167 = vmatpush1.msra.mxu0 0.0
    %1168 = vmatprep.subr.mxu0 0.0
    %1169 = vmatpush1.msra.mxu0 0.0
    %1170 = vmatprep.subr.mxu0 0.0
    %1171 = vmatpush1.msra.mxu0 0.0
    %1172 = vmatprep.subr.mxu0 0.0
    %1173 = vmatpush1.msra.mxu0 0.0
    %1174 = vmatprep.subr.mxu0 0.0
    %1175 = vmatpush1.msra.mxu0 0.0
    %1176 = vmatprep.subr.mxu0 0.0
    %1177 = vmatpush1.msra.mxu0 0.0
    %1178 = vmatprep.subr.mxu0 0.0
    %1179 = vmatpush1.msra.mxu0 0.0
    %1180 = vmatprep.subr.mxu0 0.0
    %1181 = vmatpush1.msra.mxu0 0.0
    %1182 = vmatprep.subr.mxu0 0.0
    %1183 = vmatpush1.msra.mxu0 0.0
    %1184 = vmatprep.subr.mxu0 0.0
    %1185 = vmatpush1.msra.mxu0 0.0
    %1186 = vmatprep.subr.mxu0 0.0
    %1187 = vmatpush1.msra.mxu0 0.0
    %1188 = vmatprep.subr.mxu0 0.0
    %1189 = vmatpush1.msra.mxu0 0.0
    %1190 = vmatprep.subr.mxu0 0.0
    %1191 = vmatpush1.msra.mxu0 0.0
    %1192 = vmatprep.subr.mxu0 0.0
    %1193 = vmatpush1.msra.mxu0 0.0
    %1194 = vmatprep.mubr.f32.mxu0 0.0
    %1195 = vmatmul.mubr.f32.gmra.mrb[0].mxu0 %v1128
    %v1196 = vpop.f32.mrb[0].mxu0
    %v1197 = vadd.f32 %v1124, %v1196
    %v1198 = vpop.f32.mrb[0].mxu0
    %1199 = vdwg.mxu0
    %vm1200 = vcmask 3072
    %1201 = vst.msk [vmem:[%s7] sm:$0xf] %vm1200, %v1197
    // Predicated region
    $region42: #{msc_gru_forward.3} parent=1 // pred_check
      _
    $region43: #{msc_gru_forward.3} parent=1 // pred_check_branch
      %1203 = sbr.rel (0) target = $region45
    $region44: #{msc_gru_forward.3} parent=1 // pred_region
      _
    $region45: #{msc_gru_forward.3} parent=1 // pred_fallthru
      _
    // Predicated region
    $region46: #{msc_gru_forward.3} parent=1 // pred_check
      _
    $region47: #{msc_gru_forward.3} parent=1 // pred_check_branch
      %1205 = sbr.rel (0) target = $region49
    $region48: #{msc_gru_forward.3} parent=1 // pred_region
      _
    $region49: #{msc_gru_forward.3} parent=1 // pred_fallthru
      _
    %1206 = vsyncpa [#allocation4], 1
    %1207 = vsyncpa [#allocation6], 1

// kernel: msc_gru_forward.2
$region0: #{msc_gru_forward.2}
  #allocation0 [shape = 'u32[]', space=smem, size = 0x4, offset = 0x4, fixed_abs, tag = 'smem constant byte address 0x4 - core index']
  #allocation1 [shape = 'u32[144,128]{1,0:T(1,128)}', space=vmem, size = 0x12000, scoped, tag = 'internal scratch']
  %s0 = inlined_call_operand.vmem [shape: s32[1,140], index: 0, kind: input, shape index: {}]
  %s1 = inlined_call_operand.vmem [shape: f32[35,5], index: 1, kind: input, shape index: {}]
  %s2 = inlined_call_operand.vmem [shape: f32[35,1], index: 2, kind: input, shape index: {}]
  %s3 = inlined_call_operand.hbm [shape: f32[10,30], index: 3, kind: input, shape index: {}]
  %s4 = inlined_call_operand.vmem [shape: f32[10,1], index: 4, kind: input, shape index: {}]
  %s5 = inlined_call_operand.hbm [shape: f32[10,30], index: 5, kind: input, shape index: {}]
  %s6 = inlined_call_operand.vmem [shape: f32[10,1], index: 6, kind: input, shape index: {}]
  %s7 = inlined_call_operand.hbm [shape: f32[15,30], index: 7, kind: input, shape index: {}]
  %s8 = inlined_call_operand.vmem [shape: f32[15,1], index: 8, kind: input, shape index: {}]
  %s9 = inlined_call_operand.hbm [shape: f32[33,120], index: 9, kind: input, shape index: {}]
  %s10 = inlined_call_operand.hbm [shape: f32[1,120], index: 10, kind: input, shape index: {}]
  %s11 = inlined_call_operand.hbm [shape: f32[20,60], index: 11, kind: input, shape index: {}]
  %s12 = inlined_call_operand.hbm [shape: f32[1,60], index: 12, kind: input, shape index: {}]
  %s13 = inlined_call_operand.hbm [shape: f32[20,60], index: 13, kind: input, shape index: {}]
  %s14 = inlined_call_operand.hbm [shape: f32[1,60], index: 14, kind: input, shape index: {}]
  %s15 = inlined_call_operand.hbm [shape: f32[40,120], index: 15, kind: input, shape index: {}]
  %s16 = inlined_call_operand.hbm [shape: f32[1,120], index: 16, kind: input, shape index: {}]
  %s17 = inlined_call_operand.hbm [shape: f32[20,60], index: 17, kind: input, shape index: {}]
  %s18 = inlined_call_operand.hbm [shape: f32[1,60], index: 18, kind: input, shape index: {}]
  %s19 = inlined_call_operand.hbm [shape: f32[20,60], index: 19, kind: input, shape index: {}]
  %s20 = inlined_call_operand.hbm [shape: f32[1,60], index: 20, kind: input, shape index: {}]
  %s21 = inlined_call_operand.vmem [shape: f32[160,40], index: 21, kind: output, shape index: {}]
  %s22 = sld [smem:[#allocation0]]
  $region154: #{msc_gru_forward.2} parent=0
    _
  %s24 = ssub.s32 1, %s22
  %s25 = scalar_select 0, %s24, %s22
  $region1: #{msc_gru_forward.2} parent=0
    #allocation2 [shape = 'u8[8192]{0}', space=vmem, size = 0x2000, scoped, tag = 'input window, operand 3, single buffered']
    #allocation3 [shape = 's32[1]{0}', space=sflag, size = 0x4, scoped, tag = 'scoped memory for msc_gru_forward.2']
    #allocation4 [shape = 'u8[8192]{0}', space=vmem, size = 0x2000, scoped, tag = 'input window, operand 5, single buffered']
    #allocation5 [shape = 's32[1]{0}', space=sflag, size = 0x4, scoped, tag = 'scoped memory for msc_gru_forward.2']
    #allocation6 [shape = 'u8[8192]{0}', space=vmem, size = 0x2000, scoped, tag = 'input window, operand 7, single buffered']
    #allocation7 [shape = 'u8[20480]{0}', space=vmem, size = 0x5000, scoped, tag = 'input window, operand 9, single buffered']
    #allocation8 [shape = 's32[1]{0}', space=sflag, size = 0x4, scoped, tag = 'scoped memory for msc_gru_forward.2']
    #allocation9 [shape = 'u8[512]{0}', space=vmem, size = 0x400, scoped, tag = 'input window, operand 10, single buffered']
    #allocation10 [shape = 'u8[12288]{0}', space=vmem, size = 0x3000, scoped, tag = 'input window, operand 11, single buffered']
    #allocation11 [shape = 's32[1]{0}', space=sflag, size = 0x4, scoped, tag = 'scoped memory for msc_gru_forward.2']
    #allocation12 [shape = 'u8[512]{0}', space=vmem, size = 0x400, scoped, tag = 'input window, operand 12, single buffered']
    #allocation13 [shape = 'u8[12288]{0}', space=vmem, size = 0x3000, scoped, tag = 'input window, operand 13, single buffered']
    #allocation14 [shape = 's32[1]{0}', space=sflag, size = 0x4, scoped, tag = 'scoped memory for msc_gru_forward.2']
    #allocation15 [shape = 'u8[512]{0}', space=vmem, size = 0x400, scoped, tag = 'input window, operand 14, single buffered']
    #allocation16 [shape = 'u8[20480]{0}', space=vmem, size = 0x5000, scoped, tag = 'input window, operand 15, single buffered']
    #allocation17 [shape = 's32[1]{0}', space=sflag, size = 0x4, scoped, tag = 'scoped memory for msc_gru_forward.2']
    #allocation18 [shape = 'u8[512]{0}', space=vmem, size = 0x400, scoped, tag = 'input window, operand 16, single buffered']
    #allocation19 [shape = 'u8[12288]{0}', space=vmem, size = 0x3000, scoped, tag = 'input window, operand 17, single buffered']
    #allocation20 [shape = 's32[1]{0}', space=sflag, size = 0x4, scoped, tag = 'scoped memory for msc_gru_forward.2']
    #allocation21 [shape = 'u8[512]{0}', space=vmem, size = 0x400, scoped, tag = 'input window, operand 18, single buffered']
    #allocation22 [shape = 'u8[12288]{0}', space=vmem, size = 0x3000, scoped, tag = 'input window, operand 19, single buffered']
    #allocation23 [shape = 's32[1]{0}', space=sflag, size = 0x4, scoped, tag = 'scoped memory for msc_gru_forward.2']
    #allocation24 [shape = 'u8[512]{0}', space=vmem, size = 0x400, scoped, tag = 'input window, operand 20, single buffered']
    %26 = vsyncpa [#allocation3], 0
    %27 = vsyncpa [#allocation5], 0
    %28 = vsyncpa [#allocation8], 0
    %29 = vsyncpa [#allocation11], 0
    %30 = vsyncpa [#allocation14], 0
    %31 = vsyncpa [#allocation17], 0
    %32 = vsyncpa [#allocation20], 0
    %33 = vsyncpa [#allocation23], 0
    // Predicated region
    $region2: #{msc_gru_forward.2} parent=1 // pred_check
      _
    $region3: #{msc_gru_forward.2} parent=1 // pred_check_branch
      %35 = sbr.rel (0) target = $region5
    $region4: #{msc_gru_forward.2} parent=1 // pred_region
      _
    $region5: #{msc_gru_forward.2} parent=1 // pred_fallthru
      _
    // Predicated region
    $region6: #{msc_gru_forward.2} parent=1 // pred_check
      _
    $region7: #{msc_gru_forward.2} parent=1 // pred_check_branch
      %37 = sbr.rel (0) target = $region9
    $region8: #{msc_gru_forward.2} parent=1 // pred_region
      _
    $region9: #{msc_gru_forward.2} parent=1 // pred_fallthru
      _
    // Predicated region
    $region10: #{msc_gru_forward.2} parent=1 // pred_check
      _
    $region11: #{msc_gru_forward.2} parent=1 // pred_check_branch
      %39 = sbr.rel (0) target = $region13
    $region12: #{msc_gru_forward.2} parent=1 // pred_region
      _
    $region13: #{msc_gru_forward.2} parent=1 // pred_fallthru
      _
    // Predicated region
    $region14: #{msc_gru_forward.2} parent=1 // pred_check
      _
    $region15: #{msc_gru_forward.2} parent=1 // pred_check_branch
      %41 = sbr.rel (0) target = $region17
    $region16: #{msc_gru_forward.2} parent=1 // pred_region
      %s43 = ssub.s32 256, 256
      %44 = vsyncadd [#allocation3], %s43
      %s45 = sshll.u32 [#allocation2], 4
      %s46 = int_to_ptr.vmem [resolvable:$true] %s45
      %51 = dma.hbm_to_vmem [thread:$0]  %s3, 256, %s46, [#allocation3], 128, 128, 8
    $region17: #{msc_gru_forward.2} parent=1 // pred_fallthru
      _
    // Predicated region
    $region18: #{msc_gru_forward.2} parent=1 // pred_check
      _
    $region19: #{msc_gru_forward.2} parent=1 // pred_check_branch
      %53 = sbr.rel (0) target = $region21
    $region20: #{msc_gru_forward.2} parent=1 // pred_region
      _
    $region21: #{msc_gru_forward.2} parent=1 // pred_fallthru
      _
    // Predicated region
    $region22: #{msc_gru_forward.2} parent=1 // pred_check
      _
    $region23: #{msc_gru_forward.2} parent=1 // pred_check_branch
      %55 = sbr.rel (0) target = $region25
    $region24: #{msc_gru_forward.2} parent=1 // pred_region
      %s57 = ssub.s32 256, 256
      %58 = vsyncadd [#allocation5], %s57
      %s59 = sshll.u32 [#allocation4], 4
      %s60 = int_to_ptr.vmem [resolvable:$true] %s59
      %65 = dma.hbm_to_vmem [thread:$0]  %s5, 256, %s60, [#allocation5], 128, 128, 8
    $region25: #{msc_gru_forward.2} parent=1 // pred_fallthru
      _
    // Predicated region
    $region26: #{msc_gru_forward.2} parent=1 // pred_check
      _
    $region27: #{msc_gru_forward.2} parent=1 // pred_check_branch
      %67 = sbr.rel (0) target = $region29
    $region28: #{msc_gru_forward.2} parent=1 // pred_region
      _
    $region29: #{msc_gru_forward.2} parent=1 // pred_fallthru
      _
    // Predicated region
    $region30: #{msc_gru_forward.2} parent=1 // pred_check
      _
    $region31: #{msc_gru_forward.2} parent=1 // pred_check_branch
      %69 = sbr.rel (0) target = $region33
    $region32: #{msc_gru_forward.2} parent=1 // pred_region
      %s71 = ssub.s32 256, 256
      %72 = vsyncadd [#allocation5], %s71
      %s73 = sshll.u32 [#allocation6], 4
      %s74 = int_to_ptr.vmem [resolvable:$true] %s73
      %79 = dma.hbm_to_vmem [thread:$0]  %s7, 256, %s74, [#allocation5], 128, 128, 8
    $region33: #{msc_gru_forward.2} parent=1 // pred_fallthru
      _
    // Predicated region
    $region34: #{msc_gru_forward.2} parent=1 // pred_check
      _
    $region35: #{msc_gru_forward.2} parent=1 // pred_check_branch
      %81 = sbr.rel (0) target = $region37
    $region36: #{msc_gru_forward.2} parent=1 // pred_region
      _
    $region37: #{msc_gru_forward.2} parent=1 // pred_fallthru
      _
    // Predicated region
    $region38: #{msc_gru_forward.2} parent=1 // pred_check
      _
    $region39: #{msc_gru_forward.2} parent=1 // pred_check_branch
      %83 = sbr.rel (0) target = $region41
    $region40: #{msc_gru_forward.2} parent=1 // pred_region
      %s85 = ssub.s32 640, 640
      %86 = vsyncadd [#allocation8], %s85
      %s87 = sshll.u32 [#allocation7], 4
      %s88 = int_to_ptr.vmem [resolvable:$true] %s87
      %93 = dma.hbm_to_vmem [thread:$0]  %s9, 640, %s88, [#allocation8], 128, 128, 8
    $region41: #{msc_gru_forward.2} parent=1 // pred_fallthru
      _
    // Predicated region
    $region42: #{msc_gru_forward.2} parent=1 // pred_check
      _
    $region43: #{msc_gru_forward.2} parent=1 // pred_check_branch
      %95 = sbr.rel (0) target = $region45
    $region44: #{msc_gru_forward.2} parent=1 // pred_region
      %s97 = ssub.s32 16, 16
      %98 = vsyncadd [#allocation8], %s97
      %s100 = sshll.u32 [#allocation9], 4
      %s101 = int_to_ptr.vmem [resolvable:$true] %s100
      %103 = dma.hbm_to_vmem [thread:$0]  %s10, 16, %s101, [#allocation8]
    $region45: #{msc_gru_forward.2} parent=1 // pred_fallthru
      _
    // Predicated region
    $region46: #{msc_gru_forward.2} parent=1 // pred_check
      _
    $region47: #{msc_gru_forward.2} parent=1 // pred_check_branch
      %105 = sbr.rel (0) target = $region49
    $region48: #{msc_gru_forward.2} parent=1 // pred_region
      %s107 = ssub.s32 384, 384
      %108 = vsyncadd [#allocation11], %s107
      %s109 = sshll.u32 [#allocation10], 4
      %s110 = int_to_ptr.vmem [resolvable:$true] %s109
      %115 = dma.hbm_to_vmem [thread:$0]  %s11, 384, %s110, [#allocation11], 128, 128, 8
    $region49: #{msc_gru_forward.2} parent=1 // pred_fallthru
      _
    // Predicated region
    $region50: #{msc_gru_forward.2} parent=1 // pred_check
      _
    $region51: #{msc_gru_forward.2} parent=1 // pred_check_branch
      %117 = sbr.rel (0) target = $region53
    $region52: #{msc_gru_forward.2} parent=1 // pred_region
      %s119 = ssub.s32 16, 16
      %120 = vsyncadd [#allocation11], %s119
      %s122 = sshll.u32 [#allocation12], 4
      %s123 = int_to_ptr.vmem [resolvable:$true] %s122
      %125 = dma.hbm_to_vmem [thread:$0]  %s12, 16, %s123, [#allocation11]
    $region53: #{msc_gru_forward.2} parent=1 // pred_fallthru
      _
    // Predicated region
    $region54: #{msc_gru_forward.2} parent=1 // pred_check
      _
    $region55: #{msc_gru_forward.2} parent=1 // pred_check_branch
      %127 = sbr.rel (0) target = $region57
    $region56: #{msc_gru_forward.2} parent=1 // pred_region
      %s129 = ssub.s32 384, 384
      %130 = vsyncadd [#allocation14], %s129
      %s131 = sshll.u32 [#allocation13], 4
      %s132 = int_to_ptr.vmem [resolvable:$true] %s131
      %137 = dma.hbm_to_vmem [thread:$0]  %s13, 384, %s132, [#allocation14], 128, 128, 8
    $region57: #{msc_gru_forward.2} parent=1 // pred_fallthru
      _
    // Predicated region
    $region58: #{msc_gru_forward.2} parent=1 // pred_check
      _
    $region59: #{msc_gru_forward.2} parent=1 // pred_check_branch
      %139 = sbr.rel (0) target = $region61
    $region60: #{msc_gru_forward.2} parent=1 // pred_region
      %s141 = ssub.s32 16, 16
      %142 = vsyncadd [#allocation14], %s141
      %s144 = sshll.u32 [#allocation15], 4
      %s145 = int_to_ptr.vmem [resolvable:$true] %s144
      %147 = dma.hbm_to_vmem [thread:$0]  %s14, 16, %s145, [#allocation14]
    $region61: #{msc_gru_forward.2} parent=1 // pred_fallthru
      _
    // Predicated region
    $region62: #{msc_gru_forward.2} parent=1 // pred_check
      _
    $region63: #{msc_gru_forward.2} parent=1 // pred_check_branch
      %149 = sbr.rel (0) target = $region65
    $region64: #{msc_gru_forward.2} parent=1 // pred_region
      %s151 = ssub.s32 640, 640
      %152 = vsyncadd [#allocation17], %s151
      %s153 = sshll.u32 [#allocation16], 4
      %s154 = int_to_ptr.vmem [resolvable:$true] %s153
      %159 = dma.hbm_to_vmem [thread:$0]  %s15, 640, %s154, [#allocation17], 128, 128, 8
    $region65: #{msc_gru_forward.2} parent=1 // pred_fallthru
      _
    // Predicated region
    $region66: #{msc_gru_forward.2} parent=1 // pred_check
      _
    $region67: #{msc_gru_forward.2} parent=1 // pred_check_branch
      %161 = sbr.rel (0) target = $region69
    $region68: #{msc_gru_forward.2} parent=1 // pred_region
      %s163 = ssub.s32 16, 16
      %164 = vsyncadd [#allocation17], %s163
      %s166 = sshll.u32 [#allocation18], 4
      %s167 = int_to_ptr.vmem [resolvable:$true] %s166
      %169 = dma.hbm_to_vmem [thread:$0]  %s16, 16, %s167, [#allocation17]
    $region69: #{msc_gru_forward.2} parent=1 // pred_fallthru
      _
    // Predicated region
    $region70: #{msc_gru_forward.2} parent=1 // pred_check
      _
    $region71: #{msc_gru_forward.2} parent=1 // pred_check_branch
      %171 = sbr.rel (0) target = $region73
    $region72: #{msc_gru_forward.2} parent=1 // pred_region
      %s173 = ssub.s32 384, 384
      %174 = vsyncadd [#allocation20], %s173
      %s175 = sshll.u32 [#allocation19], 4
      %s176 = int_to_ptr.vmem [resolvable:$true] %s175
      %181 = dma.hbm_to_vmem [thread:$0]  %s17, 384, %s176, [#allocation20], 128, 128, 8
    $region73: #{msc_gru_forward.2} parent=1 // pred_fallthru
      _
    // Predicated region
    $region74: #{msc_gru_forward.2} parent=1 // pred_check
      _
    $region75: #{msc_gru_forward.2} parent=1 // pred_check_branch
      %183 = sbr.rel (0) target = $region77
    $region76: #{msc_gru_forward.2} parent=1 // pred_region
      %s185 = ssub.s32 16, 16
      %186 = vsyncadd [#allocation20], %s185
      %s188 = sshll.u32 [#allocation21], 4
      %s189 = int_to_ptr.vmem [resolvable:$true] %s188
      %191 = dma.hbm_to_vmem [thread:$0]  %s18, 16, %s189, [#allocation20]
    $region77: #{msc_gru_forward.2} parent=1 // pred_fallthru
      _
    // Predicated region
    $region78: #{msc_gru_forward.2} parent=1 // pred_check
      _
    $region79: #{msc_gru_forward.2} parent=1 // pred_check_branch
      %193 = sbr.rel (0) target = $region81
    $region80: #{msc_gru_forward.2} parent=1 // pred_region
      %s195 = ssub.s32 384, 384
      %196 = vsyncadd [#allocation23], %s195
      %s197 = sshll.u32 [#allocation22], 4
      %s198 = int_to_ptr.vmem [resolvable:$true] %s197
      %203 = dma.hbm_to_vmem [thread:$0]  %s19, 384, %s198, [#allocation23], 128, 128, 8
    $region81: #{msc_gru_forward.2} parent=1 // pred_fallthru
      _
    // Predicated region
    $region82: #{msc_gru_forward.2} parent=1 // pred_check
      _
    $region83: #{msc_gru_forward.2} parent=1 // pred_check_branch
      %205 = sbr.rel (0) target = $region85
    $region84: #{msc_gru_forward.2} parent=1 // pred_region
      %s207 = ssub.s32 16, 16
      %208 = vsyncadd [#allocation23], %s207
      %s210 = sshll.u32 [#allocation24], 4
      %s211 = int_to_ptr.vmem [resolvable:$true] %s210
      %213 = dma.hbm_to_vmem [thread:$0]  %s20, 16, %s211, [#allocation23]
    $region85: #{msc_gru_forward.2} parent=1 // pred_fallthru
      _
    // Predicated region
    $region86: #{msc_gru_forward.2} parent=1 // pred_check
      _
    $region87: #{msc_gru_forward.2} parent=1 // pred_check_branch
      %215 = sbr.rel (0) target = $region89
    $region88: #{msc_gru_forward.2} parent=1 // pred_region
      %216 = dma.done [#allocation3], 256
    $region89: #{msc_gru_forward.2} parent=1 // pred_fallthru
      _
    // Predicated region
    $region90: #{msc_gru_forward.2} parent=1 // pred_check
      _
    $region91: #{msc_gru_forward.2} parent=1 // pred_check_branch
      %218 = sbr.rel (0) target = $region93
    $region92: #{msc_gru_forward.2} parent=1 // pred_region
      %219 = dma.done [#allocation5], 256
    $region93: #{msc_gru_forward.2} parent=1 // pred_fallthru
      _
    // Predicated region
    $region94: #{msc_gru_forward.2} parent=1 // pred_check
      _
    $region95: #{msc_gru_forward.2} parent=1 // pred_check_branch
      %221 = sbr.rel (0) target = $region97
    $region96: #{msc_gru_forward.2} parent=1 // pred_region
      %222 = dma.done [#allocation5], 256
    $region97: #{msc_gru_forward.2} parent=1 // pred_fallthru
      _
    // Predicated region
    $region98: #{msc_gru_forward.2} parent=1 // pred_check
      _
    $region99: #{msc_gru_forward.2} parent=1 // pred_check_branch
      %224 = sbr.rel (0) target = $region101
    $region100: #{msc_gru_forward.2} parent=1 // pred_region
      %225 = dma.done [#allocation8], 640
    $region101: #{msc_gru_forward.2} parent=1 // pred_fallthru
      _
    // Predicated region
    $region102: #{msc_gru_forward.2} parent=1 // pred_check
      _
    $region103: #{msc_gru_forward.2} parent=1 // pred_check_branch
      %227 = sbr.rel (0) target = $region105
    $region104: #{msc_gru_forward.2} parent=1 // pred_region
      %228 = dma.done [#allocation8], 16
    $region105: #{msc_gru_forward.2} parent=1 // pred_fallthru
      _
    // Predicated region
    $region106: #{msc_gru_forward.2} parent=1 // pred_check
      _
    $region107: #{msc_gru_forward.2} parent=1 // pred_check_branch
      %230 = sbr.rel (0) target = $region109
    $region108: #{msc_gru_forward.2} parent=1 // pred_region
      %231 = dma.done [#allocation11], 384
    $region109: #{msc_gru_forward.2} parent=1 // pred_fallthru
      _
    // Predicated region
    $region110: #{msc_gru_forward.2} parent=1 // pred_check
      _
    $region111: #{msc_gru_forward.2} parent=1 // pred_check_branch
      %233 = sbr.rel (0) target = $region113
    $region112: #{msc_gru_forward.2} parent=1 // pred_region
      %234 = dma.done [#allocation11], 16
    $region113: #{msc_gru_forward.2} parent=1 // pred_fallthru
      _
    // Predicated region
    $region114: #{msc_gru_forward.2} parent=1 // pred_check
      _
    $region115: #{msc_gru_forward.2} parent=1 // pred_check_branch
      %236 = sbr.rel (0) target = $region117
    $region116: #{msc_gru_forward.2} parent=1 // pred_region
      %237 = dma.done [#allocation14], 384
    $region117: #{msc_gru_forward.2} parent=1 // pred_fallthru
      _
    // Predicated region
    $region118: #{msc_gru_forward.2} parent=1 // pred_check
      _
    $region119: #{msc_gru_forward.2} parent=1 // pred_check_branch
      %239 = sbr.rel (0) target = $region121
    $region120: #{msc_gru_forward.2} parent=1 // pred_region
      %240 = dma.done [#allocation14], 16
    $region121: #{msc_gru_forward.2} parent=1 // pred_fallthru
      _
    // Predicated region
    $region122: #{msc_gru_forward.2} parent=1 // pred_check
      _
    $region123: #{msc_gru_forward.2} parent=1 // pred_check_branch
      %242 = sbr.rel (0) target = $region125
    $region124: #{msc_gru_forward.2} parent=1 // pred_region
      %243 = dma.done [#allocation17], 640
    $region125: #{msc_gru_forward.2} parent=1 // pred_fallthru
      _
    // Predicated region
    $region126: #{msc_gru_forward.2} parent=1 // pred_check
      _
    $region127: #{msc_gru_forward.2} parent=1 // pred_check_branch
      %245 = sbr.rel (0) target = $region129
    $region128: #{msc_gru_forward.2} parent=1 // pred_region
      %246 = dma.done [#allocation17], 16
    $region129: #{msc_gru_forward.2} parent=1 // pred_fallthru
      _
    // Predicated region
    $region130: #{msc_gru_forward.2} parent=1 // pred_check
      _
    $region131: #{msc_gru_forward.2} parent=1 // pred_check_branch
      %248 = sbr.rel (0) target = $region133
    $region132: #{msc_gru_forward.2} parent=1 // pred_region
      %249 = dma.done [#allocation20], 384
    $region133: #{msc_gru_forward.2} parent=1 // pred_fallthru
      _
    // Predicated region
    $region134: #{msc_gru_forward.2} parent=1 // pred_check
      _
    $region135: #{msc_gru_forward.2} parent=1 // pred_check_branch
      %251 = sbr.rel (0) target = $region137
    $region136: #{msc_gru_forward.2} parent=1 // pred_region
      %252 = dma.done [#allocation20], 16
    $region137: #{msc_gru_forward.2} parent=1 // pred_fallthru
      _
    // Predicated region
    $region138: #{msc_gru_forward.2} parent=1 // pred_check
      _
    $region139: #{msc_gru_forward.2} parent=1 // pred_check_branch
      %254 = sbr.rel (0) target = $region141
    $region140: #{msc_gru_forward.2} parent=1 // pred_region
      %255 = dma.done [#allocation23], 384
    $region141: #{msc_gru_forward.2} parent=1 // pred_fallthru
      _
    // Predicated region
    $region142: #{msc_gru_forward.2} parent=1 // pred_check
      _
    $region143: #{msc_gru_forward.2} parent=1 // pred_check_branch
      %257 = sbr.rel (0) target = $region145
    $region144: #{msc_gru_forward.2} parent=1 // pred_region
      %258 = dma.done [#allocation23], 16
    $region145: #{msc_gru_forward.2} parent=1 // pred_fallthru
      _
    %v259 = vlaneseq
    %v260 = vshrl.u32 %v259, 7
    %v261 = vld [vmem:[%s0] sm:$0x3]
    %v262 = vlaneseq
    %v263 = vshrl.u32 %v262, 7
    %v264 = vsub.s32 0, %v263
    %v265 = vrot.slane %v261, %v264
    %v266 = vlaneseq
    %v267 = vshrl.u32 %v266, 7
    %v268 = vsub.s32 1, %v267
    %v269 = vrot.slane %v261, %v268
    %vm270 = vcmp.eq.s32.totalorder %v265, %v260
    %vm271 = vcmp.eq.s32.totalorder %v269, %v260
    %v272 = vsel %vm270, 1.0, 0.0
    %v273 = vsel %vm271, 1.0, 0.0
    %v274 = vld [vmem:[%s1] sm:$0xff]
    %v275 = vld [vmem:[%s1 + $0x8] sm:$0xff]
    %v276 = vld [vmem:[%s1 + $0x10] sm:$0xff]
    %v277 = vld [vmem:[%s1 + $0x18] sm:$0xff]
    %v278 = vld [vmem:[%s1 + $0x20] sm:$0x7]
    %v279 = vld [vmem:[%s2] sm:$0xff]
    %v280 = vld [vmem:[%s2 + $0x8] sm:$0xff]
    %v281 = vld [vmem:[%s2 + $0x10] sm:$0xff]
    %v282 = vld [vmem:[%s2 + $0x18] sm:$0xff]
    %v283 = vld [vmem:[%s2 + $0x20] sm:$0x7]
    %285 = vset.pattern.permute.xlu0 0
    %286 = vperm.xlu0 %285, %v279
    %v287 = vpop.permute.xlu0 %286
    %290 = vset.pattern.permute.xlu0 0
    %291 = vperm.xlu0 %290, %v280
    %v292 = vpop.permute.xlu0 %291
    %295 = vset.pattern.permute.xlu0 0
    %296 = vperm.xlu0 %295, %v281
    %v297 = vpop.permute.xlu0 %296
    %300 = vset.pattern.permute.xlu0 0
    %301 = vperm.xlu0 %300, %v282
    %v302 = vpop.permute.xlu0 %301
    %305 = vset.pattern.permute.xlu0 0
    %306 = vperm.xlu0 %305, %v283
    %v307 = vpop.permute.xlu0 %306
    %vm309 = vcmask 39936
    %v311 = vsel %vm309, %v274, 0
    %v314 = vsel %vm309, %v275, 0
    %v317 = vsel %vm309, %v276, 0
    %v320 = vsel %vm309, %v277, 0
    %v323 = vsel %vm309, %v278, 0
    %vm325 = vcmask 1044480
    %v327 = vsel %vm325, %v272, 0
    %v330 = vsel %vm325, %v273, 0
    %332 = vmatprep.subr.mxu0 %v330
    %333 = vmatpush1.msra.mxu0 %v327
    %334 = vmatprep.subr.mxu0 0.0
    %335 = vmatpush1.msra.mxu0 0.0
    %336 = vmatprep.subr.mxu0 0.0
    %337 = vmatpush1.msra.mxu0 0.0
    %338 = vmatprep.subr.mxu0 0.0
    %339 = vmatpush1.msra.mxu0 0.0
    %340 = vmatprep.subr.mxu0 0.0
    %341 = vmatpush1.msra.mxu0 0.0
    %342 = vmatprep.subr.mxu0 0.0
    %343 = vmatpush1.msra.mxu0 0.0
    %344 = vmatprep.subr.mxu0 0.0
    %345 = vmatpush1.msra.mxu0 0.0
    %346 = vmatprep.subr.mxu0 0.0
    %347 = vmatpush1.msra.mxu0 0.0
    %348 = vmatprep.subr.mxu0 0.0
    %349 = vmatpush1.msra.mxu0 0.0
    %350 = vmatprep.subr.mxu0 0.0
    %351 = vmatpush1.msra.mxu0 0.0
    %352 = vmatprep.subr.mxu0 0.0
    %353 = vmatpush1.msra.mxu0 0.0
    %354 = vmatprep.subr.mxu0 0.0
    %355 = vmatpush1.msra.mxu0 0.0
    %356 = vmatprep.subr.mxu0 0.0
    %357 = vmatpush1.msra.mxu0 0.0
    %358 = vmatprep.subr.mxu0 0.0
    %359 = vmatpush1.msra.mxu0 0.0
    %360 = vmatprep.subr.mxu0 0.0
    %361 = vmatpush1.msra.mxu0 0.0
    %362 = vmatprep.subr.mxu0 0.0
    %363 = vmatpush1.msra.mxu0 0.0
    %364 = vmatprep.subr.mxu0 0.0
    %365 = vmatpush1.msra.mxu0 0.0
    %366 = vmatprep.subr.mxu0 0.0
    %367 = vmatpush1.msra.mxu0 0.0
    %368 = vmatprep.subr.mxu0 0.0
    %369 = vmatpush1.msra.mxu0 0.0
    %370 = vmatprep.subr.mxu0 0.0
    %371 = vmatpush1.msra.mxu0 0.0
    %372 = vmatprep.subr.mxu0 0.0
    %373 = vmatpush1.msra.mxu0 0.0
    %374 = vmatprep.subr.mxu0 0.0
    %375 = vmatpush1.msra.mxu0 0.0
    %376 = vmatprep.subr.mxu0 0.0
    %377 = vmatpush1.msra.mxu0 0.0
    %378 = vmatprep.subr.mxu0 0.0
    %379 = vmatpush1.msra.mxu0 0.0
    %380 = vmatprep.subr.mxu0 0.0
    %381 = vmatpush1.msra.mxu0 0.0
    %382 = vmatprep.subr.mxu0 0.0
    %383 = vmatpush1.msra.mxu0 0.0
    %384 = vmatprep.subr.mxu0 0.0
    %385 = vmatpush1.msra.mxu0 0.0
    %386 = vmatprep.subr.mxu0 0.0
    %387 = vmatpush1.msra.mxu0 0.0
    %388 = vmatprep.subr.mxu0 0.0
    %389 = vmatpush1.msra.mxu0 0.0
    %390 = vmatprep.subr.mxu0 0.0
    %391 = vmatpush1.msra.mxu0 0.0
    %392 = vmatprep.subr.mxu0 0.0
    %393 = vmatpush1.msra.mxu0 0.0
    %394 = vmatprep.subr.mxu0 0.0
    %395 = vmatpush1.msra.mxu0 0.0
    %396 = vmatprep.mubr.f32.mxu0 0.0
    %397 = vmatmul.mubr.f32.gmra.mrb[0].mxu0 %v311
    %v398 = vpop.f32.mrb[0].mxu0
    %v399 = vadd.f32 %v287, %v398
    %v400 = vpop.f32.mrb[0].mxu0
    %v401 = vadd.f32 %v287, %v400
    %402 = vmatprep.mubr.f32.mxu0 0.0
    %403 = vmatmul.mubr.f32.gmra.mrb[0].mxu0 %v314
    %v404 = vpop.f32.mrb[0].mxu0
    %v405 = vadd.f32 %v292, %v404
    %v406 = vpop.f32.mrb[0].mxu0
    %v407 = vadd.f32 %v292, %v406
    %408 = vmatprep.mubr.f32.mxu0 0.0
    %409 = vmatmul.mubr.f32.gmra.mrb[0].mxu0 %v317
    %v410 = vpop.f32.mrb[0].mxu0
    %v411 = vadd.f32 %v297, %v410
    %v412 = vpop.f32.mrb[0].mxu0
    %v413 = vadd.f32 %v297, %v412
    %414 = vmatprep.mubr.f32.mxu0 0.0
    %415 = vmatmul.mubr.f32.gmra.mrb[0].mxu0 %v320
    %v416 = vpop.f32.mrb[0].mxu0
    %v417 = vadd.f32 %v302, %v416
    %v418 = vpop.f32.mrb[0].mxu0
    %v419 = vadd.f32 %v302, %v418
    %420 = vmatprep.mubr.f32.mxu0 0.0
    %421 = vmatmul.mubr.f32.gmra.mrb[0].mxu0 %v323
    %v422 = vpop.f32.mrb[0].mxu0
    %v423 = vadd.f32 %v307, %v422
    %v424 = vpop.f32.mrb[0].mxu0
    %v425 = vadd.f32 %v307, %v424
    %426 = vdwg.mxu0
    %v427 = vlaneseq
    %v428 = vand.u32 %v427, 127
    %v429 = vadd.s32 %v428, 128
    %vm430 = vcmp.eq.s32.totalorder %v428, 0
    %vm431 = vcmp.eq.s32.totalorder %v429, 0
    %vm432 = vcmp.eq.s32.totalorder %v428, 34
    %vm433 = vcmp.eq.s32.totalorder %v429, 34
    %vm434 = vcmp.eq.s32.totalorder %v428, 35
    %vm435 = vcmp.eq.s32.totalorder %v429, 35
    %vm436 = vmor %vm430, %vm434
    %vm437 = vmor %vm431, %vm435
    %vm438 = vcmp.eq.s32.totalorder %v428, 69
    %vm439 = vcmp.eq.s32.totalorder %v429, 69
    %vm440 = vmor %vm432, %vm438
    %vm441 = vmor %vm433, %vm439
    %vm442 = vcmp.eq.s32.totalorder %v428, 70
    %vm443 = vcmp.eq.s32.totalorder %v429, 70
    %vm444 = vmor %vm436, %vm442
    %vm445 = vmor %vm437, %vm443
    %vm446 = vcmp.eq.s32.totalorder %v428, 104
    %vm447 = vcmp.eq.s32.totalorder %v429, 104
    %vm448 = vmor %vm440, %vm446
    %vm449 = vmor %vm441, %vm447
    %vm450 = vcmp.eq.s32.totalorder %v428, 105
    %vm451 = vcmp.eq.s32.totalorder %v429, 105
    %vm452 = vmor %vm444, %vm450
    %vm453 = vmor %vm445, %vm451
    %vm454 = vcmp.eq.s32.totalorder %v428, 139
    %vm455 = vcmp.eq.s32.totalorder %v429, 139
    %vm456 = vmor %vm448, %vm454
    %vm457 = vmor %vm449, %vm455
    %v458 = vsel %vm452, 0.0, 1.0
    %v459 = vsel %vm453, 0.0, 1.0
    %v460 = vsel %vm456, 0.0, 1.0
    %v461 = vsel %vm457, 0.0, 1.0
    %v462 = vmax.f32 %v405, 0.0
    %v463 = vmax.f32 %v407, 0.0
    %v464 = vmax.f32 %v411, 0.0
    %v465 = vmax.f32 %v413, 0.0
    %v466 = vmax.f32 %v417, 0.0
    %v467 = vmax.f32 %v419, 0.0
    %v468 = vmax.f32 %v423, 0.0
    %v469 = vmax.f32 %v425, 0.0
    %vm476 = vcmask 1040384
    %v477 = vrot.slane %v462, 7
    %v478 = vrot.slane %v464, 7
    %v479 = vsel %vm476, %v477, %v478
    %v480 = vrot.slane %v463, 7
    %v481 = vrot.slane %v465, 7
    %v482 = vsel %vm476, %v480, %v481
    %v483 = vrot.slane %v466, 7
    %v484 = vsel %vm476, %v478, %v483
    %v485 = vrot.slane %v467, 7
    %v486 = vsel %vm476, %v481, %v485
    %487 = vrot.lane.b32.xlu0 %v479, 1
    %v488 = vpop.permute.xlu0 %487
    %489 = vrot.lane.b32.xlu0 %v482, 1
    %v490 = vpop.permute.xlu0 %489
    %491 = vrot.lane.b32.xlu0 %v484, 1
    %v492 = vpop.permute.xlu0 %491
    %493 = vrot.lane.b32.xlu0 %v486, 1
    %v494 = vpop.permute.xlu0 %493
    %vm495 = vcmask 7168
    %v496 = vsel %vm495, %v488, %v490
    %v497 = vsel %vm495, %v492, %v494
    %v502 = vsel %vm495, 0.0, %v488
    %v503 = vsel %vm495, 0.0, %v492
    %v504 = vmul.f32 %v502, %v458
    %v505 = vmul.f32 %v496, %v459
    %v506 = vmul.f32 %v503, %v458
    %v507 = vmul.f32 %v497, %v459
    %508 = vrot.lane.b32.xlu0 %v462, 127
    %v509 = vpop.permute.xlu0 %508
    %510 = vrot.lane.b32.xlu0 %v463, 127
    %v511 = vpop.permute.xlu0 %510
    %512 = vrot.lane.b32.xlu0 %v464, 127
    %v513 = vpop.permute.xlu0 %512
    %514 = vrot.lane.b32.xlu0 %v465, 127
    %v515 = vpop.permute.xlu0 %514
    %516 = vrot.lane.b32.xlu0 %v466, 127
    %v517 = vpop.permute.xlu0 %516
    %518 = vrot.lane.b32.xlu0 %v467, 127
    %v519 = vpop.permute.xlu0 %518
    %vm520 = vcmask 1039360
    %v521 = vsel %vm520, %v509, %v511
    %v522 = vsel %vm520, %v513, %v515
    %v523 = vsel %vm520, %v517, %v519
    %vm530 = vcmask 89088
    %v531 = vsel %vm530, %v511, 0.0
    %v532 = vsel %vm530, %v515, 0.0
    %v533 = vsel %vm530, %v519, 0.0
    %v534 = vmul.f32 %v521, %v460
    %v535 = vmul.f32 %v531, %v461
    %v536 = vmul.f32 %v522, %v460
    %v537 = vmul.f32 %v532, %v461
    %v538 = vmul.f32 %v523, %v460
    %v539 = vmul.f32 %v533, %v461
    %vm540 = vcmask 1042432
    %v541 = vrot.slane %v462, 5
    %v542 = vrot.slane %v464, 5
    %v543 = vsel %vm540, %v541, %v542
    %v544 = vrot.slane %v463, 5
    %v545 = vrot.slane %v465, 5
    %v546 = vsel %vm540, %v544, %v545
    %v547 = vrot.slane %v466, 5
    %v548 = vsel %vm540, %v542, %v547
    %v549 = vrot.slane %v467, 5
    %v550 = vsel %vm540, %v545, %v549
    %v561 = vrot.slane %v534, 3
    %v562 = vrot.slane %v536, 3
    %v563 = vsel %vm325, %v561, %v562
    %v564 = vrot.slane %v535, 3
    %v565 = vrot.slane %v537, 3
    %v566 = vsel %vm325, %v564, %v565
    %v567 = vrot.slane %v538, 3
    %v568 = vsel %vm325, %v562, %v567
    %v569 = vrot.slane %v539, 3
    %v570 = vsel %vm325, %v565, %v569
    %vm573 = vcmask 1041408
    %v574 = vsel %vm573, %v506, %v543
    %v575 = vsel %vm573, %v507, %v546
    %vm576 = vcmask 1043456
    %v577 = vsel %vm576, %v548, %v563
    %v578 = vsel %vm576, %v550, %v566
    %v579 = vld [vmem:[#allocation2] sm:$0xff]
    %v580 = vld [vmem:[#allocation2 + $0x8] sm:$0x3]
    %v581 = vld [vmem:[%s4] sm:$0xff]
    %v582 = vld [vmem:[%s4 + $0x8] sm:$0x3]
    %584 = vset.pattern.permute.xlu0 0
    %585 = vperm.xlu0 %584, %v581
    %v586 = vpop.permute.xlu0 %585
    %589 = vset.pattern.permute.xlu0 0
    %590 = vperm.xlu0 %589, %v582
    %v591 = vpop.permute.xlu0 %590
    %vm593 = vcmask 244736
    %v595 = vsel %vm593, %v579, 0
    %v598 = vsel %vm593, %v580, 0
    %vm600 = vcmask 1045504
    %v601 = vsel %vm600, %v568, 0
    %v603 = vsel %vm600, %v570, 0
    %605 = vmatprep.subr.mxu0 %v505
    %606 = vmatpush1.msra.mxu0 %v504
    %607 = vmatprep.subr.mxu0 %v575
    %608 = vmatpush1.msra.mxu0 %v574
    %609 = vmatprep.subr.mxu0 %v578
    %610 = vmatpush1.msra.mxu0 %v577
    %611 = vmatprep.subr.mxu0 %v603
    %612 = vmatpush1.msra.mxu0 %v601
    %613 = vmatprep.subr.mxu0 0.0
    %614 = vmatpush1.msra.mxu0 0.0
    %615 = vmatprep.subr.mxu0 0.0
    %616 = vmatpush1.msra.mxu0 0.0
    %617 = vmatprep.subr.mxu0 0.0
    %618 = vmatpush1.msra.mxu0 0.0
    %619 = vmatprep.subr.mxu0 0.0
    %620 = vmatpush1.msra.mxu0 0.0
    %621 = vmatprep.subr.mxu0 0.0
    %622 = vmatpush1.msra.mxu0 0.0
    %623 = vmatprep.subr.mxu0 0.0
    %624 = vmatpush1.msra.mxu0 0.0
    %625 = vmatprep.subr.mxu0 0.0
    %626 = vmatpush1.msra.mxu0 0.0
    %627 = vmatprep.subr.mxu0 0.0
    %628 = vmatpush1.msra.mxu0 0.0
    %629 = vmatprep.subr.mxu0 0.0
    %630 = vmatpush1.msra.mxu0 0.0
    %631 = vmatprep.subr.mxu0 0.0
    %632 = vmatpush1.msra.mxu0 0.0
    %633 = vmatprep.subr.mxu0 0.0
    %634 = vmatpush1.msra.mxu0 0.0
    %635 = vmatprep.subr.mxu0 0.0
    %636 = vmatpush1.msra.mxu0 0.0
    %637 = vmatprep.subr.mxu0 0.0
    %638 = vmatpush1.msra.mxu0 0.0
    %639 = vmatprep.subr.mxu0 0.0
    %640 = vmatpush1.msra.mxu0 0.0
    %641 = vmatprep.subr.mxu0 0.0
    %642 = vmatpush1.msra.mxu0 0.0
    %643 = vmatprep.subr.mxu0 0.0
    %644 = vmatpush1.msra.mxu0 0.0
    %645 = vmatprep.subr.mxu0 0.0
    %646 = vmatpush1.msra.mxu0 0.0
    %647 = vmatprep.subr.mxu0 0.0
    %648 = vmatpush1.msra.mxu0 0.0
    %649 = vmatprep.subr.mxu0 0.0
    %650 = vmatpush1.msra.mxu0 0.0
    %651 = vmatprep.subr.mxu0 0.0
    %652 = vmatpush1.msra.mxu0 0.0
    %653 = vmatprep.subr.mxu0 0.0
    %654 = vmatpush1.msra.mxu0 0.0
    %655 = vmatprep.subr.mxu0 0.0
    %656 = vmatpush1.msra.mxu0 0.0
    %657 = vmatprep.subr.mxu0 0.0
    %658 = vmatpush1.msra.mxu0 0.0
    %659 = vmatprep.subr.mxu0 0.0
    %660 = vmatpush1.msra.mxu0 0.0
    %661 = vmatprep.subr.mxu0 0.0
    %662 = vmatpush1.msra.mxu0 0.0
    %663 = vmatprep.subr.mxu0 0.0
    %664 = vmatpush1.msra.mxu0 0.0
    %665 = vmatprep.subr.mxu0 0.0
    %666 = vmatpush1.msra.mxu0 0.0
    %667 = vmatprep.subr.mxu0 0.0
    %668 = vmatpush1.msra.mxu0 0.0
    %669 = vmatprep.mubr.f32.mxu0 0.0
    %670 = vmatmul.mubr.f32.gmra.mrb[0].mxu0 %v595
    %v671 = vpop.f32.mrb[0].mxu0
    %v672 = vadd.f32 %v586, %v671
    %v673 = vpop.f32.mrb[0].mxu0
    %v674 = vadd.f32 %v586, %v673
    %675 = vmatprep.mubr.f32.mxu0 0.0
    %676 = vmatmul.mubr.f32.gmra.mrb[0].mxu0 %v598
    %v677 = vpop.f32.mrb[0].mxu0
    %v678 = vadd.f32 %v591, %v677
    %v679 = vpop.f32.mrb[0].mxu0
    %v680 = vadd.f32 %v591, %v679
    %681 = vdwg.mxu0
    %vm684 = vcmask 1046528
    %v685 = vrot.slane %v466, 1
    %v686 = vrot.slane %v468, 1
    %v687 = vsel %vm684, %v685, %v686
    %v688 = vrot.slane %v467, 1
    %v689 = vrot.slane %v469, 1
    %v690 = vsel %vm684, %v688, %v689
    %691 = vrot.lane.b32.xlu0 %v687, 1
    %v692 = vpop.permute.xlu0 %691
    %693 = vrot.lane.b32.xlu0 %v690, 1
    %v694 = vpop.permute.xlu0 %693
    %695 = vrot.lane.b32.xlu0 %v686, 1
    %v696 = vpop.permute.xlu0 %695
    %697 = vrot.lane.b32.xlu0 %v689, 1
    %v698 = vpop.permute.xlu0 %697
    %v699 = vsel %vm495, %v692, %v694
    %v700 = vsel %vm495, %v696, %v698
    %v705 = vsel %vm495, 0.0, %v692
    %v706 = vsel %vm495, 0.0, %v696
    %v707 = vmul.f32 %v705, %v458
    %v708 = vmul.f32 %v699, %v459
    %v709 = vmul.f32 %v706, %v458
    %v710 = vmul.f32 %v700, %v459
    %711 = vrot.lane.b32.xlu0 %v468, 127
    %v712 = vpop.permute.xlu0 %711
    %713 = vrot.lane.b32.xlu0 %v469, 127
    %v714 = vpop.permute.xlu0 %713
    %v715 = vsel %vm520, %v712, %v714
    %v718 = vsel %vm530, %v714, 0.0
    %v719 = vmul.f32 %v715, %v460
    %v720 = vmul.f32 %v718, %v461
    %v721 = vrot.slane %v468, 7
    %v722 = vsel %vm476, %v483, %v721
    %v723 = vrot.slane %v469, 7
    %v724 = vsel %vm476, %v485, %v723
    %v731 = vrot.slane %v538, 5
    %v732 = vrot.slane %v539, 5
    %v733 = vrot.slane %v719, 5
    %v734 = vsel %vm540, %v731, %v733
    %v735 = vrot.slane %v720, 5
    %v736 = vsel %vm540, %v732, %v735
    %v739 = vsel %vm573, %v709, %v483
    %v740 = vsel %vm573, %v710, %v485
    %v741 = vsel %vm576, %v722, %v731
    %v742 = vsel %vm576, %v724, %v732
    %v743 = vld [vmem:[#allocation4] sm:$0xff]
    %v744 = vld [vmem:[#allocation4 + $0x8] sm:$0x3]
    %v745 = vld [vmem:[%s6] sm:$0xff]
    %v746 = vld [vmem:[%s6 + $0x8] sm:$0x3]
    %748 = vset.pattern.permute.xlu0 0
    %749 = vperm.xlu0 %748, %v745
    %v750 = vpop.permute.xlu0 %749
    %753 = vset.pattern.permute.xlu0 0
    %754 = vperm.xlu0 %753, %v746
    %v755 = vpop.permute.xlu0 %754
    %v758 = vsel %vm593, %v743, 0
    %v761 = vsel %vm593, %v744, 0
    %v763 = vsel %vm600, %v734, 0
    %v765 = vsel %vm600, %v736, 0
    %767 = vmatprep.subr.mxu0 %v708
    %768 = vmatpush1.msra.mxu0 %v707
    %769 = vmatprep.subr.mxu0 %v740
    %770 = vmatpush1.msra.mxu0 %v739
    %771 = vmatprep.subr.mxu0 %v742
    %772 = vmatpush1.msra.mxu0 %v741
    %773 = vmatprep.subr.mxu0 %v765
    %774 = vmatpush1.msra.mxu0 %v763
    %775 = vmatprep.subr.mxu0 0.0
    %776 = vmatpush1.msra.mxu0 0.0
    %777 = vmatprep.subr.mxu0 0.0
    %778 = vmatpush1.msra.mxu0 0.0
    %779 = vmatprep.subr.mxu0 0.0
    %780 = vmatpush1.msra.mxu0 0.0
    %781 = vmatprep.subr.mxu0 0.0
    %782 = vmatpush1.msra.mxu0 0.0
    %783 = vmatprep.subr.mxu0 0.0
    %784 = vmatpush1.msra.mxu0 0.0
    %785 = vmatprep.subr.mxu0 0.0
    %786 = vmatpush1.msra.mxu0 0.0
    %787 = vmatprep.subr.mxu0 0.0
    %788 = vmatpush1.msra.mxu0 0.0
    %789 = vmatprep.subr.mxu0 0.0
    %790 = vmatpush1.msra.mxu0 0.0
    %791 = vmatprep.subr.mxu0 0.0
    %792 = vmatpush1.msra.mxu0 0.0
    %793 = vmatprep.subr.mxu0 0.0
    %794 = vmatpush1.msra.mxu0 0.0
    %795 = vmatprep.subr.mxu0 0.0
    %796 = vmatpush1.msra.mxu0 0.0
    %797 = vmatprep.subr.mxu0 0.0
    %798 = vmatpush1.msra.mxu0 0.0
    %799 = vmatprep.subr.mxu0 0.0
    %800 = vmatpush1.msra.mxu0 0.0
    %801 = vmatprep.subr.mxu0 0.0
    %802 = vmatpush1.msra.mxu0 0.0
    %803 = vmatprep.subr.mxu0 0.0
    %804 = vmatpush1.msra.mxu0 0.0
    %805 = vmatprep.subr.mxu0 0.0
    %806 = vmatpush1.msra.mxu0 0.0
    %807 = vmatprep.subr.mxu0 0.0
    %808 = vmatpush1.msra.mxu0 0.0
    %809 = vmatprep.subr.mxu0 0.0
    %810 = vmatpush1.msra.mxu0 0.0
    %811 = vmatprep.subr.mxu0 0.0
    %812 = vmatpush1.msra.mxu0 0.0
    %813 = vmatprep.subr.mxu0 0.0
    %814 = vmatpush1.msra.mxu0 0.0
    %815 = vmatprep.subr.mxu0 0.0
    %816 = vmatpush1.msra.mxu0 0.0
    %817 = vmatprep.subr.mxu0 0.0
    %818 = vmatpush1.msra.mxu0 0.0
    %819 = vmatprep.subr.mxu0 0.0
    %820 = vmatpush1.msra.mxu0 0.0
    %821 = vmatprep.subr.mxu0 0.0
    %822 = vmatpush1.msra.mxu0 0.0
    %823 = vmatprep.subr.mxu0 0.0
    %824 = vmatpush1.msra.mxu0 0.0
    %825 = vmatprep.subr.mxu0 0.0
    %826 = vmatpush1.msra.mxu0 0.0
    %827 = vmatprep.subr.mxu0 0.0
    %828 = vmatpush1.msra.mxu0 0.0
    %829 = vmatprep.subr.mxu0 0.0
    %830 = vmatpush1.msra.mxu0 0.0
    %831 = vmatprep.mubr.f32.mxu0 0.0
    %832 = vmatmul.mubr.f32.gmra.mrb[0].mxu0 %v758
    %v833 = vpop.f32.mrb[0].mxu0
    %v834 = vadd.f32 %v750, %v833
    %v835 = vpop.f32.mrb[0].mxu0
    %v836 = vadd.f32 %v750, %v835
    %837 = vmatprep.mubr.f32.mxu0 0.0
    %838 = vmatmul.mubr.f32.gmra.mrb[0].mxu0 %v761
    %v839 = vpop.f32.mrb[0].mxu0
    %v840 = vadd.f32 %v755, %v839
    %v841 = vpop.f32.mrb[0].mxu0
    %v842 = vadd.f32 %v755, %v841
    %843 = vdwg.mxu0
    %v844 = vmax.f32 %v834, 0.0
    %v845 = vmax.f32 %v836, 0.0
    %v846 = vmax.f32 %v840, 0.0
    %v847 = vmax.f32 %v842, 0.0
    %852 = vrot.lane.b32.xlu0 %v844, 1
    %v853 = vpop.permute.xlu0 %852
    %854 = vrot.lane.b32.xlu0 %v845, 1
    %v855 = vpop.permute.xlu0 %854
    %856 = vrot.lane.b32.xlu0 %v846, 1
    %v857 = vpop.permute.xlu0 %856
    %858 = vrot.lane.b32.xlu0 %v847, 1
    %v859 = vpop.permute.xlu0 %858
    %v860 = vsel %vm495, %v853, %v855
    %v861 = vsel %vm495, %v857, %v859
    %v866 = vsel %vm495, 0.0, %v853
    %v867 = vsel %vm495, 0.0, %v857
    %v868 = vmul.f32 %v866, %v458
    %v869 = vmul.f32 %v860, %v459
    %v870 = vmul.f32 %v867, %v458
    %v871 = vmul.f32 %v861, %v459
    %872 = vrot.lane.b32.xlu0 %v844, 127
    %v873 = vpop.permute.xlu0 %872
    %874 = vrot.lane.b32.xlu0 %v845, 127
    %v875 = vpop.permute.xlu0 %874
    %876 = vrot.lane.b32.xlu0 %v846, 127
    %v877 = vpop.permute.xlu0 %876
    %878 = vrot.lane.b32.xlu0 %v847, 127
    %v879 = vpop.permute.xlu0 %878
    %v880 = vsel %vm520, %v873, %v875
    %v881 = vsel %vm520, %v877, %v879
    %v886 = vsel %vm530, %v875, 0.0
    %v887 = vsel %vm530, %v879, 0.0
    %v888 = vmul.f32 %v880, %v460
    %v889 = vmul.f32 %v886, %v461
    %v890 = vmul.f32 %v881, %v460
    %v891 = vmul.f32 %v887, %v461
    %v892 = vrot.slane %v844, 6
    %v893 = vrot.slane %v845, 6
    %v894 = vrot.slane %v846, 6
    %v895 = vsel %vm573, %v892, %v894
    %v896 = vrot.slane %v847, 6
    %v897 = vsel %vm573, %v893, %v896
    %v906 = vrot.slane %v888, 4
    %v907 = vrot.slane %v889, 4
    %v908 = vrot.slane %v890, 4
    %v909 = vsel %vm576, %v906, %v908
    %v910 = vrot.slane %v891, 4
    %v911 = vsel %vm576, %v907, %v910
    %v914 = vsel %vm573, %v870, %v892
    %v915 = vsel %vm573, %v871, %v893
    %v916 = vsel %vm576, %v895, %v906
    %v917 = vsel %vm576, %v897, %v907
    %v918 = vld [vmem:[#allocation6] sm:$0xff]
    %v919 = vld [vmem:[#allocation6 + $0x8] sm:$0x7f]
    %v920 = vld [vmem:[%s8] sm:$0xff]
    %v921 = vld [vmem:[%s8 + $0x8] sm:$0x7f]
    %923 = vset.pattern.permute.xlu0 0
    %924 = vperm.xlu0 %923, %v920
    %v925 = vpop.permute.xlu0 %924
    %928 = vset.pattern.permute.xlu0 0
    %929 = vperm.xlu0 %928, %v921
    %v930 = vpop.permute.xlu0 %929
    %v933 = vsel %vm593, %v918, 0
    %v936 = vsel %vm593, %v919, 0
    %v938 = vsel %vm600, %v909, 0
    %v940 = vsel %vm600, %v911, 0
    %942 = vmatprep.subr.mxu0 %v869
    %943 = vmatpush1.msra.mxu0 %v868
    %944 = vmatprep.subr.mxu0 %v915
    %945 = vmatpush1.msra.mxu0 %v914
    %946 = vmatprep.subr.mxu0 %v917
    %947 = vmatpush1.msra.mxu0 %v916
    %948 = vmatprep.subr.mxu0 %v940
    %949 = vmatpush1.msra.mxu0 %v938
    %950 = vmatprep.subr.mxu0 0.0
    %951 = vmatpush1.msra.mxu0 0.0
    %952 = vmatprep.subr.mxu0 0.0
    %953 = vmatpush1.msra.mxu0 0.0
    %954 = vmatprep.subr.mxu0 0.0
    %955 = vmatpush1.msra.mxu0 0.0
    %956 = vmatprep.subr.mxu0 0.0
    %957 = vmatpush1.msra.mxu0 0.0
    %958 = vmatprep.subr.mxu0 0.0
    %959 = vmatpush1.msra.mxu0 0.0
    %960 = vmatprep.subr.mxu0 0.0
    %961 = vmatpush1.msra.mxu0 0.0
    %962 = vmatprep.subr.mxu0 0.0
    %963 = vmatpush1.msra.mxu0 0.0
    %964 = vmatprep.subr.mxu0 0.0
    %965 = vmatpush1.msra.mxu0 0.0
    %966 = vmatprep.subr.mxu0 0.0
    %967 = vmatpush1.msra.mxu0 0.0
    %968 = vmatprep.subr.mxu0 0.0
    %969 = vmatpush1.msra.mxu0 0.0
    %970 = vmatprep.subr.mxu0 0.0
    %971 = vmatpush1.msra.mxu0 0.0
    %972 = vmatprep.subr.mxu0 0.0
    %973 = vmatpush1.msra.mxu0 0.0
    %974 = vmatprep.subr.mxu0 0.0
    %975 = vmatpush1.msra.mxu0 0.0
    %976 = vmatprep.subr.mxu0 0.0
    %977 = vmatpush1.msra.mxu0 0.0
    %978 = vmatprep.subr.mxu0 0.0
    %979 = vmatpush1.msra.mxu0 0.0
    %980 = vmatprep.subr.mxu0 0.0
    %981 = vmatpush1.msra.mxu0 0.0
    %982 = vmatprep.subr.mxu0 0.0
    %983 = vmatpush1.msra.mxu0 0.0
    %984 = vmatprep.subr.mxu0 0.0
    %985 = vmatpush1.msra.mxu0 0.0
    %986 = vmatprep.subr.mxu0 0.0
    %987 = vmatpush1.msra.mxu0 0.0
    %988 = vmatprep.subr.mxu0 0.0
    %989 = vmatpush1.msra.mxu0 0.0
    %990 = vmatprep.subr.mxu0 0.0
    %991 = vmatpush1.msra.mxu0 0.0
    %992 = vmatprep.subr.mxu0 0.0
    %993 = vmatpush1.msra.mxu0 0.0
    %994 = vmatprep.subr.mxu0 0.0
    %995 = vmatpush1.msra.mxu0 0.0
    %996 = vmatprep.subr.mxu0 0.0
    %997 = vmatpush1.msra.mxu0 0.0
    %998 = vmatprep.subr.mxu0 0.0
    %999 = vmatpush1.msra.mxu0 0.0
    %1000 = vmatprep.subr.mxu0 0.0
    %1001 = vmatpush1.msra.mxu0 0.0
    %1002 = vmatprep.subr.mxu0 0.0
    %1003 = vmatpush1.msra.mxu0 0.0
    %1004 = vmatprep.subr.mxu0 0.0
    %1005 = vmatpush1.msra.mxu0 0.0
    %1006 = vmatprep.mubr.f32.mxu0 0.0
    %1007 = vmatmul.mubr.f32.gmra.mrb[0].mxu0 %v933
    %v1008 = vpop.f32.mrb[0].mxu0
    %v1009 = vadd.f32 %v925, %v1008
    %v1010 = vpop.f32.mrb[0].mxu0
    %v1011 = vadd.f32 %v925, %v1010
    %1012 = vmatprep.mubr.f32.mxu0 0.0
    %1013 = vmatmul.mubr.f32.gmra.mrb[0].mxu0 %v936
    %v1014 = vpop.f32.mrb[0].mxu0
    %v1015 = vadd.f32 %v930, %v1014
    %v1016 = vpop.f32.mrb[0].mxu0
    %v1017 = vadd.f32 %v930, %v1016
    %1018 = vdwg.mxu0
    %v1023 = vrot.slane %v672, 1
    %v1024 = vrot.slane %v674, 1
    %v1025 = vrot.slane %v678, 1
    %v1026 = vsel %vm684, %v1023, %v1025
    %v1027 = vrot.slane %v680, 1
    %v1028 = vsel %vm684, %v1024, %v1027
    %v1039 = vrot.slane %v1009, 7
    %v1040 = vrot.slane %v1011, 7
    %v1041 = vrot.slane %v1015, 7
    %v1042 = vsel %vm476, %v1039, %v1041
    %v1043 = vrot.slane %v1017, 7
    %v1044 = vsel %vm476, %v1040, %v1043
    %v1049 = vsel %vm684, %v405, %v1023
    %v1050 = vsel %vm684, %v407, %v1024
    %v1051 = vsel %vm476, %v1025, %v1039
    %v1052 = vsel %vm476, %v1027, %v1040
    %1059 = vrot.lane.b32.xlu0 %v399, 127
    %v1060 = vpop.permute.xlu0 %1059
    %1061 = vrot.lane.b32.xlu0 %v401, 127
    %v1062 = vpop.permute.xlu0 %1061
    %1063 = vrot.lane.b32.xlu0 %v1049, 127
    %v1064 = vpop.permute.xlu0 %1063
    %1065 = vrot.lane.b32.xlu0 %v1050, 127
    %v1066 = vpop.permute.xlu0 %1065
    %1067 = vrot.lane.b32.xlu0 %v1026, 127
    %v1068 = vpop.permute.xlu0 %1067
    %1069 = vrot.lane.b32.xlu0 %v1028, 127
    %v1070 = vpop.permute.xlu0 %1069
    %1071 = vrot.lane.b32.xlu0 %v1051, 127
    %v1072 = vpop.permute.xlu0 %1071
    %1073 = vrot.lane.b32.xlu0 %v1052, 127
    %v1074 = vpop.permute.xlu0 %1073
    %1075 = vrot.lane.b32.xlu0 %v1042, 127
    %v1076 = vpop.permute.xlu0 %1075
    %1077 = vrot.lane.b32.xlu0 %v1044, 127
    %v1078 = vpop.permute.xlu0 %1077
    %v1079 = vsel %vm520, %v1060, %v1062
    %v1080 = vsel %vm520, %v1064, %v1066
    %v1081 = vsel %vm520, %v1068, %v1070
    %v1082 = vsel %vm520, %v1072, %v1074
    %v1083 = vsel %vm520, %v1076, %v1078
    %v1094 = vsel %vm530, %v1062, 0.0
    %v1095 = vsel %vm530, %v1066, 0.0
    %v1096 = vsel %vm530, %v1070, 0.0
    %v1097 = vsel %vm530, %v1074, 0.0
    %v1098 = vsel %vm530, %v1078, 0.0
    %v1099 = vmax.f32 %v399, %v1079
    %v1100 = vmax.f32 %v401, %v1094
    %v1101 = vmax.f32 %v1049, %v1080
    %v1102 = vmax.f32 %v1050, %v1095
    %v1103 = vmax.f32 %v1026, %v1081
    %v1104 = vmax.f32 %v1028, %v1096
    %v1105 = vmax.f32 %v1051, %v1082
    %v1106 = vmax.f32 %v1052, %v1097
    %v1107 = vmax.f32 %v1042, %v1083
    %v1108 = vmax.f32 %v1044, %v1098
    %1109 = vrot.lane.b32.xlu0 %v399, 126
    %v1110 = vpop.permute.xlu0 %1109
    %1111 = vrot.lane.b32.xlu0 %v401, 126
    %v1112 = vpop.permute.xlu0 %1111
    %1113 = vrot.lane.b32.xlu0 %v1049, 126
    %v1114 = vpop.permute.xlu0 %1113
    %1115 = vrot.lane.b32.xlu0 %v1050, 126
    %v1116 = vpop.permute.xlu0 %1115
    %1117 = vrot.lane.b32.xlu0 %v1026, 126
    %v1118 = vpop.permute.xlu0 %1117
    %1119 = vrot.lane.b32.xlu0 %v1028, 126
    %v1120 = vpop.permute.xlu0 %1119
    %1121 = vrot.lane.b32.xlu0 %v1051, 126
    %v1122 = vpop.permute.xlu0 %1121
    %1123 = vrot.lane.b32.xlu0 %v1052, 126
    %v1124 = vpop.permute.xlu0 %1123
    %1125 = vrot.lane.b32.xlu0 %v1042, 126
    %v1126 = vpop.permute.xlu0 %1125
    %1127 = vrot.lane.b32.xlu0 %v1044, 126
    %v1128 = vpop.permute.xlu0 %1127
    %vm1129 = vcmask 1031168
    %v1130 = vsel %vm1129, %v1110, %v1112
    %v1131 = vsel %vm1129, %v1114, %v1116
    %v1132 = vsel %vm1129, %v1118, %v1120
    %v1133 = vsel %vm1129, %v1122, %v1124
    %v1134 = vsel %vm1129, %v1126, %v1128
    %vm1145 = vcmask 80896
    %v1146 = vsel %vm1145, %v1112, 0.0
    %v1147 = vsel %vm1145, %v1116, 0.0
    %v1148 = vsel %vm1145, %v1120, 0.0
    %v1149 = vsel %vm1145, %v1124, 0.0
    %v1150 = vsel %vm1145, %v1128, 0.0
    %v1151 = vmax.f32 %v1099, %v1130
    %v1152 = vmax.f32 %v1100, %v1146
    %v1153 = vmax.f32 %v1101, %v1131
    %v1154 = vmax.f32 %v1102, %v1147
    %v1155 = vmax.f32 %v1103, %v1132
    %v1156 = vmax.f32 %v1104, %v1148
    %v1157 = vmax.f32 %v1105, %v1133
    %v1158 = vmax.f32 %v1106, %v1149
    %v1159 = vmax.f32 %v1107, %v1134
    %v1160 = vmax.f32 %v1108, %v1150
    %1166 = vrot.lane.b32.xlu0 %v1151, 93
    %v1167 = vpop.permute.xlu0 %1166
    %1168 = vrot.lane.b32.xlu0 %v1153, 93
    %v1169 = vpop.permute.xlu0 %1168
    %1170 = vrot.lane.b32.xlu0 %v1155, 93
    %v1171 = vpop.permute.xlu0 %1170
    %1172 = vrot.lane.b32.xlu0 %v1157, 93
    %v1173 = vpop.permute.xlu0 %1172
    %1174 = vrot.lane.b32.xlu0 %v1159, 93
    %v1175 = vpop.permute.xlu0 %1174
    %1176 = vrot.lane.b32.xlu0 %v1151, 58
    %v1177 = vpop.permute.xlu0 %1176
    %1178 = vrot.lane.b32.xlu0 %v1153, 58
    %v1179 = vpop.permute.xlu0 %1178
    %1180 = vrot.lane.b32.xlu0 %v1155, 58
    %v1181 = vpop.permute.xlu0 %1180
    %1182 = vrot.lane.b32.xlu0 %v1157, 58
    %v1183 = vpop.permute.xlu0 %1182
    %1184 = vrot.lane.b32.xlu0 %v1159, 58
    %v1185 = vpop.permute.xlu0 %1184
    %1191 = vrot.lane.b32.xlu0 %v1151, 23
    %v1192 = vpop.permute.xlu0 %1191
    %1193 = vrot.lane.b32.xlu0 %v1152, 23
    %v1194 = vpop.permute.xlu0 %1193
    %1195 = vrot.lane.b32.xlu0 %v1153, 23
    %v1196 = vpop.permute.xlu0 %1195
    %1197 = vrot.lane.b32.xlu0 %v1154, 23
    %v1198 = vpop.permute.xlu0 %1197
    %1199 = vrot.lane.b32.xlu0 %v1155, 23
    %v1200 = vpop.permute.xlu0 %1199
    %1201 = vrot.lane.b32.xlu0 %v1156, 23
    %v1202 = vpop.permute.xlu0 %1201
    %1203 = vrot.lane.b32.xlu0 %v1157, 23
    %v1204 = vpop.permute.xlu0 %1203
    %1205 = vrot.lane.b32.xlu0 %v1158, 23
    %v1206 = vpop.permute.xlu0 %1205
    %1207 = vrot.lane.b32.xlu0 %v1159, 23
    %v1208 = vpop.permute.xlu0 %1207
    %1209 = vrot.lane.b32.xlu0 %v1160, 23
    %v1210 = vpop.permute.xlu0 %1209
    %vm1211 = vcmask 187392
    %v1212 = vsel %vm1211, %v1192, %v1194
    %v1213 = vsel %vm1211, %v1196, %v1198
    %v1214 = vsel %vm1211, %v1200, %v1202
    %v1215 = vsel %vm1211, %v1204, %v1206
    %v1216 = vsel %vm1211, %v1208, %v1210
    %v1217 = vld [vmem:[#allocation7] sm:$0xff]
    %v1218 = vld [vmem:[#allocation7 + $0x8] sm:$0xff]
    %v1219 = vld [vmem:[#allocation7 + $0x10] sm:$0xff]
    %v1220 = vld [vmem:[#allocation7 + $0x18] sm:$0xff]
    %v1221 = vld [vmem:[#allocation7 + $0x20] sm:$0x1]
    %v1222 = vld [vmem:[#allocation9] sm:$0x1]
    %v1224 = vlaneseq
    %v1225 = vshrl.u32 %v1224, 7
    %v1226 = vsub.s32 0, %v1225
    %v1227 = vrot.slane %v1222, %v1226
    %vm1229 = vcmask 269312
    %v1230 = vsel %vm1229, %v1151, 0
    %v1232 = vsel %vm1229, %v1153, 0
    %v1234 = vsel %vm1229, %v1155, 0
    %v1236 = vsel %vm1229, %v1157, 0
    %v1238 = vsel %vm1229, %v1159, 0
    %v1240 = vsel %vm1229, %v1167, 0
    %v1242 = vsel %vm1229, %v1169, 0
    %v1244 = vsel %vm1229, %v1171, 0
    %v1246 = vsel %vm1229, %v1173, 0
    %v1248 = vsel %vm1229, %v1175, 0
    %v1250 = vsel %vm1229, %v1177, 0
    %v1252 = vsel %vm1229, %v1179, 0
    %v1254 = vsel %vm1229, %v1181, 0
    %v1256 = vsel %vm1229, %v1183, 0
    %v1258 = vsel %vm1229, %v1185, 0
    %v1260 = vsel %vm1229, %v1212, 0
    %v1262 = vsel %vm1229, %v1213, 0
    %v1264 = vsel %vm1229, %v1214, 0
    %v1266 = vsel %vm1229, %v1215, 0
    %v1268 = vsel %vm1229, %v1216, 0
    %v1271 = vsel %vm476, %v1221, 0
    %1273 = vmatprep.subr.mxu0 0.0
    %1274 = vmatpush1.msra.mxu0 %v1217
    %1275 = vmatprep.subr.mxu0 0.0
    %1276 = vmatpush1.msra.mxu0 %v1218
    %1277 = vmatprep.subr.mxu0 0.0
    %1278 = vmatpush1.msra.mxu0 %v1219
    %1279 = vmatprep.subr.mxu0 0.0
    %1280 = vmatpush1.msra.mxu0 %v1220
    %1281 = vmatprep.subr.mxu0 0.0
    %1282 = vmatpush1.msra.mxu0 %v1271
    %1283 = vmatprep.subr.mxu0 0.0
    %1284 = vmatpush1.msra.mxu0 0.0
    %1285 = vmatprep.subr.mxu0 0.0
    %1286 = vmatpush1.msra.mxu0 0.0
    %1287 = vmatprep.subr.mxu0 0.0
    %1288 = vmatpush1.msra.mxu0 0.0
    %1289 = vmatprep.subr.mxu0 0.0
    %1290 = vmatpush1.msra.mxu0 0.0
    %1291 = vmatprep.subr.mxu0 0.0
    %1292 = vmatpush1.msra.mxu0 0.0
    %1293 = vmatprep.subr.mxu0 0.0
    %1294 = vmatpush1.msra.mxu0 0.0
    %1295 = vmatprep.subr.mxu0 0.0
    %1296 = vmatpush1.msra.mxu0 0.0
    %1297 = vmatprep.subr.mxu0 0.0
    %1298 = vmatpush1.msra.mxu0 0.0
    %1299 = vmatprep.subr.mxu0 0.0
    %1300 = vmatpush1.msra.mxu0 0.0
    %1301 = vmatprep.subr.mxu0 0.0
    %1302 = vmatpush1.msra.mxu0 0.0
    %1303 = vmatprep.subr.mxu0 0.0
    %1304 = vmatpush1.msra.mxu0 0.0
    %1305 = vmatprep.subr.mxu0 0.0
    %1306 = vmatpush1.msra.mxu0 0.0
    %1307 = vmatprep.subr.mxu0 0.0
    %1308 = vmatpush1.msra.mxu0 0.0
    %1309 = vmatprep.subr.mxu0 0.0
    %1310 = vmatpush1.msra.mxu0 0.0
    %1311 = vmatprep.subr.mxu0 0.0
    %1312 = vmatpush1.msra.mxu0 0.0
    %1313 = vmatprep.subr.mxu0 0.0
    %1314 = vmatpush1.msra.mxu0 0.0
    %1315 = vmatprep.subr.mxu0 0.0
    %1316 = vmatpush1.msra.mxu0 0.0
    %1317 = vmatprep.subr.mxu0 0.0
    %1318 = vmatpush1.msra.mxu0 0.0
    %1319 = vmatprep.subr.mxu0 0.0
    %1320 = vmatpush1.msra.mxu0 0.0
    %1321 = vmatprep.subr.mxu0 0.0
    %1322 = vmatpush1.msra.mxu0 0.0
    %1323 = vmatprep.subr.mxu0 0.0
    %1324 = vmatpush1.msra.mxu0 0.0
    %1325 = vmatprep.subr.mxu0 0.0
    %1326 = vmatpush1.msra.mxu0 0.0
    %1327 = vmatprep.subr.mxu0 0.0
    %1328 = vmatpush1.msra.mxu0 0.0
    %1329 = vmatprep.subr.mxu0 0.0
    %1330 = vmatpush1.msra.mxu0 0.0
    %1331 = vmatprep.subr.mxu0 0.0
    %1332 = vmatpush1.msra.mxu0 0.0
    %1333 = vmatprep.subr.mxu0 0.0
    %1334 = vmatpush1.msra.mxu0 0.0
    %1335 = vmatprep.subr.mxu0 0.0
    %1336 = vmatpush1.msra.mxu0 0.0
    %1337 = vmatprep.mubr.f32.mxu0 0.0
    %1338 = vmatmul.mubr.f32.gmra.mrb[0].mxu0 %v1230
    %v1339 = vpop.f32.mrb[0].mxu0
    %v1340 = vadd.f32 %v1227, %v1339
    %v1341 = vpop.f32.mrb[0].mxu0
    %1342 = vmatprep.mubr.f32.mxu0 0.0
    %1343 = vmatmul.mubr.f32.gmra.mrb[0].mxu0 %v1232
    %v1344 = vpop.f32.mrb[0].mxu0
    %v1345 = vadd.f32 %v1227, %v1344
    %v1346 = vpop.f32.mrb[0].mxu0
    %1347 = vmatprep.mubr.f32.mxu0 0.0
    %1348 = vmatmul.mubr.f32.gmra.mrb[0].mxu0 %v1234
    %v1349 = vpop.f32.mrb[0].mxu0
    %v1350 = vadd.f32 %v1227, %v1349
    %v1351 = vpop.f32.mrb[0].mxu0
    %1352 = vmatprep.mubr.f32.mxu0 0.0
    %1353 = vmatmul.mubr.f32.gmra.mrb[0].mxu0 %v1236
    %v1354 = vpop.f32.mrb[0].mxu0
    %v1355 = vadd.f32 %v1227, %v1354
    %v1356 = vpop.f32.mrb[0].mxu0
    %1357 = vmatprep.mubr.f32.mxu0 0.0
    %1358 = vmatmul.mubr.f32.gmra.mrb[0].mxu0 %v1238
    %v1359 = vpop.f32.mrb[0].mxu0
    %v1360 = vadd.f32 %v1227, %v1359
    %v1361 = vpop.f32.mrb[0].mxu0
    %1362 = vmatprep.mubr.f32.mxu0 0.0
    %1363 = vmatmul.mubr.f32.gmra.mrb[0].mxu0 %v1240
    %v1364 = vpop.f32.mrb[0].mxu0
    %v1365 = vadd.f32 %v1227, %v1364
    %v1366 = vpop.f32.mrb[0].mxu0
    %1367 = vmatprep.mubr.f32.mxu0 0.0
    %1368 = vmatmul.mubr.f32.gmra.mrb[0].mxu0 %v1242
    %v1369 = vpop.f32.mrb[0].mxu0
    %v1370 = vadd.f32 %v1227, %v1369
    %v1371 = vpop.f32.mrb[0].mxu0
    %1372 = vmatprep.mubr.f32.mxu0 0.0
    %1373 = vmatmul.mubr.f32.gmra.mrb[0].mxu0 %v1244
    %v1374 = vpop.f32.mrb[0].mxu0
    %v1375 = vadd.f32 %v1227, %v1374
    %v1376 = vpop.f32.mrb[0].mxu0
    %1377 = vmatprep.mubr.f32.mxu0 0.0
    %1378 = vmatmul.mubr.f32.gmra.mrb[0].mxu0 %v1246
    %v1379 = vpop.f32.mrb[0].mxu0
    %v1380 = vadd.f32 %v1227, %v1379
    %v1381 = vpop.f32.mrb[0].mxu0
    %1382 = vmatprep.mubr.f32.mxu0 0.0
    %1383 = vmatmul.mubr.f32.gmra.mrb[0].mxu0 %v1248
    %v1384 = vpop.f32.mrb[0].mxu0
    %v1385 = vadd.f32 %v1227, %v1384
    %v1386 = vpop.f32.mrb[0].mxu0
    %1387 = vmatprep.mubr.f32.mxu0 0.0
    %1388 = vmatmul.mubr.f32.gmra.mrb[0].mxu0 %v1250
    %v1389 = vpop.f32.mrb[0].mxu0
    %v1390 = vadd.f32 %v1227, %v1389
    %v1391 = vpop.f32.mrb[0].mxu0
    %1392 = vmatprep.mubr.f32.mxu0 0.0
    %1393 = vmatmul.mubr.f32.gmra.mrb[0].mxu0 %v1252
    %v1394 = vpop.f32.mrb[0].mxu0
    %v1395 = vadd.f32 %v1227, %v1394
    %v1396 = vpop.f32.mrb[0].mxu0
    %1397 = vmatprep.mubr.f32.mxu0 0.0
    %1398 = vmatmul.mubr.f32.gmra.mrb[0].mxu0 %v1254
    %v1399 = vpop.f32.mrb[0].mxu0
    %v1400 = vadd.f32 %v1227, %v1399
    %v1401 = vpop.f32.mrb[0].mxu0
    %1402 = vmatprep.mubr.f32.mxu0 0.0
    %1403 = vmatmul.mubr.f32.gmra.mrb[0].mxu0 %v1256
    %v1404 = vpop.f32.mrb[0].mxu0
    %v1405 = vadd.f32 %v1227, %v1404
    %v1406 = vpop.f32.mrb[0].mxu0
    %1407 = vmatprep.mubr.f32.mxu0 0.0
    %1408 = vmatmul.mubr.f32.gmra.mrb[0].mxu0 %v1258
    %v1409 = vpop.f32.mrb[0].mxu0
    %v1410 = vadd.f32 %v1227, %v1409
    %v1411 = vpop.f32.mrb[0].mxu0
    %1412 = vmatprep.mubr.f32.mxu0 0.0
    %1413 = vmatmul.mubr.f32.gmra.mrb[0].mxu0 %v1260
    %v1414 = vpop.f32.mrb[0].mxu0
    %v1415 = vadd.f32 %v1227, %v1414
    %v1416 = vpop.f32.mrb[0].mxu0
    %1417 = vmatprep.mubr.f32.mxu0 0.0
    %1418 = vmatmul.mubr.f32.gmra.mrb[0].mxu0 %v1262
    %v1419 = vpop.f32.mrb[0].mxu0
    %v1420 = vadd.f32 %v1227, %v1419
    %v1421 = vpop.f32.mrb[0].mxu0
    %1422 = vmatprep.mubr.f32.mxu0 0.0
    %1423 = vmatmul.mubr.f32.gmra.mrb[0].mxu0 %v1264
    %v1424 = vpop.f32.mrb[0].mxu0
    %v1425 = vadd.f32 %v1227, %v1424
    %v1426 = vpop.f32.mrb[0].mxu0
    %1427 = vmatprep.mubr.f32.mxu0 0.0
    %1428 = vmatmul.mubr.f32.gmra.mrb[0].mxu0 %v1266
    %v1429 = vpop.f32.mrb[0].mxu0
    %v1430 = vadd.f32 %v1227, %v1429
    %v1431 = vpop.f32.mrb[0].mxu0
    %1432 = vmatprep.mubr.f32.mxu0 0.0
    %1433 = vmatmul.mubr.f32.gmra.mrb[0].mxu0 %v1268
    %v1434 = vpop.f32.mrb[0].mxu0
    %v1435 = vadd.f32 %v1227, %v1434
    %v1436 = vpop.f32.mrb[0].mxu0
    %1437 = vdwg.mxu0
    %v1438 = vld [vmem:[#allocation10] sm:$0xff]
    %v1439 = vld [vmem:[#allocation10 + $0x8] sm:$0xff]
    %v1440 = vld [vmem:[#allocation10 + $0x10] sm:$0xf]
    %v1441 = vld [vmem:[#allocation12] sm:$0x1]
    %v1442 = vld [vmem:[#allocation13] sm:$0xff]
    %v1443 = vld [vmem:[#allocation13 + $0x8] sm:$0xff]
    %v1444 = vld [vmem:[#allocation13 + $0x10] sm:$0xf]
    %v1445 = vld [vmem:[#allocation15] sm:$0x1]
    %v1447 = vlaneseq
    %v1448 = vshrl.u32 %v1447, 7
    %v1449 = vsub.s32 0, %v1448
    %v1450 = vrot.slane %v1441, %v1449
    %vm1452 = vcmask 162816
    %v1454 = vsel %vm1452, 0.0, 0
    %v1457 = vsel %vm576, %v1440, 0
    %1459 = vmatprep.subr.mxu0 0.0
    %1460 = vmatpush1.msra.mxu0 %v1438
    %1461 = vmatprep.subr.mxu0 0.0
    %1462 = vmatpush1.msra.mxu0 %v1439
    %1463 = vmatprep.subr.mxu0 0.0
    %1464 = vmatpush1.msra.mxu0 %v1457
    %1465 = vmatprep.subr.mxu0 0.0
    %1466 = vmatpush1.msra.mxu0 0.0
    %1467 = vmatprep.subr.mxu0 0.0
    %1468 = vmatpush1.msra.mxu0 0.0
    %1469 = vmatprep.subr.mxu0 0.0
    %1470 = vmatpush1.msra.mxu0 0.0
    %1471 = vmatprep.subr.mxu0 0.0
    %1472 = vmatpush1.msra.mxu0 0.0
    %1473 = vmatprep.subr.mxu0 0.0
    %1474 = vmatpush1.msra.mxu0 0.0
    %1475 = vmatprep.subr.mxu0 0.0
    %1476 = vmatpush1.msra.mxu0 0.0
    %1477 = vmatprep.subr.mxu0 0.0
    %1478 = vmatpush1.msra.mxu0 0.0
    %1479 = vmatprep.subr.mxu0 0.0
    %1480 = vmatpush1.msra.mxu0 0.0
    %1481 = vmatprep.subr.mxu0 0.0
    %1482 = vmatpush1.msra.mxu0 0.0
    %1483 = vmatprep.subr.mxu0 0.0
    %1484 = vmatpush1.msra.mxu0 0.0
    %1485 = vmatprep.subr.mxu0 0.0
    %1486 = vmatpush1.msra.mxu0 0.0
    %1487 = vmatprep.subr.mxu0 0.0
    %1488 = vmatpush1.msra.mxu0 0.0
    %1489 = vmatprep.subr.mxu0 0.0
    %1490 = vmatpush1.msra.mxu0 0.0
    %1491 = vmatprep.subr.mxu0 0.0
    %1492 = vmatpush1.msra.mxu0 0.0
    %1493 = vmatprep.subr.mxu0 0.0
    %1494 = vmatpush1.msra.mxu0 0.0
    %1495 = vmatprep.subr.mxu0 0.0
    %1496 = vmatpush1.msra.mxu0 0.0
    %1497 = vmatprep.subr.mxu0 0.0
    %1498 = vmatpush1.msra.mxu0 0.0
    %1499 = vmatprep.subr.mxu0 0.0
    %1500 = vmatpush1.msra.mxu0 0.0
    %1501 = vmatprep.subr.mxu0 0.0
    %1502 = vmatpush1.msra.mxu0 0.0
    %1503 = vmatprep.subr.mxu0 0.0
    %1504 = vmatpush1.msra.mxu0 0.0
    %1505 = vmatprep.subr.mxu0 0.0
    %1506 = vmatpush1.msra.mxu0 0.0
    %1507 = vmatprep.subr.mxu0 0.0
    %1508 = vmatpush1.msra.mxu0 0.0
    %1509 = vmatprep.subr.mxu0 0.0
    %1510 = vmatpush1.msra.mxu0 0.0
    %1511 = vmatprep.subr.mxu0 0.0
    %1512 = vmatpush1.msra.mxu0 0.0
    %1513 = vmatprep.subr.mxu0 0.0
    %1514 = vmatpush1.msra.mxu0 0.0
    %1515 = vmatprep.subr.mxu0 0.0
    %1516 = vmatpush1.msra.mxu0 0.0
    %1517 = vmatprep.subr.mxu0 0.0
    %1518 = vmatpush1.msra.mxu0 0.0
    %1519 = vmatprep.subr.mxu0 0.0
    %1520 = vmatpush1.msra.mxu0 0.0
    %1521 = vmatprep.subr.mxu0 0.0
    %1522 = vmatpush1.msra.mxu0 0.0
    %1523 = vmatprep.mubr.f32.mxu0 0.0
    %1524 = vmatmul.mubr.f32.gmra.mrb[0].mxu0 %v1454
    %v1525 = vpop.f32.mrb[0].mxu0
    %v1526 = vadd.f32 %v1450, %v1525
    %v1527 = vpop.f32.mrb[0].mxu0
    %1528 = vmatprep.mubr.f32.mxu0 0.0
    %1529 = vmatmul.mubr.f32.gmra.mrb[0].mxu0 %v1454
    %v1530 = vpop.f32.mrb[0].mxu0
    %v1531 = vadd.f32 %v1450, %v1530
    %v1532 = vpop.f32.mrb[0].mxu0
    %1533 = vmatprep.mubr.f32.mxu0 0.0
    %1534 = vmatmul.mubr.f32.gmra.mrb[0].mxu0 %v1454
    %v1535 = vpop.f32.mrb[0].mxu0
    %v1536 = vadd.f32 %v1450, %v1535
    %v1537 = vpop.f32.mrb[0].mxu0
    %1538 = vmatprep.mubr.f32.mxu0 0.0
    %1539 = vmatmul.mubr.f32.gmra.mrb[0].mxu0 %v1454
    %v1540 = vpop.f32.mrb[0].mxu0
    %v1541 = vadd.f32 %v1450, %v1540
    %v1542 = vpop.f32.mrb[0].mxu0
    %1543 = vmatprep.mubr.f32.mxu0 0.0
    %1544 = vmatmul.mubr.f32.gmra.mrb[0].mxu0 %v1454
    %v1545 = vpop.f32.mrb[0].mxu0
    %v1546 = vadd.f32 %v1450, %v1545
    %v1547 = vpop.f32.mrb[0].mxu0
    %1548 = vdwg.mxu0
    %v1549 = vadd.f32 %v1340, %v1526
    %v1550 = vadd.f32 %v1345, %v1531
    %v1551 = vadd.f32 %v1350, %v1536
    %v1552 = vadd.f32 %v1355, %v1541
    %v1553 = vadd.f32 %v1360, %v1546
    %v1554 = vxor.u32 %v1549, 2147483648
    %v1555 = vxor.u32 %v1550, 2147483648
    %v1556 = vxor.u32 %v1551, 2147483648
    %v1557 = vxor.u32 %v1552, 2147483648
    %v1558 = vxor.u32 %v1553, 2147483648
    %v1559 = vmul.f32 %v1554, 1.442695
    %v1560 = vpow.pop %v1559
    %v1561 = vmul.f32 %v1555, 1.442695
    %v1562 = vpow.pop %v1561
    %v1563 = vmul.f32 %v1556, 1.442695
    %v1564 = vpow.pop %v1563
    %v1565 = vmul.f32 %v1557, 1.442695
    %v1566 = vpow.pop %v1565
    %v1567 = vmul.f32 %v1558, 1.442695
    %v1568 = vpow.pop %v1567
    %v1569 = vadd.f32 %v1560, 1.0
    %v1570 = vadd.f32 %v1562, 1.0
    %v1571 = vadd.f32 %v1564, 1.0
    %v1572 = vadd.f32 %v1566, 1.0
    %v1573 = vadd.f32 %v1568, 1.0
    %v1574 = vrcp.pop %v1569
    %v1575 = vmul.f32 1.0, %v1574
    %v1576 = vrcp.pop %v1570
    %v1577 = vmul.f32 1.0, %v1576
    %v1578 = vrcp.pop %v1571
    %v1579 = vmul.f32 1.0, %v1578
    %v1580 = vrcp.pop %v1572
    %v1581 = vmul.f32 1.0, %v1580
    %v1582 = vrcp.pop %v1573
    %v1583 = vmul.f32 1.0, %v1582
    %1589 = vrot.lane.b32.xlu0 %v1526, 88
    %v1590 = vpop.permute.xlu0 %1589
    %1591 = vrot.lane.b32.xlu0 %v1531, 88
    %v1592 = vpop.permute.xlu0 %1591
    %1593 = vrot.lane.b32.xlu0 %v1536, 88
    %v1594 = vpop.permute.xlu0 %1593
    %1595 = vrot.lane.b32.xlu0 %v1541, 88
    %v1596 = vpop.permute.xlu0 %1595
    %1597 = vrot.lane.b32.xlu0 %v1546, 88
    %v1598 = vpop.permute.xlu0 %1597
    %v1604 = vmul.f32 %v1575, %v1590
    %v1605 = vmul.f32 %v1577, %v1592
    %v1606 = vmul.f32 %v1579, %v1594
    %v1607 = vmul.f32 %v1581, %v1596
    %v1608 = vmul.f32 %v1583, %v1598
    %1614 = vrot.lane.b32.xlu0 %v1604, 40
    %v1615 = vpop.permute.xlu0 %1614
    %1616 = vrot.lane.b32.xlu0 %v1605, 40
    %v1617 = vpop.permute.xlu0 %1616
    %1618 = vrot.lane.b32.xlu0 %v1606, 40
    %v1619 = vpop.permute.xlu0 %1618
    %1620 = vrot.lane.b32.xlu0 %v1607, 40
    %v1621 = vpop.permute.xlu0 %1620
    %1622 = vrot.lane.b32.xlu0 %v1608, 40
    %v1623 = vpop.permute.xlu0 %1622
    %v1629 = vadd.f32 %v1340, %v1615
    %v1630 = vadd.f32 %v1345, %v1617
    %v1631 = vadd.f32 %v1350, %v1619
    %v1632 = vadd.f32 %v1355, %v1621
    %v1633 = vadd.f32 %v1360, %v1623
    %v1634 = vtanh.pop %v1629
    %v1635 = vtanh.pop %v1630
    %v1636 = vtanh.pop %v1631
    %v1637 = vtanh.pop %v1632
    %v1638 = vtanh.pop %v1633
    %v1639 = vsub.f32 1.0, %v1575
    %v1640 = vsub.f32 1.0, %v1577
    %v1641 = vsub.f32 1.0, %v1579
    %v1642 = vsub.f32 1.0, %v1581
    %v1643 = vsub.f32 1.0, %v1583
    %1649 = vrot.lane.b32.xlu0 %v1634, 108
    %v1650 = vpop.permute.xlu0 %1649
    %1651 = vrot.lane.b32.xlu0 %v1635, 108
    %v1652 = vpop.permute.xlu0 %1651
    %1653 = vrot.lane.b32.xlu0 %v1636, 108
    %v1654 = vpop.permute.xlu0 %1653
    %1655 = vrot.lane.b32.xlu0 %v1637, 108
    %v1656 = vpop.permute.xlu0 %1655
    %1657 = vrot.lane.b32.xlu0 %v1638, 108
    %v1658 = vpop.permute.xlu0 %1657
    %v1664 = vmul.f32 %v1639, %v1650
    %v1665 = vmul.f32 %v1640, %v1652
    %v1666 = vmul.f32 %v1641, %v1654
    %v1667 = vmul.f32 %v1642, %v1656
    %v1668 = vmul.f32 %v1643, %v1658
    %v1669 = vmul.f32 %v1575, 0.0
    %v1670 = vmul.f32 %v1577, 0.0
    %v1671 = vmul.f32 %v1579, 0.0
    %v1672 = vmul.f32 %v1581, 0.0
    %v1673 = vmul.f32 %v1583, 0.0
    %v1674 = vadd.f32 %v1664, %v1669
    %v1675 = vadd.f32 %v1665, %v1670
    %v1676 = vadd.f32 %v1666, %v1671
    %v1677 = vadd.f32 %v1667, %v1672
    %v1678 = vadd.f32 %v1668, %v1673
    %v1680 = vlaneseq
    %v1681 = vshrl.u32 %v1680, 7
    %v1682 = vsub.s32 0, %v1681
    %v1683 = vrot.slane %v1445, %v1682
    %v1686 = vsel %vm576, %v1444, 0
    %1688 = vmatprep.subr.mxu0 0.0
    %1689 = vmatpush1.msra.mxu0 %v1442
    %1690 = vmatprep.subr.mxu0 0.0
    %1691 = vmatpush1.msra.mxu0 %v1443
    %1692 = vmatprep.subr.mxu0 0.0
    %1693 = vmatpush1.msra.mxu0 %v1686
    %1694 = vmatprep.subr.mxu0 0.0
    %1695 = vmatpush1.msra.mxu0 0.0
    %1696 = vmatprep.subr.mxu0 0.0
    %1697 = vmatpush1.msra.mxu0 0.0
    %1698 = vmatprep.subr.mxu0 0.0
    %1699 = vmatpush1.msra.mxu0 0.0
    %1700 = vmatprep.subr.mxu0 0.0
    %1701 = vmatpush1.msra.mxu0 0.0
    %1702 = vmatprep.subr.mxu0 0.0
    %1703 = vmatpush1.msra.mxu0 0.0
    %1704 = vmatprep.subr.mxu0 0.0
    %1705 = vmatpush1.msra.mxu0 0.0
    %1706 = vmatprep.subr.mxu0 0.0
    %1707 = vmatpush1.msra.mxu0 0.0
    %1708 = vmatprep.subr.mxu0 0.0
    %1709 = vmatpush1.msra.mxu0 0.0
    %1710 = vmatprep.subr.mxu0 0.0
    %1711 = vmatpush1.msra.mxu0 0.0
    %1712 = vmatprep.subr.mxu0 0.0
    %1713 = vmatpush1.msra.mxu0 0.0
    %1714 = vmatprep.subr.mxu0 0.0
    %1715 = vmatpush1.msra.mxu0 0.0
    %1716 = vmatprep.subr.mxu0 0.0
    %1717 = vmatpush1.msra.mxu0 0.0
    %1718 = vmatprep.subr.mxu0 0.0
    %1719 = vmatpush1.msra.mxu0 0.0
    %1720 = vmatprep.subr.mxu0 0.0
    %1721 = vmatpush1.msra.mxu0 0.0
    %1722 = vmatprep.subr.mxu0 0.0
    %1723 = vmatpush1.msra.mxu0 0.0
    %1724 = vmatprep.subr.mxu0 0.0
    %1725 = vmatpush1.msra.mxu0 0.0
    %1726 = vmatprep.subr.mxu0 0.0
    %1727 = vmatpush1.msra.mxu0 0.0
    %1728 = vmatprep.subr.mxu0 0.0
    %1729 = vmatpush1.msra.mxu0 0.0
    %1730 = vmatprep.subr.mxu0 0.0
    %1731 = vmatpush1.msra.mxu0 0.0
    %1732 = vmatprep.subr.mxu0 0.0
    %1733 = vmatpush1.msra.mxu0 0.0
    %1734 = vmatprep.subr.mxu0 0.0
    %1735 = vmatpush1.msra.mxu0 0.0
    %1736 = vmatprep.subr.mxu0 0.0
    %1737 = vmatpush1.msra.mxu0 0.0
    %1738 = vmatprep.subr.mxu0 0.0
    %1739 = vmatpush1.msra.mxu0 0.0
    %1740 = vmatprep.subr.mxu0 0.0
    %1741 = vmatpush1.msra.mxu0 0.0
    %1742 = vmatprep.subr.mxu0 0.0
    %1743 = vmatpush1.msra.mxu0 0.0
    %1744 = vmatprep.subr.mxu0 0.0
    %1745 = vmatpush1.msra.mxu0 0.0
    %1746 = vmatprep.subr.mxu0 0.0
    %1747 = vmatpush1.msra.mxu0 0.0
    %1748 = vmatprep.subr.mxu0 0.0
    %1749 = vmatpush1.msra.mxu0 0.0
    %1750 = vmatprep.subr.mxu0 0.0
    %1751 = vmatpush1.msra.mxu0 0.0
    %1752 = vmatprep.mubr.f32.mxu0 0.0
    %1753 = vmatmul.mubr.f32.gmra.mrb[0].mxu0 %v1454
    %v1754 = vpop.f32.mrb[0].mxu0
    %v1755 = vadd.f32 %v1683, %v1754
    %v1756 = vpop.f32.mrb[0].mxu0
    %1757 = vmatprep.mubr.f32.mxu0 0.0
    %1758 = vmatmul.mubr.f32.gmra.mrb[0].mxu0 %v1454
    %v1759 = vpop.f32.mrb[0].mxu0
    %v1760 = vadd.f32 %v1683, %v1759
    %v1761 = vpop.f32.mrb[0].mxu0
    %1762 = vmatprep.mubr.f32.mxu0 0.0
    %1763 = vmatmul.mubr.f32.gmra.mrb[0].mxu0 %v1454
    %v1764 = vpop.f32.mrb[0].mxu0
    %v1765 = vadd.f32 %v1683, %v1764
    %v1766 = vpop.f32.mrb[0].mxu0
    %1767 = vmatprep.mubr.f32.mxu0 0.0
    %1768 = vmatmul.mubr.f32.gmra.mrb[0].mxu0 %v1454
    %v1769 = vpop.f32.mrb[0].mxu0
    %v1770 = vadd.f32 %v1683, %v1769
    %v1771 = vpop.f32.mrb[0].mxu0
    %1772 = vmatprep.mubr.f32.mxu0 0.0
    %1773 = vmatmul.mubr.f32.gmra.mrb[0].mxu0 %v1454
    %v1774 = vpop.f32.mrb[0].mxu0
    %v1775 = vadd.f32 %v1683, %v1774
    %v1776 = vpop.f32.mrb[0].mxu0
    %1777 = vdwg.mxu0
    %1783 = vrot.lane.b32.xlu0 %v1755, 60
    %v1784 = vpop.permute.xlu0 %1783
    %1785 = vrot.lane.b32.xlu0 %v1760, 60
    %v1786 = vpop.permute.xlu0 %1785
    %1787 = vrot.lane.b32.xlu0 %v1765, 60
    %v1788 = vpop.permute.xlu0 %1787
    %1789 = vrot.lane.b32.xlu0 %v1770, 60
    %v1790 = vpop.permute.xlu0 %1789
    %1791 = vrot.lane.b32.xlu0 %v1775, 60
    %v1792 = vpop.permute.xlu0 %1791
    %v1798 = vadd.f32 %v1415, %v1784
    %v1799 = vadd.f32 %v1420, %v1786
    %v1800 = vadd.f32 %v1425, %v1788
    %v1801 = vadd.f32 %v1430, %v1790
    %v1802 = vadd.f32 %v1435, %v1792
    %v1803 = vxor.u32 %v1798, 2147483648
    %v1804 = vxor.u32 %v1799, 2147483648
    %v1805 = vxor.u32 %v1800, 2147483648
    %v1806 = vxor.u32 %v1801, 2147483648
    %v1807 = vxor.u32 %v1802, 2147483648
    %v1808 = vmul.f32 %v1803, 1.442695
    %v1809 = vpow.pop %v1808
    %v1810 = vmul.f32 %v1804, 1.442695
    %v1811 = vpow.pop %v1810
    %v1812 = vmul.f32 %v1805, 1.442695
    %v1813 = vpow.pop %v1812
    %v1814 = vmul.f32 %v1806, 1.442695
    %v1815 = vpow.pop %v1814
    %v1816 = vmul.f32 %v1807, 1.442695
    %v1817 = vpow.pop %v1816
    %v1818 = vadd.f32 %v1809, 1.0
    %v1819 = vadd.f32 %v1811, 1.0
    %v1820 = vadd.f32 %v1813, 1.0
    %v1821 = vadd.f32 %v1815, 1.0
    %v1822 = vadd.f32 %v1817, 1.0
    %v1823 = vrcp.pop %v1818
    %v1824 = vmul.f32 1.0, %v1823
    %v1825 = vrcp.pop %v1819
    %v1826 = vmul.f32 1.0, %v1825
    %v1827 = vrcp.pop %v1820
    %v1828 = vmul.f32 1.0, %v1827
    %v1829 = vrcp.pop %v1821
    %v1830 = vmul.f32 1.0, %v1829
    %v1831 = vrcp.pop %v1822
    %v1832 = vmul.f32 1.0, %v1831
    %1833 = vrot.lane.b32.xlu0 %v1755, 20
    %v1834 = vpop.permute.xlu0 %1833
    %1835 = vrot.lane.b32.xlu0 %v1760, 20
    %v1836 = vpop.permute.xlu0 %1835
    %1837 = vrot.lane.b32.xlu0 %v1765, 20
    %v1838 = vpop.permute.xlu0 %1837
    %1839 = vrot.lane.b32.xlu0 %v1770, 20
    %v1840 = vpop.permute.xlu0 %1839
    %1841 = vrot.lane.b32.xlu0 %v1775, 20
    %v1842 = vpop.permute.xlu0 %1841
    %v1848 = vmul.f32 %v1824, %v1834
    %v1849 = vmul.f32 %v1826, %v1836
    %v1850 = vmul.f32 %v1828, %v1838
    %v1851 = vmul.f32 %v1830, %v1840
    %v1852 = vmul.f32 %v1832, %v1842
    %1858 = vrot.lane.b32.xlu0 %v1848, 40
    %v1859 = vpop.permute.xlu0 %1858
    %1860 = vrot.lane.b32.xlu0 %v1849, 40
    %v1861 = vpop.permute.xlu0 %1860
    %1862 = vrot.lane.b32.xlu0 %v1850, 40
    %v1863 = vpop.permute.xlu0 %1862
    %1864 = vrot.lane.b32.xlu0 %v1851, 40
    %v1865 = vpop.permute.xlu0 %1864
    %1866 = vrot.lane.b32.xlu0 %v1852, 40
    %v1867 = vpop.permute.xlu0 %1866
    %v1873 = vadd.f32 %v1415, %v1859
    %v1874 = vadd.f32 %v1420, %v1861
    %v1875 = vadd.f32 %v1425, %v1863
    %v1876 = vadd.f32 %v1430, %v1865
    %v1877 = vadd.f32 %v1435, %v1867
    %v1878 = vtanh.pop %v1873
    %v1879 = vtanh.pop %v1874
    %v1880 = vtanh.pop %v1875
    %v1881 = vtanh.pop %v1876
    %v1882 = vtanh.pop %v1877
    %v1883 = vsub.f32 1.0, %v1824
    %v1884 = vsub.f32 1.0, %v1826
    %v1885 = vsub.f32 1.0, %v1828
    %v1886 = vsub.f32 1.0, %v1830
    %v1887 = vsub.f32 1.0, %v1832
    %1893 = vrot.lane.b32.xlu0 %v1878, 108
    %v1894 = vpop.permute.xlu0 %1893
    %1895 = vrot.lane.b32.xlu0 %v1879, 108
    %v1896 = vpop.permute.xlu0 %1895
    %1897 = vrot.lane.b32.xlu0 %v1880, 108
    %v1898 = vpop.permute.xlu0 %1897
    %1899 = vrot.lane.b32.xlu0 %v1881, 108
    %v1900 = vpop.permute.xlu0 %1899
    %1901 = vrot.lane.b32.xlu0 %v1882, 108
    %v1902 = vpop.permute.xlu0 %1901
    %v1908 = vmul.f32 %v1883, %v1894
    %v1909 = vmul.f32 %v1884, %v1896
    %v1910 = vmul.f32 %v1885, %v1898
    %v1911 = vmul.f32 %v1886, %v1900
    %v1912 = vmul.f32 %v1887, %v1902
    %v1913 = vmul.f32 %v1824, 0.0
    %v1914 = vmul.f32 %v1826, 0.0
    %v1915 = vmul.f32 %v1828, 0.0
    %v1916 = vmul.f32 %v1830, 0.0
    %v1917 = vmul.f32 %v1832, 0.0
    %v1918 = vadd.f32 %v1908, %v1913
    %v1919 = vadd.f32 %v1909, %v1914
    %v1920 = vadd.f32 %v1910, %v1915
    %v1921 = vadd.f32 %v1911, %v1916
    %v1922 = vadd.f32 %v1912, %v1917
    %1928 = vrot.lane.b32.xlu0 %v1674, 108
    %v1929 = vpop.permute.xlu0 %1928
    %1930 = vrot.lane.b32.xlu0 %v1675, 108
    %v1931 = vpop.permute.xlu0 %1930
    %1932 = vrot.lane.b32.xlu0 %v1676, 108
    %v1933 = vpop.permute.xlu0 %1932
    %1934 = vrot.lane.b32.xlu0 %v1677, 108
    %v1935 = vpop.permute.xlu0 %1934
    %1936 = vrot.lane.b32.xlu0 %v1678, 108
    %v1937 = vpop.permute.xlu0 %1936
    %v1938 = vsel %vm1452, %v1929, 0
    %v1940 = vsel %vm1452, %v1931, 0
    %v1942 = vsel %vm1452, %v1933, 0
    %v1944 = vsel %vm1452, %v1935, 0
    %v1946 = vsel %vm1452, %v1937, 0
    %1948 = vmatprep.subr.mxu0 0.0
    %1949 = vmatpush1.msra.mxu0 %v1438
    %1950 = vmatprep.subr.mxu0 0.0
    %1951 = vmatpush1.msra.mxu0 %v1439
    %1952 = vmatprep.subr.mxu0 0.0
    %1953 = vmatpush1.msra.mxu0 %v1457
    %1954 = vmatprep.subr.mxu0 0.0
    %1955 = vmatpush1.msra.mxu0 0.0
    %1956 = vmatprep.subr.mxu0 0.0
    %1957 = vmatpush1.msra.mxu0 0.0
    %1958 = vmatprep.subr.mxu0 0.0
    %1959 = vmatpush1.msra.mxu0 0.0
    %1960 = vmatprep.subr.mxu0 0.0
    %1961 = vmatpush1.msra.mxu0 0.0
    %1962 = vmatprep.subr.mxu0 0.0
    %1963 = vmatpush1.msra.mxu0 0.0
    %1964 = vmatprep.subr.mxu0 0.0
    %1965 = vmatpush1.msra.mxu0 0.0
    %1966 = vmatprep.subr.mxu0 0.0
    %1967 = vmatpush1.msra.mxu0 0.0
    %1968 = vmatprep.subr.mxu0 0.0
    %1969 = vmatpush1.msra.mxu0 0.0
    %1970 = vmatprep.subr.mxu0 0.0
    %1971 = vmatpush1.msra.mxu0 0.0
    %1972 = vmatprep.subr.mxu0 0.0
    %1973 = vmatpush1.msra.mxu0 0.0
    %1974 = vmatprep.subr.mxu0 0.0
    %1975 = vmatpush1.msra.mxu0 0.0
    %1976 = vmatprep.subr.mxu0 0.0
    %1977 = vmatpush1.msra.mxu0 0.0
    %1978 = vmatprep.subr.mxu0 0.0
    %1979 = vmatpush1.msra.mxu0 0.0
    %1980 = vmatprep.subr.mxu0 0.0
    %1981 = vmatpush1.msra.mxu0 0.0
    %1982 = vmatprep.subr.mxu0 0.0
    %1983 = vmatpush1.msra.mxu0 0.0
    %1984 = vmatprep.subr.mxu0 0.0
    %1985 = vmatpush1.msra.mxu0 0.0
    %1986 = vmatprep.subr.mxu0 0.0
    %1987 = vmatpush1.msra.mxu0 0.0
    %1988 = vmatprep.subr.mxu0 0.0
    %1989 = vmatpush1.msra.mxu0 0.0
    %1990 = vmatprep.subr.mxu0 0.0
    %1991 = vmatpush1.msra.mxu0 0.0
    %1992 = vmatprep.subr.mxu0 0.0
    %1993 = vmatpush1.msra.mxu0 0.0
    %1994 = vmatprep.subr.mxu0 0.0
    %1995 = vmatpush1.msra.mxu0 0.0
    %1996 = vmatprep.subr.mxu0 0.0
    %1997 = vmatpush1.msra.mxu0 0.0
    %1998 = vmatprep.subr.mxu0 0.0
    %1999 = vmatpush1.msra.mxu0 0.0
    %2000 = vmatprep.subr.mxu0 0.0
    %2001 = vmatpush1.msra.mxu0 0.0
    %2002 = vmatprep.subr.mxu0 0.0
    %2003 = vmatpush1.msra.mxu0 0.0
    %2004 = vmatprep.subr.mxu0 0.0
    %2005 = vmatpush1.msra.mxu0 0.0
    %2006 = vmatprep.subr.mxu0 0.0
    %2007 = vmatpush1.msra.mxu0 0.0
    %2008 = vmatprep.subr.mxu0 0.0
    %2009 = vmatpush1.msra.mxu0 0.0
    %2010 = vmatprep.subr.mxu0 0.0
    %2011 = vmatpush1.msra.mxu0 0.0
    %2012 = vmatprep.mubr.f32.mxu0 0.0
    %2013 = vmatmul.mubr.f32.gmra.mrb[0].mxu0 %v1938
    %v2014 = vpop.f32.mrb[0].mxu0
    %v2015 = vadd.f32 %v1450, %v2014
    %v2016 = vpop.f32.mrb[0].mxu0
    %2017 = vmatprep.mubr.f32.mxu0 0.0
    %2018 = vmatmul.mubr.f32.gmra.mrb[0].mxu0 %v1940
    %v2019 = vpop.f32.mrb[0].mxu0
    %v2020 = vadd.f32 %v1450, %v2019
    %v2021 = vpop.f32.mrb[0].mxu0
    %2022 = vmatprep.mubr.f32.mxu0 0.0
    %2023 = vmatmul.mubr.f32.gmra.mrb[0].mxu0 %v1942
    %v2024 = vpop.f32.mrb[0].mxu0
    %v2025 = vadd.f32 %v1450, %v2024
    %v2026 = vpop.f32.mrb[0].mxu0
    %2027 = vmatprep.mubr.f32.mxu0 0.0
    %2028 = vmatmul.mubr.f32.gmra.mrb[0].mxu0 %v1944
    %v2029 = vpop.f32.mrb[0].mxu0
    %v2030 = vadd.f32 %v1450, %v2029
    %v2031 = vpop.f32.mrb[0].mxu0
    %2032 = vmatprep.mubr.f32.mxu0 0.0
    %2033 = vmatmul.mubr.f32.gmra.mrb[0].mxu0 %v1946
    %v2034 = vpop.f32.mrb[0].mxu0
    %v2035 = vadd.f32 %v1450, %v2034
    %v2036 = vpop.f32.mrb[0].mxu0
    %2037 = vdwg.mxu0
    %v2038 = vadd.f32 %v1365, %v2015
    %v2039 = vadd.f32 %v1370, %v2020
    %v2040 = vadd.f32 %v1375, %v2025
    %v2041 = vadd.f32 %v1380, %v2030
    %v2042 = vadd.f32 %v1385, %v2035
    %v2043 = vxor.u32 %v2038, 2147483648
    %v2044 = vxor.u32 %v2039, 2147483648
    %v2045 = vxor.u32 %v2040, 2147483648
    %v2046 = vxor.u32 %v2041, 2147483648
    %v2047 = vxor.u32 %v2042, 2147483648
    %v2048 = vmul.f32 %v2043, 1.442695
    %v2049 = vpow.pop %v2048
    %v2050 = vmul.f32 %v2044, 1.442695
    %v2051 = vpow.pop %v2050
    %v2052 = vmul.f32 %v2045, 1.442695
    %v2053 = vpow.pop %v2052
    %v2054 = vmul.f32 %v2046, 1.442695
    %v2055 = vpow.pop %v2054
    %v2056 = vmul.f32 %v2047, 1.442695
    %v2057 = vpow.pop %v2056
    %v2058 = vadd.f32 %v2049, 1.0
    %v2059 = vadd.f32 %v2051, 1.0
    %v2060 = vadd.f32 %v2053, 1.0
    %v2061 = vadd.f32 %v2055, 1.0
    %v2062 = vadd.f32 %v2057, 1.0
    %v2063 = vrcp.pop %v2058
    %v2064 = vmul.f32 1.0, %v2063
    %v2065 = vrcp.pop %v2059
    %v2066 = vmul.f32 1.0, %v2065
    %v2067 = vrcp.pop %v2060
    %v2068 = vmul.f32 1.0, %v2067
    %v2069 = vrcp.pop %v2061
    %v2070 = vmul.f32 1.0, %v2069
    %v2071 = vrcp.pop %v2062
    %v2072 = vmul.f32 1.0, %v2071
    %2078 = vrot.lane.b32.xlu0 %v2015, 88
    %v2079 = vpop.permute.xlu0 %2078
    %2080 = vrot.lane.b32.xlu0 %v2020, 88
    %v2081 = vpop.permute.xlu0 %2080
    %2082 = vrot.lane.b32.xlu0 %v2025, 88
    %v2083 = vpop.permute.xlu0 %2082
    %2084 = vrot.lane.b32.xlu0 %v2030, 88
    %v2085 = vpop.permute.xlu0 %2084
    %2086 = vrot.lane.b32.xlu0 %v2035, 88
    %v2087 = vpop.permute.xlu0 %2086
    %v2093 = vmul.f32 %v2064, %v2079
    %v2094 = vmul.f32 %v2066, %v2081
    %v2095 = vmul.f32 %v2068, %v2083
    %v2096 = vmul.f32 %v2070, %v2085
    %v2097 = vmul.f32 %v2072, %v2087
    %2103 = vrot.lane.b32.xlu0 %v2093, 40
    %v2104 = vpop.permute.xlu0 %2103
    %2105 = vrot.lane.b32.xlu0 %v2094, 40
    %v2106 = vpop.permute.xlu0 %2105
    %2107 = vrot.lane.b32.xlu0 %v2095, 40
    %v2108 = vpop.permute.xlu0 %2107
    %2109 = vrot.lane.b32.xlu0 %v2096, 40
    %v2110 = vpop.permute.xlu0 %2109
    %2111 = vrot.lane.b32.xlu0 %v2097, 40
    %v2112 = vpop.permute.xlu0 %2111
    %v2118 = vadd.f32 %v1365, %v2104
    %v2119 = vadd.f32 %v1370, %v2106
    %v2120 = vadd.f32 %v1375, %v2108
    %v2121 = vadd.f32 %v1380, %v2110
    %v2122 = vadd.f32 %v1385, %v2112
    %v2123 = vtanh.pop %v2118
    %v2124 = vtanh.pop %v2119
    %v2125 = vtanh.pop %v2120
    %v2126 = vtanh.pop %v2121
    %v2127 = vtanh.pop %v2122
    %v2128 = vsub.f32 1.0, %v2064
    %v2129 = vsub.f32 1.0, %v2066
    %v2130 = vsub.f32 1.0, %v2068
    %v2131 = vsub.f32 1.0, %v2070
    %v2132 = vsub.f32 1.0, %v2072
    %2138 = vrot.lane.b32.xlu0 %v2123, 108
    %v2139 = vpop.permute.xlu0 %2138
    %2140 = vrot.lane.b32.xlu0 %v2124, 108
    %v2141 = vpop.permute.xlu0 %2140
    %2142 = vrot.lane.b32.xlu0 %v2125, 108
    %v2143 = vpop.permute.xlu0 %2142
    %2144 = vrot.lane.b32.xlu0 %v2126, 108
    %v2145 = vpop.permute.xlu0 %2144
    %2146 = vrot.lane.b32.xlu0 %v2127, 108
    %v2147 = vpop.permute.xlu0 %2146
    %v2153 = vmul.f32 %v2128, %v2139
    %v2154 = vmul.f32 %v2129, %v2141
    %v2155 = vmul.f32 %v2130, %v2143
    %v2156 = vmul.f32 %v2131, %v2145
    %v2157 = vmul.f32 %v2132, %v2147
    %v2158 = vmul.f32 %v2064, %v1674
    %v2159 = vmul.f32 %v2066, %v1675
    %v2160 = vmul.f32 %v2068, %v1676
    %v2161 = vmul.f32 %v2070, %v1677
    %v2162 = vmul.f32 %v2072, %v1678
    %v2163 = vadd.f32 %v2153, %v2158
    %v2164 = vadd.f32 %v2154, %v2159
    %v2165 = vadd.f32 %v2155, %v2160
    %v2166 = vadd.f32 %v2156, %v2161
    %v2167 = vadd.f32 %v2157, %v2162
    %2173 = vrot.lane.b32.xlu0 %v1918, 48
    %v2174 = vpop.permute.xlu0 %2173
    %2175 = vrot.lane.b32.xlu0 %v1919, 48
    %v2176 = vpop.permute.xlu0 %2175
    %2177 = vrot.lane.b32.xlu0 %v1920, 48
    %v2178 = vpop.permute.xlu0 %2177
    %2179 = vrot.lane.b32.xlu0 %v1921, 48
    %v2180 = vpop.permute.xlu0 %2179
    %2181 = vrot.lane.b32.xlu0 %v1922, 48
    %v2182 = vpop.permute.xlu0 %2181
    %v2183 = vsel %vm1452, %v2174, 0
    %v2185 = vsel %vm1452, %v2176, 0
    %v2187 = vsel %vm1452, %v2178, 0
    %v2189 = vsel %vm1452, %v2180, 0
    %v2191 = vsel %vm1452, %v2182, 0
    %2193 = vmatprep.subr.mxu0 0.0
    %2194 = vmatpush1.msra.mxu0 %v1442
    %2195 = vmatprep.subr.mxu0 0.0
    %2196 = vmatpush1.msra.mxu0 %v1443
    %2197 = vmatprep.subr.mxu0 0.0
    %2198 = vmatpush1.msra.mxu0 %v1686
    %2199 = vmatprep.subr.mxu0 0.0
    %2200 = vmatpush1.msra.mxu0 0.0
    %2201 = vmatprep.subr.mxu0 0.0
    %2202 = vmatpush1.msra.mxu0 0.0
    %2203 = vmatprep.subr.mxu0 0.0
    %2204 = vmatpush1.msra.mxu0 0.0
    %2205 = vmatprep.subr.mxu0 0.0
    %2206 = vmatpush1.msra.mxu0 0.0
    %2207 = vmatprep.subr.mxu0 0.0
    %2208 = vmatpush1.msra.mxu0 0.0
    %2209 = vmatprep.subr.mxu0 0.0
    %2210 = vmatpush1.msra.mxu0 0.0
    %2211 = vmatprep.subr.mxu0 0.0
    %2212 = vmatpush1.msra.mxu0 0.0
    %2213 = vmatprep.subr.mxu0 0.0
    %2214 = vmatpush1.msra.mxu0 0.0
    %2215 = vmatprep.subr.mxu0 0.0
    %2216 = vmatpush1.msra.mxu0 0.0
    %2217 = vmatprep.subr.mxu0 0.0
    %2218 = vmatpush1.msra.mxu0 0.0
    %2219 = vmatprep.subr.mxu0 0.0
    %2220 = vmatpush1.msra.mxu0 0.0
    %2221 = vmatprep.subr.mxu0 0.0
    %2222 = vmatpush1.msra.mxu0 0.0
    %2223 = vmatprep.subr.mxu0 0.0
    %2224 = vmatpush1.msra.mxu0 0.0
    %2225 = vmatprep.subr.mxu0 0.0
    %2226 = vmatpush1.msra.mxu0 0.0
    %2227 = vmatprep.subr.mxu0 0.0
    %2228 = vmatpush1.msra.mxu0 0.0
    %2229 = vmatprep.subr.mxu0 0.0
    %2230 = vmatpush1.msra.mxu0 0.0
    %2231 = vmatprep.subr.mxu0 0.0
    %2232 = vmatpush1.msra.mxu0 0.0
    %2233 = vmatprep.subr.mxu0 0.0
    %2234 = vmatpush1.msra.mxu0 0.0
    %2235 = vmatprep.subr.mxu0 0.0
    %2236 = vmatpush1.msra.mxu0 0.0
    %2237 = vmatprep.subr.mxu0 0.0
    %2238 = vmatpush1.msra.mxu0 0.0
    %2239 = vmatprep.subr.mxu0 0.0
    %2240 = vmatpush1.msra.mxu0 0.0
    %2241 = vmatprep.subr.mxu0 0.0
    %2242 = vmatpush1.msra.mxu0 0.0
    %2243 = vmatprep.subr.mxu0 0.0
    %2244 = vmatpush1.msra.mxu0 0.0
    %2245 = vmatprep.subr.mxu0 0.0
    %2246 = vmatpush1.msra.mxu0 0.0
    %2247 = vmatprep.subr.mxu0 0.0
    %2248 = vmatpush1.msra.mxu0 0.0
    %2249 = vmatprep.subr.mxu0 0.0
    %2250 = vmatpush1.msra.mxu0 0.0
    %2251 = vmatprep.subr.mxu0 0.0
    %2252 = vmatpush1.msra.mxu0 0.0
    %2253 = vmatprep.subr.mxu0 0.0
    %2254 = vmatpush1.msra.mxu0 0.0
    %2255 = vmatprep.subr.mxu0 0.0
    %2256 = vmatpush1.msra.mxu0 0.0
    %2257 = vmatprep.mubr.f32.mxu0 0.0
    %2258 = vmatmul.mubr.f32.gmra.mrb[0].mxu0 %v2183
    %v2259 = vpop.f32.mrb[0].mxu0
    %v2260 = vadd.f32 %v1683, %v2259
    %v2261 = vpop.f32.mrb[0].mxu0
    %2262 = vmatprep.mubr.f32.mxu0 0.0
    %2263 = vmatmul.mubr.f32.gmra.mrb[0].mxu0 %v2185
    %v2264 = vpop.f32.mrb[0].mxu0
    %v2265 = vadd.f32 %v1683, %v2264
    %v2266 = vpop.f32.mrb[0].mxu0
    %2267 = vmatprep.mubr.f32.mxu0 0.0
    %2268 = vmatmul.mubr.f32.gmra.mrb[0].mxu0 %v2187
    %v2269 = vpop.f32.mrb[0].mxu0
    %v2270 = vadd.f32 %v1683, %v2269
    %v2271 = vpop.f32.mrb[0].mxu0
    %2272 = vmatprep.mubr.f32.mxu0 0.0
    %2273 = vmatmul.mubr.f32.gmra.mrb[0].mxu0 %v2189
    %v2274 = vpop.f32.mrb[0].mxu0
    %v2275 = vadd.f32 %v1683, %v2274
    %v2276 = vpop.f32.mrb[0].mxu0
    %2277 = vmatprep.mubr.f32.mxu0 0.0
    %2278 = vmatmul.mubr.f32.gmra.mrb[0].mxu0 %v2191
    %v2279 = vpop.f32.mrb[0].mxu0
    %v2280 = vadd.f32 %v1683, %v2279
    %v2281 = vpop.f32.mrb[0].mxu0
    %2282 = vdwg.mxu0
    %2288 = vrot.lane.b32.xlu0 %v2260, 60
    %v2289 = vpop.permute.xlu0 %2288
    %2290 = vrot.lane.b32.xlu0 %v2265, 60
    %v2291 = vpop.permute.xlu0 %2290
    %2292 = vrot.lane.b32.xlu0 %v2270, 60
    %v2293 = vpop.permute.xlu0 %2292
    %2294 = vrot.lane.b32.xlu0 %v2275, 60
    %v2295 = vpop.permute.xlu0 %2294
    %2296 = vrot.lane.b32.xlu0 %v2280, 60
    %v2297 = vpop.permute.xlu0 %2296
    %v2303 = vadd.f32 %v1390, %v2289
    %v2304 = vadd.f32 %v1395, %v2291
    %v2305 = vadd.f32 %v1400, %v2293
    %v2306 = vadd.f32 %v1405, %v2295
    %v2307 = vadd.f32 %v1410, %v2297
    %v2308 = vxor.u32 %v2303, 2147483648
    %v2309 = vxor.u32 %v2304, 2147483648
    %v2310 = vxor.u32 %v2305, 2147483648
    %v2311 = vxor.u32 %v2306, 2147483648
    %v2312 = vxor.u32 %v2307, 2147483648
    %v2313 = vmul.f32 %v2308, 1.442695
    %v2314 = vpow.pop %v2313
    %v2315 = vmul.f32 %v2309, 1.442695
    %v2316 = vpow.pop %v2315
    %v2317 = vmul.f32 %v2310, 1.442695
    %v2318 = vpow.pop %v2317
    %v2319 = vmul.f32 %v2311, 1.442695
    %v2320 = vpow.pop %v2319
    %v2321 = vmul.f32 %v2312, 1.442695
    %v2322 = vpow.pop %v2321
    %v2323 = vadd.f32 %v2314, 1.0
    %v2324 = vadd.f32 %v2316, 1.0
    %v2325 = vadd.f32 %v2318, 1.0
    %v2326 = vadd.f32 %v2320, 1.0
    %v2327 = vadd.f32 %v2322, 1.0
    %v2328 = vrcp.pop %v2323
    %v2329 = vmul.f32 1.0, %v2328
    %v2330 = vrcp.pop %v2324
    %v2331 = vmul.f32 1.0, %v2330
    %v2332 = vrcp.pop %v2325
    %v2333 = vmul.f32 1.0, %v2332
    %v2334 = vrcp.pop %v2326
    %v2335 = vmul.f32 1.0, %v2334
    %v2336 = vrcp.pop %v2327
    %v2337 = vmul.f32 1.0, %v2336
    %2338 = vrot.lane.b32.xlu0 %v2260, 20
    %v2339 = vpop.permute.xlu0 %2338
    %2340 = vrot.lane.b32.xlu0 %v2265, 20
    %v2341 = vpop.permute.xlu0 %2340
    %2342 = vrot.lane.b32.xlu0 %v2270, 20
    %v2343 = vpop.permute.xlu0 %2342
    %2344 = vrot.lane.b32.xlu0 %v2275, 20
    %v2345 = vpop.permute.xlu0 %2344
    %2346 = vrot.lane.b32.xlu0 %v2280, 20
    %v2347 = vpop.permute.xlu0 %2346
    %v2353 = vmul.f32 %v2329, %v2339
    %v2354 = vmul.f32 %v2331, %v2341
    %v2355 = vmul.f32 %v2333, %v2343
    %v2356 = vmul.f32 %v2335, %v2345
    %v2357 = vmul.f32 %v2337, %v2347
    %2363 = vrot.lane.b32.xlu0 %v2353, 40
    %v2364 = vpop.permute.xlu0 %2363
    %2365 = vrot.lane.b32.xlu0 %v2354, 40
    %v2366 = vpop.permute.xlu0 %2365
    %2367 = vrot.lane.b32.xlu0 %v2355, 40
    %v2368 = vpop.permute.xlu0 %2367
    %2369 = vrot.lane.b32.xlu0 %v2356, 40
    %v2370 = vpop.permute.xlu0 %2369
    %2371 = vrot.lane.b32.xlu0 %v2357, 40
    %v2372 = vpop.permute.xlu0 %2371
    %v2378 = vadd.f32 %v1390, %v2364
    %v2379 = vadd.f32 %v1395, %v2366
    %v2380 = vadd.f32 %v1400, %v2368
    %v2381 = vadd.f32 %v1405, %v2370
    %v2382 = vadd.f32 %v1410, %v2372
    %v2383 = vtanh.pop %v2378
    %v2384 = vtanh.pop %v2379
    %v2385 = vtanh.pop %v2380
    %v2386 = vtanh.pop %v2381
    %v2387 = vtanh.pop %v2382
    %v2388 = vsub.f32 1.0, %v2329
    %v2389 = vsub.f32 1.0, %v2331
    %v2390 = vsub.f32 1.0, %v2333
    %v2391 = vsub.f32 1.0, %v2335
    %v2392 = vsub.f32 1.0, %v2337
    %2398 = vrot.lane.b32.xlu0 %v2383, 108
    %v2399 = vpop.permute.xlu0 %2398
    %2400 = vrot.lane.b32.xlu0 %v2384, 108
    %v2401 = vpop.permute.xlu0 %2400
    %2402 = vrot.lane.b32.xlu0 %v2385, 108
    %v2403 = vpop.permute.xlu0 %2402
    %2404 = vrot.lane.b32.xlu0 %v2386, 108
    %v2405 = vpop.permute.xlu0 %2404
    %2406 = vrot.lane.b32.xlu0 %v2387, 108
    %v2407 = vpop.permute.xlu0 %2406
    %v2413 = vmul.f32 %v2388, %v2399
    %v2414 = vmul.f32 %v2389, %v2401
    %v2415 = vmul.f32 %v2390, %v2403
    %v2416 = vmul.f32 %v2391, %v2405
    %v2417 = vmul.f32 %v2392, %v2407
    %v2418 = vmul.f32 %v2329, %v1918
    %v2419 = vmul.f32 %v2331, %v1919
    %v2420 = vmul.f32 %v2333, %v1920
    %v2421 = vmul.f32 %v2335, %v1921
    %v2422 = vmul.f32 %v2337, %v1922
    %v2423 = vadd.f32 %v2413, %v2418
    %v2424 = vadd.f32 %v2414, %v2419
    %v2425 = vadd.f32 %v2415, %v2420
    %v2426 = vadd.f32 %v2416, %v2421
    %v2427 = vadd.f32 %v2417, %v2422
    %2433 = vrot.lane.b32.xlu0 %v2163, 108
    %v2434 = vpop.permute.xlu0 %2433
    %2435 = vrot.lane.b32.xlu0 %v2164, 108
    %v2436 = vpop.permute.xlu0 %2435
    %2437 = vrot.lane.b32.xlu0 %v2165, 108
    %v2438 = vpop.permute.xlu0 %2437
    %2439 = vrot.lane.b32.xlu0 %v2166, 108
    %v2440 = vpop.permute.xlu0 %2439
    %2441 = vrot.lane.b32.xlu0 %v2167, 108
    %v2442 = vpop.permute.xlu0 %2441
    %v2443 = vsel %vm1452, %v2434, 0
    %v2445 = vsel %vm1452, %v2436, 0
    %v2447 = vsel %vm1452, %v2438, 0
    %v2449 = vsel %vm1452, %v2440, 0
    %v2451 = vsel %vm1452, %v2442, 0
    %2453 = vmatprep.subr.mxu0 0.0
    %2454 = vmatpush1.msra.mxu0 %v1438
    %2455 = vmatprep.subr.mxu0 0.0
    %2456 = vmatpush1.msra.mxu0 %v1439
    %2457 = vmatprep.subr.mxu0 0.0
    %2458 = vmatpush1.msra.mxu0 %v1457
    %2459 = vmatprep.subr.mxu0 0.0
    %2460 = vmatpush1.msra.mxu0 0.0
    %2461 = vmatprep.subr.mxu0 0.0
    %2462 = vmatpush1.msra.mxu0 0.0
    %2463 = vmatprep.subr.mxu0 0.0
    %2464 = vmatpush1.msra.mxu0 0.0
    %2465 = vmatprep.subr.mxu0 0.0
    %2466 = vmatpush1.msra.mxu0 0.0
    %2467 = vmatprep.subr.mxu0 0.0
    %2468 = vmatpush1.msra.mxu0 0.0
    %2469 = vmatprep.subr.mxu0 0.0
    %2470 = vmatpush1.msra.mxu0 0.0
    %2471 = vmatprep.subr.mxu0 0.0
    %2472 = vmatpush1.msra.mxu0 0.0
    %2473 = vmatprep.subr.mxu0 0.0
    %2474 = vmatpush1.msra.mxu0 0.0
    %2475 = vmatprep.subr.mxu0 0.0
    %2476 = vmatpush1.msra.mxu0 0.0
    %2477 = vmatprep.subr.mxu0 0.0
    %2478 = vmatpush1.msra.mxu0 0.0
    %2479 = vmatprep.subr.mxu0 0.0
    %2480 = vmatpush1.msra.mxu0 0.0
    %2481 = vmatprep.subr.mxu0 0.0
    %2482 = vmatpush1.msra.mxu0 0.0
    %2483 = vmatprep.subr.mxu0 0.0
    %2484 = vmatpush1.msra.mxu0 0.0
    %2485 = vmatprep.subr.mxu0 0.0
    %2486 = vmatpush1.msra.mxu0 0.0
    %2487 = vmatprep.subr.mxu0 0.0
    %2488 = vmatpush1.msra.mxu0 0.0
    %2489 = vmatprep.subr.mxu0 0.0
    %2490 = vmatpush1.msra.mxu0 0.0
    %2491 = vmatprep.subr.mxu0 0.0
    %2492 = vmatpush1.msra.mxu0 0.0
    %2493 = vmatprep.subr.mxu0 0.0
    %2494 = vmatpush1.msra.mxu0 0.0
    %2495 = vmatprep.subr.mxu0 0.0
    %2496 = vmatpush1.msra.mxu0 0.0
    %2497 = vmatprep.subr.mxu0 0.0
    %2498 = vmatpush1.msra.mxu0 0.0
    %2499 = vmatprep.subr.mxu0 0.0
    %2500 = vmatpush1.msra.mxu0 0.0
    %2501 = vmatprep.subr.mxu0 0.0
    %2502 = vmatpush1.msra.mxu0 0.0
    %2503 = vmatprep.subr.mxu0 0.0
    %2504 = vmatpush1.msra.mxu0 0.0
    %2505 = vmatprep.subr.mxu0 0.0
    %2506 = vmatpush1.msra.mxu0 0.0
    %2507 = vmatprep.subr.mxu0 0.0
    %2508 = vmatpush1.msra.mxu0 0.0
    %2509 = vmatprep.subr.mxu0 0.0
    %2510 = vmatpush1.msra.mxu0 0.0
    %2511 = vmatprep.subr.mxu0 0.0
    %2512 = vmatpush1.msra.mxu0 0.0
    %2513 = vmatprep.subr.mxu0 0.0
    %2514 = vmatpush1.msra.mxu0 0.0
    %2515 = vmatprep.subr.mxu0 0.0
    %2516 = vmatpush1.msra.mxu0 0.0
    %2517 = vmatprep.mubr.f32.mxu0 0.0
    %2518 = vmatmul.mubr.f32.gmra.mrb[0].mxu0 %v2443
    %v2519 = vpop.f32.mrb[0].mxu0
    %v2520 = vadd.f32 %v1450, %v2519
    %v2521 = vpop.f32.mrb[0].mxu0
    %2522 = vmatprep.mubr.f32.mxu0 0.0
    %2523 = vmatmul.mubr.f32.gmra.mrb[0].mxu0 %v2445
    %v2524 = vpop.f32.mrb[0].mxu0
    %v2525 = vadd.f32 %v1450, %v2524
    %v2526 = vpop.f32.mrb[0].mxu0
    %2527 = vmatprep.mubr.f32.mxu0 0.0
    %2528 = vmatmul.mubr.f32.gmra.mrb[0].mxu0 %v2447
    %v2529 = vpop.f32.mrb[0].mxu0
    %v2530 = vadd.f32 %v1450, %v2529
    %v2531 = vpop.f32.mrb[0].mxu0
    %2532 = vmatprep.mubr.f32.mxu0 0.0
    %2533 = vmatmul.mubr.f32.gmra.mrb[0].mxu0 %v2449
    %v2534 = vpop.f32.mrb[0].mxu0
    %v2535 = vadd.f32 %v1450, %v2534
    %v2536 = vpop.f32.mrb[0].mxu0
    %2537 = vmatprep.mubr.f32.mxu0 0.0
    %2538 = vmatmul.mubr.f32.gmra.mrb[0].mxu0 %v2451
    %v2539 = vpop.f32.mrb[0].mxu0
    %v2540 = vadd.f32 %v1450, %v2539
    %v2541 = vpop.f32.mrb[0].mxu0
    %2542 = vdwg.mxu0
    %v2543 = vadd.f32 %v1390, %v2520
    %v2544 = vadd.f32 %v1395, %v2525
    %v2545 = vadd.f32 %v1400, %v2530
    %v2546 = vadd.f32 %v1405, %v2535
    %v2547 = vadd.f32 %v1410, %v2540
    %v2548 = vxor.u32 %v2543, 2147483648
    %v2549 = vxor.u32 %v2544, 2147483648
    %v2550 = vxor.u32 %v2545, 2147483648
    %v2551 = vxor.u32 %v2546, 2147483648
    %v2552 = vxor.u32 %v2547, 2147483648
    %v2553 = vmul.f32 %v2548, 1.442695
    %v2554 = vpow.pop %v2553
    %v2555 = vmul.f32 %v2549, 1.442695
    %v2556 = vpow.pop %v2555
    %v2557 = vmul.f32 %v2550, 1.442695
    %v2558 = vpow.pop %v2557
    %v2559 = vmul.f32 %v2551, 1.442695
    %v2560 = vpow.pop %v2559
    %v2561 = vmul.f32 %v2552, 1.442695
    %v2562 = vpow.pop %v2561
    %v2563 = vadd.f32 %v2554, 1.0
    %v2564 = vadd.f32 %v2556, 1.0
    %v2565 = vadd.f32 %v2558, 1.0
    %v2566 = vadd.f32 %v2560, 1.0
    %v2567 = vadd.f32 %v2562, 1.0
    %v2568 = vrcp.pop %v2563
    %v2569 = vmul.f32 1.0, %v2568
    %v2570 = vrcp.pop %v2564
    %v2571 = vmul.f32 1.0, %v2570
    %v2572 = vrcp.pop %v2565
    %v2573 = vmul.f32 1.0, %v2572
    %v2574 = vrcp.pop %v2566
    %v2575 = vmul.f32 1.0, %v2574
    %v2576 = vrcp.pop %v2567
    %v2577 = vmul.f32 1.0, %v2576
    %2583 = vrot.lane.b32.xlu0 %v2520, 88
    %v2584 = vpop.permute.xlu0 %2583
    %2585 = vrot.lane.b32.xlu0 %v2525, 88
    %v2586 = vpop.permute.xlu0 %2585
    %2587 = vrot.lane.b32.xlu0 %v2530, 88
    %v2588 = vpop.permute.xlu0 %2587
    %2589 = vrot.lane.b32.xlu0 %v2535, 88
    %v2590 = vpop.permute.xlu0 %2589
    %2591 = vrot.lane.b32.xlu0 %v2540, 88
    %v2592 = vpop.permute.xlu0 %2591
    %v2598 = vmul.f32 %v2569, %v2584
    %v2599 = vmul.f32 %v2571, %v2586
    %v2600 = vmul.f32 %v2573, %v2588
    %v2601 = vmul.f32 %v2575, %v2590
    %v2602 = vmul.f32 %v2577, %v2592
    %2608 = vrot.lane.b32.xlu0 %v2598, 40
    %v2609 = vpop.permute.xlu0 %2608
    %2610 = vrot.lane.b32.xlu0 %v2599, 40
    %v2611 = vpop.permute.xlu0 %2610
    %2612 = vrot.lane.b32.xlu0 %v2600, 40
    %v2613 = vpop.permute.xlu0 %2612
    %2614 = vrot.lane.b32.xlu0 %v2601, 40
    %v2615 = vpop.permute.xlu0 %2614
    %2616 = vrot.lane.b32.xlu0 %v2602, 40
    %v2617 = vpop.permute.xlu0 %2616
    %v2623 = vadd.f32 %v1390, %v2609
    %v2624 = vadd.f32 %v1395, %v2611
    %v2625 = vadd.f32 %v1400, %v2613
    %v2626 = vadd.f32 %v1405, %v2615
    %v2627 = vadd.f32 %v1410, %v2617
    %v2628 = vtanh.pop %v2623
    %v2629 = vtanh.pop %v2624
    %v2630 = vtanh.pop %v2625
    %v2631 = vtanh.pop %v2626
    %v2632 = vtanh.pop %v2627
    %v2633 = vsub.f32 1.0, %v2569
    %v2634 = vsub.f32 1.0, %v2571
    %v2635 = vsub.f32 1.0, %v2573
    %v2636 = vsub.f32 1.0, %v2575
    %v2637 = vsub.f32 1.0, %v2577
    %2643 = vrot.lane.b32.xlu0 %v2628, 108
    %v2644 = vpop.permute.xlu0 %2643
    %2645 = vrot.lane.b32.xlu0 %v2629, 108
    %v2646 = vpop.permute.xlu0 %2645
    %2647 = vrot.lane.b32.xlu0 %v2630, 108
    %v2648 = vpop.permute.xlu0 %2647
    %2649 = vrot.lane.b32.xlu0 %v2631, 108
    %v2650 = vpop.permute.xlu0 %2649
    %2651 = vrot.lane.b32.xlu0 %v2632, 108
    %v2652 = vpop.permute.xlu0 %2651
    %v2658 = vmul.f32 %v2633, %v2644
    %v2659 = vmul.f32 %v2634, %v2646
    %v2660 = vmul.f32 %v2635, %v2648
    %v2661 = vmul.f32 %v2636, %v2650
    %v2662 = vmul.f32 %v2637, %v2652
    %v2663 = vmul.f32 %v2569, %v2163
    %v2664 = vmul.f32 %v2571, %v2164
    %v2665 = vmul.f32 %v2573, %v2165
    %v2666 = vmul.f32 %v2575, %v2166
    %v2667 = vmul.f32 %v2577, %v2167
    %v2668 = vadd.f32 %v2658, %v2663
    %v2669 = vadd.f32 %v2659, %v2664
    %v2670 = vadd.f32 %v2660, %v2665
    %v2671 = vadd.f32 %v2661, %v2666
    %v2672 = vadd.f32 %v2662, %v2667
    %2678 = vrot.lane.b32.xlu0 %v2423, 48
    %v2679 = vpop.permute.xlu0 %2678
    %2680 = vrot.lane.b32.xlu0 %v2424, 48
    %v2681 = vpop.permute.xlu0 %2680
    %2682 = vrot.lane.b32.xlu0 %v2425, 48
    %v2683 = vpop.permute.xlu0 %2682
    %2684 = vrot.lane.b32.xlu0 %v2426, 48
    %v2685 = vpop.permute.xlu0 %2684
    %2686 = vrot.lane.b32.xlu0 %v2427, 48
    %v2687 = vpop.permute.xlu0 %2686
    %v2688 = vsel %vm1452, %v2679, 0
    %v2690 = vsel %vm1452, %v2681, 0
    %v2692 = vsel %vm1452, %v2683, 0
    %v2694 = vsel %vm1452, %v2685, 0
    %v2696 = vsel %vm1452, %v2687, 0
    %2698 = vmatprep.subr.mxu0 0.0
    %2699 = vmatpush1.msra.mxu0 %v1442
    %2700 = vmatprep.subr.mxu0 0.0
    %2701 = vmatpush1.msra.mxu0 %v1443
    %2702 = vmatprep.subr.mxu0 0.0
    %2703 = vmatpush1.msra.mxu0 %v1686
    %2704 = vmatprep.subr.mxu0 0.0
    %2705 = vmatpush1.msra.mxu0 0.0
    %2706 = vmatprep.subr.mxu0 0.0
    %2707 = vmatpush1.msra.mxu0 0.0
    %2708 = vmatprep.subr.mxu0 0.0
    %2709 = vmatpush1.msra.mxu0 0.0
    %2710 = vmatprep.subr.mxu0 0.0
    %2711 = vmatpush1.msra.mxu0 0.0
    %2712 = vmatprep.subr.mxu0 0.0
    %2713 = vmatpush1.msra.mxu0 0.0
    %2714 = vmatprep.subr.mxu0 0.0
    %2715 = vmatpush1.msra.mxu0 0.0
    %2716 = vmatprep.subr.mxu0 0.0
    %2717 = vmatpush1.msra.mxu0 0.0
    %2718 = vmatprep.subr.mxu0 0.0
    %2719 = vmatpush1.msra.mxu0 0.0
    %2720 = vmatprep.subr.mxu0 0.0
    %2721 = vmatpush1.msra.mxu0 0.0
    %2722 = vmatprep.subr.mxu0 0.0
    %2723 = vmatpush1.msra.mxu0 0.0
    %2724 = vmatprep.subr.mxu0 0.0
    %2725 = vmatpush1.msra.mxu0 0.0
    %2726 = vmatprep.subr.mxu0 0.0
    %2727 = vmatpush1.msra.mxu0 0.0
    %2728 = vmatprep.subr.mxu0 0.0
    %2729 = vmatpush1.msra.mxu0 0.0
    %2730 = vmatprep.subr.mxu0 0.0
    %2731 = vmatpush1.msra.mxu0 0.0
    %2732 = vmatprep.subr.mxu0 0.0
    %2733 = vmatpush1.msra.mxu0 0.0
    %2734 = vmatprep.subr.mxu0 0.0
    %2735 = vmatpush1.msra.mxu0 0.0
    %2736 = vmatprep.subr.mxu0 0.0
    %2737 = vmatpush1.msra.mxu0 0.0
    %2738 = vmatprep.subr.mxu0 0.0
    %2739 = vmatpush1.msra.mxu0 0.0
    %2740 = vmatprep.subr.mxu0 0.0
    %2741 = vmatpush1.msra.mxu0 0.0
    %2742 = vmatprep.subr.mxu0 0.0
    %2743 = vmatpush1.msra.mxu0 0.0
    %2744 = vmatprep.subr.mxu0 0.0
    %2745 = vmatpush1.msra.mxu0 0.0
    %2746 = vmatprep.subr.mxu0 0.0
    %2747 = vmatpush1.msra.mxu0 0.0
    %2748 = vmatprep.subr.mxu0 0.0
    %2749 = vmatpush1.msra.mxu0 0.0
    %2750 = vmatprep.subr.mxu0 0.0
    %2751 = vmatpush1.msra.mxu0 0.0
    %2752 = vmatprep.subr.mxu0 0.0
    %2753 = vmatpush1.msra.mxu0 0.0
    %2754 = vmatprep.subr.mxu0 0.0
    %2755 = vmatpush1.msra.mxu0 0.0
    %2756 = vmatprep.subr.mxu0 0.0
    %2757 = vmatpush1.msra.mxu0 0.0
    %2758 = vmatprep.subr.mxu0 0.0
    %2759 = vmatpush1.msra.mxu0 0.0
    %2760 = vmatprep.subr.mxu0 0.0
    %2761 = vmatpush1.msra.mxu0 0.0
    %2762 = vmatprep.mubr.f32.mxu0 0.0
    %2763 = vmatmul.mubr.f32.gmra.mrb[0].mxu0 %v2688
    %v2764 = vpop.f32.mrb[0].mxu0
    %v2765 = vadd.f32 %v1683, %v2764
    %v2766 = vpop.f32.mrb[0].mxu0
    %2767 = vmatprep.mubr.f32.mxu0 0.0
    %2768 = vmatmul.mubr.f32.gmra.mrb[0].mxu0 %v2690
    %v2769 = vpop.f32.mrb[0].mxu0
    %v2770 = vadd.f32 %v1683, %v2769
    %v2771 = vpop.f32.mrb[0].mxu0
    %2772 = vmatprep.mubr.f32.mxu0 0.0
    %2773 = vmatmul.mubr.f32.gmra.mrb[0].mxu0 %v2692
    %v2774 = vpop.f32.mrb[0].mxu0
    %v2775 = vadd.f32 %v1683, %v2774
    %v2776 = vpop.f32.mrb[0].mxu0
    %2777 = vmatprep.mubr.f32.mxu0 0.0
    %2778 = vmatmul.mubr.f32.gmra.mrb[0].mxu0 %v2694
    %v2779 = vpop.f32.mrb[0].mxu0
    %v2780 = vadd.f32 %v1683, %v2779
    %v2781 = vpop.f32.mrb[0].mxu0
    %2782 = vmatprep.mubr.f32.mxu0 0.0
    %2783 = vmatmul.mubr.f32.gmra.mrb[0].mxu0 %v2696
    %v2784 = vpop.f32.mrb[0].mxu0
    %v2785 = vadd.f32 %v1683, %v2784
    %v2786 = vpop.f32.mrb[0].mxu0
    %2787 = vdwg.mxu0
    %2793 = vrot.lane.b32.xlu0 %v2765, 60
    %v2794 = vpop.permute.xlu0 %2793
    %2795 = vrot.lane.b32.xlu0 %v2770, 60
    %v2796 = vpop.permute.xlu0 %2795
    %2797 = vrot.lane.b32.xlu0 %v2775, 60
    %v2798 = vpop.permute.xlu0 %2797
    %2799 = vrot.lane.b32.xlu0 %v2780, 60
    %v2800 = vpop.permute.xlu0 %2799
    %2801 = vrot.lane.b32.xlu0 %v2785, 60
    %v2802 = vpop.permute.xlu0 %2801
    %v2808 = vadd.f32 %v1365, %v2794
    %v2809 = vadd.f32 %v1370, %v2796
    %v2810 = vadd.f32 %v1375, %v2798
    %v2811 = vadd.f32 %v1380, %v2800
    %v2812 = vadd.f32 %v1385, %v2802
    %v2813 = vxor.u32 %v2808, 2147483648
    %v2814 = vxor.u32 %v2809, 2147483648
    %v2815 = vxor.u32 %v2810, 2147483648
    %v2816 = vxor.u32 %v2811, 2147483648
    %v2817 = vxor.u32 %v2812, 2147483648
    %v2818 = vmul.f32 %v2813, 1.442695
    %v2819 = vpow.pop %v2818
    %v2820 = vmul.f32 %v2814, 1.442695
    %v2821 = vpow.pop %v2820
    %v2822 = vmul.f32 %v2815, 1.442695
    %v2823 = vpow.pop %v2822
    %v2824 = vmul.f32 %v2816, 1.442695
    %v2825 = vpow.pop %v2824
    %v2826 = vmul.f32 %v2817, 1.442695
    %v2827 = vpow.pop %v2826
    %v2828 = vadd.f32 %v2819, 1.0
    %v2829 = vadd.f32 %v2821, 1.0
    %v2830 = vadd.f32 %v2823, 1.0
    %v2831 = vadd.f32 %v2825, 1.0
    %v2832 = vadd.f32 %v2827, 1.0
    %v2833 = vrcp.pop %v2828
    %v2834 = vmul.f32 1.0, %v2833
    %v2835 = vrcp.pop %v2829
    %v2836 = vmul.f32 1.0, %v2835
    %v2837 = vrcp.pop %v2830
    %v2838 = vmul.f32 1.0, %v2837
    %v2839 = vrcp.pop %v2831
    %v2840 = vmul.f32 1.0, %v2839
    %v2841 = vrcp.pop %v2832
    %v2842 = vmul.f32 1.0, %v2841
    %2843 = vrot.lane.b32.xlu0 %v2765, 20
    %v2844 = vpop.permute.xlu0 %2843
    %2845 = vrot.lane.b32.xlu0 %v2770, 20
    %v2846 = vpop.permute.xlu0 %2845
    %2847 = vrot.lane.b32.xlu0 %v2775, 20
    %v2848 = vpop.permute.xlu0 %2847
    %2849 = vrot.lane.b32.xlu0 %v2780, 20
    %v2850 = vpop.permute.xlu0 %2849
    %2851 = vrot.lane.b32.xlu0 %v2785, 20
    %v2852 = vpop.permute.xlu0 %2851
    %v2858 = vmul.f32 %v2834, %v2844
    %v2859 = vmul.f32 %v2836, %v2846
    %v2860 = vmul.f32 %v2838, %v2848
    %v2861 = vmul.f32 %v2840, %v2850
    %v2862 = vmul.f32 %v2842, %v2852
    %2868 = vrot.lane.b32.xlu0 %v2858, 40
    %v2869 = vpop.permute.xlu0 %2868
    %2870 = vrot.lane.b32.xlu0 %v2859, 40
    %v2871 = vpop.permute.xlu0 %2870
    %2872 = vrot.lane.b32.xlu0 %v2860, 40
    %v2873 = vpop.permute.xlu0 %2872
    %2874 = vrot.lane.b32.xlu0 %v2861, 40
    %v2875 = vpop.permute.xlu0 %2874
    %2876 = vrot.lane.b32.xlu0 %v2862, 40
    %v2877 = vpop.permute.xlu0 %2876
    %v2883 = vadd.f32 %v1365, %v2869
    %v2884 = vadd.f32 %v1370, %v2871
    %v2885 = vadd.f32 %v1375, %v2873
    %v2886 = vadd.f32 %v1380, %v2875
    %v2887 = vadd.f32 %v1385, %v2877
    %v2888 = vtanh.pop %v2883
    %v2889 = vtanh.pop %v2884
    %v2890 = vtanh.pop %v2885
    %v2891 = vtanh.pop %v2886
    %v2892 = vtanh.pop %v2887
    %v2893 = vsub.f32 1.0, %v2834
    %v2894 = vsub.f32 1.0, %v2836
    %v2895 = vsub.f32 1.0, %v2838
    %v2896 = vsub.f32 1.0, %v2840
    %v2897 = vsub.f32 1.0, %v2842
    %2903 = vrot.lane.b32.xlu0 %v2888, 108
    %v2904 = vpop.permute.xlu0 %2903
    %2905 = vrot.lane.b32.xlu0 %v2889, 108
    %v2906 = vpop.permute.xlu0 %2905
    %2907 = vrot.lane.b32.xlu0 %v2890, 108
    %v2908 = vpop.permute.xlu0 %2907
    %2909 = vrot.lane.b32.xlu0 %v2891, 108
    %v2910 = vpop.permute.xlu0 %2909
    %2911 = vrot.lane.b32.xlu0 %v2892, 108
    %v2912 = vpop.permute.xlu0 %2911
    %v2918 = vmul.f32 %v2893, %v2904
    %v2919 = vmul.f32 %v2894, %v2906
    %v2920 = vmul.f32 %v2895, %v2908
    %v2921 = vmul.f32 %v2896, %v2910
    %v2922 = vmul.f32 %v2897, %v2912
    %v2923 = vmul.f32 %v2834, %v2423
    %v2924 = vmul.f32 %v2836, %v2424
    %v2925 = vmul.f32 %v2838, %v2425
    %v2926 = vmul.f32 %v2840, %v2426
    %v2927 = vmul.f32 %v2842, %v2427
    %v2928 = vadd.f32 %v2918, %v2923
    %v2929 = vadd.f32 %v2919, %v2924
    %v2930 = vadd.f32 %v2920, %v2925
    %v2931 = vadd.f32 %v2921, %v2926
    %v2932 = vadd.f32 %v2922, %v2927
    %2938 = vrot.lane.b32.xlu0 %v2668, 108
    %v2939 = vpop.permute.xlu0 %2938
    %2940 = vrot.lane.b32.xlu0 %v2669, 108
    %v2941 = vpop.permute.xlu0 %2940
    %2942 = vrot.lane.b32.xlu0 %v2670, 108
    %v2943 = vpop.permute.xlu0 %2942
    %2944 = vrot.lane.b32.xlu0 %v2671, 108
    %v2945 = vpop.permute.xlu0 %2944
    %2946 = vrot.lane.b32.xlu0 %v2672, 108
    %v2947 = vpop.permute.xlu0 %2946
    %v2948 = vsel %vm1452, %v2939, 0
    %v2950 = vsel %vm1452, %v2941, 0
    %v2952 = vsel %vm1452, %v2943, 0
    %v2954 = vsel %vm1452, %v2945, 0
    %v2956 = vsel %vm1452, %v2947, 0
    %2958 = vmatprep.subr.mxu0 0.0
    %2959 = vmatpush1.msra.mxu0 %v1438
    %2960 = vmatprep.subr.mxu0 0.0
    %2961 = vmatpush1.msra.mxu0 %v1439
    %2962 = vmatprep.subr.mxu0 0.0
    %2963 = vmatpush1.msra.mxu0 %v1457
    %2964 = vmatprep.subr.mxu0 0.0
    %2965 = vmatpush1.msra.mxu0 0.0
    %2966 = vmatprep.subr.mxu0 0.0
    %2967 = vmatpush1.msra.mxu0 0.0
    %2968 = vmatprep.subr.mxu0 0.0
    %2969 = vmatpush1.msra.mxu0 0.0
    %2970 = vmatprep.subr.mxu0 0.0
    %2971 = vmatpush1.msra.mxu0 0.0
    %2972 = vmatprep.subr.mxu0 0.0
    %2973 = vmatpush1.msra.mxu0 0.0
    %2974 = vmatprep.subr.mxu0 0.0
    %2975 = vmatpush1.msra.mxu0 0.0
    %2976 = vmatprep.subr.mxu0 0.0
    %2977 = vmatpush1.msra.mxu0 0.0
    %2978 = vmatprep.subr.mxu0 0.0
    %2979 = vmatpush1.msra.mxu0 0.0
    %2980 = vmatprep.subr.mxu0 0.0
    %2981 = vmatpush1.msra.mxu0 0.0
    %2982 = vmatprep.subr.mxu0 0.0
    %2983 = vmatpush1.msra.mxu0 0.0
    %2984 = vmatprep.subr.mxu0 0.0
    %2985 = vmatpush1.msra.mxu0 0.0
    %2986 = vmatprep.subr.mxu0 0.0
    %2987 = vmatpush1.msra.mxu0 0.0
    %2988 = vmatprep.subr.mxu0 0.0
    %2989 = vmatpush1.msra.mxu0 0.0
    %2990 = vmatprep.subr.mxu0 0.0
    %2991 = vmatpush1.msra.mxu0 0.0
    %2992 = vmatprep.subr.mxu0 0.0
    %2993 = vmatpush1.msra.mxu0 0.0
    %2994 = vmatprep.subr.mxu0 0.0
    %2995 = vmatpush1.msra.mxu0 0.0
    %2996 = vmatprep.subr.mxu0 0.0
    %2997 = vmatpush1.msra.mxu0 0.0
    %2998 = vmatprep.subr.mxu0 0.0
    %2999 = vmatpush1.msra.mxu0 0.0
    %3000 = vmatprep.subr.mxu0 0.0
    %3001 = vmatpush1.msra.mxu0 0.0
    %3002 = vmatprep.subr.mxu0 0.0
    %3003 = vmatpush1.msra.mxu0 0.0
    %3004 = vmatprep.subr.mxu0 0.0
    %3005 = vmatpush1.msra.mxu0 0.0
    %3006 = vmatprep.subr.mxu0 0.0
    %3007 = vmatpush1.msra.mxu0 0.0
    %3008 = vmatprep.subr.mxu0 0.0
    %3009 = vmatpush1.msra.mxu0 0.0
    %3010 = vmatprep.subr.mxu0 0.0
    %3011 = vmatpush1.msra.mxu0 0.0
    %3012 = vmatprep.subr.mxu0 0.0
    %3013 = vmatpush1.msra.mxu0 0.0
    %3014 = vmatprep.subr.mxu0 0.0
    %3015 = vmatpush1.msra.mxu0 0.0
    %3016 = vmatprep.subr.mxu0 0.0
    %3017 = vmatpush1.msra.mxu0 0.0
    %3018 = vmatprep.subr.mxu0 0.0
    %3019 = vmatpush1.msra.mxu0 0.0
    %3020 = vmatprep.subr.mxu0 0.0
    %3021 = vmatpush1.msra.mxu0 0.0
    %3022 = vmatprep.mubr.f32.mxu0 0.0
    %3023 = vmatmul.mubr.f32.gmra.mrb[0].mxu0 %v2948
    %v3024 = vpop.f32.mrb[0].mxu0
    %v3025 = vadd.f32 %v1450, %v3024
    %v3026 = vpop.f32.mrb[0].mxu0
    %3027 = vmatprep.mubr.f32.mxu0 0.0
    %3028 = vmatmul.mubr.f32.gmra.mrb[0].mxu0 %v2950
    %v3029 = vpop.f32.mrb[0].mxu0
    %v3030 = vadd.f32 %v1450, %v3029
    %v3031 = vpop.f32.mrb[0].mxu0
    %3032 = vmatprep.mubr.f32.mxu0 0.0
    %3033 = vmatmul.mubr.f32.gmra.mrb[0].mxu0 %v2952
    %v3034 = vpop.f32.mrb[0].mxu0
    %v3035 = vadd.f32 %v1450, %v3034
    %v3036 = vpop.f32.mrb[0].mxu0
    %3037 = vmatprep.mubr.f32.mxu0 0.0
    %3038 = vmatmul.mubr.f32.gmra.mrb[0].mxu0 %v2954
    %v3039 = vpop.f32.mrb[0].mxu0
    %v3040 = vadd.f32 %v1450, %v3039
    %v3041 = vpop.f32.mrb[0].mxu0
    %3042 = vmatprep.mubr.f32.mxu0 0.0
    %3043 = vmatmul.mubr.f32.gmra.mrb[0].mxu0 %v2956
    %v3044 = vpop.f32.mrb[0].mxu0
    %v3045 = vadd.f32 %v1450, %v3044
    %v3046 = vpop.f32.mrb[0].mxu0
    %3047 = vdwg.mxu0
    %v3048 = vadd.f32 %v1415, %v3025
    %v3049 = vadd.f32 %v1420, %v3030
    %v3050 = vadd.f32 %v1425, %v3035
    %v3051 = vadd.f32 %v1430, %v3040
    %v3052 = vadd.f32 %v1435, %v3045
    %v3053 = vxor.u32 %v3048, 2147483648
    %v3054 = vxor.u32 %v3049, 2147483648
    %v3055 = vxor.u32 %v3050, 2147483648
    %v3056 = vxor.u32 %v3051, 2147483648
    %v3057 = vxor.u32 %v3052, 2147483648
    %v3058 = vmul.f32 %v3053, 1.442695
    %v3059 = vpow.pop %v3058
    %v3060 = vmul.f32 %v3054, 1.442695
    %v3061 = vpow.pop %v3060
    %v3062 = vmul.f32 %v3055, 1.442695
    %v3063 = vpow.pop %v3062
    %v3064 = vmul.f32 %v3056, 1.442695
    %v3065 = vpow.pop %v3064
    %v3066 = vmul.f32 %v3057, 1.442695
    %v3067 = vpow.pop %v3066
    %v3068 = vadd.f32 %v3059, 1.0
    %v3069 = vadd.f32 %v3061, 1.0
    %v3070 = vadd.f32 %v3063, 1.0
    %v3071 = vadd.f32 %v3065, 1.0
    %v3072 = vadd.f32 %v3067, 1.0
    %v3073 = vrcp.pop %v3068
    %v3074 = vmul.f32 1.0, %v3073
    %v3075 = vrcp.pop %v3069
    %v3076 = vmul.f32 1.0, %v3075
    %v3077 = vrcp.pop %v3070
    %v3078 = vmul.f32 1.0, %v3077
    %v3079 = vrcp.pop %v3071
    %v3080 = vmul.f32 1.0, %v3079
    %v3081 = vrcp.pop %v3072
    %v3082 = vmul.f32 1.0, %v3081
    %3088 = vrot.lane.b32.xlu0 %v3025, 88
    %v3089 = vpop.permute.xlu0 %3088
    %3090 = vrot.lane.b32.xlu0 %v3030, 88
    %v3091 = vpop.permute.xlu0 %3090
    %3092 = vrot.lane.b32.xlu0 %v3035, 88
    %v3093 = vpop.permute.xlu0 %3092
    %3094 = vrot.lane.b32.xlu0 %v3040, 88
    %v3095 = vpop.permute.xlu0 %3094
    %3096 = vrot.lane.b32.xlu0 %v3045, 88
    %v3097 = vpop.permute.xlu0 %3096
    %v3103 = vmul.f32 %v3074, %v3089
    %v3104 = vmul.f32 %v3076, %v3091
    %v3105 = vmul.f32 %v3078, %v3093
    %v3106 = vmul.f32 %v3080, %v3095
    %v3107 = vmul.f32 %v3082, %v3097
    %3113 = vrot.lane.b32.xlu0 %v3103, 40
    %v3114 = vpop.permute.xlu0 %3113
    %3115 = vrot.lane.b32.xlu0 %v3104, 40
    %v3116 = vpop.permute.xlu0 %3115
    %3117 = vrot.lane.b32.xlu0 %v3105, 40
    %v3118 = vpop.permute.xlu0 %3117
    %3119 = vrot.lane.b32.xlu0 %v3106, 40
    %v3120 = vpop.permute.xlu0 %3119
    %3121 = vrot.lane.b32.xlu0 %v3107, 40
    %v3122 = vpop.permute.xlu0 %3121
    %v3128 = vadd.f32 %v1415, %v3114
    %v3129 = vadd.f32 %v1420, %v3116
    %v3130 = vadd.f32 %v1425, %v3118
    %v3131 = vadd.f32 %v1430, %v3120
    %v3132 = vadd.f32 %v1435, %v3122
    %v3133 = vtanh.pop %v3128
    %v3134 = vtanh.pop %v3129
    %v3135 = vtanh.pop %v3130
    %v3136 = vtanh.pop %v3131
    %v3137 = vtanh.pop %v3132
    %v3138 = vsub.f32 1.0, %v3074
    %v3139 = vsub.f32 1.0, %v3076
    %v3140 = vsub.f32 1.0, %v3078
    %v3141 = vsub.f32 1.0, %v3080
    %v3142 = vsub.f32 1.0, %v3082
    %3148 = vrot.lane.b32.xlu0 %v3133, 108
    %v3149 = vpop.permute.xlu0 %3148
    %3150 = vrot.lane.b32.xlu0 %v3134, 108
    %v3151 = vpop.permute.xlu0 %3150
    %3152 = vrot.lane.b32.xlu0 %v3135, 108
    %v3153 = vpop.permute.xlu0 %3152
    %3154 = vrot.lane.b32.xlu0 %v3136, 108
    %v3155 = vpop.permute.xlu0 %3154
    %3156 = vrot.lane.b32.xlu0 %v3137, 108
    %v3157 = vpop.permute.xlu0 %3156
    %v3163 = vmul.f32 %v3138, %v3149
    %v3164 = vmul.f32 %v3139, %v3151
    %v3165 = vmul.f32 %v3140, %v3153
    %v3166 = vmul.f32 %v3141, %v3155
    %v3167 = vmul.f32 %v3142, %v3157
    %v3168 = vmul.f32 %v3074, %v2668
    %v3169 = vmul.f32 %v3076, %v2669
    %v3170 = vmul.f32 %v3078, %v2670
    %v3171 = vmul.f32 %v3080, %v2671
    %v3172 = vmul.f32 %v3082, %v2672
    %v3173 = vadd.f32 %v3163, %v3168
    %v3174 = vadd.f32 %v3164, %v3169
    %v3175 = vadd.f32 %v3165, %v3170
    %v3176 = vadd.f32 %v3166, %v3171
    %v3177 = vadd.f32 %v3167, %v3172
    %3183 = vrot.lane.b32.xlu0 %v2928, 48
    %v3184 = vpop.permute.xlu0 %3183
    %3185 = vrot.lane.b32.xlu0 %v2929, 48
    %v3186 = vpop.permute.xlu0 %3185
    %3187 = vrot.lane.b32.xlu0 %v2930, 48
    %v3188 = vpop.permute.xlu0 %3187
    %3189 = vrot.lane.b32.xlu0 %v2931, 48
    %v3190 = vpop.permute.xlu0 %3189
    %3191 = vrot.lane.b32.xlu0 %v2932, 48
    %v3192 = vpop.permute.xlu0 %3191
    %v3193 = vsel %vm1452, %v3184, 0
    %v3195 = vsel %vm1452, %v3186, 0
    %v3197 = vsel %vm1452, %v3188, 0
    %v3199 = vsel %vm1452, %v3190, 0
    %v3201 = vsel %vm1452, %v3192, 0
    %3203 = vmatprep.subr.mxu0 0.0
    %3204 = vmatpush1.msra.mxu0 %v1442
    %3205 = vmatprep.subr.mxu0 0.0
    %3206 = vmatpush1.msra.mxu0 %v1443
    %3207 = vmatprep.subr.mxu0 0.0
    %3208 = vmatpush1.msra.mxu0 %v1686
    %3209 = vmatprep.subr.mxu0 0.0
    %3210 = vmatpush1.msra.mxu0 0.0
    %3211 = vmatprep.subr.mxu0 0.0
    %3212 = vmatpush1.msra.mxu0 0.0
    %3213 = vmatprep.subr.mxu0 0.0
    %3214 = vmatpush1.msra.mxu0 0.0
    %3215 = vmatprep.subr.mxu0 0.0
    %3216 = vmatpush1.msra.mxu0 0.0
    %3217 = vmatprep.subr.mxu0 0.0
    %3218 = vmatpush1.msra.mxu0 0.0
    %3219 = vmatprep.subr.mxu0 0.0
    %3220 = vmatpush1.msra.mxu0 0.0
    %3221 = vmatprep.subr.mxu0 0.0
    %3222 = vmatpush1.msra.mxu0 0.0
    %3223 = vmatprep.subr.mxu0 0.0
    %3224 = vmatpush1.msra.mxu0 0.0
    %3225 = vmatprep.subr.mxu0 0.0
    %3226 = vmatpush1.msra.mxu0 0.0
    %3227 = vmatprep.subr.mxu0 0.0
    %3228 = vmatpush1.msra.mxu0 0.0
    %3229 = vmatprep.subr.mxu0 0.0
    %3230 = vmatpush1.msra.mxu0 0.0
    %3231 = vmatprep.subr.mxu0 0.0
    %3232 = vmatpush1.msra.mxu0 0.0
    %3233 = vmatprep.subr.mxu0 0.0
    %3234 = vmatpush1.msra.mxu0 0.0
    %3235 = vmatprep.subr.mxu0 0.0
    %3236 = vmatpush1.msra.mxu0 0.0
    %3237 = vmatprep.subr.mxu0 0.0
    %3238 = vmatpush1.msra.mxu0 0.0
    %3239 = vmatprep.subr.mxu0 0.0
    %3240 = vmatpush1.msra.mxu0 0.0
    %3241 = vmatprep.subr.mxu0 0.0
    %3242 = vmatpush1.msra.mxu0 0.0
    %3243 = vmatprep.subr.mxu0 0.0
    %3244 = vmatpush1.msra.mxu0 0.0
    %3245 = vmatprep.subr.mxu0 0.0
    %3246 = vmatpush1.msra.mxu0 0.0
    %3247 = vmatprep.subr.mxu0 0.0
    %3248 = vmatpush1.msra.mxu0 0.0
    %3249 = vmatprep.subr.mxu0 0.0
    %3250 = vmatpush1.msra.mxu0 0.0
    %3251 = vmatprep.subr.mxu0 0.0
    %3252 = vmatpush1.msra.mxu0 0.0
    %3253 = vmatprep.subr.mxu0 0.0
    %3254 = vmatpush1.msra.mxu0 0.0
    %3255 = vmatprep.subr.mxu0 0.0
    %3256 = vmatpush1.msra.mxu0 0.0
    %3257 = vmatprep.subr.mxu0 0.0
    %3258 = vmatpush1.msra.mxu0 0.0
    %3259 = vmatprep.subr.mxu0 0.0
    %3260 = vmatpush1.msra.mxu0 0.0
    %3261 = vmatprep.subr.mxu0 0.0
    %3262 = vmatpush1.msra.mxu0 0.0
    %3263 = vmatprep.subr.mxu0 0.0
    %3264 = vmatpush1.msra.mxu0 0.0
    %3265 = vmatprep.subr.mxu0 0.0
    %3266 = vmatpush1.msra.mxu0 0.0
    %3267 = vmatprep.mubr.f32.mxu0 0.0
    %3268 = vmatmul.mubr.f32.gmra.mrb[0].mxu0 %v3193
    %v3269 = vpop.f32.mrb[0].mxu0
    %v3270 = vadd.f32 %v1683, %v3269
    %v3271 = vpop.f32.mrb[0].mxu0
    %3272 = vmatprep.mubr.f32.mxu0 0.0
    %3273 = vmatmul.mubr.f32.gmra.mrb[0].mxu0 %v3195
    %v3274 = vpop.f32.mrb[0].mxu0
    %v3275 = vadd.f32 %v1683, %v3274
    %v3276 = vpop.f32.mrb[0].mxu0
    %3277 = vmatprep.mubr.f32.mxu0 0.0
    %3278 = vmatmul.mubr.f32.gmra.mrb[0].mxu0 %v3197
    %v3279 = vpop.f32.mrb[0].mxu0
    %v3280 = vadd.f32 %v1683, %v3279
    %v3281 = vpop.f32.mrb[0].mxu0
    %3282 = vmatprep.mubr.f32.mxu0 0.0
    %3283 = vmatmul.mubr.f32.gmra.mrb[0].mxu0 %v3199
    %v3284 = vpop.f32.mrb[0].mxu0
    %v3285 = vadd.f32 %v1683, %v3284
    %v3286 = vpop.f32.mrb[0].mxu0
    %3287 = vmatprep.mubr.f32.mxu0 0.0
    %3288 = vmatmul.mubr.f32.gmra.mrb[0].mxu0 %v3201
    %v3289 = vpop.f32.mrb[0].mxu0
    %v3290 = vadd.f32 %v1683, %v3289
    %v3291 = vpop.f32.mrb[0].mxu0
    %3292 = vdwg.mxu0
    %3298 = vrot.lane.b32.xlu0 %v3270, 60
    %v3299 = vpop.permute.xlu0 %3298
    %3300 = vrot.lane.b32.xlu0 %v3275, 60
    %v3301 = vpop.permute.xlu0 %3300
    %3302 = vrot.lane.b32.xlu0 %v3280, 60
    %v3303 = vpop.permute.xlu0 %3302
    %3304 = vrot.lane.b32.xlu0 %v3285, 60
    %v3305 = vpop.permute.xlu0 %3304
    %3306 = vrot.lane.b32.xlu0 %v3290, 60
    %v3307 = vpop.permute.xlu0 %3306
    %v3313 = vadd.f32 %v1340, %v3299
    %v3314 = vadd.f32 %v1345, %v3301
    %v3315 = vadd.f32 %v1350, %v3303
    %v3316 = vadd.f32 %v1355, %v3305
    %v3317 = vadd.f32 %v1360, %v3307
    %v3318 = vxor.u32 %v3313, 2147483648
    %v3319 = vxor.u32 %v3314, 2147483648
    %v3320 = vxor.u32 %v3315, 2147483648
    %v3321 = vxor.u32 %v3316, 2147483648
    %v3322 = vxor.u32 %v3317, 2147483648
    %v3323 = vmul.f32 %v3318, 1.442695
    %v3324 = vpow.pop %v3323
    %v3325 = vmul.f32 %v3319, 1.442695
    %v3326 = vpow.pop %v3325
    %v3327 = vmul.f32 %v3320, 1.442695
    %v3328 = vpow.pop %v3327
    %v3329 = vmul.f32 %v3321, 1.442695
    %v3330 = vpow.pop %v3329
    %v3331 = vmul.f32 %v3322, 1.442695
    %v3332 = vpow.pop %v3331
    %v3333 = vadd.f32 %v3324, 1.0
    %v3334 = vadd.f32 %v3326, 1.0
    %v3335 = vadd.f32 %v3328, 1.0
    %v3336 = vadd.f32 %v3330, 1.0
    %v3337 = vadd.f32 %v3332, 1.0
    %v3338 = vrcp.pop %v3333
    %v3339 = vmul.f32 1.0, %v3338
    %v3340 = vrcp.pop %v3334
    %v3341 = vmul.f32 1.0, %v3340
    %v3342 = vrcp.pop %v3335
    %v3343 = vmul.f32 1.0, %v3342
    %v3344 = vrcp.pop %v3336
    %v3345 = vmul.f32 1.0, %v3344
    %v3346 = vrcp.pop %v3337
    %v3347 = vmul.f32 1.0, %v3346
    %3348 = vrot.lane.b32.xlu0 %v3270, 20
    %v3349 = vpop.permute.xlu0 %3348
    %3350 = vrot.lane.b32.xlu0 %v3275, 20
    %v3351 = vpop.permute.xlu0 %3350
    %3352 = vrot.lane.b32.xlu0 %v3280, 20
    %v3353 = vpop.permute.xlu0 %3352
    %3354 = vrot.lane.b32.xlu0 %v3285, 20
    %v3355 = vpop.permute.xlu0 %3354
    %3356 = vrot.lane.b32.xlu0 %v3290, 20
    %v3357 = vpop.permute.xlu0 %3356
    %v3363 = vmul.f32 %v3339, %v3349
    %v3364 = vmul.f32 %v3341, %v3351
    %v3365 = vmul.f32 %v3343, %v3353
    %v3366 = vmul.f32 %v3345, %v3355
    %v3367 = vmul.f32 %v3347, %v3357
    %3373 = vrot.lane.b32.xlu0 %v3363, 40
    %v3374 = vpop.permute.xlu0 %3373
    %3375 = vrot.lane.b32.xlu0 %v3364, 40
    %v3376 = vpop.permute.xlu0 %3375
    %3377 = vrot.lane.b32.xlu0 %v3365, 40
    %v3378 = vpop.permute.xlu0 %3377
    %3379 = vrot.lane.b32.xlu0 %v3366, 40
    %v3380 = vpop.permute.xlu0 %3379
    %3381 = vrot.lane.b32.xlu0 %v3367, 40
    %v3382 = vpop.permute.xlu0 %3381
    %v3388 = vadd.f32 %v1340, %v3374
    %v3389 = vadd.f32 %v1345, %v3376
    %v3390 = vadd.f32 %v1350, %v3378
    %v3391 = vadd.f32 %v1355, %v3380
    %v3392 = vadd.f32 %v1360, %v3382
    %v3393 = vtanh.pop %v3388
    %v3394 = vtanh.pop %v3389
    %v3395 = vtanh.pop %v3390
    %v3396 = vtanh.pop %v3391
    %v3397 = vtanh.pop %v3392
    %v3398 = vsub.f32 1.0, %v3339
    %v3399 = vsub.f32 1.0, %v3341
    %v3400 = vsub.f32 1.0, %v3343
    %v3401 = vsub.f32 1.0, %v3345
    %v3402 = vsub.f32 1.0, %v3347
    %3408 = vrot.lane.b32.xlu0 %v3393, 108
    %v3409 = vpop.permute.xlu0 %3408
    %3410 = vrot.lane.b32.xlu0 %v3394, 108
    %v3411 = vpop.permute.xlu0 %3410
    %3412 = vrot.lane.b32.xlu0 %v3395, 108
    %v3413 = vpop.permute.xlu0 %3412
    %3414 = vrot.lane.b32.xlu0 %v3396, 108
    %v3415 = vpop.permute.xlu0 %3414
    %3416 = vrot.lane.b32.xlu0 %v3397, 108
    %v3417 = vpop.permute.xlu0 %3416
    %v3423 = vmul.f32 %v3398, %v3409
    %v3424 = vmul.f32 %v3399, %v3411
    %v3425 = vmul.f32 %v3400, %v3413
    %v3426 = vmul.f32 %v3401, %v3415
    %v3427 = vmul.f32 %v3402, %v3417
    %v3428 = vmul.f32 %v3339, %v2928
    %v3429 = vmul.f32 %v3341, %v2929
    %v3430 = vmul.f32 %v3343, %v2930
    %v3431 = vmul.f32 %v3345, %v2931
    %v3432 = vmul.f32 %v3347, %v2932
    %v3433 = vadd.f32 %v3423, %v3428
    %v3434 = vadd.f32 %v3424, %v3429
    %v3435 = vadd.f32 %v3425, %v3430
    %v3436 = vadd.f32 %v3426, %v3431
    %v3437 = vadd.f32 %v3427, %v3432
    %3448 = vrot.lane.b32.xlu0 %v3433, 68
    %v3449 = vpop.permute.xlu0 %3448
    %3450 = vrot.lane.b32.xlu0 %v3434, 68
    %v3451 = vpop.permute.xlu0 %3450
    %3452 = vrot.lane.b32.xlu0 %v3435, 68
    %v3453 = vpop.permute.xlu0 %3452
    %3454 = vrot.lane.b32.xlu0 %v3436, 68
    %v3455 = vpop.permute.xlu0 %3454
    %3456 = vrot.lane.b32.xlu0 %v3437, 68
    %v3457 = vpop.permute.xlu0 %3456
    %v3463 = vsel %vm1452, %v1929, %v3449
    %v3464 = vsel %vm1452, %v1931, %v3451
    %v3465 = vsel %vm1452, %v1933, %v3453
    %v3466 = vsel %vm1452, %v1935, %v3455
    %v3467 = vsel %vm1452, %v1937, %v3457
    %3473 = vrot.lane.b32.xlu0 %v2928, 68
    %v3474 = vpop.permute.xlu0 %3473
    %3475 = vrot.lane.b32.xlu0 %v2929, 68
    %v3476 = vpop.permute.xlu0 %3475
    %3477 = vrot.lane.b32.xlu0 %v2930, 68
    %v3478 = vpop.permute.xlu0 %3477
    %3479 = vrot.lane.b32.xlu0 %v2931, 68
    %v3480 = vpop.permute.xlu0 %3479
    %3481 = vrot.lane.b32.xlu0 %v2932, 68
    %v3482 = vpop.permute.xlu0 %3481
    %v3488 = vsel %vm1452, %v2434, %v3474
    %v3489 = vsel %vm1452, %v2436, %v3476
    %v3490 = vsel %vm1452, %v2438, %v3478
    %v3491 = vsel %vm1452, %v2440, %v3480
    %v3492 = vsel %vm1452, %v2442, %v3482
    %3498 = vrot.lane.b32.xlu0 %v2423, 68
    %v3499 = vpop.permute.xlu0 %3498
    %3500 = vrot.lane.b32.xlu0 %v2424, 68
    %v3501 = vpop.permute.xlu0 %3500
    %3502 = vrot.lane.b32.xlu0 %v2425, 68
    %v3503 = vpop.permute.xlu0 %3502
    %3504 = vrot.lane.b32.xlu0 %v2426, 68
    %v3505 = vpop.permute.xlu0 %3504
    %3506 = vrot.lane.b32.xlu0 %v2427, 68
    %v3507 = vpop.permute.xlu0 %3506
    %v3513 = vsel %vm1452, %v2939, %v3499
    %v3514 = vsel %vm1452, %v2941, %v3501
    %v3515 = vsel %vm1452, %v2943, %v3503
    %v3516 = vsel %vm1452, %v2945, %v3505
    %v3517 = vsel %vm1452, %v2947, %v3507
    %3523 = vrot.lane.b32.xlu0 %v3173, 108
    %v3524 = vpop.permute.xlu0 %3523
    %3525 = vrot.lane.b32.xlu0 %v3174, 108
    %v3526 = vpop.permute.xlu0 %3525
    %3527 = vrot.lane.b32.xlu0 %v3175, 108
    %v3528 = vpop.permute.xlu0 %3527
    %3529 = vrot.lane.b32.xlu0 %v3176, 108
    %v3530 = vpop.permute.xlu0 %3529
    %3531 = vrot.lane.b32.xlu0 %v3177, 108
    %v3532 = vpop.permute.xlu0 %3531
    %3538 = vrot.lane.b32.xlu0 %v1918, 68
    %v3539 = vpop.permute.xlu0 %3538
    %3540 = vrot.lane.b32.xlu0 %v1919, 68
    %v3541 = vpop.permute.xlu0 %3540
    %3542 = vrot.lane.b32.xlu0 %v1920, 68
    %v3543 = vpop.permute.xlu0 %3542
    %3544 = vrot.lane.b32.xlu0 %v1921, 68
    %v3545 = vpop.permute.xlu0 %3544
    %3546 = vrot.lane.b32.xlu0 %v1922, 68
    %v3547 = vpop.permute.xlu0 %3546
    %v3553 = vsel %vm1452, %v3524, %v3539
    %v3554 = vsel %vm1452, %v3526, %v3541
    %v3555 = vsel %vm1452, %v3528, %v3543
    %v3556 = vsel %vm1452, %v3530, %v3545
    %v3557 = vsel %vm1452, %v3532, %v3547
    %v3558 = vld [vmem:[#allocation16] sm:$0xff]
    %v3559 = vld [vmem:[#allocation16 + $0x8] sm:$0xff]
    %v3560 = vld [vmem:[#allocation16 + $0x10] sm:$0xff]
    %v3561 = vld [vmem:[#allocation16 + $0x18] sm:$0xff]
    %v3562 = vld [vmem:[#allocation16 + $0x20] sm:$0xff]
    %v3563 = vld [vmem:[#allocation18] sm:$0x1]
    %v3565 = vlaneseq
    %v3566 = vshrl.u32 %v3565, 7
    %v3567 = vsub.s32 0, %v3566
    %v3568 = vrot.slane %v3563, %v3567
    %vm3570 = vcmask 326656
    %v3572 = vsel %vm3570, %v3463, 0
    %v3575 = vsel %vm3570, %v3464, 0
    %v3578 = vsel %vm3570, %v3465, 0
    %v3581 = vsel %vm3570, %v3466, 0
    %v3584 = vsel %vm3570, %v3467, 0
    %v3587 = vsel %vm3570, %v3488, 0
    %v3590 = vsel %vm3570, %v3489, 0
    %v3593 = vsel %vm3570, %v3490, 0
    %v3596 = vsel %vm3570, %v3491, 0
    %v3599 = vsel %vm3570, %v3492, 0
    %v3602 = vsel %vm3570, %v3513, 0
    %v3605 = vsel %vm3570, %v3514, 0
    %v3608 = vsel %vm3570, %v3515, 0
    %v3611 = vsel %vm3570, %v3516, 0
    %v3614 = vsel %vm3570, %v3517, 0
    %v3617 = vsel %vm3570, %v3553, 0
    %v3620 = vsel %vm3570, %v3554, 0
    %v3623 = vsel %vm3570, %v3555, 0
    %v3626 = vsel %vm3570, %v3556, 0
    %v3629 = vsel %vm3570, %v3557, 0
    %3631 = vmatprep.subr.mxu0 0.0
    %3632 = vmatpush1.msra.mxu0 %v3558
    %3633 = vmatprep.subr.mxu0 0.0
    %3634 = vmatpush1.msra.mxu0 %v3559
    %3635 = vmatprep.subr.mxu0 0.0
    %3636 = vmatpush1.msra.mxu0 %v3560
    %3637 = vmatprep.subr.mxu0 0.0
    %3638 = vmatpush1.msra.mxu0 %v3561
    %3639 = vmatprep.subr.mxu0 0.0
    %3640 = vmatpush1.msra.mxu0 %v3562
    %3641 = vmatprep.subr.mxu0 0.0
    %3642 = vmatpush1.msra.mxu0 0.0
    %3643 = vmatprep.subr.mxu0 0.0
    %3644 = vmatpush1.msra.mxu0 0.0
    %3645 = vmatprep.subr.mxu0 0.0
    %3646 = vmatpush1.msra.mxu0 0.0
    %3647 = vmatprep.subr.mxu0 0.0
    %3648 = vmatpush1.msra.mxu0 0.0
    %3649 = vmatprep.subr.mxu0 0.0
    %3650 = vmatpush1.msra.mxu0 0.0
    %3651 = vmatprep.subr.mxu0 0.0
    %3652 = vmatpush1.msra.mxu0 0.0
    %3653 = vmatprep.subr.mxu0 0.0
    %3654 = vmatpush1.msra.mxu0 0.0
    %3655 = vmatprep.subr.mxu0 0.0
    %3656 = vmatpush1.msra.mxu0 0.0
    %3657 = vmatprep.subr.mxu0 0.0
    %3658 = vmatpush1.msra.mxu0 0.0
    %3659 = vmatprep.subr.mxu0 0.0
    %3660 = vmatpush1.msra.mxu0 0.0
    %3661 = vmatprep.subr.mxu0 0.0
    %3662 = vmatpush1.msra.mxu0 0.0
    %3663 = vmatprep.subr.mxu0 0.0
    %3664 = vmatpush1.msra.mxu0 0.0
    %3665 = vmatprep.subr.mxu0 0.0
    %3666 = vmatpush1.msra.mxu0 0.0
    %3667 = vmatprep.subr.mxu0 0.0
    %3668 = vmatpush1.msra.mxu0 0.0
    %3669 = vmatprep.subr.mxu0 0.0
    %3670 = vmatpush1.msra.mxu0 0.0
    %3671 = vmatprep.subr.mxu0 0.0
    %3672 = vmatpush1.msra.mxu0 0.0
    %3673 = vmatprep.subr.mxu0 0.0
    %3674 = vmatpush1.msra.mxu0 0.0
    %3675 = vmatprep.subr.mxu0 0.0
    %3676 = vmatpush1.msra.mxu0 0.0
    %3677 = vmatprep.subr.mxu0 0.0
    %3678 = vmatpush1.msra.mxu0 0.0
    %3679 = vmatprep.subr.mxu0 0.0
    %3680 = vmatpush1.msra.mxu0 0.0
    %3681 = vmatprep.subr.mxu0 0.0
    %3682 = vmatpush1.msra.mxu0 0.0
    %3683 = vmatprep.subr.mxu0 0.0
    %3684 = vmatpush1.msra.mxu0 0.0
    %3685 = vmatprep.subr.mxu0 0.0
    %3686 = vmatpush1.msra.mxu0 0.0
    %3687 = vmatprep.subr.mxu0 0.0
    %3688 = vmatpush1.msra.mxu0 0.0
    %3689 = vmatprep.subr.mxu0 0.0
    %3690 = vmatpush1.msra.mxu0 0.0
    %3691 = vmatprep.subr.mxu0 0.0
    %3692 = vmatpush1.msra.mxu0 0.0
    %3693 = vmatprep.subr.mxu0 0.0
    %3694 = vmatpush1.msra.mxu0 0.0
    %3695 = vmatprep.mubr.f32.mxu0 0.0
    %3696 = vmatmul.mubr.f32.gmra.mrb[0].mxu0 %v3572
    %v3697 = vpop.f32.mrb[0].mxu0
    %v3698 = vadd.f32 %v3568, %v3697
    %v3699 = vpop.f32.mrb[0].mxu0
    %3700 = vmatprep.mubr.f32.mxu0 0.0
    %3701 = vmatmul.mubr.f32.gmra.mrb[0].mxu0 %v3575
    %v3702 = vpop.f32.mrb[0].mxu0
    %v3703 = vadd.f32 %v3568, %v3702
    %v3704 = vpop.f32.mrb[0].mxu0
    %3705 = vmatprep.mubr.f32.mxu0 0.0
    %3706 = vmatmul.mubr.f32.gmra.mrb[0].mxu0 %v3578
    %v3707 = vpop.f32.mrb[0].mxu0
    %v3708 = vadd.f32 %v3568, %v3707
    %v3709 = vpop.f32.mrb[0].mxu0
    %3710 = vmatprep.mubr.f32.mxu0 0.0
    %3711 = vmatmul.mubr.f32.gmra.mrb[0].mxu0 %v3581
    %v3712 = vpop.f32.mrb[0].mxu0
    %v3713 = vadd.f32 %v3568, %v3712
    %v3714 = vpop.f32.mrb[0].mxu0
    %3715 = vmatprep.mubr.f32.mxu0 0.0
    %3716 = vmatmul.mubr.f32.gmra.mrb[0].mxu0 %v3584
    %v3717 = vpop.f32.mrb[0].mxu0
    %v3718 = vadd.f32 %v3568, %v3717
    %v3719 = vpop.f32.mrb[0].mxu0
    %3720 = vmatprep.mubr.f32.mxu0 0.0
    %3721 = vmatmul.mubr.f32.gmra.mrb[0].mxu0 %v3587
    %v3722 = vpop.f32.mrb[0].mxu0
    %v3723 = vadd.f32 %v3568, %v3722
    %v3724 = vpop.f32.mrb[0].mxu0
    %3725 = vmatprep.mubr.f32.mxu0 0.0
    %3726 = vmatmul.mubr.f32.gmra.mrb[0].mxu0 %v3590
    %v3727 = vpop.f32.mrb[0].mxu0
    %v3728 = vadd.f32 %v3568, %v3727
    %v3729 = vpop.f32.mrb[0].mxu0
    %3730 = vmatprep.mubr.f32.mxu0 0.0
    %3731 = vmatmul.mubr.f32.gmra.mrb[0].mxu0 %v3593
    %v3732 = vpop.f32.mrb[0].mxu0
    %v3733 = vadd.f32 %v3568, %v3732
    %v3734 = vpop.f32.mrb[0].mxu0
    %3735 = vmatprep.mubr.f32.mxu0 0.0
    %3736 = vmatmul.mubr.f32.gmra.mrb[0].mxu0 %v3596
    %v3737 = vpop.f32.mrb[0].mxu0
    %v3738 = vadd.f32 %v3568, %v3737
    %v3739 = vpop.f32.mrb[0].mxu0
    %3740 = vmatprep.mubr.f32.mxu0 0.0
    %3741 = vmatmul.mubr.f32.gmra.mrb[0].mxu0 %v3599
    %v3742 = vpop.f32.mrb[0].mxu0
    %v3743 = vadd.f32 %v3568, %v3742
    %v3744 = vpop.f32.mrb[0].mxu0
    %3745 = vmatprep.mubr.f32.mxu0 0.0
    %3746 = vmatmul.mubr.f32.gmra.mrb[0].mxu0 %v3602
    %v3747 = vpop.f32.mrb[0].mxu0
    %v3748 = vadd.f32 %v3568, %v3747
    %v3749 = vpop.f32.mrb[0].mxu0
    %3750 = vmatprep.mubr.f32.mxu0 0.0
    %3751 = vmatmul.mubr.f32.gmra.mrb[0].mxu0 %v3605
    %v3752 = vpop.f32.mrb[0].mxu0
    %v3753 = vadd.f32 %v3568, %v3752
    %v3754 = vpop.f32.mrb[0].mxu0
    %3755 = vmatprep.mubr.f32.mxu0 0.0
    %3756 = vmatmul.mubr.f32.gmra.mrb[0].mxu0 %v3608
    %v3757 = vpop.f32.mrb[0].mxu0
    %v3758 = vadd.f32 %v3568, %v3757
    %v3759 = vpop.f32.mrb[0].mxu0
    %3760 = vmatprep.mubr.f32.mxu0 0.0
    %3761 = vmatmul.mubr.f32.gmra.mrb[0].mxu0 %v3611
    %v3762 = vpop.f32.mrb[0].mxu0
    %v3763 = vadd.f32 %v3568, %v3762
    %v3764 = vpop.f32.mrb[0].mxu0
    %3765 = vmatprep.mubr.f32.mxu0 0.0
    %3766 = vmatmul.mubr.f32.gmra.mrb[0].mxu0 %v3614
    %v3767 = vpop.f32.mrb[0].mxu0
    %v3768 = vadd.f32 %v3568, %v3767
    %v3769 = vpop.f32.mrb[0].mxu0
    %3770 = vmatprep.mubr.f32.mxu0 0.0
    %3771 = vmatmul.mubr.f32.gmra.mrb[0].mxu0 %v3617
    %v3772 = vpop.f32.mrb[0].mxu0
    %v3773 = vadd.f32 %v3568, %v3772
    %v3774 = vpop.f32.mrb[0].mxu0
    %3775 = vmatprep.mubr.f32.mxu0 0.0
    %3776 = vmatmul.mubr.f32.gmra.mrb[0].mxu0 %v3620
    %v3777 = vpop.f32.mrb[0].mxu0
    %v3778 = vadd.f32 %v3568, %v3777
    %v3779 = vpop.f32.mrb[0].mxu0
    %3780 = vmatprep.mubr.f32.mxu0 0.0
    %3781 = vmatmul.mubr.f32.gmra.mrb[0].mxu0 %v3623
    %v3782 = vpop.f32.mrb[0].mxu0
    %v3783 = vadd.f32 %v3568, %v3782
    %v3784 = vpop.f32.mrb[0].mxu0
    %3785 = vmatprep.mubr.f32.mxu0 0.0
    %3786 = vmatmul.mubr.f32.gmra.mrb[0].mxu0 %v3626
    %v3787 = vpop.f32.mrb[0].mxu0
    %v3788 = vadd.f32 %v3568, %v3787
    %v3789 = vpop.f32.mrb[0].mxu0
    %3790 = vmatprep.mubr.f32.mxu0 0.0
    %3791 = vmatmul.mubr.f32.gmra.mrb[0].mxu0 %v3629
    %v3792 = vpop.f32.mrb[0].mxu0
    %v3793 = vadd.f32 %v3568, %v3792
    %v3794 = vpop.f32.mrb[0].mxu0
    %3795 = vdwg.mxu0
    %v3796 = vld [vmem:[#allocation19] sm:$0xff]
    %v3797 = vld [vmem:[#allocation19 + $0x8] sm:$0xff]
    %v3798 = vld [vmem:[#allocation19 + $0x10] sm:$0xf]
    %v3799 = vld [vmem:[#allocation21] sm:$0x1]
    %v3800 = vld [vmem:[#allocation22] sm:$0xff]
    %v3801 = vld [vmem:[#allocation22 + $0x8] sm:$0xff]
    %v3802 = vld [vmem:[#allocation22 + $0x10] sm:$0xf]
    %v3803 = vld [vmem:[#allocation24] sm:$0x1]
    %v3805 = vlaneseq
    %v3806 = vshrl.u32 %v3805, 7
    %v3807 = vsub.s32 0, %v3806
    %v3808 = vrot.slane %v3799, %v3807
    %v3811 = vsel %vm576, %v3798, 0
    %3813 = vmatprep.subr.mxu0 0.0
    %3814 = vmatpush1.msra.mxu0 %v3796
    %3815 = vmatprep.subr.mxu0 0.0
    %3816 = vmatpush1.msra.mxu0 %v3797
    %3817 = vmatprep.subr.mxu0 0.0
    %3818 = vmatpush1.msra.mxu0 %v3811
    %3819 = vmatprep.subr.mxu0 0.0
    %3820 = vmatpush1.msra.mxu0 0.0
    %3821 = vmatprep.subr.mxu0 0.0
    %3822 = vmatpush1.msra.mxu0 0.0
    %3823 = vmatprep.subr.mxu0 0.0
    %3824 = vmatpush1.msra.mxu0 0.0
    %3825 = vmatprep.subr.mxu0 0.0
    %3826 = vmatpush1.msra.mxu0 0.0
    %3827 = vmatprep.subr.mxu0 0.0
    %3828 = vmatpush1.msra.mxu0 0.0
    %3829 = vmatprep.subr.mxu0 0.0
    %3830 = vmatpush1.msra.mxu0 0.0
    %3831 = vmatprep.subr.mxu0 0.0
    %3832 = vmatpush1.msra.mxu0 0.0
    %3833 = vmatprep.subr.mxu0 0.0
    %3834 = vmatpush1.msra.mxu0 0.0
    %3835 = vmatprep.subr.mxu0 0.0
    %3836 = vmatpush1.msra.mxu0 0.0
    %3837 = vmatprep.subr.mxu0 0.0
    %3838 = vmatpush1.msra.mxu0 0.0
    %3839 = vmatprep.subr.mxu0 0.0
    %3840 = vmatpush1.msra.mxu0 0.0
    %3841 = vmatprep.subr.mxu0 0.0
    %3842 = vmatpush1.msra.mxu0 0.0
    %3843 = vmatprep.subr.mxu0 0.0
    %3844 = vmatpush1.msra.mxu0 0.0
    %3845 = vmatprep.subr.mxu0 0.0
    %3846 = vmatpush1.msra.mxu0 0.0
    %3847 = vmatprep.subr.mxu0 0.0
    %3848 = vmatpush1.msra.mxu0 0.0
    %3849 = vmatprep.subr.mxu0 0.0
    %3850 = vmatpush1.msra.mxu0 0.0
    %3851 = vmatprep.subr.mxu0 0.0
    %3852 = vmatpush1.msra.mxu0 0.0
    %3853 = vmatprep.subr.mxu0 0.0
    %3854 = vmatpush1.msra.mxu0 0.0
    %3855 = vmatprep.subr.mxu0 0.0
    %3856 = vmatpush1.msra.mxu0 0.0
    %3857 = vmatprep.subr.mxu0 0.0
    %3858 = vmatpush1.msra.mxu0 0.0
    %3859 = vmatprep.subr.mxu0 0.0
    %3860 = vmatpush1.msra.mxu0 0.0
    %3861 = vmatprep.subr.mxu0 0.0
    %3862 = vmatpush1.msra.mxu0 0.0
    %3863 = vmatprep.subr.mxu0 0.0
    %3864 = vmatpush1.msra.mxu0 0.0
    %3865 = vmatprep.subr.mxu0 0.0
    %3866 = vmatpush1.msra.mxu0 0.0
    %3867 = vmatprep.subr.mxu0 0.0
    %3868 = vmatpush1.msra.mxu0 0.0
    %3869 = vmatprep.subr.mxu0 0.0
    %3870 = vmatpush1.msra.mxu0 0.0
    %3871 = vmatprep.subr.mxu0 0.0
    %3872 = vmatpush1.msra.mxu0 0.0
    %3873 = vmatprep.subr.mxu0 0.0
    %3874 = vmatpush1.msra.mxu0 0.0
    %3875 = vmatprep.subr.mxu0 0.0
    %3876 = vmatpush1.msra.mxu0 0.0
    %3877 = vmatprep.mubr.f32.mxu0 0.0
    %3878 = vmatmul.mubr.f32.gmra.mrb[0].mxu0 %v1454
    %v3879 = vpop.f32.mrb[0].mxu0
    %v3880 = vadd.f32 %v3808, %v3879
    %v3881 = vpop.f32.mrb[0].mxu0
    %3882 = vmatprep.mubr.f32.mxu0 0.0
    %3883 = vmatmul.mubr.f32.gmra.mrb[0].mxu0 %v1454
    %v3884 = vpop.f32.mrb[0].mxu0
    %v3885 = vadd.f32 %v3808, %v3884
    %v3886 = vpop.f32.mrb[0].mxu0
    %3887 = vmatprep.mubr.f32.mxu0 0.0
    %3888 = vmatmul.mubr.f32.gmra.mrb[0].mxu0 %v1454
    %v3889 = vpop.f32.mrb[0].mxu0
    %v3890 = vadd.f32 %v3808, %v3889
    %v3891 = vpop.f32.mrb[0].mxu0
    %3892 = vmatprep.mubr.f32.mxu0 0.0
    %3893 = vmatmul.mubr.f32.gmra.mrb[0].mxu0 %v1454
    %v3894 = vpop.f32.mrb[0].mxu0
    %v3895 = vadd.f32 %v3808, %v3894
    %v3896 = vpop.f32.mrb[0].mxu0
    %3897 = vmatprep.mubr.f32.mxu0 0.0
    %3898 = vmatmul.mubr.f32.gmra.mrb[0].mxu0 %v1454
    %v3899 = vpop.f32.mrb[0].mxu0
    %v3900 = vadd.f32 %v3808, %v3899
    %v3901 = vpop.f32.mrb[0].mxu0
    %3902 = vdwg.mxu0
    %v3903 = vadd.f32 %v3698, %v3880
    %v3904 = vadd.f32 %v3703, %v3885
    %v3905 = vadd.f32 %v3708, %v3890
    %v3906 = vadd.f32 %v3713, %v3895
    %v3907 = vadd.f32 %v3718, %v3900
    %v3908 = vxor.u32 %v3903, 2147483648
    %v3909 = vxor.u32 %v3904, 2147483648
    %v3910 = vxor.u32 %v3905, 2147483648
    %v3911 = vxor.u32 %v3906, 2147483648
    %v3912 = vxor.u32 %v3907, 2147483648
    %v3913 = vmul.f32 %v3908, 1.442695
    %v3914 = vpow.pop %v3913
    %v3915 = vmul.f32 %v3909, 1.442695
    %v3916 = vpow.pop %v3915
    %v3917 = vmul.f32 %v3910, 1.442695
    %v3918 = vpow.pop %v3917
    %v3919 = vmul.f32 %v3911, 1.442695
    %v3920 = vpow.pop %v3919
    %v3921 = vmul.f32 %v3912, 1.442695
    %v3922 = vpow.pop %v3921
    %v3923 = vadd.f32 %v3914, 1.0
    %v3924 = vadd.f32 %v3916, 1.0
    %v3925 = vadd.f32 %v3918, 1.0
    %v3926 = vadd.f32 %v3920, 1.0
    %v3927 = vadd.f32 %v3922, 1.0
    %v3928 = vrcp.pop %v3923
    %v3929 = vmul.f32 1.0, %v3928
    %v3930 = vrcp.pop %v3924
    %v3931 = vmul.f32 1.0, %v3930
    %v3932 = vrcp.pop %v3925
    %v3933 = vmul.f32 1.0, %v3932
    %v3934 = vrcp.pop %v3926
    %v3935 = vmul.f32 1.0, %v3934
    %v3936 = vrcp.pop %v3927
    %v3937 = vmul.f32 1.0, %v3936
    %3943 = vrot.lane.b32.xlu0 %v3880, 88
    %v3944 = vpop.permute.xlu0 %3943
    %3945 = vrot.lane.b32.xlu0 %v3885, 88
    %v3946 = vpop.permute.xlu0 %3945
    %3947 = vrot.lane.b32.xlu0 %v3890, 88
    %v3948 = vpop.permute.xlu0 %3947
    %3949 = vrot.lane.b32.xlu0 %v3895, 88
    %v3950 = vpop.permute.xlu0 %3949
    %3951 = vrot.lane.b32.xlu0 %v3900, 88
    %v3952 = vpop.permute.xlu0 %3951
    %v3958 = vmul.f32 %v3929, %v3944
    %v3959 = vmul.f32 %v3931, %v3946
    %v3960 = vmul.f32 %v3933, %v3948
    %v3961 = vmul.f32 %v3935, %v3950
    %v3962 = vmul.f32 %v3937, %v3952
    %3968 = vrot.lane.b32.xlu0 %v3958, 40
    %v3969 = vpop.permute.xlu0 %3968
    %3970 = vrot.lane.b32.xlu0 %v3959, 40
    %v3971 = vpop.permute.xlu0 %3970
    %3972 = vrot.lane.b32.xlu0 %v3960, 40
    %v3973 = vpop.permute.xlu0 %3972
    %3974 = vrot.lane.b32.xlu0 %v3961, 40
    %v3975 = vpop.permute.xlu0 %3974
    %3976 = vrot.lane.b32.xlu0 %v3962, 40
    %v3977 = vpop.permute.xlu0 %3976
    %v3983 = vadd.f32 %v3698, %v3969
    %v3984 = vadd.f32 %v3703, %v3971
    %v3985 = vadd.f32 %v3708, %v3973
    %v3986 = vadd.f32 %v3713, %v3975
    %v3987 = vadd.f32 %v3718, %v3977
    %v3988 = vtanh.pop %v3983
    %v3989 = vtanh.pop %v3984
    %v3990 = vtanh.pop %v3985
    %v3991 = vtanh.pop %v3986
    %v3992 = vtanh.pop %v3987
    %v3993 = vsub.f32 1.0, %v3929
    %v3994 = vsub.f32 1.0, %v3931
    %v3995 = vsub.f32 1.0, %v3933
    %v3996 = vsub.f32 1.0, %v3935
    %v3997 = vsub.f32 1.0, %v3937
    %4003 = vrot.lane.b32.xlu0 %v3988, 108
    %v4004 = vpop.permute.xlu0 %4003
    %4005 = vrot.lane.b32.xlu0 %v3989, 108
    %v4006 = vpop.permute.xlu0 %4005
    %4007 = vrot.lane.b32.xlu0 %v3990, 108
    %v4008 = vpop.permute.xlu0 %4007
    %4009 = vrot.lane.b32.xlu0 %v3991, 108
    %v4010 = vpop.permute.xlu0 %4009
    %4011 = vrot.lane.b32.xlu0 %v3992, 108
    %v4012 = vpop.permute.xlu0 %4011
    %v4018 = vmul.f32 %v3993, %v4004
    %v4019 = vmul.f32 %v3994, %v4006
    %v4020 = vmul.f32 %v3995, %v4008
    %v4021 = vmul.f32 %v3996, %v4010
    %v4022 = vmul.f32 %v3997, %v4012
    %v4023 = vmul.f32 %v3929, 0.0
    %v4024 = vmul.f32 %v3931, 0.0
    %v4025 = vmul.f32 %v3933, 0.0
    %v4026 = vmul.f32 %v3935, 0.0
    %v4027 = vmul.f32 %v3937, 0.0
    %v4028 = vadd.f32 %v4018, %v4023
    %v4029 = vadd.f32 %v4019, %v4024
    %v4030 = vadd.f32 %v4020, %v4025
    %v4031 = vadd.f32 %v4021, %v4026
    %v4032 = vadd.f32 %v4022, %v4027
    %v4034 = vlaneseq
    %v4035 = vshrl.u32 %v4034, 7
    %v4036 = vsub.s32 0, %v4035
    %v4037 = vrot.slane %v3803, %v4036
    %v4040 = vsel %vm576, %v3802, 0
    %4042 = vmatprep.subr.mxu0 0.0
    %4043 = vmatpush1.msra.mxu0 %v3800
    %4044 = vmatprep.subr.mxu0 0.0
    %4045 = vmatpush1.msra.mxu0 %v3801
    %4046 = vmatprep.subr.mxu0 0.0
    %4047 = vmatpush1.msra.mxu0 %v4040
    %4048 = vmatprep.subr.mxu0 0.0
    %4049 = vmatpush1.msra.mxu0 0.0
    %4050 = vmatprep.subr.mxu0 0.0
    %4051 = vmatpush1.msra.mxu0 0.0
    %4052 = vmatprep.subr.mxu0 0.0
    %4053 = vmatpush1.msra.mxu0 0.0
    %4054 = vmatprep.subr.mxu0 0.0
    %4055 = vmatpush1.msra.mxu0 0.0
    %4056 = vmatprep.subr.mxu0 0.0
    %4057 = vmatpush1.msra.mxu0 0.0
    %4058 = vmatprep.subr.mxu0 0.0
    %4059 = vmatpush1.msra.mxu0 0.0
    %4060 = vmatprep.subr.mxu0 0.0
    %4061 = vmatpush1.msra.mxu0 0.0
    %4062 = vmatprep.subr.mxu0 0.0
    %4063 = vmatpush1.msra.mxu0 0.0
    %4064 = vmatprep.subr.mxu0 0.0
    %4065 = vmatpush1.msra.mxu0 0.0
    %4066 = vmatprep.subr.mxu0 0.0
    %4067 = vmatpush1.msra.mxu0 0.0
    %4068 = vmatprep.subr.mxu0 0.0
    %4069 = vmatpush1.msra.mxu0 0.0
    %4070 = vmatprep.subr.mxu0 0.0
    %4071 = vmatpush1.msra.mxu0 0.0
    %4072 = vmatprep.subr.mxu0 0.0
    %4073 = vmatpush1.msra.mxu0 0.0
    %4074 = vmatprep.subr.mxu0 0.0
    %4075 = vmatpush1.msra.mxu0 0.0
    %4076 = vmatprep.subr.mxu0 0.0
    %4077 = vmatpush1.msra.mxu0 0.0
    %4078 = vmatprep.subr.mxu0 0.0
    %4079 = vmatpush1.msra.mxu0 0.0
    %4080 = vmatprep.subr.mxu0 0.0
    %4081 = vmatpush1.msra.mxu0 0.0
    %4082 = vmatprep.subr.mxu0 0.0
    %4083 = vmatpush1.msra.mxu0 0.0
    %4084 = vmatprep.subr.mxu0 0.0
    %4085 = vmatpush1.msra.mxu0 0.0
    %4086 = vmatprep.subr.mxu0 0.0
    %4087 = vmatpush1.msra.mxu0 0.0
    %4088 = vmatprep.subr.mxu0 0.0
    %4089 = vmatpush1.msra.mxu0 0.0
    %4090 = vmatprep.subr.mxu0 0.0
    %4091 = vmatpush1.msra.mxu0 0.0
    %4092 = vmatprep.subr.mxu0 0.0
    %4093 = vmatpush1.msra.mxu0 0.0
    %4094 = vmatprep.subr.mxu0 0.0
    %4095 = vmatpush1.msra.mxu0 0.0
    %4096 = vmatprep.subr.mxu0 0.0
    %4097 = vmatpush1.msra.mxu0 0.0
    %4098 = vmatprep.subr.mxu0 0.0
    %4099 = vmatpush1.msra.mxu0 0.0
    %4100 = vmatprep.subr.mxu0 0.0
    %4101 = vmatpush1.msra.mxu0 0.0
    %4102 = vmatprep.subr.mxu0 0.0
    %4103 = vmatpush1.msra.mxu0 0.0
    %4104 = vmatprep.subr.mxu0 0.0
    %4105 = vmatpush1.msra.mxu0 0.0
    %4106 = vmatprep.mubr.f32.mxu0 0.0
    %4107 = vmatmul.mubr.f32.gmra.mrb[0].mxu0 %v1454
    %v4108 = vpop.f32.mrb[0].mxu0
    %v4109 = vadd.f32 %v4037, %v4108
    %v4110 = vpop.f32.mrb[0].mxu0
    %4111 = vmatprep.mubr.f32.mxu0 0.0
    %4112 = vmatmul.mubr.f32.gmra.mrb[0].mxu0 %v1454
    %v4113 = vpop.f32.mrb[0].mxu0
    %v4114 = vadd.f32 %v4037, %v4113
    %v4115 = vpop.f32.mrb[0].mxu0
    %4116 = vmatprep.mubr.f32.mxu0 0.0
    %4117 = vmatmul.mubr.f32.gmra.mrb[0].mxu0 %v1454
    %v4118 = vpop.f32.mrb[0].mxu0
    %v4119 = vadd.f32 %v4037, %v4118
    %v4120 = vpop.f32.mrb[0].mxu0
    %4121 = vmatprep.mubr.f32.mxu0 0.0
    %4122 = vmatmul.mubr.f32.gmra.mrb[0].mxu0 %v1454
    %v4123 = vpop.f32.mrb[0].mxu0
    %v4124 = vadd.f32 %v4037, %v4123
    %v4125 = vpop.f32.mrb[0].mxu0
    %4126 = vmatprep.mubr.f32.mxu0 0.0
    %4127 = vmatmul.mubr.f32.gmra.mrb[0].mxu0 %v1454
    %v4128 = vpop.f32.mrb[0].mxu0
    %v4129 = vadd.f32 %v4037, %v4128
    %v4130 = vpop.f32.mrb[0].mxu0
    %4131 = vdwg.mxu0
    %4137 = vrot.lane.b32.xlu0 %v4109, 60
    %v4138 = vpop.permute.xlu0 %4137
    %4139 = vrot.lane.b32.xlu0 %v4114, 60
    %v4140 = vpop.permute.xlu0 %4139
    %4141 = vrot.lane.b32.xlu0 %v4119, 60
    %v4142 = vpop.permute.xlu0 %4141
    %4143 = vrot.lane.b32.xlu0 %v4124, 60
    %v4144 = vpop.permute.xlu0 %4143
    %4145 = vrot.lane.b32.xlu0 %v4129, 60
    %v4146 = vpop.permute.xlu0 %4145
    %v4152 = vadd.f32 %v3773, %v4138
    %v4153 = vadd.f32 %v3778, %v4140
    %v4154 = vadd.f32 %v3783, %v4142
    %v4155 = vadd.f32 %v3788, %v4144
    %v4156 = vadd.f32 %v3793, %v4146
    %v4157 = vxor.u32 %v4152, 2147483648
    %v4158 = vxor.u32 %v4153, 2147483648
    %v4159 = vxor.u32 %v4154, 2147483648
    %v4160 = vxor.u32 %v4155, 2147483648
    %v4161 = vxor.u32 %v4156, 2147483648
    %v4162 = vmul.f32 %v4157, 1.442695
    %v4163 = vpow.pop %v4162
    %v4164 = vmul.f32 %v4158, 1.442695
    %v4165 = vpow.pop %v4164
    %v4166 = vmul.f32 %v4159, 1.442695
    %v4167 = vpow.pop %v4166
    %v4168 = vmul.f32 %v4160, 1.442695
    %v4169 = vpow.pop %v4168
    %v4170 = vmul.f32 %v4161, 1.442695
    %v4171 = vpow.pop %v4170
    %v4172 = vadd.f32 %v4163, 1.0
    %v4173 = vadd.f32 %v4165, 1.0
    %v4174 = vadd.f32 %v4167, 1.0
    %v4175 = vadd.f32 %v4169, 1.0
    %v4176 = vadd.f32 %v4171, 1.0
    %v4177 = vrcp.pop %v4172
    %v4178 = vmul.f32 1.0, %v4177
    %v4179 = vrcp.pop %v4173
    %v4180 = vmul.f32 1.0, %v4179
    %v4181 = vrcp.pop %v4174
    %v4182 = vmul.f32 1.0, %v4181
    %v4183 = vrcp.pop %v4175
    %v4184 = vmul.f32 1.0, %v4183
    %v4185 = vrcp.pop %v4176
    %v4186 = vmul.f32 1.0, %v4185
    %4187 = vrot.lane.b32.xlu0 %v4109, 20
    %v4188 = vpop.permute.xlu0 %4187
    %4189 = vrot.lane.b32.xlu0 %v4114, 20
    %v4190 = vpop.permute.xlu0 %4189
    %4191 = vrot.lane.b32.xlu0 %v4119, 20
    %v4192 = vpop.permute.xlu0 %4191
    %4193 = vrot.lane.b32.xlu0 %v4124, 20
    %v4194 = vpop.permute.xlu0 %4193
    %4195 = vrot.lane.b32.xlu0 %v4129, 20
    %v4196 = vpop.permute.xlu0 %4195
    %v4202 = vmul.f32 %v4178, %v4188
    %v4203 = vmul.f32 %v4180, %v4190
    %v4204 = vmul.f32 %v4182, %v4192
    %v4205 = vmul.f32 %v4184, %v4194
    %v4206 = vmul.f32 %v4186, %v4196
    %4212 = vrot.lane.b32.xlu0 %v4202, 40
    %v4213 = vpop.permute.xlu0 %4212
    %4214 = vrot.lane.b32.xlu0 %v4203, 40
    %v4215 = vpop.permute.xlu0 %4214
    %4216 = vrot.lane.b32.xlu0 %v4204, 40
    %v4217 = vpop.permute.xlu0 %4216
    %4218 = vrot.lane.b32.xlu0 %v4205, 40
    %v4219 = vpop.permute.xlu0 %4218
    %4220 = vrot.lane.b32.xlu0 %v4206, 40
    %v4221 = vpop.permute.xlu0 %4220
    %v4227 = vadd.f32 %v3773, %v4213
    %v4228 = vadd.f32 %v3778, %v4215
    %v4229 = vadd.f32 %v3783, %v4217
    %v4230 = vadd.f32 %v3788, %v4219
    %v4231 = vadd.f32 %v3793, %v4221
    %v4232 = vtanh.pop %v4227
    %v4233 = vtanh.pop %v4228
    %v4234 = vtanh.pop %v4229
    %v4235 = vtanh.pop %v4230
    %v4236 = vtanh.pop %v4231
    %v4237 = vsub.f32 1.0, %v4178
    %v4238 = vsub.f32 1.0, %v4180
    %v4239 = vsub.f32 1.0, %v4182
    %v4240 = vsub.f32 1.0, %v4184
    %v4241 = vsub.f32 1.0, %v4186
    %4247 = vrot.lane.b32.xlu0 %v4232, 108
    %v4248 = vpop.permute.xlu0 %4247
    %4249 = vrot.lane.b32.xlu0 %v4233, 108
    %v4250 = vpop.permute.xlu0 %4249
    %4251 = vrot.lane.b32.xlu0 %v4234, 108
    %v4252 = vpop.permute.xlu0 %4251
    %4253 = vrot.lane.b32.xlu0 %v4235, 108
    %v4254 = vpop.permute.xlu0 %4253
    %4255 = vrot.lane.b32.xlu0 %v4236, 108
    %v4256 = vpop.permute.xlu0 %4255
    %v4262 = vmul.f32 %v4237, %v4248
    %v4263 = vmul.f32 %v4238, %v4250
    %v4264 = vmul.f32 %v4239, %v4252
    %v4265 = vmul.f32 %v4240, %v4254
    %v4266 = vmul.f32 %v4241, %v4256
    %v4267 = vmul.f32 %v4178, 0.0
    %v4268 = vmul.f32 %v4180, 0.0
    %v4269 = vmul.f32 %v4182, 0.0
    %v4270 = vmul.f32 %v4184, 0.0
    %v4271 = vmul.f32 %v4186, 0.0
    %v4272 = vadd.f32 %v4262, %v4267
    %v4273 = vadd.f32 %v4263, %v4268
    %v4274 = vadd.f32 %v4264, %v4269
    %v4275 = vadd.f32 %v4265, %v4270
    %v4276 = vadd.f32 %v4266, %v4271
    %4282 = vrot.lane.b32.xlu0 %v4028, 108
    %v4283 = vpop.permute.xlu0 %4282
    %4284 = vrot.lane.b32.xlu0 %v4029, 108
    %v4285 = vpop.permute.xlu0 %4284
    %4286 = vrot.lane.b32.xlu0 %v4030, 108
    %v4287 = vpop.permute.xlu0 %4286
    %4288 = vrot.lane.b32.xlu0 %v4031, 108
    %v4289 = vpop.permute.xlu0 %4288
    %4290 = vrot.lane.b32.xlu0 %v4032, 108
    %v4291 = vpop.permute.xlu0 %4290
    %v4292 = vsel %vm1452, %v4283, 0
    %v4294 = vsel %vm1452, %v4285, 0
    %v4296 = vsel %vm1452, %v4287, 0
    %v4298 = vsel %vm1452, %v4289, 0
    %v4300 = vsel %vm1452, %v4291, 0
    %4302 = vmatprep.subr.mxu0 0.0
    %4303 = vmatpush1.msra.mxu0 %v3796
    %4304 = vmatprep.subr.mxu0 0.0
    %4305 = vmatpush1.msra.mxu0 %v3797
    %4306 = vmatprep.subr.mxu0 0.0
    %4307 = vmatpush1.msra.mxu0 %v3811
    %4308 = vmatprep.subr.mxu0 0.0
    %4309 = vmatpush1.msra.mxu0 0.0
    %4310 = vmatprep.subr.mxu0 0.0
    %4311 = vmatpush1.msra.mxu0 0.0
    %4312 = vmatprep.subr.mxu0 0.0
    %4313 = vmatpush1.msra.mxu0 0.0
    %4314 = vmatprep.subr.mxu0 0.0
    %4315 = vmatpush1.msra.mxu0 0.0
    %4316 = vmatprep.subr.mxu0 0.0
    %4317 = vmatpush1.msra.mxu0 0.0
    %4318 = vmatprep.subr.mxu0 0.0
    %4319 = vmatpush1.msra.mxu0 0.0
    %4320 = vmatprep.subr.mxu0 0.0
    %4321 = vmatpush1.msra.mxu0 0.0
    %4322 = vmatprep.subr.mxu0 0.0
    %4323 = vmatpush1.msra.mxu0 0.0
    %4324 = vmatprep.subr.mxu0 0.0
    %4325 = vmatpush1.msra.mxu0 0.0
    %4326 = vmatprep.subr.mxu0 0.0
    %4327 = vmatpush1.msra.mxu0 0.0
    %4328 = vmatprep.subr.mxu0 0.0
    %4329 = vmatpush1.msra.mxu0 0.0
    %4330 = vmatprep.subr.mxu0 0.0
    %4331 = vmatpush1.msra.mxu0 0.0
    %4332 = vmatprep.subr.mxu0 0.0
    %4333 = vmatpush1.msra.mxu0 0.0
    %4334 = vmatprep.subr.mxu0 0.0
    %4335 = vmatpush1.msra.mxu0 0.0
    %4336 = vmatprep.subr.mxu0 0.0
    %4337 = vmatpush1.msra.mxu0 0.0
    %4338 = vmatprep.subr.mxu0 0.0
    %4339 = vmatpush1.msra.mxu0 0.0
    %4340 = vmatprep.subr.mxu0 0.0
    %4341 = vmatpush1.msra.mxu0 0.0
    %4342 = vmatprep.subr.mxu0 0.0
    %4343 = vmatpush1.msra.mxu0 0.0
    %4344 = vmatprep.subr.mxu0 0.0
    %4345 = vmatpush1.msra.mxu0 0.0
    %4346 = vmatprep.subr.mxu0 0.0
    %4347 = vmatpush1.msra.mxu0 0.0
    %4348 = vmatprep.subr.mxu0 0.0
    %4349 = vmatpush1.msra.mxu0 0.0
    %4350 = vmatprep.subr.mxu0 0.0
    %4351 = vmatpush1.msra.mxu0 0.0
    %4352 = vmatprep.subr.mxu0 0.0
    %4353 = vmatpush1.msra.mxu0 0.0
    %4354 = vmatprep.subr.mxu0 0.0
    %4355 = vmatpush1.msra.mxu0 0.0
    %4356 = vmatprep.subr.mxu0 0.0
    %4357 = vmatpush1.msra.mxu0 0.0
    %4358 = vmatprep.subr.mxu0 0.0
    %4359 = vmatpush1.msra.mxu0 0.0
    %4360 = vmatprep.subr.mxu0 0.0
    %4361 = vmatpush1.msra.mxu0 0.0
    %4362 = vmatprep.subr.mxu0 0.0
    %4363 = vmatpush1.msra.mxu0 0.0
    %4364 = vmatprep.subr.mxu0 0.0
    %4365 = vmatpush1.msra.mxu0 0.0
    %4366 = vmatprep.mubr.f32.mxu0 0.0
    %4367 = vmatmul.mubr.f32.gmra.mrb[0].mxu0 %v4292
    %v4368 = vpop.f32.mrb[0].mxu0
    %v4369 = vadd.f32 %v3808, %v4368
    %v4370 = vpop.f32.mrb[0].mxu0
    %4371 = vmatprep.mubr.f32.mxu0 0.0
    %4372 = vmatmul.mubr.f32.gmra.mrb[0].mxu0 %v4294
    %v4373 = vpop.f32.mrb[0].mxu0
    %v4374 = vadd.f32 %v3808, %v4373
    %v4375 = vpop.f32.mrb[0].mxu0
    %4376 = vmatprep.mubr.f32.mxu0 0.0
    %4377 = vmatmul.mubr.f32.gmra.mrb[0].mxu0 %v4296
    %v4378 = vpop.f32.mrb[0].mxu0
    %v4379 = vadd.f32 %v3808, %v4378
    %v4380 = vpop.f32.mrb[0].mxu0
    %4381 = vmatprep.mubr.f32.mxu0 0.0
    %4382 = vmatmul.mubr.f32.gmra.mrb[0].mxu0 %v4298
    %v4383 = vpop.f32.mrb[0].mxu0
    %v4384 = vadd.f32 %v3808, %v4383
    %v4385 = vpop.f32.mrb[0].mxu0
    %4386 = vmatprep.mubr.f32.mxu0 0.0
    %4387 = vmatmul.mubr.f32.gmra.mrb[0].mxu0 %v4300
    %v4388 = vpop.f32.mrb[0].mxu0
    %v4389 = vadd.f32 %v3808, %v4388
    %v4390 = vpop.f32.mrb[0].mxu0
    %4391 = vdwg.mxu0
    %v4392 = vadd.f32 %v3723, %v4369
    %v4393 = vadd.f32 %v3728, %v4374
    %v4394 = vadd.f32 %v3733, %v4379
    %v4395 = vadd.f32 %v3738, %v4384
    %v4396 = vadd.f32 %v3743, %v4389
    %v4397 = vxor.u32 %v4392, 2147483648
    %v4398 = vxor.u32 %v4393, 2147483648
    %v4399 = vxor.u32 %v4394, 2147483648
    %v4400 = vxor.u32 %v4395, 2147483648
    %v4401 = vxor.u32 %v4396, 2147483648
    %v4402 = vmul.f32 %v4397, 1.442695
    %v4403 = vpow.pop %v4402
    %v4404 = vmul.f32 %v4398, 1.442695
    %v4405 = vpow.pop %v4404
    %v4406 = vmul.f32 %v4399, 1.442695
    %v4407 = vpow.pop %v4406
    %v4408 = vmul.f32 %v4400, 1.442695
    %v4409 = vpow.pop %v4408
    %v4410 = vmul.f32 %v4401, 1.442695
    %v4411 = vpow.pop %v4410
    %v4412 = vadd.f32 %v4403, 1.0
    %v4413 = vadd.f32 %v4405, 1.0
    %v4414 = vadd.f32 %v4407, 1.0
    %v4415 = vadd.f32 %v4409, 1.0
    %v4416 = vadd.f32 %v4411, 1.0
    %v4417 = vrcp.pop %v4412
    %v4418 = vmul.f32 1.0, %v4417
    %v4419 = vrcp.pop %v4413
    %v4420 = vmul.f32 1.0, %v4419
    %v4421 = vrcp.pop %v4414
    %v4422 = vmul.f32 1.0, %v4421
    %v4423 = vrcp.pop %v4415
    %v4424 = vmul.f32 1.0, %v4423
    %v4425 = vrcp.pop %v4416
    %v4426 = vmul.f32 1.0, %v4425
    %4432 = vrot.lane.b32.xlu0 %v4369, 88
    %v4433 = vpop.permute.xlu0 %4432
    %4434 = vrot.lane.b32.xlu0 %v4374, 88
    %v4435 = vpop.permute.xlu0 %4434
    %4436 = vrot.lane.b32.xlu0 %v4379, 88
    %v4437 = vpop.permute.xlu0 %4436
    %4438 = vrot.lane.b32.xlu0 %v4384, 88
    %v4439 = vpop.permute.xlu0 %4438
    %4440 = vrot.lane.b32.xlu0 %v4389, 88
    %v4441 = vpop.permute.xlu0 %4440
    %v4447 = vmul.f32 %v4418, %v4433
    %v4448 = vmul.f32 %v4420, %v4435
    %v4449 = vmul.f32 %v4422, %v4437
    %v4450 = vmul.f32 %v4424, %v4439
    %v4451 = vmul.f32 %v4426, %v4441
    %4457 = vrot.lane.b32.xlu0 %v4447, 40
    %v4458 = vpop.permute.xlu0 %4457
    %4459 = vrot.lane.b32.xlu0 %v4448, 40
    %v4460 = vpop.permute.xlu0 %4459
    %4461 = vrot.lane.b32.xlu0 %v4449, 40
    %v4462 = vpop.permute.xlu0 %4461
    %4463 = vrot.lane.b32.xlu0 %v4450, 40
    %v4464 = vpop.permute.xlu0 %4463
    %4465 = vrot.lane.b32.xlu0 %v4451, 40
    %v4466 = vpop.permute.xlu0 %4465
    %v4472 = vadd.f32 %v3723, %v4458
    %v4473 = vadd.f32 %v3728, %v4460
    %v4474 = vadd.f32 %v3733, %v4462
    %v4475 = vadd.f32 %v3738, %v4464
    %v4476 = vadd.f32 %v3743, %v4466
    %v4477 = vtanh.pop %v4472
    %v4478 = vtanh.pop %v4473
    %v4479 = vtanh.pop %v4474
    %v4480 = vtanh.pop %v4475
    %v4481 = vtanh.pop %v4476
    %v4482 = vsub.f32 1.0, %v4418
    %v4483 = vsub.f32 1.0, %v4420
    %v4484 = vsub.f32 1.0, %v4422
    %v4485 = vsub.f32 1.0, %v4424
    %v4486 = vsub.f32 1.0, %v4426
    %4492 = vrot.lane.b32.xlu0 %v4477, 108
    %v4493 = vpop.permute.xlu0 %4492
    %4494 = vrot.lane.b32.xlu0 %v4478, 108
    %v4495 = vpop.permute.xlu0 %4494
    %4496 = vrot.lane.b32.xlu0 %v4479, 108
    %v4497 = vpop.permute.xlu0 %4496
    %4498 = vrot.lane.b32.xlu0 %v4480, 108
    %v4499 = vpop.permute.xlu0 %4498
    %4500 = vrot.lane.b32.xlu0 %v4481, 108
    %v4501 = vpop.permute.xlu0 %4500
    %v4507 = vmul.f32 %v4482, %v4493
    %v4508 = vmul.f32 %v4483, %v4495
    %v4509 = vmul.f32 %v4484, %v4497
    %v4510 = vmul.f32 %v4485, %v4499
    %v4511 = vmul.f32 %v4486, %v4501
    %v4512 = vmul.f32 %v4418, %v4028
    %v4513 = vmul.f32 %v4420, %v4029
    %v4514 = vmul.f32 %v4422, %v4030
    %v4515 = vmul.f32 %v4424, %v4031
    %v4516 = vmul.f32 %v4426, %v4032
    %v4517 = vadd.f32 %v4507, %v4512
    %v4518 = vadd.f32 %v4508, %v4513
    %v4519 = vadd.f32 %v4509, %v4514
    %v4520 = vadd.f32 %v4510, %v4515
    %v4521 = vadd.f32 %v4511, %v4516
    %4527 = vrot.lane.b32.xlu0 %v4272, 48
    %v4528 = vpop.permute.xlu0 %4527
    %4529 = vrot.lane.b32.xlu0 %v4273, 48
    %v4530 = vpop.permute.xlu0 %4529
    %4531 = vrot.lane.b32.xlu0 %v4274, 48
    %v4532 = vpop.permute.xlu0 %4531
    %4533 = vrot.lane.b32.xlu0 %v4275, 48
    %v4534 = vpop.permute.xlu0 %4533
    %4535 = vrot.lane.b32.xlu0 %v4276, 48
    %v4536 = vpop.permute.xlu0 %4535
    %v4537 = vsel %vm1452, %v4528, 0
    %v4539 = vsel %vm1452, %v4530, 0
    %v4541 = vsel %vm1452, %v4532, 0
    %v4543 = vsel %vm1452, %v4534, 0
    %v4545 = vsel %vm1452, %v4536, 0
    %4547 = vmatprep.subr.mxu0 0.0
    %4548 = vmatpush1.msra.mxu0 %v3800
    %4549 = vmatprep.subr.mxu0 0.0
    %4550 = vmatpush1.msra.mxu0 %v3801
    %4551 = vmatprep.subr.mxu0 0.0
    %4552 = vmatpush1.msra.mxu0 %v4040
    %4553 = vmatprep.subr.mxu0 0.0
    %4554 = vmatpush1.msra.mxu0 0.0
    %4555 = vmatprep.subr.mxu0 0.0
    %4556 = vmatpush1.msra.mxu0 0.0
    %4557 = vmatprep.subr.mxu0 0.0
    %4558 = vmatpush1.msra.mxu0 0.0
    %4559 = vmatprep.subr.mxu0 0.0
    %4560 = vmatpush1.msra.mxu0 0.0
    %4561 = vmatprep.subr.mxu0 0.0
    %4562 = vmatpush1.msra.mxu0 0.0
    %4563 = vmatprep.subr.mxu0 0.0
    %4564 = vmatpush1.msra.mxu0 0.0
    %4565 = vmatprep.subr.mxu0 0.0
    %4566 = vmatpush1.msra.mxu0 0.0
    %4567 = vmatprep.subr.mxu0 0.0
    %4568 = vmatpush1.msra.mxu0 0.0
    %4569 = vmatprep.subr.mxu0 0.0
    %4570 = vmatpush1.msra.mxu0 0.0
    %4571 = vmatprep.subr.mxu0 0.0
    %4572 = vmatpush1.msra.mxu0 0.0
    %4573 = vmatprep.subr.mxu0 0.0
    %4574 = vmatpush1.msra.mxu0 0.0
    %4575 = vmatprep.subr.mxu0 0.0
    %4576 = vmatpush1.msra.mxu0 0.0
    %4577 = vmatprep.subr.mxu0 0.0
    %4578 = vmatpush1.msra.mxu0 0.0
    %4579 = vmatprep.subr.mxu0 0.0
    %4580 = vmatpush1.msra.mxu0 0.0
    %4581 = vmatprep.subr.mxu0 0.0
    %4582 = vmatpush1.msra.mxu0 0.0
    %4583 = vmatprep.subr.mxu0 0.0
    %4584 = vmatpush1.msra.mxu0 0.0
    %4585 = vmatprep.subr.mxu0 0.0
    %4586 = vmatpush1.msra.mxu0 0.0
    %4587 = vmatprep.subr.mxu0 0.0
    %4588 = vmatpush1.msra.mxu0 0.0
    %4589 = vmatprep.subr.mxu0 0.0
    %4590 = vmatpush1.msra.mxu0 0.0
    %4591 = vmatprep.subr.mxu0 0.0
    %4592 = vmatpush1.msra.mxu0 0.0
    %4593 = vmatprep.subr.mxu0 0.0
    %4594 = vmatpush1.msra.mxu0 0.0
    %4595 = vmatprep.subr.mxu0 0.0
    %4596 = vmatpush1.msra.mxu0 0.0
    %4597 = vmatprep.subr.mxu0 0.0
    %4598 = vmatpush1.msra.mxu0 0.0
    %4599 = vmatprep.subr.mxu0 0.0
    %4600 = vmatpush1.msra.mxu0 0.0
    %4601 = vmatprep.subr.mxu0 0.0
    %4602 = vmatpush1.msra.mxu0 0.0
    %4603 = vmatprep.subr.mxu0 0.0
    %4604 = vmatpush1.msra.mxu0 0.0
    %4605 = vmatprep.subr.mxu0 0.0
    %4606 = vmatpush1.msra.mxu0 0.0
    %4607 = vmatprep.subr.mxu0 0.0
    %4608 = vmatpush1.msra.mxu0 0.0
    %4609 = vmatprep.subr.mxu0 0.0
    %4610 = vmatpush1.msra.mxu0 0.0
    %4611 = vmatprep.mubr.f32.mxu0 0.0
    %4612 = vmatmul.mubr.f32.gmra.mrb[0].mxu0 %v4537
    %v4613 = vpop.f32.mrb[0].mxu0
    %v4614 = vadd.f32 %v4037, %v4613
    %v4615 = vpop.f32.mrb[0].mxu0
    %4616 = vmatprep.mubr.f32.mxu0 0.0
    %4617 = vmatmul.mubr.f32.gmra.mrb[0].mxu0 %v4539
    %v4618 = vpop.f32.mrb[0].mxu0
    %v4619 = vadd.f32 %v4037, %v4618
    %v4620 = vpop.f32.mrb[0].mxu0
    %4621 = vmatprep.mubr.f32.mxu0 0.0
    %4622 = vmatmul.mubr.f32.gmra.mrb[0].mxu0 %v4541
    %v4623 = vpop.f32.mrb[0].mxu0
    %v4624 = vadd.f32 %v4037, %v4623
    %v4625 = vpop.f32.mrb[0].mxu0
    %4626 = vmatprep.mubr.f32.mxu0 0.0
    %4627 = vmatmul.mubr.f32.gmra.mrb[0].mxu0 %v4543
    %v4628 = vpop.f32.mrb[0].mxu0
    %v4629 = vadd.f32 %v4037, %v4628
    %v4630 = vpop.f32.mrb[0].mxu0
    %4631 = vmatprep.mubr.f32.mxu0 0.0
    %4632 = vmatmul.mubr.f32.gmra.mrb[0].mxu0 %v4545
    %v4633 = vpop.f32.mrb[0].mxu0
    %v4634 = vadd.f32 %v4037, %v4633
    %v4635 = vpop.f32.mrb[0].mxu0
    %4636 = vdwg.mxu0
    %4642 = vrot.lane.b32.xlu0 %v4614, 60
    %v4643 = vpop.permute.xlu0 %4642
    %4644 = vrot.lane.b32.xlu0 %v4619, 60
    %v4645 = vpop.permute.xlu0 %4644
    %4646 = vrot.lane.b32.xlu0 %v4624, 60
    %v4647 = vpop.permute.xlu0 %4646
    %4648 = vrot.lane.b32.xlu0 %v4629, 60
    %v4649 = vpop.permute.xlu0 %4648
    %4650 = vrot.lane.b32.xlu0 %v4634, 60
    %v4651 = vpop.permute.xlu0 %4650
    %v4657 = vadd.f32 %v3748, %v4643
    %v4658 = vadd.f32 %v3753, %v4645
    %v4659 = vadd.f32 %v3758, %v4647
    %v4660 = vadd.f32 %v3763, %v4649
    %v4661 = vadd.f32 %v3768, %v4651
    %v4662 = vxor.u32 %v4657, 2147483648
    %v4663 = vxor.u32 %v4658, 2147483648
    %v4664 = vxor.u32 %v4659, 2147483648
    %v4665 = vxor.u32 %v4660, 2147483648
    %v4666 = vxor.u32 %v4661, 2147483648
    %v4667 = vmul.f32 %v4662, 1.442695
    %v4668 = vpow.pop %v4667
    %v4669 = vmul.f32 %v4663, 1.442695
    %v4670 = vpow.pop %v4669
    %v4671 = vmul.f32 %v4664, 1.442695
    %v4672 = vpow.pop %v4671
    %v4673 = vmul.f32 %v4665, 1.442695
    %v4674 = vpow.pop %v4673
    %v4675 = vmul.f32 %v4666, 1.442695
    %v4676 = vpow.pop %v4675
    %v4677 = vadd.f32 %v4668, 1.0
    %v4678 = vadd.f32 %v4670, 1.0
    %v4679 = vadd.f32 %v4672, 1.0
    %v4680 = vadd.f32 %v4674, 1.0
    %v4681 = vadd.f32 %v4676, 1.0
    %v4682 = vrcp.pop %v4677
    %v4683 = vmul.f32 1.0, %v4682
    %v4684 = vrcp.pop %v4678
    %v4685 = vmul.f32 1.0, %v4684
    %v4686 = vrcp.pop %v4679
    %v4687 = vmul.f32 1.0, %v4686
    %v4688 = vrcp.pop %v4680
    %v4689 = vmul.f32 1.0, %v4688
    %v4690 = vrcp.pop %v4681
    %v4691 = vmul.f32 1.0, %v4690
    %4692 = vrot.lane.b32.xlu0 %v4614, 20
    %v4693 = vpop.permute.xlu0 %4692
    %4694 = vrot.lane.b32.xlu0 %v4619, 20
    %v4695 = vpop.permute.xlu0 %4694
    %4696 = vrot.lane.b32.xlu0 %v4624, 20
    %v4697 = vpop.permute.xlu0 %4696
    %4698 = vrot.lane.b32.xlu0 %v4629, 20
    %v4699 = vpop.permute.xlu0 %4698
    %4700 = vrot.lane.b32.xlu0 %v4634, 20
    %v4701 = vpop.permute.xlu0 %4700
    %v4707 = vmul.f32 %v4683, %v4693
    %v4708 = vmul.f32 %v4685, %v4695
    %v4709 = vmul.f32 %v4687, %v4697
    %v4710 = vmul.f32 %v4689, %v4699
    %v4711 = vmul.f32 %v4691, %v4701
    %4717 = vrot.lane.b32.xlu0 %v4707, 40
    %v4718 = vpop.permute.xlu0 %4717
    %4719 = vrot.lane.b32.xlu0 %v4708, 40
    %v4720 = vpop.permute.xlu0 %4719
    %4721 = vrot.lane.b32.xlu0 %v4709, 40
    %v4722 = vpop.permute.xlu0 %4721
    %4723 = vrot.lane.b32.xlu0 %v4710, 40
    %v4724 = vpop.permute.xlu0 %4723
    %4725 = vrot.lane.b32.xlu0 %v4711, 40
    %v4726 = vpop.permute.xlu0 %4725
    %v4732 = vadd.f32 %v3748, %v4718
    %v4733 = vadd.f32 %v3753, %v4720
    %v4734 = vadd.f32 %v3758, %v4722
    %v4735 = vadd.f32 %v3763, %v4724
    %v4736 = vadd.f32 %v3768, %v4726
    %v4737 = vtanh.pop %v4732
    %v4738 = vtanh.pop %v4733
    %v4739 = vtanh.pop %v4734
    %v4740 = vtanh.pop %v4735
    %v4741 = vtanh.pop %v4736
    %v4742 = vsub.f32 1.0, %v4683
    %v4743 = vsub.f32 1.0, %v4685
    %v4744 = vsub.f32 1.0, %v4687
    %v4745 = vsub.f32 1.0, %v4689
    %v4746 = vsub.f32 1.0, %v4691
    %4752 = vrot.lane.b32.xlu0 %v4737, 108
    %v4753 = vpop.permute.xlu0 %4752
    %4754 = vrot.lane.b32.xlu0 %v4738, 108
    %v4755 = vpop.permute.xlu0 %4754
    %4756 = vrot.lane.b32.xlu0 %v4739, 108
    %v4757 = vpop.permute.xlu0 %4756
    %4758 = vrot.lane.b32.xlu0 %v4740, 108
    %v4759 = vpop.permute.xlu0 %4758
    %4760 = vrot.lane.b32.xlu0 %v4741, 108
    %v4761 = vpop.permute.xlu0 %4760
    %v4767 = vmul.f32 %v4742, %v4753
    %v4768 = vmul.f32 %v4743, %v4755
    %v4769 = vmul.f32 %v4744, %v4757
    %v4770 = vmul.f32 %v4745, %v4759
    %v4771 = vmul.f32 %v4746, %v4761
    %v4772 = vmul.f32 %v4683, %v4272
    %v4773 = vmul.f32 %v4685, %v4273
    %v4774 = vmul.f32 %v4687, %v4274
    %v4775 = vmul.f32 %v4689, %v4275
    %v4776 = vmul.f32 %v4691, %v4276
    %v4777 = vadd.f32 %v4767, %v4772
    %v4778 = vadd.f32 %v4768, %v4773
    %v4779 = vadd.f32 %v4769, %v4774
    %v4780 = vadd.f32 %v4770, %v4775
    %v4781 = vadd.f32 %v4771, %v4776
    %4787 = vrot.lane.b32.xlu0 %v4517, 108
    %v4788 = vpop.permute.xlu0 %4787
    %4789 = vrot.lane.b32.xlu0 %v4518, 108
    %v4790 = vpop.permute.xlu0 %4789
    %4791 = vrot.lane.b32.xlu0 %v4519, 108
    %v4792 = vpop.permute.xlu0 %4791
    %4793 = vrot.lane.b32.xlu0 %v4520, 108
    %v4794 = vpop.permute.xlu0 %4793
    %4795 = vrot.lane.b32.xlu0 %v4521, 108
    %v4796 = vpop.permute.xlu0 %4795
    %v4797 = vsel %vm1452, %v4788, 0
    %v4799 = vsel %vm1452, %v4790, 0
    %v4801 = vsel %vm1452, %v4792, 0
    %v4803 = vsel %vm1452, %v4794, 0
    %v4805 = vsel %vm1452, %v4796, 0
    %4807 = vmatprep.subr.mxu0 0.0
    %4808 = vmatpush1.msra.mxu0 %v3796
    %4809 = vmatprep.subr.mxu0 0.0
    %4810 = vmatpush1.msra.mxu0 %v3797
    %4811 = vmatprep.subr.mxu0 0.0
    %4812 = vmatpush1.msra.mxu0 %v3811
    %4813 = vmatprep.subr.mxu0 0.0
    %4814 = vmatpush1.msra.mxu0 0.0
    %4815 = vmatprep.subr.mxu0 0.0
    %4816 = vmatpush1.msra.mxu0 0.0
    %4817 = vmatprep.subr.mxu0 0.0
    %4818 = vmatpush1.msra.mxu0 0.0
    %4819 = vmatprep.subr.mxu0 0.0
    %4820 = vmatpush1.msra.mxu0 0.0
    %4821 = vmatprep.subr.mxu0 0.0
    %4822 = vmatpush1.msra.mxu0 0.0
    %4823 = vmatprep.subr.mxu0 0.0
    %4824 = vmatpush1.msra.mxu0 0.0
    %4825 = vmatprep.subr.mxu0 0.0
    %4826 = vmatpush1.msra.mxu0 0.0
    %4827 = vmatprep.subr.mxu0 0.0
    %4828 = vmatpush1.msra.mxu0 0.0
    %4829 = vmatprep.subr.mxu0 0.0
    %4830 = vmatpush1.msra.mxu0 0.0
    %4831 = vmatprep.subr.mxu0 0.0
    %4832 = vmatpush1.msra.mxu0 0.0
    %4833 = vmatprep.subr.mxu0 0.0
    %4834 = vmatpush1.msra.mxu0 0.0
    %4835 = vmatprep.subr.mxu0 0.0
    %4836 = vmatpush1.msra.mxu0 0.0
    %4837 = vmatprep.subr.mxu0 0.0
    %4838 = vmatpush1.msra.mxu0 0.0
    %4839 = vmatprep.subr.mxu0 0.0
    %4840 = vmatpush1.msra.mxu0 0.0
    %4841 = vmatprep.subr.mxu0 0.0
    %4842 = vmatpush1.msra.mxu0 0.0
    %4843 = vmatprep.subr.mxu0 0.0
    %4844 = vmatpush1.msra.mxu0 0.0
    %4845 = vmatprep.subr.mxu0 0.0
    %4846 = vmatpush1.msra.mxu0 0.0
    %4847 = vmatprep.subr.mxu0 0.0
    %4848 = vmatpush1.msra.mxu0 0.0
    %4849 = vmatprep.subr.mxu0 0.0
    %4850 = vmatpush1.msra.mxu0 0.0
    %4851 = vmatprep.subr.mxu0 0.0
    %4852 = vmatpush1.msra.mxu0 0.0
    %4853 = vmatprep.subr.mxu0 0.0
    %4854 = vmatpush1.msra.mxu0 0.0
    %4855 = vmatprep.subr.mxu0 0.0
    %4856 = vmatpush1.msra.mxu0 0.0
    %4857 = vmatprep.subr.mxu0 0.0
    %4858 = vmatpush1.msra.mxu0 0.0
    %4859 = vmatprep.subr.mxu0 0.0
    %4860 = vmatpush1.msra.mxu0 0.0
    %4861 = vmatprep.subr.mxu0 0.0
    %4862 = vmatpush1.msra.mxu0 0.0
    %4863 = vmatprep.subr.mxu0 0.0
    %4864 = vmatpush1.msra.mxu0 0.0
    %4865 = vmatprep.subr.mxu0 0.0
    %4866 = vmatpush1.msra.mxu0 0.0
    %4867 = vmatprep.subr.mxu0 0.0
    %4868 = vmatpush1.msra.mxu0 0.0
    %4869 = vmatprep.subr.mxu0 0.0
    %4870 = vmatpush1.msra.mxu0 0.0
    %4871 = vmatprep.mubr.f32.mxu0 0.0
    %4872 = vmatmul.mubr.f32.gmra.mrb[0].mxu0 %v4797
    %v4873 = vpop.f32.mrb[0].mxu0
    %v4874 = vadd.f32 %v3808, %v4873
    %v4875 = vpop.f32.mrb[0].mxu0
    %4876 = vmatprep.mubr.f32.mxu0 0.0
    %4877 = vmatmul.mubr.f32.gmra.mrb[0].mxu0 %v4799
    %v4878 = vpop.f32.mrb[0].mxu0
    %v4879 = vadd.f32 %v3808, %v4878
    %v4880 = vpop.f32.mrb[0].mxu0
    %4881 = vmatprep.mubr.f32.mxu0 0.0
    %4882 = vmatmul.mubr.f32.gmra.mrb[0].mxu0 %v4801
    %v4883 = vpop.f32.mrb[0].mxu0
    %v4884 = vadd.f32 %v3808, %v4883
    %v4885 = vpop.f32.mrb[0].mxu0
    %4886 = vmatprep.mubr.f32.mxu0 0.0
    %4887 = vmatmul.mubr.f32.gmra.mrb[0].mxu0 %v4803
    %v4888 = vpop.f32.mrb[0].mxu0
    %v4889 = vadd.f32 %v3808, %v4888
    %v4890 = vpop.f32.mrb[0].mxu0
    %4891 = vmatprep.mubr.f32.mxu0 0.0
    %4892 = vmatmul.mubr.f32.gmra.mrb[0].mxu0 %v4805
    %v4893 = vpop.f32.mrb[0].mxu0
    %v4894 = vadd.f32 %v3808, %v4893
    %v4895 = vpop.f32.mrb[0].mxu0
    %4896 = vdwg.mxu0
    %v4897 = vadd.f32 %v3748, %v4874
    %v4898 = vadd.f32 %v3753, %v4879
    %v4899 = vadd.f32 %v3758, %v4884
    %v4900 = vadd.f32 %v3763, %v4889
    %v4901 = vadd.f32 %v3768, %v4894
    %v4902 = vxor.u32 %v4897, 2147483648
    %v4903 = vxor.u32 %v4898, 2147483648
    %v4904 = vxor.u32 %v4899, 2147483648
    %v4905 = vxor.u32 %v4900, 2147483648
    %v4906 = vxor.u32 %v4901, 2147483648
    %v4907 = vmul.f32 %v4902, 1.442695
    %v4908 = vpow.pop %v4907
    %v4909 = vmul.f32 %v4903, 1.442695
    %v4910 = vpow.pop %v4909
    %v4911 = vmul.f32 %v4904, 1.442695
    %v4912 = vpow.pop %v4911
    %v4913 = vmul.f32 %v4905, 1.442695
    %v4914 = vpow.pop %v4913
    %v4915 = vmul.f32 %v4906, 1.442695
    %v4916 = vpow.pop %v4915
    %v4917 = vadd.f32 %v4908, 1.0
    %v4918 = vadd.f32 %v4910, 1.0
    %v4919 = vadd.f32 %v4912, 1.0
    %v4920 = vadd.f32 %v4914, 1.0
    %v4921 = vadd.f32 %v4916, 1.0
    %v4922 = vrcp.pop %v4917
    %v4923 = vmul.f32 1.0, %v4922
    %v4924 = vrcp.pop %v4918
    %v4925 = vmul.f32 1.0, %v4924
    %v4926 = vrcp.pop %v4919
    %v4927 = vmul.f32 1.0, %v4926
    %v4928 = vrcp.pop %v4920
    %v4929 = vmul.f32 1.0, %v4928
    %v4930 = vrcp.pop %v4921
    %v4931 = vmul.f32 1.0, %v4930
    %4937 = vrot.lane.b32.xlu0 %v4874, 88
    %v4938 = vpop.permute.xlu0 %4937
    %4939 = vrot.lane.b32.xlu0 %v4879, 88
    %v4940 = vpop.permute.xlu0 %4939
    %4941 = vrot.lane.b32.xlu0 %v4884, 88
    %v4942 = vpop.permute.xlu0 %4941
    %4943 = vrot.lane.b32.xlu0 %v4889, 88
    %v4944 = vpop.permute.xlu0 %4943
    %4945 = vrot.lane.b32.xlu0 %v4894, 88
    %v4946 = vpop.permute.xlu0 %4945
    %v4952 = vmul.f32 %v4923, %v4938
    %v4953 = vmul.f32 %v4925, %v4940
    %v4954 = vmul.f32 %v4927, %v4942
    %v4955 = vmul.f32 %v4929, %v4944
    %v4956 = vmul.f32 %v4931, %v4946
    %4962 = vrot.lane.b32.xlu0 %v4952, 40
    %v4963 = vpop.permute.xlu0 %4962
    %4964 = vrot.lane.b32.xlu0 %v4953, 40
    %v4965 = vpop.permute.xlu0 %4964
    %4966 = vrot.lane.b32.xlu0 %v4954, 40
    %v4967 = vpop.permute.xlu0 %4966
    %4968 = vrot.lane.b32.xlu0 %v4955, 40
    %v4969 = vpop.permute.xlu0 %4968
    %4970 = vrot.lane.b32.xlu0 %v4956, 40
    %v4971 = vpop.permute.xlu0 %4970
    %v4977 = vadd.f32 %v3748, %v4963
    %v4978 = vadd.f32 %v3753, %v4965
    %v4979 = vadd.f32 %v3758, %v4967
    %v4980 = vadd.f32 %v3763, %v4969
    %v4981 = vadd.f32 %v3768, %v4971
    %v4982 = vtanh.pop %v4977
    %v4983 = vtanh.pop %v4978
    %v4984 = vtanh.pop %v4979
    %v4985 = vtanh.pop %v4980
    %v4986 = vtanh.pop %v4981
    %v4987 = vsub.f32 1.0, %v4923
    %v4988 = vsub.f32 1.0, %v4925
    %v4989 = vsub.f32 1.0, %v4927
    %v4990 = vsub.f32 1.0, %v4929
    %v4991 = vsub.f32 1.0, %v4931
    %4997 = vrot.lane.b32.xlu0 %v4982, 108
    %v4998 = vpop.permute.xlu0 %4997
    %4999 = vrot.lane.b32.xlu0 %v4983, 108
    %v5000 = vpop.permute.xlu0 %4999
    %5001 = vrot.lane.b32.xlu0 %v4984, 108
    %v5002 = vpop.permute.xlu0 %5001
    %5003 = vrot.lane.b32.xlu0 %v4985, 108
    %v5004 = vpop.permute.xlu0 %5003
    %5005 = vrot.lane.b32.xlu0 %v4986, 108
    %v5006 = vpop.permute.xlu0 %5005
    %v5012 = vmul.f32 %v4987, %v4998
    %v5013 = vmul.f32 %v4988, %v5000
    %v5014 = vmul.f32 %v4989, %v5002
    %v5015 = vmul.f32 %v4990, %v5004
    %v5016 = vmul.f32 %v4991, %v5006
    %v5017 = vmul.f32 %v4923, %v4517
    %v5018 = vmul.f32 %v4925, %v4518
    %v5019 = vmul.f32 %v4927, %v4519
    %v5020 = vmul.f32 %v4929, %v4520
    %v5021 = vmul.f32 %v4931, %v4521
    %v5022 = vadd.f32 %v5012, %v5017
    %v5023 = vadd.f32 %v5013, %v5018
    %v5024 = vadd.f32 %v5014, %v5019
    %v5025 = vadd.f32 %v5015, %v5020
    %v5026 = vadd.f32 %v5016, %v5021
    %5032 = vrot.lane.b32.xlu0 %v4777, 48
    %v5033 = vpop.permute.xlu0 %5032
    %5034 = vrot.lane.b32.xlu0 %v4778, 48
    %v5035 = vpop.permute.xlu0 %5034
    %5036 = vrot.lane.b32.xlu0 %v4779, 48
    %v5037 = vpop.permute.xlu0 %5036
    %5038 = vrot.lane.b32.xlu0 %v4780, 48
    %v5039 = vpop.permute.xlu0 %5038
    %5040 = vrot.lane.b32.xlu0 %v4781, 48
    %v5041 = vpop.permute.xlu0 %5040
    %v5042 = vsel %vm1452, %v5033, 0
    %v5044 = vsel %vm1452, %v5035, 0
    %v5046 = vsel %vm1452, %v5037, 0
    %v5048 = vsel %vm1452, %v5039, 0
    %v5050 = vsel %vm1452, %v5041, 0
    %5052 = vmatprep.subr.mxu0 0.0
    %5053 = vmatpush1.msra.mxu0 %v3800
    %5054 = vmatprep.subr.mxu0 0.0
    %5055 = vmatpush1.msra.mxu0 %v3801
    %5056 = vmatprep.subr.mxu0 0.0
    %5057 = vmatpush1.msra.mxu0 %v4040
    %5058 = vmatprep.subr.mxu0 0.0
    %5059 = vmatpush1.msra.mxu0 0.0
    %5060 = vmatprep.subr.mxu0 0.0
    %5061 = vmatpush1.msra.mxu0 0.0
    %5062 = vmatprep.subr.mxu0 0.0
    %5063 = vmatpush1.msra.mxu0 0.0
    %5064 = vmatprep.subr.mxu0 0.0
    %5065 = vmatpush1.msra.mxu0 0.0
    %5066 = vmatprep.subr.mxu0 0.0
    %5067 = vmatpush1.msra.mxu0 0.0
    %5068 = vmatprep.subr.mxu0 0.0
    %5069 = vmatpush1.msra.mxu0 0.0
    %5070 = vmatprep.subr.mxu0 0.0
    %5071 = vmatpush1.msra.mxu0 0.0
    %5072 = vmatprep.subr.mxu0 0.0
    %5073 = vmatpush1.msra.mxu0 0.0
    %5074 = vmatprep.subr.mxu0 0.0
    %5075 = vmatpush1.msra.mxu0 0.0
    %5076 = vmatprep.subr.mxu0 0.0
    %5077 = vmatpush1.msra.mxu0 0.0
    %5078 = vmatprep.subr.mxu0 0.0
    %5079 = vmatpush1.msra.mxu0 0.0
    %5080 = vmatprep.subr.mxu0 0.0
    %5081 = vmatpush1.msra.mxu0 0.0
    %5082 = vmatprep.subr.mxu0 0.0
    %5083 = vmatpush1.msra.mxu0 0.0
    %5084 = vmatprep.subr.mxu0 0.0
    %5085 = vmatpush1.msra.mxu0 0.0
    %5086 = vmatprep.subr.mxu0 0.0
    %5087 = vmatpush1.msra.mxu0 0.0
    %5088 = vmatprep.subr.mxu0 0.0
    %5089 = vmatpush1.msra.mxu0 0.0
    %5090 = vmatprep.subr.mxu0 0.0
    %5091 = vmatpush1.msra.mxu0 0.0
    %5092 = vmatprep.subr.mxu0 0.0
    %5093 = vmatpush1.msra.mxu0 0.0
    %5094 = vmatprep.subr.mxu0 0.0
    %5095 = vmatpush1.msra.mxu0 0.0
    %5096 = vmatprep.subr.mxu0 0.0
    %5097 = vmatpush1.msra.mxu0 0.0
    %5098 = vmatprep.subr.mxu0 0.0
    %5099 = vmatpush1.msra.mxu0 0.0
    %5100 = vmatprep.subr.mxu0 0.0
    %5101 = vmatpush1.msra.mxu0 0.0
    %5102 = vmatprep.subr.mxu0 0.0
    %5103 = vmatpush1.msra.mxu0 0.0
    %5104 = vmatprep.subr.mxu0 0.0
    %5105 = vmatpush1.msra.mxu0 0.0
    %5106 = vmatprep.subr.mxu0 0.0
    %5107 = vmatpush1.msra.mxu0 0.0
    %5108 = vmatprep.subr.mxu0 0.0
    %5109 = vmatpush1.msra.mxu0 0.0
    %5110 = vmatprep.subr.mxu0 0.0
    %5111 = vmatpush1.msra.mxu0 0.0
    %5112 = vmatprep.subr.mxu0 0.0
    %5113 = vmatpush1.msra.mxu0 0.0
    %5114 = vmatprep.subr.mxu0 0.0
    %5115 = vmatpush1.msra.mxu0 0.0
    %5116 = vmatprep.mubr.f32.mxu0 0.0
    %5117 = vmatmul.mubr.f32.gmra.mrb[0].mxu0 %v5042
    %v5118 = vpop.f32.mrb[0].mxu0
    %v5119 = vadd.f32 %v4037, %v5118
    %v5120 = vpop.f32.mrb[0].mxu0
    %5121 = vmatprep.mubr.f32.mxu0 0.0
    %5122 = vmatmul.mubr.f32.gmra.mrb[0].mxu0 %v5044
    %v5123 = vpop.f32.mrb[0].mxu0
    %v5124 = vadd.f32 %v4037, %v5123
    %v5125 = vpop.f32.mrb[0].mxu0
    %5126 = vmatprep.mubr.f32.mxu0 0.0
    %5127 = vmatmul.mubr.f32.gmra.mrb[0].mxu0 %v5046
    %v5128 = vpop.f32.mrb[0].mxu0
    %v5129 = vadd.f32 %v4037, %v5128
    %v5130 = vpop.f32.mrb[0].mxu0
    %5131 = vmatprep.mubr.f32.mxu0 0.0
    %5132 = vmatmul.mubr.f32.gmra.mrb[0].mxu0 %v5048
    %v5133 = vpop.f32.mrb[0].mxu0
    %v5134 = vadd.f32 %v4037, %v5133
    %v5135 = vpop.f32.mrb[0].mxu0
    %5136 = vmatprep.mubr.f32.mxu0 0.0
    %5137 = vmatmul.mubr.f32.gmra.mrb[0].mxu0 %v5050
    %v5138 = vpop.f32.mrb[0].mxu0
    %v5139 = vadd.f32 %v4037, %v5138
    %v5140 = vpop.f32.mrb[0].mxu0
    %5141 = vdwg.mxu0
    %5147 = vrot.lane.b32.xlu0 %v5119, 60
    %v5148 = vpop.permute.xlu0 %5147
    %5149 = vrot.lane.b32.xlu0 %v5124, 60
    %v5150 = vpop.permute.xlu0 %5149
    %5151 = vrot.lane.b32.xlu0 %v5129, 60
    %v5152 = vpop.permute.xlu0 %5151
    %5153 = vrot.lane.b32.xlu0 %v5134, 60
    %v5154 = vpop.permute.xlu0 %5153
    %5155 = vrot.lane.b32.xlu0 %v5139, 60
    %v5156 = vpop.permute.xlu0 %5155
    %v5162 = vadd.f32 %v3723, %v5148
    %v5163 = vadd.f32 %v3728, %v5150
    %v5164 = vadd.f32 %v3733, %v5152
    %v5165 = vadd.f32 %v3738, %v5154
    %v5166 = vadd.f32 %v3743, %v5156
    %v5167 = vxor.u32 %v5162, 2147483648
    %v5168 = vxor.u32 %v5163, 2147483648
    %v5169 = vxor.u32 %v5164, 2147483648
    %v5170 = vxor.u32 %v5165, 2147483648
    %v5171 = vxor.u32 %v5166, 2147483648
    %v5172 = vmul.f32 %v5167, 1.442695
    %v5173 = vpow.pop %v5172
    %v5174 = vmul.f32 %v5168, 1.442695
    %v5175 = vpow.pop %v5174
    %v5176 = vmul.f32 %v5169, 1.442695
    %v5177 = vpow.pop %v5176
    %v5178 = vmul.f32 %v5170, 1.442695
    %v5179 = vpow.pop %v5178
    %v5180 = vmul.f32 %v5171, 1.442695
    %v5181 = vpow.pop %v5180
    %v5182 = vadd.f32 %v5173, 1.0
    %v5183 = vadd.f32 %v5175, 1.0
    %v5184 = vadd.f32 %v5177, 1.0
    %v5185 = vadd.f32 %v5179, 1.0
    %v5186 = vadd.f32 %v5181, 1.0
    %v5187 = vrcp.pop %v5182
    %v5188 = vmul.f32 1.0, %v5187
    %v5189 = vrcp.pop %v5183
    %v5190 = vmul.f32 1.0, %v5189
    %v5191 = vrcp.pop %v5184
    %v5192 = vmul.f32 1.0, %v5191
    %v5193 = vrcp.pop %v5185
    %v5194 = vmul.f32 1.0, %v5193
    %v5195 = vrcp.pop %v5186
    %v5196 = vmul.f32 1.0, %v5195
    %5197 = vrot.lane.b32.xlu0 %v5119, 20
    %v5198 = vpop.permute.xlu0 %5197
    %5199 = vrot.lane.b32.xlu0 %v5124, 20
    %v5200 = vpop.permute.xlu0 %5199
    %5201 = vrot.lane.b32.xlu0 %v5129, 20
    %v5202 = vpop.permute.xlu0 %5201
    %5203 = vrot.lane.b32.xlu0 %v5134, 20
    %v5204 = vpop.permute.xlu0 %5203
    %5205 = vrot.lane.b32.xlu0 %v5139, 20
    %v5206 = vpop.permute.xlu0 %5205
    %v5212 = vmul.f32 %v5188, %v5198
    %v5213 = vmul.f32 %v5190, %v5200
    %v5214 = vmul.f32 %v5192, %v5202
    %v5215 = vmul.f32 %v5194, %v5204
    %v5216 = vmul.f32 %v5196, %v5206
    %5222 = vrot.lane.b32.xlu0 %v5212, 40
    %v5223 = vpop.permute.xlu0 %5222
    %5224 = vrot.lane.b32.xlu0 %v5213, 40
    %v5225 = vpop.permute.xlu0 %5224
    %5226 = vrot.lane.b32.xlu0 %v5214, 40
    %v5227 = vpop.permute.xlu0 %5226
    %5228 = vrot.lane.b32.xlu0 %v5215, 40
    %v5229 = vpop.permute.xlu0 %5228
    %5230 = vrot.lane.b32.xlu0 %v5216, 40
    %v5231 = vpop.permute.xlu0 %5230
    %v5237 = vadd.f32 %v3723, %v5223
    %v5238 = vadd.f32 %v3728, %v5225
    %v5239 = vadd.f32 %v3733, %v5227
    %v5240 = vadd.f32 %v3738, %v5229
    %v5241 = vadd.f32 %v3743, %v5231
    %v5242 = vtanh.pop %v5237
    %v5243 = vtanh.pop %v5238
    %v5244 = vtanh.pop %v5239
    %v5245 = vtanh.pop %v5240
    %v5246 = vtanh.pop %v5241
    %v5247 = vsub.f32 1.0, %v5188
    %v5248 = vsub.f32 1.0, %v5190
    %v5249 = vsub.f32 1.0, %v5192
    %v5250 = vsub.f32 1.0, %v5194
    %v5251 = vsub.f32 1.0, %v5196
    %5257 = vrot.lane.b32.xlu0 %v5242, 108
    %v5258 = vpop.permute.xlu0 %5257
    %5259 = vrot.lane.b32.xlu0 %v5243, 108
    %v5260 = vpop.permute.xlu0 %5259
    %5261 = vrot.lane.b32.xlu0 %v5244, 108
    %v5262 = vpop.permute.xlu0 %5261
    %5263 = vrot.lane.b32.xlu0 %v5245, 108
    %v5264 = vpop.permute.xlu0 %5263
    %5265 = vrot.lane.b32.xlu0 %v5246, 108
    %v5266 = vpop.permute.xlu0 %5265
    %v5272 = vmul.f32 %v5247, %v5258
    %v5273 = vmul.f32 %v5248, %v5260
    %v5274 = vmul.f32 %v5249, %v5262
    %v5275 = vmul.f32 %v5250, %v5264
    %v5276 = vmul.f32 %v5251, %v5266
    %v5277 = vmul.f32 %v5188, %v4777
    %v5278 = vmul.f32 %v5190, %v4778
    %v5279 = vmul.f32 %v5192, %v4779
    %v5280 = vmul.f32 %v5194, %v4780
    %v5281 = vmul.f32 %v5196, %v4781
    %v5282 = vadd.f32 %v5272, %v5277
    %v5283 = vadd.f32 %v5273, %v5278
    %v5284 = vadd.f32 %v5274, %v5279
    %v5285 = vadd.f32 %v5275, %v5280
    %v5286 = vadd.f32 %v5276, %v5281
    %5292 = vrot.lane.b32.xlu0 %v5022, 108
    %v5293 = vpop.permute.xlu0 %5292
    %5294 = vrot.lane.b32.xlu0 %v5023, 108
    %v5295 = vpop.permute.xlu0 %5294
    %5296 = vrot.lane.b32.xlu0 %v5024, 108
    %v5297 = vpop.permute.xlu0 %5296
    %5298 = vrot.lane.b32.xlu0 %v5025, 108
    %v5299 = vpop.permute.xlu0 %5298
    %5300 = vrot.lane.b32.xlu0 %v5026, 108
    %v5301 = vpop.permute.xlu0 %5300
    %v5302 = vsel %vm1452, %v5293, 0
    %v5304 = vsel %vm1452, %v5295, 0
    %v5306 = vsel %vm1452, %v5297, 0
    %v5308 = vsel %vm1452, %v5299, 0
    %v5310 = vsel %vm1452, %v5301, 0
    %5312 = vmatprep.subr.mxu0 0.0
    %5313 = vmatpush1.msra.mxu0 %v3796
    %5314 = vmatprep.subr.mxu0 0.0
    %5315 = vmatpush1.msra.mxu0 %v3797
    %5316 = vmatprep.subr.mxu0 0.0
    %5317 = vmatpush1.msra.mxu0 %v3811
    %5318 = vmatprep.subr.mxu0 0.0
    %5319 = vmatpush1.msra.mxu0 0.0
    %5320 = vmatprep.subr.mxu0 0.0
    %5321 = vmatpush1.msra.mxu0 0.0
    %5322 = vmatprep.subr.mxu0 0.0
    %5323 = vmatpush1.msra.mxu0 0.0
    %5324 = vmatprep.subr.mxu0 0.0
    %5325 = vmatpush1.msra.mxu0 0.0
    %5326 = vmatprep.subr.mxu0 0.0
    %5327 = vmatpush1.msra.mxu0 0.0
    %5328 = vmatprep.subr.mxu0 0.0
    %5329 = vmatpush1.msra.mxu0 0.0
    %5330 = vmatprep.subr.mxu0 0.0
    %5331 = vmatpush1.msra.mxu0 0.0
    %5332 = vmatprep.subr.mxu0 0.0
    %5333 = vmatpush1.msra.mxu0 0.0
    %5334 = vmatprep.subr.mxu0 0.0
    %5335 = vmatpush1.msra.mxu0 0.0
    %5336 = vmatprep.subr.mxu0 0.0
    %5337 = vmatpush1.msra.mxu0 0.0
    %5338 = vmatprep.subr.mxu0 0.0
    %5339 = vmatpush1.msra.mxu0 0.0
    %5340 = vmatprep.subr.mxu0 0.0
    %5341 = vmatpush1.msra.mxu0 0.0
    %5342 = vmatprep.subr.mxu0 0.0
    %5343 = vmatpush1.msra.mxu0 0.0
    %5344 = vmatprep.subr.mxu0 0.0
    %5345 = vmatpush1.msra.mxu0 0.0
    %5346 = vmatprep.subr.mxu0 0.0
    %5347 = vmatpush1.msra.mxu0 0.0
    %5348 = vmatprep.subr.mxu0 0.0
    %5349 = vmatpush1.msra.mxu0 0.0
    %5350 = vmatprep.subr.mxu0 0.0
    %5351 = vmatpush1.msra.mxu0 0.0
    %5352 = vmatprep.subr.mxu0 0.0
    %5353 = vmatpush1.msra.mxu0 0.0
    %5354 = vmatprep.subr.mxu0 0.0
    %5355 = vmatpush1.msra.mxu0 0.0
    %5356 = vmatprep.subr.mxu0 0.0
    %5357 = vmatpush1.msra.mxu0 0.0
    %5358 = vmatprep.subr.mxu0 0.0
    %5359 = vmatpush1.msra.mxu0 0.0
    %5360 = vmatprep.subr.mxu0 0.0
    %5361 = vmatpush1.msra.mxu0 0.0
    %5362 = vmatprep.subr.mxu0 0.0
    %5363 = vmatpush1.msra.mxu0 0.0
    %5364 = vmatprep.subr.mxu0 0.0
    %5365 = vmatpush1.msra.mxu0 0.0
    %5366 = vmatprep.subr.mxu0 0.0
    %5367 = vmatpush1.msra.mxu0 0.0
    %5368 = vmatprep.subr.mxu0 0.0
    %5369 = vmatpush1.msra.mxu0 0.0
    %5370 = vmatprep.subr.mxu0 0.0
    %5371 = vmatpush1.msra.mxu0 0.0
    %5372 = vmatprep.subr.mxu0 0.0
    %5373 = vmatpush1.msra.mxu0 0.0
    %5374 = vmatprep.subr.mxu0 0.0
    %5375 = vmatpush1.msra.mxu0 0.0
    %5376 = vmatprep.mubr.f32.mxu0 0.0
    %5377 = vmatmul.mubr.f32.gmra.mrb[0].mxu0 %v5302
    %v5378 = vpop.f32.mrb[0].mxu0
    %v5379 = vadd.f32 %v3808, %v5378
    %v5380 = vpop.f32.mrb[0].mxu0
    %5381 = vmatprep.mubr.f32.mxu0 0.0
    %5382 = vmatmul.mubr.f32.gmra.mrb[0].mxu0 %v5304
    %v5383 = vpop.f32.mrb[0].mxu0
    %v5384 = vadd.f32 %v3808, %v5383
    %v5385 = vpop.f32.mrb[0].mxu0
    %5386 = vmatprep.mubr.f32.mxu0 0.0
    %5387 = vmatmul.mubr.f32.gmra.mrb[0].mxu0 %v5306
    %v5388 = vpop.f32.mrb[0].mxu0
    %v5389 = vadd.f32 %v3808, %v5388
    %v5390 = vpop.f32.mrb[0].mxu0
    %5391 = vmatprep.mubr.f32.mxu0 0.0
    %5392 = vmatmul.mubr.f32.gmra.mrb[0].mxu0 %v5308
    %v5393 = vpop.f32.mrb[0].mxu0
    %v5394 = vadd.f32 %v3808, %v5393
    %v5395 = vpop.f32.mrb[0].mxu0
    %5396 = vmatprep.mubr.f32.mxu0 0.0
    %5397 = vmatmul.mubr.f32.gmra.mrb[0].mxu0 %v5310
    %v5398 = vpop.f32.mrb[0].mxu0
    %v5399 = vadd.f32 %v3808, %v5398
    %v5400 = vpop.f32.mrb[0].mxu0
    %5401 = vdwg.mxu0
    %v5402 = vadd.f32 %v3773, %v5379
    %v5403 = vadd.f32 %v3778, %v5384
    %v5404 = vadd.f32 %v3783, %v5389
    %v5405 = vadd.f32 %v3788, %v5394
    %v5406 = vadd.f32 %v3793, %v5399
    %v5407 = vxor.u32 %v5402, 2147483648
    %v5408 = vxor.u32 %v5403, 2147483648
    %v5409 = vxor.u32 %v5404, 2147483648
    %v5410 = vxor.u32 %v5405, 2147483648
    %v5411 = vxor.u32 %v5406, 2147483648
    %v5412 = vmul.f32 %v5407, 1.442695
    %v5413 = vpow.pop %v5412
    %v5414 = vmul.f32 %v5408, 1.442695
    %v5415 = vpow.pop %v5414
    %v5416 = vmul.f32 %v5409, 1.442695
    %v5417 = vpow.pop %v5416
    %v5418 = vmul.f32 %v5410, 1.442695
    %v5419 = vpow.pop %v5418
    %v5420 = vmul.f32 %v5411, 1.442695
    %v5421 = vpow.pop %v5420
    %v5422 = vadd.f32 %v5413, 1.0
    %v5423 = vadd.f32 %v5415, 1.0
    %v5424 = vadd.f32 %v5417, 1.0
    %v5425 = vadd.f32 %v5419, 1.0
    %v5426 = vadd.f32 %v5421, 1.0
    %v5427 = vrcp.pop %v5422
    %v5428 = vmul.f32 1.0, %v5427
    %v5429 = vrcp.pop %v5423
    %v5430 = vmul.f32 1.0, %v5429
    %v5431 = vrcp.pop %v5424
    %v5432 = vmul.f32 1.0, %v5431
    %v5433 = vrcp.pop %v5425
    %v5434 = vmul.f32 1.0, %v5433
    %v5435 = vrcp.pop %v5426
    %v5436 = vmul.f32 1.0, %v5435
    %5442 = vrot.lane.b32.xlu0 %v5379, 88
    %v5443 = vpop.permute.xlu0 %5442
    %5444 = vrot.lane.b32.xlu0 %v5384, 88
    %v5445 = vpop.permute.xlu0 %5444
    %5446 = vrot.lane.b32.xlu0 %v5389, 88
    %v5447 = vpop.permute.xlu0 %5446
    %5448 = vrot.lane.b32.xlu0 %v5394, 88
    %v5449 = vpop.permute.xlu0 %5448
    %5450 = vrot.lane.b32.xlu0 %v5399, 88
    %v5451 = vpop.permute.xlu0 %5450
    %v5457 = vmul.f32 %v5428, %v5443
    %v5458 = vmul.f32 %v5430, %v5445
    %v5459 = vmul.f32 %v5432, %v5447
    %v5460 = vmul.f32 %v5434, %v5449
    %v5461 = vmul.f32 %v5436, %v5451
    %5467 = vrot.lane.b32.xlu0 %v5457, 40
    %v5468 = vpop.permute.xlu0 %5467
    %5469 = vrot.lane.b32.xlu0 %v5458, 40
    %v5470 = vpop.permute.xlu0 %5469
    %5471 = vrot.lane.b32.xlu0 %v5459, 40
    %v5472 = vpop.permute.xlu0 %5471
    %5473 = vrot.lane.b32.xlu0 %v5460, 40
    %v5474 = vpop.permute.xlu0 %5473
    %5475 = vrot.lane.b32.xlu0 %v5461, 40
    %v5476 = vpop.permute.xlu0 %5475
    %v5482 = vadd.f32 %v3773, %v5468
    %v5483 = vadd.f32 %v3778, %v5470
    %v5484 = vadd.f32 %v3783, %v5472
    %v5485 = vadd.f32 %v3788, %v5474
    %v5486 = vadd.f32 %v3793, %v5476
    %v5487 = vtanh.pop %v5482
    %v5488 = vtanh.pop %v5483
    %v5489 = vtanh.pop %v5484
    %v5490 = vtanh.pop %v5485
    %v5491 = vtanh.pop %v5486
    %v5492 = vsub.f32 1.0, %v5428
    %v5493 = vsub.f32 1.0, %v5430
    %v5494 = vsub.f32 1.0, %v5432
    %v5495 = vsub.f32 1.0, %v5434
    %v5496 = vsub.f32 1.0, %v5436
    %5502 = vrot.lane.b32.xlu0 %v5487, 108
    %v5503 = vpop.permute.xlu0 %5502
    %5504 = vrot.lane.b32.xlu0 %v5488, 108
    %v5505 = vpop.permute.xlu0 %5504
    %5506 = vrot.lane.b32.xlu0 %v5489, 108
    %v5507 = vpop.permute.xlu0 %5506
    %5508 = vrot.lane.b32.xlu0 %v5490, 108
    %v5509 = vpop.permute.xlu0 %5508
    %5510 = vrot.lane.b32.xlu0 %v5491, 108
    %v5511 = vpop.permute.xlu0 %5510
    %v5517 = vmul.f32 %v5492, %v5503
    %v5518 = vmul.f32 %v5493, %v5505
    %v5519 = vmul.f32 %v5494, %v5507
    %v5520 = vmul.f32 %v5495, %v5509
    %v5521 = vmul.f32 %v5496, %v5511
    %v5522 = vmul.f32 %v5428, %v5022
    %v5523 = vmul.f32 %v5430, %v5023
    %v5524 = vmul.f32 %v5432, %v5024
    %v5525 = vmul.f32 %v5434, %v5025
    %v5526 = vmul.f32 %v5436, %v5026
    %v5527 = vadd.f32 %v5517, %v5522
    %v5528 = vadd.f32 %v5518, %v5523
    %v5529 = vadd.f32 %v5519, %v5524
    %v5530 = vadd.f32 %v5520, %v5525
    %v5531 = vadd.f32 %v5521, %v5526
    %5537 = vrot.lane.b32.xlu0 %v5282, 48
    %v5538 = vpop.permute.xlu0 %5537
    %5539 = vrot.lane.b32.xlu0 %v5283, 48
    %v5540 = vpop.permute.xlu0 %5539
    %5541 = vrot.lane.b32.xlu0 %v5284, 48
    %v5542 = vpop.permute.xlu0 %5541
    %5543 = vrot.lane.b32.xlu0 %v5285, 48
    %v5544 = vpop.permute.xlu0 %5543
    %5545 = vrot.lane.b32.xlu0 %v5286, 48
    %v5546 = vpop.permute.xlu0 %5545
    %v5547 = vsel %vm1452, %v5538, 0
    %v5549 = vsel %vm1452, %v5540, 0
    %v5551 = vsel %vm1452, %v5542, 0
    %v5553 = vsel %vm1452, %v5544, 0
    %v5555 = vsel %vm1452, %v5546, 0
    %5557 = vmatprep.subr.mxu0 0.0
    %5558 = vmatpush1.msra.mxu0 %v3800
    %5559 = vmatprep.subr.mxu0 0.0
    %5560 = vmatpush1.msra.mxu0 %v3801
    %5561 = vmatprep.subr.mxu0 0.0
    %5562 = vmatpush1.msra.mxu0 %v4040
    %5563 = vmatprep.subr.mxu0 0.0
    %5564 = vmatpush1.msra.mxu0 0.0
    %5565 = vmatprep.subr.mxu0 0.0
    %5566 = vmatpush1.msra.mxu0 0.0
    %5567 = vmatprep.subr.mxu0 0.0
    %5568 = vmatpush1.msra.mxu0 0.0
    %5569 = vmatprep.subr.mxu0 0.0
    %5570 = vmatpush1.msra.mxu0 0.0
    %5571 = vmatprep.subr.mxu0 0.0
    %5572 = vmatpush1.msra.mxu0 0.0
    %5573 = vmatprep.subr.mxu0 0.0
    %5574 = vmatpush1.msra.mxu0 0.0
    %5575 = vmatprep.subr.mxu0 0.0
    %5576 = vmatpush1.msra.mxu0 0.0
    %5577 = vmatprep.subr.mxu0 0.0
    %5578 = vmatpush1.msra.mxu0 0.0
    %5579 = vmatprep.subr.mxu0 0.0
    %5580 = vmatpush1.msra.mxu0 0.0
    %5581 = vmatprep.subr.mxu0 0.0
    %5582 = vmatpush1.msra.mxu0 0.0
    %5583 = vmatprep.subr.mxu0 0.0
    %5584 = vmatpush1.msra.mxu0 0.0
    %5585 = vmatprep.subr.mxu0 0.0
    %5586 = vmatpush1.msra.mxu0 0.0
    %5587 = vmatprep.subr.mxu0 0.0
    %5588 = vmatpush1.msra.mxu0 0.0
    %5589 = vmatprep.subr.mxu0 0.0
    %5590 = vmatpush1.msra.mxu0 0.0
    %5591 = vmatprep.subr.mxu0 0.0
    %5592 = vmatpush1.msra.mxu0 0.0
    %5593 = vmatprep.subr.mxu0 0.0
    %5594 = vmatpush1.msra.mxu0 0.0
    %5595 = vmatprep.subr.mxu0 0.0
    %5596 = vmatpush1.msra.mxu0 0.0
    %5597 = vmatprep.subr.mxu0 0.0
    %5598 = vmatpush1.msra.mxu0 0.0
    %5599 = vmatprep.subr.mxu0 0.0
    %5600 = vmatpush1.msra.mxu0 0.0
    %5601 = vmatprep.subr.mxu0 0.0
    %5602 = vmatpush1.msra.mxu0 0.0
    %5603 = vmatprep.subr.mxu0 0.0
    %5604 = vmatpush1.msra.mxu0 0.0
    %5605 = vmatprep.subr.mxu0 0.0
    %5606 = vmatpush1.msra.mxu0 0.0
    %5607 = vmatprep.subr.mxu0 0.0
    %5608 = vmatpush1.msra.mxu0 0.0
    %5609 = vmatprep.subr.mxu0 0.0
    %5610 = vmatpush1.msra.mxu0 0.0
    %5611 = vmatprep.subr.mxu0 0.0
    %5612 = vmatpush1.msra.mxu0 0.0
    %5613 = vmatprep.subr.mxu0 0.0
    %5614 = vmatpush1.msra.mxu0 0.0
    %5615 = vmatprep.subr.mxu0 0.0
    %5616 = vmatpush1.msra.mxu0 0.0
    %5617 = vmatprep.subr.mxu0 0.0
    %5618 = vmatpush1.msra.mxu0 0.0
    %5619 = vmatprep.subr.mxu0 0.0
    %5620 = vmatpush1.msra.mxu0 0.0
    %5621 = vmatprep.mubr.f32.mxu0 0.0
    %5622 = vmatmul.mubr.f32.gmra.mrb[0].mxu0 %v5547
    %v5623 = vpop.f32.mrb[0].mxu0
    %v5624 = vadd.f32 %v4037, %v5623
    %v5625 = vpop.f32.mrb[0].mxu0
    %5626 = vmatprep.mubr.f32.mxu0 0.0
    %5627 = vmatmul.mubr.f32.gmra.mrb[0].mxu0 %v5549
    %v5628 = vpop.f32.mrb[0].mxu0
    %v5629 = vadd.f32 %v4037, %v5628
    %v5630 = vpop.f32.mrb[0].mxu0
    %5631 = vmatprep.mubr.f32.mxu0 0.0
    %5632 = vmatmul.mubr.f32.gmra.mrb[0].mxu0 %v5551
    %v5633 = vpop.f32.mrb[0].mxu0
    %v5634 = vadd.f32 %v4037, %v5633
    %v5635 = vpop.f32.mrb[0].mxu0
    %5636 = vmatprep.mubr.f32.mxu0 0.0
    %5637 = vmatmul.mubr.f32.gmra.mrb[0].mxu0 %v5553
    %v5638 = vpop.f32.mrb[0].mxu0
    %v5639 = vadd.f32 %v4037, %v5638
    %v5640 = vpop.f32.mrb[0].mxu0
    %5641 = vmatprep.mubr.f32.mxu0 0.0
    %5642 = vmatmul.mubr.f32.gmra.mrb[0].mxu0 %v5555
    %v5643 = vpop.f32.mrb[0].mxu0
    %v5644 = vadd.f32 %v4037, %v5643
    %v5645 = vpop.f32.mrb[0].mxu0
    %5646 = vdwg.mxu0
    %5652 = vrot.lane.b32.xlu0 %v5624, 60
    %v5653 = vpop.permute.xlu0 %5652
    %5654 = vrot.lane.b32.xlu0 %v5629, 60
    %v5655 = vpop.permute.xlu0 %5654
    %5656 = vrot.lane.b32.xlu0 %v5634, 60
    %v5657 = vpop.permute.xlu0 %5656
    %5658 = vrot.lane.b32.xlu0 %v5639, 60
    %v5659 = vpop.permute.xlu0 %5658
    %5660 = vrot.lane.b32.xlu0 %v5644, 60
    %v5661 = vpop.permute.xlu0 %5660
    %v5667 = vadd.f32 %v3698, %v5653
    %v5668 = vadd.f32 %v3703, %v5655
    %v5669 = vadd.f32 %v3708, %v5657
    %v5670 = vadd.f32 %v3713, %v5659
    %v5671 = vadd.f32 %v3718, %v5661
    %v5672 = vxor.u32 %v5667, 2147483648
    %v5673 = vxor.u32 %v5668, 2147483648
    %v5674 = vxor.u32 %v5669, 2147483648
    %v5675 = vxor.u32 %v5670, 2147483648
    %v5676 = vxor.u32 %v5671, 2147483648
    %v5677 = vmul.f32 %v5672, 1.442695
    %v5678 = vpow.pop %v5677
    %v5679 = vmul.f32 %v5673, 1.442695
    %v5680 = vpow.pop %v5679
    %v5681 = vmul.f32 %v5674, 1.442695
    %v5682 = vpow.pop %v5681
    %v5683 = vmul.f32 %v5675, 1.442695
    %v5684 = vpow.pop %v5683
    %v5685 = vmul.f32 %v5676, 1.442695
    %v5686 = vpow.pop %v5685
    %v5687 = vadd.f32 %v5678, 1.0
    %v5688 = vadd.f32 %v5680, 1.0
    %v5689 = vadd.f32 %v5682, 1.0
    %v5690 = vadd.f32 %v5684, 1.0
    %v5691 = vadd.f32 %v5686, 1.0
    %v5692 = vrcp.pop %v5687
    %v5693 = vmul.f32 1.0, %v5692
    %v5694 = vrcp.pop %v5688
    %v5695 = vmul.f32 1.0, %v5694
    %v5696 = vrcp.pop %v5689
    %v5697 = vmul.f32 1.0, %v5696
    %v5698 = vrcp.pop %v5690
    %v5699 = vmul.f32 1.0, %v5698
    %v5700 = vrcp.pop %v5691
    %v5701 = vmul.f32 1.0, %v5700
    %5702 = vrot.lane.b32.xlu0 %v5624, 20
    %v5703 = vpop.permute.xlu0 %5702
    %5704 = vrot.lane.b32.xlu0 %v5629, 20
    %v5705 = vpop.permute.xlu0 %5704
    %5706 = vrot.lane.b32.xlu0 %v5634, 20
    %v5707 = vpop.permute.xlu0 %5706
    %5708 = vrot.lane.b32.xlu0 %v5639, 20
    %v5709 = vpop.permute.xlu0 %5708
    %5710 = vrot.lane.b32.xlu0 %v5644, 20
    %v5711 = vpop.permute.xlu0 %5710
    %v5717 = vmul.f32 %v5693, %v5703
    %v5718 = vmul.f32 %v5695, %v5705
    %v5719 = vmul.f32 %v5697, %v5707
    %v5720 = vmul.f32 %v5699, %v5709
    %v5721 = vmul.f32 %v5701, %v5711
    %5727 = vrot.lane.b32.xlu0 %v5717, 40
    %v5728 = vpop.permute.xlu0 %5727
    %5729 = vrot.lane.b32.xlu0 %v5718, 40
    %v5730 = vpop.permute.xlu0 %5729
    %5731 = vrot.lane.b32.xlu0 %v5719, 40
    %v5732 = vpop.permute.xlu0 %5731
    %5733 = vrot.lane.b32.xlu0 %v5720, 40
    %v5734 = vpop.permute.xlu0 %5733
    %5735 = vrot.lane.b32.xlu0 %v5721, 40
    %v5736 = vpop.permute.xlu0 %5735
    %v5742 = vadd.f32 %v3698, %v5728
    %v5743 = vadd.f32 %v3703, %v5730
    %v5744 = vadd.f32 %v3708, %v5732
    %v5745 = vadd.f32 %v3713, %v5734
    %v5746 = vadd.f32 %v3718, %v5736
    %v5747 = vtanh.pop %v5742
    %v5748 = vtanh.pop %v5743
    %v5749 = vtanh.pop %v5744
    %v5750 = vtanh.pop %v5745
    %v5751 = vtanh.pop %v5746
    %v5752 = vsub.f32 1.0, %v5693
    %v5753 = vsub.f32 1.0, %v5695
    %v5754 = vsub.f32 1.0, %v5697
    %v5755 = vsub.f32 1.0, %v5699
    %v5756 = vsub.f32 1.0, %v5701
    %5762 = vrot.lane.b32.xlu0 %v5747, 108
    %v5763 = vpop.permute.xlu0 %5762
    %5764 = vrot.lane.b32.xlu0 %v5748, 108
    %v5765 = vpop.permute.xlu0 %5764
    %5766 = vrot.lane.b32.xlu0 %v5749, 108
    %v5767 = vpop.permute.xlu0 %5766
    %5768 = vrot.lane.b32.xlu0 %v5750, 108
    %v5769 = vpop.permute.xlu0 %5768
    %5770 = vrot.lane.b32.xlu0 %v5751, 108
    %v5771 = vpop.permute.xlu0 %5770
    %v5777 = vmul.f32 %v5752, %v5763
    %v5778 = vmul.f32 %v5753, %v5765
    %v5779 = vmul.f32 %v5754, %v5767
    %v5780 = vmul.f32 %v5755, %v5769
    %v5781 = vmul.f32 %v5756, %v5771
    %v5782 = vmul.f32 %v5693, %v5282
    %v5783 = vmul.f32 %v5695, %v5283
    %v5784 = vmul.f32 %v5697, %v5284
    %v5785 = vmul.f32 %v5699, %v5285
    %v5786 = vmul.f32 %v5701, %v5286
    %v5787 = vadd.f32 %v5777, %v5782
    %v5788 = vadd.f32 %v5778, %v5783
    %v5789 = vadd.f32 %v5779, %v5784
    %v5790 = vadd.f32 %v5780, %v5785
    %v5791 = vadd.f32 %v5781, %v5786
    %5802 = vrot.lane.b32.xlu0 %v5787, 68
    %v5803 = vpop.permute.xlu0 %5802
    %5804 = vrot.lane.b32.xlu0 %v5788, 68
    %v5805 = vpop.permute.xlu0 %5804
    %5806 = vrot.lane.b32.xlu0 %v5789, 68
    %v5807 = vpop.permute.xlu0 %5806
    %5808 = vrot.lane.b32.xlu0 %v5790, 68
    %v5809 = vpop.permute.xlu0 %5808
    %5810 = vrot.lane.b32.xlu0 %v5791, 68
    %v5811 = vpop.permute.xlu0 %5810
    %v5817 = vsel %vm1452, %v4283, %v5803
    %v5818 = vsel %vm1452, %v4285, %v5805
    %v5819 = vsel %vm1452, %v4287, %v5807
    %v5820 = vsel %vm1452, %v4289, %v5809
    %v5821 = vsel %vm1452, %v4291, %v5811
    %5827 = vrot.lane.b32.xlu0 %v5282, 68
    %v5828 = vpop.permute.xlu0 %5827
    %5829 = vrot.lane.b32.xlu0 %v5283, 68
    %v5830 = vpop.permute.xlu0 %5829
    %5831 = vrot.lane.b32.xlu0 %v5284, 68
    %v5832 = vpop.permute.xlu0 %5831
    %5833 = vrot.lane.b32.xlu0 %v5285, 68
    %v5834 = vpop.permute.xlu0 %5833
    %5835 = vrot.lane.b32.xlu0 %v5286, 68
    %v5836 = vpop.permute.xlu0 %5835
    %v5842 = vsel %vm1452, %v4788, %v5828
    %v5843 = vsel %vm1452, %v4790, %v5830
    %v5844 = vsel %vm1452, %v4792, %v5832
    %v5845 = vsel %vm1452, %v4794, %v5834
    %v5846 = vsel %vm1452, %v4796, %v5836
    %5852 = vrot.lane.b32.xlu0 %v4777, 68
    %v5853 = vpop.permute.xlu0 %5852
    %5854 = vrot.lane.b32.xlu0 %v4778, 68
    %v5855 = vpop.permute.xlu0 %5854
    %5856 = vrot.lane.b32.xlu0 %v4779, 68
    %v5857 = vpop.permute.xlu0 %5856
    %5858 = vrot.lane.b32.xlu0 %v4780, 68
    %v5859 = vpop.permute.xlu0 %5858
    %5860 = vrot.lane.b32.xlu0 %v4781, 68
    %v5861 = vpop.permute.xlu0 %5860
    %v5867 = vsel %vm1452, %v5293, %v5853
    %v5868 = vsel %vm1452, %v5295, %v5855
    %v5869 = vsel %vm1452, %v5297, %v5857
    %v5870 = vsel %vm1452, %v5299, %v5859
    %v5871 = vsel %vm1452, %v5301, %v5861
    %5877 = vrot.lane.b32.xlu0 %v5527, 108
    %v5878 = vpop.permute.xlu0 %5877
    %5879 = vrot.lane.b32.xlu0 %v5528, 108
    %v5880 = vpop.permute.xlu0 %5879
    %5881 = vrot.lane.b32.xlu0 %v5529, 108
    %v5882 = vpop.permute.xlu0 %5881
    %5883 = vrot.lane.b32.xlu0 %v5530, 108
    %v5884 = vpop.permute.xlu0 %5883
    %5885 = vrot.lane.b32.xlu0 %v5531, 108
    %v5886 = vpop.permute.xlu0 %5885
    %5892 = vrot.lane.b32.xlu0 %v4272, 68
    %v5893 = vpop.permute.xlu0 %5892
    %5894 = vrot.lane.b32.xlu0 %v4273, 68
    %v5895 = vpop.permute.xlu0 %5894
    %5896 = vrot.lane.b32.xlu0 %v4274, 68
    %v5897 = vpop.permute.xlu0 %5896
    %5898 = vrot.lane.b32.xlu0 %v4275, 68
    %v5899 = vpop.permute.xlu0 %5898
    %5900 = vrot.lane.b32.xlu0 %v4276, 68
    %v5901 = vpop.permute.xlu0 %5900
    %v5907 = vsel %vm1452, %v5878, %v5893
    %v5908 = vsel %vm1452, %v5880, %v5895
    %v5909 = vsel %vm1452, %v5882, %v5897
    %v5910 = vsel %vm1452, %v5884, %v5899
    %v5911 = vsel %vm1452, %v5886, %v5901
    %5912 = vst.msk [vmem:[%s21] sm:$0xff] %vm3570, %v5817
    %5913 = vst.msk [vmem:[%s21 + $0x8] sm:$0xff] %vm3570, %v5818
    %5914 = vst.msk [vmem:[%s21 + $0x10] sm:$0xff] %vm3570, %v5819
    %5915 = vst.msk [vmem:[%s21 + $0x18] sm:$0xff] %vm3570, %v5820
    %5916 = vst.msk [vmem:[%s21 + $0x20] sm:$0xff] %vm3570, %v5821
    %5917 = vst.msk [vmem:[%s21 + $0x28] sm:$0xff] %vm3570, %v5842
    %5918 = vst.msk [vmem:[%s21 + $0x30] sm:$0xff] %vm3570, %v5843
    %5919 = vst.msk [vmem:[%s21 + $0x38] sm:$0xff] %vm3570, %v5844
    %5920 = vst.msk [vmem:[%s21 + $0x40] sm:$0xff] %vm3570, %v5845
    %5921 = vst.msk [vmem:[%s21 + $0x48] sm:$0xff] %vm3570, %v5846
    %5922 = vst.msk [vmem:[%s21 + $0x50] sm:$0xff] %vm3570, %v5867
    %5923 = vst.msk [vmem:[%s21 + $0x58] sm:$0xff] %vm3570, %v5868
    %5924 = vst.msk [vmem:[%s21 + $0x60] sm:$0xff] %vm3570, %v5869
    %5925 = vst.msk [vmem:[%s21 + $0x68] sm:$0xff] %vm3570, %v5870
    %5926 = vst.msk [vmem:[%s21 + $0x70] sm:$0xff] %vm3570, %v5871
    %5927 = vst.msk [vmem:[%s21 + $0x78] sm:$0xff] %vm3570, %v5907
    %5928 = vst.msk [vmem:[%s21 + $0x80] sm:$0xff] %vm3570, %v5908
    %5929 = vst.msk [vmem:[%s21 + $0x88] sm:$0xff] %vm3570, %v5909
    %5930 = vst.msk [vmem:[%s21 + $0x90] sm:$0xff] %vm3570, %v5910
    %5931 = vst.msk [vmem:[%s21 + $0x98] sm:$0xff] %vm3570, %v5911
    // Predicated region
    $region146: #{msc_gru_forward.2} parent=1 // pred_check
      _
    $region147: #{msc_gru_forward.2} parent=1 // pred_check_branch
      %5933 = sbr.rel (0) target = $region149
    $region148: #{msc_gru_forward.2} parent=1 // pred_region
      _
    $region149: #{msc_gru_forward.2} parent=1 // pred_fallthru
      _
    // Predicated region
    $region150: #{msc_gru_forward.2} parent=1 // pred_check
      _
    $region151: #{msc_gru_forward.2} parent=1 // pred_check_branch
      %5935 = sbr.rel (0) target = $region153
    $region152: #{msc_gru_forward.2} parent=1 // pred_region
      _
    $region153: #{msc_gru_forward.2} parent=1 // pred_fallthru
      _
    %5936 = vsyncpa [#allocation3], 1
    %5937 = vsyncpa [#allocation5], 1
    %5938 = vsyncpa [#allocation8], 1
    %5939 = vsyncpa [#allocation11], 1
    %5940 = vsyncpa [#allocation14], 1
    %5941 = vsyncpa [#allocation17], 1
    %5942 = vsyncpa [#allocation20], 1
    %5943 = vsyncpa [#allocation23], 1

</llo_original>
